<compile_context>
chip_gen: v7x
topology: tpu7x:2x2x1
jax: 0.10.0
libtpu: 0.0.40
codegen_flags: <defaults>
</compile_context>

<pallas_src>
import functools
import math

import jax
import jax.numpy as jnp
from jax.experimental import pallas as pl
from jax.experimental.pallas import tpu as pltpu

D_MODEL = 32
NHEAD = 4
HEAD_DIM = D_MODEL // NHEAD
AGG0 = 4          # aggregate (depthwise conv) size / stride
AGG1 = 4          # max-pool size / stride
LN_EPS = 1e-5     # nn.LayerNorm default eps


# ----------------------------- in-kernel helpers ------------------------------

def _layernorm(x, gamma, beta):
    # LayerNorm over the last (channel) dim, matching nn.LayerNorm semantics.
    mean = jnp.mean(x, axis=-1, keepdims=True)
    var = jnp.mean(jnp.square(x - mean), axis=-1, keepdims=True)
    return (x - mean) * jax.lax.rsqrt(var + LN_EPS) * gamma + beta


def _pick_tile(m, cands=(2048, 1024, 512, 256, 128, 64, 32, 16, 8)):
    for c in cands:
        if m % c == 0:
            return c
    return m


# --------------------------------- kernels ------------------------------------

def _frontend_kernel(x_ref, src_ref, wagg_ref, g1_ref, b1_ref,
                     wq_ref, wkv_ref, wm_ref, o_ref, *, s0, s1, C, nhead):
    """Fused: aggregate+norm1, max_pool+norm1, q/kv projections, MHA, merge.

    x_ref   : [1, Ho, s0, Wo, s0*C]  (free reshape of NHWC x)
    src_ref : [1, Hp, s1, Wp, s1*C]  (free reshape of NHWC source)
    wagg_ref: [s0, 1, s0*C]          depthwise-conv weights, lane-folded
    wq_ref  : [C, C], wkv_ref: [C, 2C], wm_ref: [C, C]
    o_ref   : [1, L, C]              attention message m
    """
    gamma1 = g1_ref[...]
    beta1 = b1_ref[...]

    # ---- query = norm1(aggregate(x)) : depthwise s0 x s0 conv, stride s0 ----
    xv = x_ref[0]                               # [Ho, s0, Wo, s0*C]
    wagg = wagg_ref[...]                        # [s0, 1, s0*C]
    acc = xv[:, 0] * wagg[0]                    # [Ho, Wo, s0*C]
    for dy in range(1, s0):
        acc = acc + xv[:, dy] * wagg[dy]
    # fold the s0 lane groups of C channels -> [Ho, Wo, C]
    q32 = acc[:, :, 0:C]
    for dx in range(1, s0):
        q32 = q32 + acc[:, :, dx * C:(dx + 1) * C]
    Ho, Wo = q32.shape[0], q32.shape[1]
    q_tok = _layernorm(q32.reshape(Ho * Wo, C), gamma1, beta1)      # [L, C]

    # ---- source = norm1(max_pool(source)) : s1 x s1 max pool, stride s1 ----
    sv = src_ref[0]                             # [Hp, s1, Wp, s1*C]
    mx = sv[:, 0]
    for dy in range(1, s1):
        mx = jnp.maximum(mx, sv[:, dy])         # [Hp, Wp, s1*C]
    k32 = mx[:, :, 0:C]
    for dx in range(1, s1):
        k32 = jnp.maximum(k32, mx[:, :, dx * C:(dx + 1) * C])
    Hp, Wp = k32.shape[0], k32.shape[1]
    s_tok = _layernorm(k32.reshape(Hp * Wp, C), gamma1, beta1)      # [S, C]

    # ---- full-width projections (K = N = C instead of per-head width 8) ----
    q_all = jnp.dot(q_tok, wq_ref[...], preferred_element_type=jnp.float32)   # [L, C]
    kv = jnp.dot(s_tok, wkv_ref[...], preferred_element_type=jnp.float32)     # [S, 2C]
    k_all = kv[:, 0:C]
    v_all = kv[:, C:2 * C]

    # ---- per-head scaled dot-product attention ----
    dim = C // nhead
    scale = 1.0 / math.sqrt(dim)
    heads = []
    for h in range(nhead):
        qh = q_all[:, h * dim:(h + 1) * dim]
        kh = k_all[:, h * dim:(h + 1) * dim]
        vh = v_all[:, h * dim:(h + 1) * dim]
        sc = jax.lax.dot_general(qh, kh, (((1,), (1,)), ((), ())),
                                 preferred_element_type=jnp.float32) * scale   # [L, S]
        sc = sc - jnp.max(sc, axis=-1, keepdims=True)
        p = jnp.exp(sc)
        p = p * pl.reciprocal(jnp.sum(p, axis=-1, keepdims=True), approx=True)
        heads.append(jnp.dot(p, vh, preferred_element_type=jnp.float32))        # [L, d]
    o_cat = jnp.concatenate(heads, axis=-1)                                     # [L, C]
    o_ref[0] = jnp.dot(o_cat, wm_ref[...],
                       preferred_element_type=jnp.float32).astype(o_ref.dtype)


def _conv1x1_relu_kernel(x_ref, m_ref, wa_ref, wb_ref, o_ref):
    # mlp[0]: 1x1 conv (2C -> C, no bias) split as x@W1a + m@W1b, fused with ReLU.
    # Lane-dense formulation: 4 pixels folded into 128 lanes, block-diag weights.
    y = jnp.dot(x_ref[...], wa_ref[...], preferred_element_type=jnp.float32)
    y = y + jnp.dot(m_ref[...], wb_ref[...], preferred_element_type=jnp.float32)
    o_ref[...] = jnp.maximum(y, 0.0).astype(o_ref.dtype)


def _conv3_ln_res_kernel(tp_ref, w2_ref, g_ref, b_ref, xres_ref, o_ref, *, H, W, C):
    # mlp[2]: 3x3 conv (padding=1, no bias) via 9 shifted in-VMEM reads of the
    # padded activation, then norm2 and residual add.
    # tp_ref: [1, H+2, W+2, C], w2_ref: [9, C, C], xres_ref/o_ref: [1, H*W, C]
    tp = tp_ref[0]                              # [H+2, W+2, C]
    w2 = w2_ref[...]                            # [9, C, C]
    acc = jnp.zeros((H * W, C), jnp.float32)
    for dy in range(3):
        for dx in range(3):
            patch = tp[dy:dy + H, dx:dx + W, :].reshape(H * W, C)
            acc = acc + jnp.dot(patch, w2[dy * 3 + dx],
                                preferred_element_type=jnp.float32)
    y = _layernorm(acc, g_ref[...], b_ref[...])
    o_ref[0] = (xres_ref[0] + y).astype(o_ref.dtype)


# ------------------------------ pallas wrappers --------------------------------

def attention_frontend(x_nhwc, s_nhwc, params):
    """aggregate+norm1, max_pool+norm1, projections, attention, merge -> m [N, L, C]."""
    N, H, W, C = x_nhwc.shape
    _, H1, W1, _ = s_nhwc.shape
    s0, s1 = AGG0, AGG1
    assert H % s0 == 0 and W % s0 == 0 and H1 % s1 == 0 and W1 % s1 == 0
    Ho, Wo = H // s0, W // s0
    Hp, Wp = H1 // s1, W1 // s1
    L = Ho * Wo

    # free (bitcast) reshapes only — no host-side transposes / copies
    x5 = x_nhwc.reshape(N, Ho, s0, Wo, s0 * C)
    s5 = s_nhwc.reshape(N, Hp, s1, Wp, s1 * C)

    kern = functools.partial(_frontend_kernel, s0=s0, s1=s1, C=C, nhead=NHEAD)
    return pl.pallas_call(
        kern,
        out_shape=jax.ShapeDtypeStruct((N, L, C), jnp.float32),
        grid=(N,),
        in_specs=[
            pl.BlockSpec((1, Ho, s0, Wo, s0 * C), lambda n: (n, 0, 0, 0, 0)),
            pl.BlockSpec((1, Hp, s1, Wp, s1 * C), lambda n: (n, 0, 0, 0, 0)),
            pl.BlockSpec((s0, 1, s0 * C), lambda n: (0, 0, 0)),
            pl.BlockSpec((1, C), lambda n: (0, 0)),
            pl.BlockSpec((1, C), lambda n: (0, 0)),
            pl.BlockSpec((C, C), lambda n: (0, 0)),
            pl.BlockSpec((C, 2 * C), lambda n: (0, 0)),
            pl.BlockSpec((C, C), lambda n: (0, 0)),
        ],
        out_specs=pl.BlockSpec((1, L, C), lambda n: (n, 0, 0)),
        compiler_params=pltpu.CompilerParams(
            dimension_semantics=("parallel",),
            vmem_limit_bytes=40 * 1024 * 1024),
    )(x5, s5, params["wagg"], params["gamma1"], params["beta1"],
      params["wq"], params["wkv"], params["wm"])


def conv1x1_relu_fused(x_nhwc, m_nhwc, w1a, w1b):
    """relu(conv1x1(cat([x, m]))) without materializing the concat; lane-dense tiles."""
    N, H, W, C = x_nhwc.shape
    if 128 % C == 0 and W % (128 // C) == 0:
        fold = 128 // C                     # pack 4 pixels -> 128 lanes (C=32)
    else:
        fold = 1                            # generic fallback
    Cf = fold * C
    M = (N * H * W) // fold
    x2 = x_nhwc.reshape(M, Cf)              # free reshapes
    m2 = m_nhwc.reshape(M, Cf)
    if fold > 1:
        eye = jnp.eye(fold, dtype=jnp.float32)
        wa = jnp.kron(eye, w1a)             # [Cf, Cf] block-diagonal
        wb = jnp.kron(eye, w1b)
    else:
        wa, wb = w1a, w1b
    tm = _pick_tile(M)
    out = pl.pallas_call(
        _conv1x1_relu_kernel,
        out_shape=jax.ShapeDtypeStruct((M, Cf), jnp.float32),
        grid=(M // tm,),
        in_specs=[
            pl.BlockSpec((tm, Cf), lambda i: (i, 0)),
            pl.BlockSpec((tm, Cf), lambda i: (i, 0)),
            pl.BlockSpec((Cf, Cf), lambda i: (0, 0)),
            pl.BlockSpec((Cf, Cf), lambda i: (0, 0)),
        ],
        out_specs=pl.BlockSpec((tm, Cf), lambda i: (i, 0)),
        compiler_params=pltpu.CompilerParams(dimension_semantics=("parallel",)),
    )(x2, m2, wa, wb)
    return out.reshape(N, H, W, C)


def conv3x3_ln_residual(t_nhwc, w2, gamma2, beta2, x_nhwc):
    N, H, W, C = t_nhwc.shape
    HW = H * W
    t_pad = jnp.pad(t_nhwc, ((0, 0), (1, 1), (1, 1), (0, 0)))   # conv padding=1
    xres = x_nhwc.reshape(N, HW, C)
    out = pl.pallas_call(
        functools.partial(_conv3_ln_res_kernel, H=H, W=W, C=C),
        out_shape=jax.ShapeDtypeStruct((N, HW, C), jnp.float32),
        grid=(N,),
        in_specs=[
            pl.BlockSpec((1, H + 2, W + 2, C), lambda n: (n, 0, 0, 0)),
            pl.BlockSpec((9, C, C), lambda n: (0, 0, 0)),
            pl.BlockSpec((1, C), lambda n: (0, 0)),
            pl.BlockSpec((1, C), lambda n: (0, 0)),
            pl.BlockSpec((1, HW, C), lambda n: (n, 0, 0)),
        ],
        out_specs=pl.BlockSpec((1, HW, C), lambda n: (n, 0, 0)),
        compiler_params=pltpu.CompilerParams(
            dimension_semantics=("parallel",),
            vmem_limit_bytes=40 * 1024 * 1024),
    )(t_pad, w2, gamma2, beta2, xres)
    return out.reshape(N, H, W, C)


# ------------------------------- plain-JAX glue ---------------------------------

def upsample_bilinear_nhwc(x, s):
    # F.interpolate(scale_factor=s, mode='bilinear', align_corners=False) equivalent.
    N, Hc, Wc, C = x.shape
    Ho, Wo = Hc * s, Wc * s

    def idx_w(size_in, size_out):
        coords = (jnp.arange(size_out, dtype=jnp.float32) + 0.5) / s - 0.5
        coords = jnp.clip(coords, 0.0, size_in - 1.0)
        lo = jnp.floor(coords).astype(jnp.int32)
        hi = jnp.minimum(lo + 1, size_in - 1)
        frac = coords - lo.astype(jnp.float32)
        return lo, hi, frac

    ylo, yhi, yf = idx_w(Hc, Ho)
    xlo, xhi, xf = idx_w(Wc, Wo)
    rows = x[:, ylo] * (1.0 - yf)[None, :, None, None] + x[:, yhi] * yf[None, :, None, None]
    out = rows[:, :, xlo] * (1.0 - xf)[None, None, :, None] + rows[:, :, xhi] * xf[None, None, :, None]
    return out


def ag_rope_encoder_layer_forward(params, x, source):
    """x, source: [N, C, H, W] float32 (NCHW, PyTorch convention). Returns NCHW."""
    N, C, H0, W0 = x.shape
    x_nhwc = jnp.transpose(x, (0, 2, 3, 1)).astype(jnp.float32)
    s_nhwc = jnp.transpose(source, (0, 2, 3, 1)).astype(jnp.float32)

    # fused: query=norm1(aggregate(x)), source=norm1(max_pool(source)), q/k/v, attn, merge
    m = attention_frontend(x_nhwc, s_nhwc, params)          # [N, L, C]

    Ho, Wo = H0 // AGG0, W0 // AGG0
    m = m.reshape(N, Ho, Wo, C)
    if AGG0 != 1:
        m = upsample_bilinear_nhwc(m, AGG0)                 # [N, H0, W0, C]

    # mlp: (split-weight 1x1 conv + ReLU) -> 3x3 conv -> norm2 -> residual
    t = conv1x1_relu_fused(x_nhwc, m, params["w1a"], params["w1b"])
    out_nhwc = conv3x3_ln_residual(t, params["w2"], params["gamma2"],
                                   params["beta2"], x_nhwc)
    return jnp.transpose(out_nhwc, (0, 3, 1, 2))


# ------------------------------- parameter init ---------------------------------

def init_params(key, d_model=D_MODEL, nhead=NHEAD, agg0=AGG0):
    C = d_model
    ks = jax.random.split(key, 7)
    scale = 1.0 / math.sqrt(C)
    ss = agg0 * agg0
    # depthwise aggregate conv: torch weight [C, 1, s, s]
    #   -> w_agg[dy*s+dx, c] = w_torch[c, 0, dy, dx]   (dy-major, dx-minor!)
    w_agg = jax.random.normal(ks[0], (ss, C), jnp.float32) / ss
    # lane-folded broadcast form used by the fused kernel:
    #   wagg_b[dy, 0, dx*C + c] = w_agg[dy*s+dx, c]
    wagg_b = w_agg.reshape(agg0, agg0, C).reshape(agg0, 1, agg0 * C)
    # linear weights stored transposed (y = x @ W); load torch weights as W_torch.T
    wq = jax.random.normal(ks[1], (C, C), jnp.float32) * scale
    wk = jax.random.normal(ks[2], (C, C), jnp.float32) * scale
    wv = jax.random.normal(ks[3], (C, C), jnp.float32) * scale
    wm = jax.random.normal(ks[4], (C, C), jnp.float32) * scale
    # mlp[0]: Conv2d(2C, C, 1): first C input channels are x, last C are m
    w1 = jax.random.normal(ks[5], (2 * C, C), jnp.float32) / math.sqrt(2 * C)
    # mlp[2]: Conv2d(C, C, 3): torch [Cout, Cin, 3, 3]
    #   -> w2[dy*3+dx, cin, cout] = w_torch[cout, cin, dy, dx]   (dy-major, dx-minor!)
    w2 = jax.random.normal(ks[6], (9, C, C), jnp.float32) / math.sqrt(9 * C)
    return dict(
        wagg=wagg_b,
        wq=wq,
        wkv=jnp.concatenate([wk, wv], axis=1),      # [C, 2C]
        wm=wm,
        w1a=w1[:C], w1b=w1[C:],
        w2=w2,
        gamma1=jnp.ones((1, C), jnp.float32), beta1=jnp.zeros((1, C), jnp.float32),
        gamma2=jnp.ones((1, C), jnp.float32), beta2=jnp.zeros((1, C), jnp.float32),
    )


if __name__ == "__main__":
    key = jax.random.PRNGKey(0)
    kx, ksrc, kp = jax.random.split(key, 3)
    N, C, H0, W0 = 2, D_MODEL, 16, 16
    H1, W1 = 16, 16
    x = jax.random.normal(kx, (N, C, H0, W0), jnp.float32)
    source = jax.random.normal(ksrc, (N, C, H1, W1), jnp.float32)
    params = init_params(kp)

    fwd = jax.jit(ag_rope_encoder_layer_forward)
    out = jax.block_until_ready(fwd(params, x, source))
    assert out.shape == (N, C, H0, W0) and out.dtype == jnp.float32
    print("KERNEL_OK")
</pallas_src>

<mosaic_0001>
module attributes {stable_mosaic.version = 11 : i64} {
  func.func @_frontend_kernel(%arg0: i32, %arg1: memref<1x4x4x4x128xf32, #tpu.memory_space<vmem>>, %arg2: memref<1x4x4x4x128xf32, #tpu.memory_space<vmem>>, %arg3: memref<4x1x128xf32, #tpu.memory_space<vmem>>, %arg4: memref<1x32xf32, #tpu.memory_space<vmem>>, %arg5: memref<1x32xf32, #tpu.memory_space<vmem>>, %arg6: memref<32x32xf32, #tpu.memory_space<vmem>>, %arg7: memref<32x64xf32, #tpu.memory_space<vmem>>, %arg8: memref<32x32xf32, #tpu.memory_space<vmem>>, %arg9: memref<1x16x32xf32, #tpu.memory_space<vmem>>) attributes {dimension_semantics = [#tpu.dimension_semantics<parallel>], iteration_bounds = array<i64: 2>, scalar_prefetch = 0 : i64, scratch_operands = 0 : i64, tpu.core_type = #tpu.core_type<tc>, window_params = [{transform_indices = @transform_0, window_bounds = array<i64: 1, 4, 4, 4, 128>}, {transform_indices = @transform_1, window_bounds = array<i64: 1, 4, 4, 4, 128>}, {pipeline_mode = #tpu.pipeline_mode<synchronous>, transform_indices = @transform_2, window_bounds = array<i64: 4, 1, 128>}, {pipeline_mode = #tpu.pipeline_mode<synchronous>, transform_indices = @transform_3, window_bounds = array<i64: 1, 32>}, {pipeline_mode = #tpu.pipeline_mode<synchronous>, transform_indices = @transform_4, window_bounds = array<i64: 1, 32>}, {pipeline_mode = #tpu.pipeline_mode<synchronous>, transform_indices = @transform_5, window_bounds = array<i64: 32, 32>}, {pipeline_mode = #tpu.pipeline_mode<synchronous>, transform_indices = @transform_6, window_bounds = array<i64: 32, 64>}, {pipeline_mode = #tpu.pipeline_mode<synchronous>, transform_indices = @transform_7, window_bounds = array<i64: 32, 32>}, {transform_indices = @transform_8, window_bounds = array<i64: 1, 16, 32>}]} {
    %c0 = arith.constant 0 : index
    %c0_0 = arith.constant 0 : index
    %0 = vector.load %arg4[%c0, %c0_0] : memref<1x32xf32, #tpu.memory_space<vmem>>, vector<1x32xf32>
    %c0_1 = arith.constant 0 : index
    %c0_2 = arith.constant 0 : index
    %1 = vector.load %arg5[%c0_1, %c0_2] : memref<1x32xf32, #tpu.memory_space<vmem>>, vector<1x32xf32>
    %c0_3 = arith.constant 0 : index
    %c0_4 = arith.constant 0 : index
    %c0_5 = arith.constant 0 : index
    %c0_6 = arith.constant 0 : index
    %c0_7 = arith.constant 0 : index
    %2 = vector.load %arg1[%c0_3, %c0_4, %c0_5, %c0_6, %c0_7] : memref<1x4x4x4x128xf32, #tpu.memory_space<vmem>>, vector<1x4x4x4x128xf32>
    %3 = vector.shape_cast %2 : vector<1x4x4x4x128xf32> to vector<4x4x4x128xf32>
    %c0_8 = arith.constant 0 : index
    %c0_9 = arith.constant 0 : index
    %c0_10 = arith.constant 0 : index
    %4 = vector.load %arg3[%c0_8, %c0_9, %c0_10] : memref<4x1x128xf32, #tpu.memory_space<vmem>>, vector<4x1x128xf32>
    %5 = vector.extract_strided_slice %3 {offsets = [0, 0, 0, 0], sizes = [4, 1, 4, 128], strides = [1, 1, 1, 1]} : vector<4x4x4x128xf32> to vector<4x1x4x128xf32>
    %6 = vector.shape_cast %5 : vector<4x1x4x128xf32> to vector<4x4x128xf32>
    %7 = vector.extract_strided_slice %4 {offsets = [0, 0, 0], sizes = [1, 1, 128], strides = [1, 1, 1]} : vector<4x1x128xf32> to vector<1x1x128xf32>
    %8 = vector.shape_cast %7 : vector<1x1x128xf32> to vector<1x128xf32>
    %9 = vector.shape_cast %8 : vector<1x128xf32> to vector<1x1x128xf32>
    %10 = vector.broadcast %9 : vector<1x1x128xf32> to vector<4x4x128xf32>
    %11 = arith.mulf %6, %10 : vector<4x4x128xf32>
    %12 = vector.extract_strided_slice %3 {offsets = [0, 1, 0, 0], sizes = [4, 1, 4, 128], strides = [1, 1, 1, 1]} : vector<4x4x4x128xf32> to vector<4x1x4x128xf32>
    %13 = vector.shape_cast %12 : vector<4x1x4x128xf32> to vector<4x4x128xf32>
    %14 = vector.extract_strided_slice %4 {offsets = [1, 0, 0], sizes = [1, 1, 128], strides = [1, 1, 1]} : vector<4x1x128xf32> to vector<1x1x128xf32>
    %15 = vector.shape_cast %14 : vector<1x1x128xf32> to vector<1x128xf32>
    %16 = vector.shape_cast %15 : vector<1x128xf32> to vector<1x1x128xf32>
    %17 = vector.broadcast %16 : vector<1x1x128xf32> to vector<4x4x128xf32>
    %18 = arith.mulf %13, %17 : vector<4x4x128xf32>
    %19 = arith.addf %11, %18 : vector<4x4x128xf32>
    %20 = vector.extract_strided_slice %3 {offsets = [0, 2, 0, 0], sizes = [4, 1, 4, 128], strides = [1, 1, 1, 1]} : vector<4x4x4x128xf32> to vector<4x1x4x128xf32>
    %21 = vector.shape_cast %20 : vector<4x1x4x128xf32> to vector<4x4x128xf32>
    %22 = vector.extract_strided_slice %4 {offsets = [2, 0, 0], sizes = [1, 1, 128], strides = [1, 1, 1]} : vector<4x1x128xf32> to vector<1x1x128xf32>
    %23 = vector.shape_cast %22 : vector<1x1x128xf32> to vector<1x128xf32>
    %24 = vector.shape_cast %23 : vector<1x128xf32> to vector<1x1x128xf32>
    %25 = vector.broadcast %24 : vector<1x1x128xf32> to vector<4x4x128xf32>
    %26 = arith.mulf %21, %25 : vector<4x4x128xf32>
    %27 = arith.addf %19, %26 : vector<4x4x128xf32>
    %28 = vector.extract_strided_slice %3 {offsets = [0, 3, 0, 0], sizes = [4, 1, 4, 128], strides = [1, 1, 1, 1]} : vector<4x4x4x128xf32> to vector<4x1x4x128xf32>
    %29 = vector.shape_cast %28 : vector<4x1x4x128xf32> to vector<4x4x128xf32>
    %30 = vector.extract_strided_slice %4 {offsets = [3, 0, 0], sizes = [1, 1, 128], strides = [1, 1, 1]} : vector<4x1x128xf32> to vector<1x1x128xf32>
    %31 = vector.shape_cast %30 : vector<1x1x128xf32> to vector<1x128xf32>
    %32 = vector.shape_cast %31 : vector<1x128xf32> to vector<1x1x128xf32>
    %33 = vector.broadcast %32 : vector<1x1x128xf32> to vector<4x4x128xf32>
    %34 = arith.mulf %29, %33 : vector<4x4x128xf32>
    %35 = arith.addf %27, %34 : vector<4x4x128xf32>
    %36 = vector.extract_strided_slice %35 {offsets = [0, 0, 0], sizes = [4, 4, 32], strides = [1, 1, 1]} : vector<4x4x128xf32> to vector<4x4x32xf32>
    %37 = vector.extract_strided_slice %35 {offsets = [0, 0, 32], sizes = [4, 4, 32], strides = [1, 1, 1]} : vector<4x4x128xf32> to vector<4x4x32xf32>
    %38 = arith.addf %36, %37 : vector<4x4x32xf32>
    %39 = vector.extract_strided_slice %35 {offsets = [0, 0, 64], sizes = [4, 4, 32], strides = [1, 1, 1]} : vector<4x4x128xf32> to vector<4x4x32xf32>
    %40 = arith.addf %38, %39 : vector<4x4x32xf32>
    %41 = vector.extract_strided_slice %35 {offsets = [0, 0, 96], sizes = [4, 4, 32], strides = [1, 1, 1]} : vector<4x4x128xf32> to vector<4x4x32xf32>
    %42 = arith.addf %40, %41 : vector<4x4x32xf32>
    %43 = vector.shape_cast %42 : vector<4x4x32xf32> to vector<16x32xf32>
    %cst = arith.constant dense<0.000000e+00> : vector<16xf32>
    %44 = vector.multi_reduction <add>, %43, %cst [1] : vector<16x32xf32> to vector<16xf32>
    %45 = vector.shape_cast %44 : vector<16xf32> to vector<16x1xf32>
    %cst_11 = arith.constant 3.200000e+01 : f32
    %46 = vector.broadcast %cst_11 : f32 to vector<16x1xf32>
    %47 = arith.divf %45, %46 : vector<16x1xf32>
    %48 = vector.broadcast %47 : vector<16x1xf32> to vector<16x32xf32>
    %49 = arith.subf %43, %48 : vector<16x32xf32>
    %50 = arith.mulf %49, %49 : vector<16x32xf32>
    %cst_12 = arith.constant dense<0.000000e+00> : vector<16xf32>
    %51 = vector.multi_reduction <add>, %50, %cst_12 [1] : vector<16x32xf32> to vector<16xf32>
    %52 = vector.shape_cast %51 : vector<16xf32> to vector<16x1xf32>
    %cst_13 = arith.constant 3.200000e+01 : f32
    %53 = vector.broadcast %cst_13 : f32 to vector<16x1xf32>
    %54 = arith.divf %52, %53 : vector<16x1xf32>
    %55 = vector.broadcast %47 : vector<16x1xf32> to vector<16x32xf32>
    %56 = arith.subf %43, %55 : vector<16x32xf32>
    %cst_14 = arith.constant 9.99999974E-6 : f32
    %57 = vector.broadcast %cst_14 : f32 to vector<16x1xf32>
    %58 = arith.addf %54, %57 : vector<16x1xf32>
    %59 = math.rsqrt %58 : vector<16x1xf32>
    %60 = vector.broadcast %59 : vector<16x1xf32> to vector<16x32xf32>
    %61 = arith.mulf %56, %60 : vector<16x32xf32>
    %62 = vector.broadcast %0 : vector<1x32xf32> to vector<16x32xf32>
    %63 = arith.mulf %61, %62 : vector<16x32xf32>
    %64 = vector.broadcast %1 : vector<1x32xf32> to vector<16x32xf32>
    %65 = arith.addf %63, %64 : vector<16x32xf32>
    %c0_15 = arith.constant 0 : index
    %c0_16 = arith.constant 0 : index
    %c0_17 = arith.constant 0 : index
    %c0_18 = arith.constant 0 : index
    %c0_19 = arith.constant 0 : index
    %66 = vector.load %arg2[%c0_15, %c0_16, %c0_17, %c0_18, %c0_19] : memref<1x4x4x4x128xf32, #tpu.memory_space<vmem>>, vector<1x4x4x4x128xf32>
    %67 = vector.shape_cast %66 : vector<1x4x4x4x128xf32> to vector<4x4x4x128xf32>
    %68 = vector.extract_strided_slice %67 {offsets = [0, 0, 0, 0], sizes = [4, 1, 4, 128], strides = [1, 1, 1, 1]} : vector<4x4x4x128xf32> to vector<4x1x4x128xf32>
    %69 = vector.shape_cast %68 : vector<4x1x4x128xf32> to vector<4x4x128xf32>
    %70 = vector.extract_strided_slice %67 {offsets = [0, 1, 0, 0], sizes = [4, 1, 4, 128], strides = [1, 1, 1, 1]} : vector<4x4x4x128xf32> to vector<4x1x4x128xf32>
    %71 = vector.shape_cast %70 : vector<4x1x4x128xf32> to vector<4x4x128xf32>
    %72 = arith.maximumf %69, %71 : vector<4x4x128xf32>
    %73 = vector.extract_strided_slice %67 {offsets = [0, 2, 0, 0], sizes = [4, 1, 4, 128], strides = [1, 1, 1, 1]} : vector<4x4x4x128xf32> to vector<4x1x4x128xf32>
    %74 = vector.shape_cast %73 : vector<4x1x4x128xf32> to vector<4x4x128xf32>
    %75 = arith.maximumf %72, %74 : vector<4x4x128xf32>
    %76 = vector.extract_strided_slice %67 {offsets = [0, 3, 0, 0], sizes = [4, 1, 4, 128], strides = [1, 1, 1, 1]} : vector<4x4x4x128xf32> to vector<4x1x4x128xf32>
    %77 = vector.shape_cast %76 : vector<4x1x4x128xf32> to vector<4x4x128xf32>
    %78 = arith.maximumf %75, %77 : vector<4x4x128xf32>
    %79 = vector.extract_strided_slice %78 {offsets = [0, 0, 0], sizes = [4, 4, 32], strides = [1, 1, 1]} : vector<4x4x128xf32> to vector<4x4x32xf32>
    %80 = vector.extract_strided_slice %78 {offsets = [0, 0, 32], sizes = [4, 4, 32], strides = [1, 1, 1]} : vector<4x4x128xf32> to vector<4x4x32xf32>
    %81 = arith.maximumf %79, %80 : vector<4x4x32xf32>
    %82 = vector.extract_strided_slice %78 {offsets = [0, 0, 64], sizes = [4, 4, 32], strides = [1, 1, 1]} : vector<4x4x128xf32> to vector<4x4x32xf32>
    %83 = arith.maximumf %81, %82 : vector<4x4x32xf32>
    %84 = vector.extract_strided_slice %78 {offsets = [0, 0, 96], sizes = [4, 4, 32], strides = [1, 1, 1]} : vector<4x4x128xf32> to vector<4x4x32xf32>
    %85 = arith.maximumf %83, %84 : vector<4x4x32xf32>
    %86 = vector.shape_cast %85 : vector<4x4x32xf32> to vector<16x32xf32>
    %cst_20 = arith.constant dense<0.000000e+00> : vector<16xf32>
    %87 = vector.multi_reduction <add>, %86, %cst_20 [1] : vector<16x32xf32> to vector<16xf32>
    %88 = vector.shape_cast %87 : vector<16xf32> to vector<16x1xf32>
    %cst_21 = arith.constant 3.200000e+01 : f32
    %89 = vector.broadcast %cst_21 : f32 to vector<16x1xf32>
    %90 = arith.divf %88, %89 : vector<16x1xf32>
    %91 = vector.broadcast %90 : vector<16x1xf32> to vector<16x32xf32>
    %92 = arith.subf %86, %91 : vector<16x32xf32>
    %93 = arith.mulf %92, %92 : vector<16x32xf32>
    %cst_22 = arith.constant dense<0.000000e+00> : vector<16xf32>
    %94 = vector.multi_reduction <add>, %93, %cst_22 [1] : vector<16x32xf32> to vector<16xf32>
    %95 = vector.shape_cast %94 : vector<16xf32> to vector<16x1xf32>
    %cst_23 = arith.constant 3.200000e+01 : f32
    %96 = vector.broadcast %cst_23 : f32 to vector<16x1xf32>
    %97 = arith.divf %95, %96 : vector<16x1xf32>
    %98 = vector.broadcast %90 : vector<16x1xf32> to vector<16x32xf32>
    %99 = arith.subf %86, %98 : vector<16x32xf32>
    %cst_24 = arith.constant 9.99999974E-6 : f32
    %100 = vector.broadcast %cst_24 : f32 to vector<16x1xf32>
    %101 = arith.addf %97, %100 : vector<16x1xf32>
    %102 = math.rsqrt %101 : vector<16x1xf32>
    %103 = vector.broadcast %102 : vector<16x1xf32> to vector<16x32xf32>
    %104 = arith.mulf %99, %103 : vector<16x32xf32>
    %105 = vector.broadcast %0 : vector<1x32xf32> to vector<16x32xf32>
    %106 = arith.mulf %104, %105 : vector<16x32xf32>
    %107 = vector.broadcast %1 : vector<1x32xf32> to vector<16x32xf32>
    %108 = arith.addf %106, %107 : vector<16x32xf32>
    %c0_25 = arith.constant 0 : index
    %c0_26 = arith.constant 0 : index
    %109 = vector.load %arg6[%c0_25, %c0_26] : memref<32x32xf32, #tpu.memory_space<vmem>>, vector<32x32xf32>
    %cst_27 = arith.constant dense<0.000000e+00> : vector<16x32xf32>
    %110 = tpu.matmul %65, %109, %cst_27 {dimension_numbers = #tpu.dot_dimension_numbers<[1], [0], [0], [1], [0, 0, 1, 1], [], []>} : vector<16x32xf32>, vector<32x32xf32>, vector<16x32xf32> -> vector<16x32xf32>
    %c0_28 = arith.constant 0 : index
    %c0_29 = arith.constant 0 : index
    %111 = vector.load %arg7[%c0_28, %c0_29] : memref<32x64xf32, #tpu.memory_space<vmem>>, vector<32x64xf32>
    %cst_30 = arith.constant dense<0.000000e+00> : vector<16x64xf32>
    %112 = tpu.matmul %108, %111, %cst_30 {dimension_numbers = #tpu.dot_dimension_numbers<[1], [0], [0], [1], [0, 0, 1, 1], [], []>} : vector<16x32xf32>, vector<32x64xf32>, vector<16x64xf32> -> vector<16x64xf32>
    %113 = vector.extract_strided_slice %112 {offsets = [0, 0], sizes = [16, 32], strides = [1, 1]} : vector<16x64xf32> to vector<16x32xf32>
    %114 = vector.extract_strided_slice %112 {offsets = [0, 32], sizes = [16, 32], strides = [1, 1]} : vector<16x64xf32> to vector<16x32xf32>
    %115 = vector.extract_strided_slice %110 {offsets = [0, 0], sizes = [16, 8], strides = [1, 1]} : vector<16x32xf32> to vector<16x8xf32>
    %116 = vector.extract_strided_slice %113 {offsets = [0, 0], sizes = [16, 8], strides = [1, 1]} : vector<16x32xf32> to vector<16x8xf32>
    %117 = vector.extract_strided_slice %114 {offsets = [0, 0], sizes = [16, 8], strides = [1, 1]} : vector<16x32xf32> to vector<16x8xf32>
    %cst_31 = arith.constant dense<0.000000e+00> : vector<16x16xf32>
    %118 = tpu.matmul %115, %116, %cst_31 {dimension_numbers = #tpu.dot_dimension_numbers<[1], [1], [0], [0], [0, 0, 1, 0], [], []>} : vector<16x8xf32>, vector<16x8xf32>, vector<16x16xf32> -> vector<16x16xf32>
    %cst_32 = arith.constant 0.353553385 : f32
    %119 = vector.broadcast %cst_32 : f32 to vector<16x16xf32>
    %120 = arith.mulf %118, %119 : vector<16x16xf32>
    %cst_33 = arith.constant dense<0xFF800000> : vector<16xf32>
    %121 = vector.multi_reduction <maximumf>, %120, %cst_33 [1] : vector<16x16xf32> to vector<16xf32>
    %122 = vector.shape_cast %121 : vector<16xf32> to vector<16x1xf32>
    %123 = vector.broadcast %122 : vector<16x1xf32> to vector<16x16xf32>
    %124 = arith.subf %120, %123 : vector<16x16xf32>
    %125 = math.exp %124 : vector<16x16xf32>
    %cst_34 = arith.constant dense<0.000000e+00> : vector<16xf32>
    %126 = vector.multi_reduction <add>, %125, %cst_34 [1] : vector<16x16xf32> to vector<16xf32>
    %127 = vector.shape_cast %126 : vector<16xf32> to vector<16x1xf32>
    %128 = tpu.reciprocal %127 {approx = true} : vector<16x1xf32> -> vector<16x1xf32>
    %129 = vector.broadcast %128 : vector<16x1xf32> to vector<16x16xf32>
    %130 = arith.mulf %125, %129 : vector<16x16xf32>
    %cst_35 = arith.constant dense<0.000000e+00> : vector<16x8xf32>
    %131 = tpu.matmul %130, %117, %cst_35 {dimension_numbers = #tpu.dot_dimension_numbers<[1], [0], [0], [1], [0, 0, 1, 1], [], []>} : vector<16x16xf32>, vector<16x8xf32>, vector<16x8xf32> -> vector<16x8xf32>
    %132 = vector.extract_strided_slice %110 {offsets = [0, 8], sizes = [16, 8], strides = [1, 1]} : vector<16x32xf32> to vector<16x8xf32>
    %133 = vector.extract_strided_slice %113 {offsets = [0, 8], sizes = [16, 8], strides = [1, 1]} : vector<16x32xf32> to vector<16x8xf32>
    %134 = vector.extract_strided_slice %114 {offsets = [0, 8], sizes = [16, 8], strides = [1, 1]} : vector<16x32xf32> to vector<16x8xf32>
    %cst_36 = arith.constant dense<0.000000e+00> : vector<16x16xf32>
    %135 = tpu.matmul %132, %133, %cst_36 {dimension_numbers = #tpu.dot_dimension_numbers<[1], [1], [0], [0], [0, 0, 1, 0], [], []>} : vector<16x8xf32>, vector<16x8xf32>, vector<16x16xf32> -> vector<16x16xf32>
    %cst_37 = arith.constant 0.353553385 : f32
    %136 = vector.broadcast %cst_37 : f32 to vector<16x16xf32>
    %137 = arith.mulf %135, %136 : vector<16x16xf32>
    %cst_38 = arith.constant dense<0xFF800000> : vector<16xf32>
    %138 = vector.multi_reduction <maximumf>, %137, %cst_38 [1] : vector<16x16xf32> to vector<16xf32>
    %139 = vector.shape_cast %138 : vector<16xf32> to vector<16x1xf32>
    %140 = vector.broadcast %139 : vector<16x1xf32> to vector<16x16xf32>
    %141 = arith.subf %137, %140 : vector<16x16xf32>
    %142 = math.exp %141 : vector<16x16xf32>
    %cst_39 = arith.constant dense<0.000000e+00> : vector<16xf32>
    %143 = vector.multi_reduction <add>, %142, %cst_39 [1] : vector<16x16xf32> to vector<16xf32>
    %144 = vector.shape_cast %143 : vector<16xf32> to vector<16x1xf32>
    %145 = tpu.reciprocal %144 {approx = true} : vector<16x1xf32> -> vector<16x1xf32>
    %146 = vector.broadcast %145 : vector<16x1xf32> to vector<16x16xf32>
    %147 = arith.mulf %142, %146 : vector<16x16xf32>
    %cst_40 = arith.constant dense<0.000000e+00> : vector<16x8xf32>
    %148 = tpu.matmul %147, %134, %cst_40 {dimension_numbers = #tpu.dot_dimension_numbers<[1], [0], [0], [1], [0, 0, 1, 1], [], []>} : vector<16x16xf32>, vector<16x8xf32>, vector<16x8xf32> -> vector<16x8xf32>
    %149 = vector.extract_strided_slice %110 {offsets = [0, 16], sizes = [16, 8], strides = [1, 1]} : vector<16x32xf32> to vector<16x8xf32>
    %150 = vector.extract_strided_slice %113 {offsets = [0, 16], sizes = [16, 8], strides = [1, 1]} : vector<16x32xf32> to vector<16x8xf32>
    %151 = vector.extract_strided_slice %114 {offsets = [0, 16], sizes = [16, 8], strides = [1, 1]} : vector<16x32xf32> to vector<16x8xf32>
    %cst_41 = arith.constant dense<0.000000e+00> : vector<16x16xf32>
    %152 = tpu.matmul %149, %150, %cst_41 {dimension_numbers = #tpu.dot_dimension_numbers<[1], [1], [0], [0], [0, 0, 1, 0], [], []>} : vector<16x8xf32>, vector<16x8xf32>, vector<16x16xf32> -> vector<16x16xf32>
    %cst_42 = arith.constant 0.353553385 : f32
    %153 = vector.broadcast %cst_42 : f32 to vector<16x16xf32>
    %154 = arith.mulf %152, %153 : vector<16x16xf32>
    %cst_43 = arith.constant dense<0xFF800000> : vector<16xf32>
    %155 = vector.multi_reduction <maximumf>, %154, %cst_43 [1] : vector<16x16xf32> to vector<16xf32>
    %156 = vector.shape_cast %155 : vector<16xf32> to vector<16x1xf32>
    %157 = vector.broadcast %156 : vector<16x1xf32> to vector<16x16xf32>
    %158 = arith.subf %154, %157 : vector<16x16xf32>
    %159 = math.exp %158 : vector<16x16xf32>
    %cst_44 = arith.constant dense<0.000000e+00> : vector<16xf32>
    %160 = vector.multi_reduction <add>, %159, %cst_44 [1] : vector<16x16xf32> to vector<16xf32>
    %161 = vector.shape_cast %160 : vector<16xf32> to vector<16x1xf32>
    %162 = tpu.reciprocal %161 {approx = true} : vector<16x1xf32> -> vector<16x1xf32>
    %163 = vector.broadcast %162 : vector<16x1xf32> to vector<16x16xf32>
    %164 = arith.mulf %159, %163 : vector<16x16xf32>
    %cst_45 = arith.constant dense<0.000000e+00> : vector<16x8xf32>
    %165 = tpu.matmul %164, %151, %cst_45 {dimension_numbers = #tpu.dot_dimension_numbers<[1], [0], [0], [1], [0, 0, 1, 1], [], []>} : vector<16x16xf32>, vector<16x8xf32>, vector<16x8xf32> -> vector<16x8xf32>
    %166 = vector.extract_strided_slice %110 {offsets = [0, 24], sizes = [16, 8], strides = [1, 1]} : vector<16x32xf32> to vector<16x8xf32>
    %167 = vector.extract_strided_slice %113 {offsets = [0, 24], sizes = [16, 8], strides = [1, 1]} : vector<16x32xf32> to vector<16x8xf32>
    %168 = vector.extract_strided_slice %114 {offsets = [0, 24], sizes = [16, 8], strides = [1, 1]} : vector<16x32xf32> to vector<16x8xf32>
    %cst_46 = arith.constant dense<0.000000e+00> : vector<16x16xf32>
    %169 = tpu.matmul %166, %167, %cst_46 {dimension_numbers = #tpu.dot_dimension_numbers<[1], [1], [0], [0], [0, 0, 1, 0], [], []>} : vector<16x8xf32>, vector<16x8xf32>, vector<16x16xf32> -> vector<16x16xf32>
    %cst_47 = arith.constant 0.353553385 : f32
    %170 = vector.broadcast %cst_47 : f32 to vector<16x16xf32>
    %171 = arith.mulf %169, %170 : vector<16x16xf32>
    %cst_48 = arith.constant dense<0xFF800000> : vector<16xf32>
    %172 = vector.multi_reduction <maximumf>, %171, %cst_48 [1] : vector<16x16xf32> to vector<16xf32>
    %173 = vector.shape_cast %172 : vector<16xf32> to vector<16x1xf32>
    %174 = vector.broadcast %173 : vector<16x1xf32> to vector<16x16xf32>
    %175 = arith.subf %171, %174 : vector<16x16xf32>
    %176 = math.exp %175 : vector<16x16xf32>
    %cst_49 = arith.constant dense<0.000000e+00> : vector<16xf32>
    %177 = vector.multi_reduction <add>, %176, %cst_49 [1] : vector<16x16xf32> to vector<16xf32>
    %178 = vector.shape_cast %177 : vector<16xf32> to vector<16x1xf32>
    %179 = tpu.reciprocal %178 {approx = true} : vector<16x1xf32> -> vector<16x1xf32>
    %180 = vector.broadcast %179 : vector<16x1xf32> to vector<16x16xf32>
    %181 = arith.mulf %176, %180 : vector<16x16xf32>
    %cst_50 = arith.constant dense<0.000000e+00> : vector<16x8xf32>
    %182 = tpu.matmul %181, %168, %cst_50 {dimension_numbers = #tpu.dot_dimension_numbers<[1], [0], [0], [1], [0, 0, 1, 1], [], []>} : vector<16x16xf32>, vector<16x8xf32>, vector<16x8xf32> -> vector<16x8xf32>
    %183 = tpu.concatenate %131, %148, %165, %182 in 1 : vector<16x8xf32>, vector<16x8xf32>, vector<16x8xf32>, vector<16x8xf32> -> vector<16x32xf32>
    %c0_51 = arith.constant 0 : index
    %c0_52 = arith.constant 0 : index
    %184 = vector.load %arg8[%c0_51, %c0_52] : memref<32x32xf32, #tpu.memory_space<vmem>>, vector<32x32xf32>
    %cst_53 = arith.constant dense<0.000000e+00> : vector<16x32xf32>
    %185 = tpu.matmul %183, %184, %cst_53 {dimension_numbers = #tpu.dot_dimension_numbers<[1], [0], [0], [1], [0, 0, 1, 1], [], []>} : vector<16x32xf32>, vector<32x32xf32>, vector<16x32xf32> -> vector<16x32xf32>
    %c0_54 = arith.constant 0 : index
    %c0_55 = arith.constant 0 : index
    %c0_56 = arith.constant 0 : index
    %186 = vector.load %arg9[%c0_54, %c0_55, %c0_56] : memref<1x16x32xf32, #tpu.memory_space<vmem>>, vector<1x16x32xf32>
    %187 = vector.shape_cast %186 : vector<1x16x32xf32> to vector<16x32xf32>
    %188 = vector.shape_cast %185 : vector<16x32xf32> to vector<1x16x32xf32>
    tpu.vector_store %arg9[%c0_54, %c0_55, %c0_56], %188 {strides = array<i32>} : memref<1x16x32xf32, #tpu.memory_space<vmem>>, vector<1x16x32xf32>,
    return
  }
  func.func @transform_0(%arg0: i32) -> (i32, i32, i32, i32, i32) {
    %c0_i32 = arith.constant 0 : i32
    %c0_i32_0 = arith.constant 0 : i32
    %c0_i32_1 = arith.constant 0 : i32
    %c0_i32_2 = arith.constant 0 : i32
    %c0_i32_3 = arith.constant 0 : i32
    return %arg0, %c0_i32, %c0_i32_0, %c0_i32_1, %c0_i32_2 : i32, i32, i32, i32, i32
  }
  func.func @transform_1(%arg0: i32) -> (i32, i32, i32, i32, i32) {
    %c0_i32 = arith.constant 0 : i32
    %c0_i32_0 = arith.constant 0 : i32
    %c0_i32_1 = arith.constant 0 : i32
    %c0_i32_2 = arith.constant 0 : i32
    %c0_i32_3 = arith.constant 0 : i32
    return %arg0, %c0_i32, %c0_i32_0, %c0_i32_1, %c0_i32_2 : i32, i32, i32, i32, i32
  }
  func.func @transform_2(%arg0: i32) -> (i32, i32, i32) {
    %c0_i32 = arith.constant 0 : i32
    %c0_i32_0 = arith.constant 0 : i32
    %c0_i32_1 = arith.constant 0 : i32
    %c0_i32_2 = arith.constant 0 : i32
    return %c0_i32, %c0_i32_0, %c0_i32_1 : i32, i32, i32
  }
  func.func @transform_3(%arg0: i32) -> (i32, i32) {
    %c0_i32 = arith.constant 0 : i32
    %c0_i32_0 = arith.constant 0 : i32
    %c0_i32_1 = arith.constant 0 : i32
    return %c0_i32, %c0_i32_0 : i32, i32
  }
  func.func @transform_4(%arg0: i32) -> (i32, i32) {
    %c0_i32 = arith.constant 0 : i32
    %c0_i32_0 = arith.constant 0 : i32
    %c0_i32_1 = arith.constant 0 : i32
    return %c0_i32, %c0_i32_0 : i32, i32
  }
  func.func @transform_5(%arg0: i32) -> (i32, i32) {
    %c0_i32 = arith.constant 0 : i32
    %c0_i32_0 = arith.constant 0 : i32
    %c0_i32_1 = arith.constant 0 : i32
    return %c0_i32, %c0_i32_0 : i32, i32
  }
  func.func @transform_6(%arg0: i32) -> (i32, i32) {
    %c0_i32 = arith.constant 0 : i32
    %c0_i32_0 = arith.constant 0 : i32
    %c0_i32_1 = arith.constant 0 : i32
    return %c0_i32, %c0_i32_0 : i32, i32
  }
  func.func @transform_7(%arg0: i32) -> (i32, i32) {
    %c0_i32 = arith.constant 0 : i32
    %c0_i32_0 = arith.constant 0 : i32
    %c0_i32_1 = arith.constant 0 : i32
    return %c0_i32, %c0_i32_0 : i32, i32
  }
  func.func @transform_8(%arg0: i32) -> (i32, i32, i32) {
    %c0_i32 = arith.constant 0 : i32
    %c0_i32_0 = arith.constant 0 : i32
    %c0_i32_1 = arith.constant 0 : i32
    return %arg0, %c0_i32, %c0_i32_0 : i32, i32, i32
  }
}

module attributes {stable_mosaic.version = 11 : i64} {
  func.func @_conv1x1_relu_kernel(%arg0: i32, %arg1: memref<128x128xf32, #tpu.memory_space<vmem>>, %arg2: memref<128x128xf32, #tpu.memory_space<vmem>>, %arg3: memref<128x128xf32, #tpu.memory_space<vmem>>, %arg4: memref<128x128xf32, #tpu.memory_space<vmem>>, %arg5: memref<128x128xf32, #tpu.memory_space<vmem>>) attributes {dimension_semantics = [#tpu.dimension_semantics<parallel>], iteration_bounds = array<i64: 1>, scalar_prefetch = 0 : i64, scratch_operands = 0 : i64, tpu.core_type = #tpu.core_type<tc>, window_params = [{transform_indices = @transform_0, window_bounds = array<i64: 128, 128>}, {transform_indices = @transform_1, window_bounds = array<i64: 128, 128>}, {pipeline_mode = #tpu.pipeline_mode<synchronous>, transform_indices = @transform_2, window_bounds = array<i64: 128, 128>}, {pipeline_mode = #tpu.pipeline_mode<synchronous>, transform_indices = @transform_3, window_bounds = array<i64: 128, 128>}, {transform_indices = @transform_4, window_bounds = array<i64: 128, 128>}]} {
    %c0 = arith.constant 0 : index
    %c0_0 = arith.constant 0 : index
    %0 = vector.load %arg1[%c0, %c0_0] : memref<128x128xf32, #tpu.memory_space<vmem>>, vector<128x128xf32>
    %c0_1 = arith.constant 0 : index
    %c0_2 = arith.constant 0 : index
    %1 = vector.load %arg3[%c0_1, %c0_2] : memref<128x128xf32, #tpu.memory_space<vmem>>, vector<128x128xf32>
    %cst = arith.constant dense<0.000000e+00> : vector<128x128xf32>
    %2 = tpu.matmul %0, %1, %cst {dimension_numbers = #tpu.dot_dimension_numbers<[1], [0], [0], [1], [0, 0, 1, 1], [], []>} : vector<128x128xf32>, vector<128x128xf32>, vector<128x128xf32> -> vector<128x128xf32>
    %c0_3 = arith.constant 0 : index
    %c0_4 = arith.constant 0 : index
    %3 = vector.load %arg2[%c0_3, %c0_4] : memref<128x128xf32, #tpu.memory_space<vmem>>, vector<128x128xf32>
    %c0_5 = arith.constant 0 : index
    %c0_6 = arith.constant 0 : index
    %4 = vector.load %arg4[%c0_5, %c0_6] : memref<128x128xf32, #tpu.memory_space<vmem>>, vector<128x128xf32>
    %cst_7 = arith.constant dense<0.000000e+00> : vector<128x128xf32>
    %5 = tpu.matmul %3, %4, %cst_7 {dimension_numbers = #tpu.dot_dimension_numbers<[1], [0], [0], [1], [0, 0, 1, 1], [], []>} : vector<128x128xf32>, vector<128x128xf32>, vector<128x128xf32> -> vector<128x128xf32>
    %6 = arith.addf %2, %5 : vector<128x128xf32>
    %cst_8 = arith.constant 0.000000e+00 : f32
    %7 = vector.broadcast %cst_8 : f32 to vector<128x128xf32>
    %8 = arith.maximumf %6, %7 : vector<128x128xf32>
    %c0_9 = arith.constant 0 : index
    %c0_10 = arith.constant 0 : index
    %9 = vector.load %arg5[%c0_9, %c0_10] : memref<128x128xf32, #tpu.memory_space<vmem>>, vector<128x128xf32>
    tpu.vector_store %arg5[%c0_9, %c0_10], %8 {strides = array<i32>} : memref<128x128xf32, #tpu.memory_space<vmem>>, vector<128x128xf32>,
    return
  }
  func.func @transform_0(%arg0: i32) -> (i32, i32) {
    %c0_i32 = arith.constant 0 : i32
    %c0_i32_0 = arith.constant 0 : i32
    return %arg0, %c0_i32 : i32, i32
  }
  func.func @transform_1(%arg0: i32) -> (i32, i32) {
    %c0_i32 = arith.constant 0 : i32
    %c0_i32_0 = arith.constant 0 : i32
    return %arg0, %c0_i32 : i32, i32
  }
  func.func @transform_2(%arg0: i32) -> (i32, i32) {
    %c0_i32 = arith.constant 0 : i32
    %c0_i32_0 = arith.constant 0 : i32
    %c0_i32_1 = arith.constant 0 : i32
    return %c0_i32, %c0_i32_0 : i32, i32
  }
  func.func @transform_3(%arg0: i32) -> (i32, i32) {
    %c0_i32 = arith.constant 0 : i32
    %c0_i32_0 = arith.constant 0 : i32
    %c0_i32_1 = arith.constant 0 : i32
    return %c0_i32, %c0_i32_0 : i32, i32
  }
  func.func @transform_4(%arg0: i32) -> (i32, i32) {
    %c0_i32 = arith.constant 0 : i32
    %c0_i32_0 = arith.constant 0 : i32
    return %arg0, %c0_i32 : i32, i32
  }
}

module attributes {stable_mosaic.version = 11 : i64} {
  func.func @_conv3_ln_res_kernel(%arg0: i32, %arg1: memref<1x18x18x32xf32, #tpu.memory_space<vmem>>, %arg2: memref<9x32x32xf32, #tpu.memory_space<vmem>>, %arg3: memref<1x32xf32, #tpu.memory_space<vmem>>, %arg4: memref<1x32xf32, #tpu.memory_space<vmem>>, %arg5: memref<1x256x32xf32, #tpu.memory_space<vmem>>, %arg6: memref<1x256x32xf32, #tpu.memory_space<vmem>>) attributes {dimension_semantics = [#tpu.dimension_semantics<parallel>], iteration_bounds = array<i64: 2>, scalar_prefetch = 0 : i64, scratch_operands = 0 : i64, tpu.core_type = #tpu.core_type<tc>, window_params = [{transform_indices = @transform_0, window_bounds = array<i64: 1, 18, 18, 32>}, {pipeline_mode = #tpu.pipeline_mode<synchronous>, transform_indices = @transform_1, window_bounds = array<i64: 9, 32, 32>}, {pipeline_mode = #tpu.pipeline_mode<synchronous>, transform_indices = @transform_2, window_bounds = array<i64: 1, 32>}, {pipeline_mode = #tpu.pipeline_mode<synchronous>, transform_indices = @transform_3, window_bounds = array<i64: 1, 32>}, {transform_indices = @transform_4, window_bounds = array<i64: 1, 256, 32>}, {transform_indices = @transform_5, window_bounds = array<i64: 1, 256, 32>}]} {
    %c0 = arith.constant 0 : index
    %c0_0 = arith.constant 0 : index
    %c0_1 = arith.constant 0 : index
    %c0_2 = arith.constant 0 : index
    %0 = vector.load %arg1[%c0, %c0_0, %c0_1, %c0_2] : memref<1x18x18x32xf32, #tpu.memory_space<vmem>>, vector<1x18x18x32xf32>
    %1 = vector.shape_cast %0 : vector<1x18x18x32xf32> to vector<18x18x32xf32>
    %c0_3 = arith.constant 0 : index
    %c0_4 = arith.constant 0 : index
    %c0_5 = arith.constant 0 : index
    %2 = vector.load %arg2[%c0_3, %c0_4, %c0_5] : memref<9x32x32xf32, #tpu.memory_space<vmem>>, vector<9x32x32xf32>
    %cst = arith.constant 0.000000e+00 : f32
    %3 = vector.broadcast %cst : f32 to vector<256x32xf32>
    %4 = vector.extract_strided_slice %1 {offsets = [0, 0, 0], sizes = [16, 16, 32], strides = [1, 1, 1]} : vector<18x18x32xf32> to vector<16x16x32xf32>
    %5 = vector.shape_cast %4 : vector<16x16x32xf32> to vector<256x32xf32>
    %6 = vector.extract_strided_slice %2 {offsets = [0, 0, 0], sizes = [1, 32, 32], strides = [1, 1, 1]} : vector<9x32x32xf32> to vector<1x32x32xf32>
    %7 = vector.shape_cast %6 : vector<1x32x32xf32> to vector<32x32xf32>
    %cst_6 = arith.constant dense<0.000000e+00> : vector<256x32xf32>
    %8 = tpu.matmul %5, %7, %cst_6 {dimension_numbers = #tpu.dot_dimension_numbers<[1], [0], [0], [1], [0, 0, 1, 1], [], []>} : vector<256x32xf32>, vector<32x32xf32>, vector<256x32xf32> -> vector<256x32xf32>
    %9 = arith.addf %3, %8 : vector<256x32xf32>
    %10 = vector.extract_strided_slice %1 {offsets = [0, 1, 0], sizes = [16, 16, 32], strides = [1, 1, 1]} : vector<18x18x32xf32> to vector<16x16x32xf32>
    %11 = vector.shape_cast %10 : vector<16x16x32xf32> to vector<256x32xf32>
    %12 = vector.extract_strided_slice %2 {offsets = [1, 0, 0], sizes = [1, 32, 32], strides = [1, 1, 1]} : vector<9x32x32xf32> to vector<1x32x32xf32>
    %13 = vector.shape_cast %12 : vector<1x32x32xf32> to vector<32x32xf32>
    %cst_7 = arith.constant dense<0.000000e+00> : vector<256x32xf32>
    %14 = tpu.matmul %11, %13, %cst_7 {dimension_numbers = #tpu.dot_dimension_numbers<[1], [0], [0], [1], [0, 0, 1, 1], [], []>} : vector<256x32xf32>, vector<32x32xf32>, vector<256x32xf32> -> vector<256x32xf32>
    %15 = arith.addf %9, %14 : vector<256x32xf32>
    %16 = vector.extract_strided_slice %1 {offsets = [0, 2, 0], sizes = [16, 16, 32], strides = [1, 1, 1]} : vector<18x18x32xf32> to vector<16x16x32xf32>
    %17 = vector.shape_cast %16 : vector<16x16x32xf32> to vector<256x32xf32>
    %18 = vector.extract_strided_slice %2 {offsets = [2, 0, 0], sizes = [1, 32, 32], strides = [1, 1, 1]} : vector<9x32x32xf32> to vector<1x32x32xf32>
    %19 = vector.shape_cast %18 : vector<1x32x32xf32> to vector<32x32xf32>
    %cst_8 = arith.constant dense<0.000000e+00> : vector<256x32xf32>
    %20 = tpu.matmul %17, %19, %cst_8 {dimension_numbers = #tpu.dot_dimension_numbers<[1], [0], [0], [1], [0, 0, 1, 1], [], []>} : vector<256x32xf32>, vector<32x32xf32>, vector<256x32xf32> -> vector<256x32xf32>
    %21 = arith.addf %15, %20 : vector<256x32xf32>
    %22 = vector.extract_strided_slice %1 {offsets = [1, 0, 0], sizes = [16, 16, 32], strides = [1, 1, 1]} : vector<18x18x32xf32> to vector<16x16x32xf32>
    %23 = vector.shape_cast %22 : vector<16x16x32xf32> to vector<256x32xf32>
    %24 = vector.extract_strided_slice %2 {offsets = [3, 0, 0], sizes = [1, 32, 32], strides = [1, 1, 1]} : vector<9x32x32xf32> to vector<1x32x32xf32>
    %25 = vector.shape_cast %24 : vector<1x32x32xf32> to vector<32x32xf32>
    %cst_9 = arith.constant dense<0.000000e+00> : vector<256x32xf32>
    %26 = tpu.matmul %23, %25, %cst_9 {dimension_numbers = #tpu.dot_dimension_numbers<[1], [0], [0], [1], [0, 0, 1, 1], [], []>} : vector<256x32xf32>, vector<32x32xf32>, vector<256x32xf32> -> vector<256x32xf32>
    %27 = arith.addf %21, %26 : vector<256x32xf32>
    %28 = vector.extract_strided_slice %1 {offsets = [1, 1, 0], sizes = [16, 16, 32], strides = [1, 1, 1]} : vector<18x18x32xf32> to vector<16x16x32xf32>
    %29 = vector.shape_cast %28 : vector<16x16x32xf32> to vector<256x32xf32>
    %30 = vector.extract_strided_slice %2 {offsets = [4, 0, 0], sizes = [1, 32, 32], strides = [1, 1, 1]} : vector<9x32x32xf32> to vector<1x32x32xf32>
    %31 = vector.shape_cast %30 : vector<1x32x32xf32> to vector<32x32xf32>
    %cst_10 = arith.constant dense<0.000000e+00> : vector<256x32xf32>
    %32 = tpu.matmul %29, %31, %cst_10 {dimension_numbers = #tpu.dot_dimension_numbers<[1], [0], [0], [1], [0, 0, 1, 1], [], []>} : vector<256x32xf32>, vector<32x32xf32>, vector<256x32xf32> -> vector<256x32xf32>
    %33 = arith.addf %27, %32 : vector<256x32xf32>
    %34 = vector.extract_strided_slice %1 {offsets = [1, 2, 0], sizes = [16, 16, 32], strides = [1, 1, 1]} : vector<18x18x32xf32> to vector<16x16x32xf32>
    %35 = vector.shape_cast %34 : vector<16x16x32xf32> to vector<256x32xf32>
    %36 = vector.extract_strided_slice %2 {offsets = [5, 0, 0], sizes = [1, 32, 32], strides = [1, 1, 1]} : vector<9x32x32xf32> to vector<1x32x32xf32>
    %37 = vector.shape_cast %36 : vector<1x32x32xf32> to vector<32x32xf32>
    %cst_11 = arith.constant dense<0.000000e+00> : vector<256x32xf32>
    %38 = tpu.matmul %35, %37, %cst_11 {dimension_numbers = #tpu.dot_dimension_numbers<[1], [0], [0], [1], [0, 0, 1, 1], [], []>} : vector<256x32xf32>, vector<32x32xf32>, vector<256x32xf32> -> vector<256x32xf32>
    %39 = arith.addf %33, %38 : vector<256x32xf32>
    %40 = vector.extract_strided_slice %1 {offsets = [2, 0, 0], sizes = [16, 16, 32], strides = [1, 1, 1]} : vector<18x18x32xf32> to vector<16x16x32xf32>
    %41 = vector.shape_cast %40 : vector<16x16x32xf32> to vector<256x32xf32>
    %42 = vector.extract_strided_slice %2 {offsets = [6, 0, 0], sizes = [1, 32, 32], strides = [1, 1, 1]} : vector<9x32x32xf32> to vector<1x32x32xf32>
    %43 = vector.shape_cast %42 : vector<1x32x32xf32> to vector<32x32xf32>
    %cst_12 = arith.constant dense<0.000000e+00> : vector<256x32xf32>
    %44 = tpu.matmul %41, %43, %cst_12 {dimension_numbers = #tpu.dot_dimension_numbers<[1], [0], [0], [1], [0, 0, 1, 1], [], []>} : vector<256x32xf32>, vector<32x32xf32>, vector<256x32xf32> -> vector<256x32xf32>
    %45 = arith.addf %39, %44 : vector<256x32xf32>
    %46 = vector.extract_strided_slice %1 {offsets = [2, 1, 0], sizes = [16, 16, 32], strides = [1, 1, 1]} : vector<18x18x32xf32> to vector<16x16x32xf32>
    %47 = vector.shape_cast %46 : vector<16x16x32xf32> to vector<256x32xf32>
    %48 = vector.extract_strided_slice %2 {offsets = [7, 0, 0], sizes = [1, 32, 32], strides = [1, 1, 1]} : vector<9x32x32xf32> to vector<1x32x32xf32>
    %49 = vector.shape_cast %48 : vector<1x32x32xf32> to vector<32x32xf32>
    %cst_13 = arith.constant dense<0.000000e+00> : vector<256x32xf32>
    %50 = tpu.matmul %47, %49, %cst_13 {dimension_numbers = #tpu.dot_dimension_numbers<[1], [0], [0], [1], [0, 0, 1, 1], [], []>} : vector<256x32xf32>, vector<32x32xf32>, vector<256x32xf32> -> vector<256x32xf32>
    %51 = arith.addf %45, %50 : vector<256x32xf32>
    %52 = vector.extract_strided_slice %1 {offsets = [2, 2, 0], sizes = [16, 16, 32], strides = [1, 1, 1]} : vector<18x18x32xf32> to vector<16x16x32xf32>
    %53 = vector.shape_cast %52 : vector<16x16x32xf32> to vector<256x32xf32>
    %54 = vector.extract_strided_slice %2 {offsets = [8, 0, 0], sizes = [1, 32, 32], strides = [1, 1, 1]} : vector<9x32x32xf32> to vector<1x32x32xf32>
    %55 = vector.shape_cast %54 : vector<1x32x32xf32> to vector<32x32xf32>
    %cst_14 = arith.constant dense<0.000000e+00> : vector<256x32xf32>
    %56 = tpu.matmul %53, %55, %cst_14 {dimension_numbers = #tpu.dot_dimension_numbers<[1], [0], [0], [1], [0, 0, 1, 1], [], []>} : vector<256x32xf32>, vector<32x32xf32>, vector<256x32xf32> -> vector<256x32xf32>
    %57 = arith.addf %51, %56 : vector<256x32xf32>
    %c0_15 = arith.constant 0 : index
    %c0_16 = arith.constant 0 : index
    %58 = vector.load %arg3[%c0_15, %c0_16] : memref<1x32xf32, #tpu.memory_space<vmem>>, vector<1x32xf32>
    %c0_17 = arith.constant 0 : index
    %c0_18 = arith.constant 0 : index
    %59 = vector.load %arg4[%c0_17, %c0_18] : memref<1x32xf32, #tpu.memory_space<vmem>>, vector<1x32xf32>
    %cst_19 = arith.constant dense<0.000000e+00> : vector<256xf32>
    %60 = vector.multi_reduction <add>, %57, %cst_19 [1] : vector<256x32xf32> to vector<256xf32>
    %61 = vector.shape_cast %60 : vector<256xf32> to vector<256x1xf32>
    %cst_20 = arith.constant 3.200000e+01 : f32
    %62 = vector.broadcast %cst_20 : f32 to vector<256x1xf32>
    %63 = arith.divf %61, %62 : vector<256x1xf32>
    %64 = vector.broadcast %63 : vector<256x1xf32> to vector<256x32xf32>
    %65 = arith.subf %57, %64 : vector<256x32xf32>
    %66 = arith.mulf %65, %65 : vector<256x32xf32>
    %cst_21 = arith.constant dense<0.000000e+00> : vector<256xf32>
    %67 = vector.multi_reduction <add>, %66, %cst_21 [1] : vector<256x32xf32> to vector<256xf32>
    %68 = vector.shape_cast %67 : vector<256xf32> to vector<256x1xf32>
    %cst_22 = arith.constant 3.200000e+01 : f32
    %69 = vector.broadcast %cst_22 : f32 to vector<256x1xf32>
    %70 = arith.divf %68, %69 : vector<256x1xf32>
    %71 = vector.broadcast %63 : vector<256x1xf32> to vector<256x32xf32>
    %72 = arith.subf %57, %71 : vector<256x32xf32>
    %cst_23 = arith.constant 9.99999974E-6 : f32
    %73 = vector.broadcast %cst_23 : f32 to vector<256x1xf32>
    %74 = arith.addf %70, %73 : vector<256x1xf32>
    %75 = math.rsqrt %74 : vector<256x1xf32>
    %76 = vector.broadcast %75 : vector<256x1xf32> to vector<256x32xf32>
    %77 = arith.mulf %72, %76 : vector<256x32xf32>
    %78 = vector.broadcast %58 : vector<1x32xf32> to vector<256x32xf32>
    %79 = arith.mulf %77, %78 : vector<256x32xf32>
    %80 = vector.broadcast %59 : vector<1x32xf32> to vector<256x32xf32>
    %81 = arith.addf %79, %80 : vector<256x32xf32>
    %c0_24 = arith.constant 0 : index
    %c0_25 = arith.constant 0 : index
    %c0_26 = arith.constant 0 : index
    %82 = vector.load %arg5[%c0_24, %c0_25, %c0_26] : memref<1x256x32xf32, #tpu.memory_space<vmem>>, vector<1x256x32xf32>
    %83 = vector.shape_cast %82 : vector<1x256x32xf32> to vector<256x32xf32>
    %84 = arith.addf %83, %81 : vector<256x32xf32>
    %c0_27 = arith.constant 0 : index
    %c0_28 = arith.constant 0 : index
    %c0_29 = arith.constant 0 : index
    %85 = vector.load %arg6[%c0_27, %c0_28, %c0_29] : memref<1x256x32xf32, #tpu.memory_space<vmem>>, vector<1x256x32xf32>
    %86 = vector.shape_cast %85 : vector<1x256x32xf32> to vector<256x32xf32>
    %87 = vector.shape_cast %84 : vector<256x32xf32> to vector<1x256x32xf32>
    tpu.vector_store %arg6[%c0_27, %c0_28, %c0_29], %87 {strides = array<i32>} : memref<1x256x32xf32, #tpu.memory_space<vmem>>, vector<1x256x32xf32>,
    return
  }
  func.func @transform_0(%arg0: i32) -> (i32, i32, i32, i32) {
    %c0_i32 = arith.constant 0 : i32
    %c0_i32_0 = arith.constant 0 : i32
    %c0_i32_1 = arith.constant 0 : i32
    %c0_i32_2 = arith.constant 0 : i32
    return %arg0, %c0_i32, %c0_i32_0, %c0_i32_1 : i32, i32, i32, i32
  }
  func.func @transform_1(%arg0: i32) -> (i32, i32, i32) {
    %c0_i32 = arith.constant 0 : i32
    %c0_i32_0 = arith.constant 0 : i32
    %c0_i32_1 = arith.constant 0 : i32
    %c0_i32_2 = arith.constant 0 : i32
    return %c0_i32, %c0_i32_0, %c0_i32_1 : i32, i32, i32
  }
  func.func @transform_2(%arg0: i32) -> (i32, i32) {
    %c0_i32 = arith.constant 0 : i32
    %c0_i32_0 = arith.constant 0 : i32
    %c0_i32_1 = arith.constant 0 : i32
    return %c0_i32, %c0_i32_0 : i32, i32
  }
  func.func @transform_3(%arg0: i32) -> (i32, i32) {
    %c0_i32 = arith.constant 0 : i32
    %c0_i32_0 = arith.constant 0 : i32
    %c0_i32_1 = arith.constant 0 : i32
    return %c0_i32, %c0_i32_0 : i32, i32
  }
  func.func @transform_4(%arg0: i32) -> (i32, i32, i32) {
    %c0_i32 = arith.constant 0 : i32
    %c0_i32_0 = arith.constant 0 : i32
    %c0_i32_1 = arith.constant 0 : i32
    return %arg0, %c0_i32, %c0_i32_0 : i32, i32, i32
  }
  func.func @transform_5(%arg0: i32) -> (i32, i32, i32) {
    %c0_i32 = arith.constant 0 : i32
    %c0_i32_0 = arith.constant 0 : i32
    %c0_i32_1 = arith.constant 0 : i32
    return %arg0, %c0_i32, %c0_i32_0 : i32, i32, i32
  }
}

</mosaic_0001>

<llo_original>
// kernel: ag_rope_encoder_layer_forward.3
$region0: #{ag_rope_encoder_layer_forward.3}
  #allocation0 [shape = 'u32[]', space=smem, size = 0x4, offset = 0x4, fixed_abs, tag = 'smem constant byte address 0x4 - core index']
  #allocation1 [shape = 'u32[144,128]{1,0:T(1,128)}', space=vmem, size = 0x12000, scoped, tag = 'internal scratch']
  %s0 = inlined_call_operand.vmem [shape: f32[2,4,4,4,128], index: 0, kind: input, shape index: {}]
  %s1 = inlined_call_operand.vmem [shape: f32[2,4,4,4,128], index: 1, kind: input, shape index: {}]
  %s2 = inlined_call_operand.vmem [shape: f32[4,1,128], index: 2, kind: input, shape index: {}]
  %s3 = inlined_call_operand.vmem [shape: f32[1,32], index: 3, kind: input, shape index: {}]
  %s4 = inlined_call_operand.vmem [shape: f32[1,32], index: 4, kind: input, shape index: {}]
  %s5 = inlined_call_operand.vmem [shape: f32[32,32], index: 5, kind: input, shape index: {}]
  %s6 = inlined_call_operand.vmem [shape: f32[32,64], index: 6, kind: input, shape index: {}]
  %s7 = inlined_call_operand.vmem [shape: f32[32,32], index: 7, kind: input, shape index: {}]
  %s8 = inlined_call_operand.vmem [shape: f32[2,16,32], index: 8, kind: output, shape index: {}]
  %s9 = sld [smem:[#allocation0]]
  $region65: #{ag_rope_encoder_layer_forward.3} parent=0
    _
  %s11 = ssub.s32 1, %s9
  %s12 = scalar_select 0, %s11, %s9
  loop: start=0, step=1, limit=4
  $region2: #{ag_rope_encoder_layer_forward.3} parent=0 // loop_pre_header
    _
  $region3: #{ag_rope_encoder_layer_forward.3} parent=0 // loop_header
    %s14 = sphi 0, %s18
    %p15 = scmp.ge.s32.totalorder %s14, 4
    %s24 = sphi 0, %s26
    %s27 = sphi 0, %s24
    %s28 = sphi 0, %s27
    %s44 = sphi 0, %s28
    %s50 = sphi 0, %s52
    %s53 = sphi 0, %s50
    %s54 = sphi 0, %s53
    %s70 = sphi 0, %s54
    %s74 = sphi 0, %s74
    %s76 = sphi 0, %s74
    %s77 = sphi 0, %s76
    %s91 = sphi 0, %s77
    %s95 = sphi 0, %s95
    %s97 = sphi 0, %s95
    %s98 = sphi 0, %s97
    %s112 = sphi 0, %s98
    %s116 = sphi 0, %s116
    %s118 = sphi 0, %s116
    %s119 = sphi 0, %s118
    %s133 = sphi 0, %s119
    %s137 = sphi 0, %s137
    %s139 = sphi 0, %s137
    %s140 = sphi 0, %s139
    %s154 = sphi 0, %s140
    %s158 = sphi 0, %s158
    %s160 = sphi 0, %s158
    %s161 = sphi 0, %s160
    %s175 = sphi 0, %s161
    %s179 = sphi 0, %s179
    %s181 = sphi 0, %s179
    %s182 = sphi 0, %s181
    %s196 = sphi 0, %s182
    %s202 = sphi 0, %s204
    %s205 = sphi 0, %s202
    %s206 = sphi 0, %s205
    %s222 = sphi 0, %s206
  $region4: #{ag_rope_encoder_layer_forward.3} parent=0 // loop_header_branch
    %17 = sbr.rel (%p15) target = $region8
  $region5: #{ag_rope_encoder_layer_forward.3} parent=0 // loop_body
    %s19 = ssub.s32 %s14, 1
    %s20 = ssub.s32 %s14, 2
    %s21 = sadd.s32 %s14, 1
    %s22 = ssub.s32 %s14, %s21
    %p23 = scmp.eq.s32.totalorder %s22, 0
    %s25 = sadd.s32 %s24, 1
    %s26 = scalar_select %p23, %s24, %s25
    %p29 = pneg %p23
    %p30 = scmp.eq.s32.totalorder %s14, 1
    %p31 = por %p29, %p30
    %p32 = scmp.ne.s32.totalorder %s24, %s27
    %p33 = scmp.eq.s32.totalorder %s14, 0
    %p34 = por %p32, %p33
    %p35 = scmp.ne.s32.totalorder %s24, %s27
    %p36 = scmp.eq.s32.totalorder %s19, 1
    %p37 = por %p35, %p36
    %p38 = scmp.ne.s32.totalorder %s27, %s28
    %p39 = scmp.eq.s32.totalorder %s19, 0
    %p40 = por %p38, %p39
    %p41 = scmp.ne.s32.totalorder %s27, %s28
    %p42 = scmp.eq.s32.totalorder %s20, 1
    %p43 = por %p41, %p42
    %p45 = scmp.ne.s32.totalorder %s28, %s44
    %p46 = scmp.eq.s32.totalorder %s20, 0
    %p47 = por %p45, %p46
    %s48 = ssub.s32 %s14, %s21
    %p49 = scmp.eq.s32.totalorder %s48, 0
    %s51 = sadd.s32 %s50, 1
    %s52 = scalar_select %p49, %s50, %s51
    %p55 = pneg %p49
    %p56 = scmp.eq.s32.totalorder %s14, 1
    %p57 = por %p55, %p56
    %p58 = scmp.ne.s32.totalorder %s50, %s53
    %p59 = scmp.eq.s32.totalorder %s14, 0
    %p60 = por %p58, %p59
    %p61 = scmp.ne.s32.totalorder %s50, %s53
    %p62 = scmp.eq.s32.totalorder %s19, 1
    %p63 = por %p61, %p62
    %p64 = scmp.ne.s32.totalorder %s53, %s54
    %p65 = scmp.eq.s32.totalorder %s19, 0
    %p66 = por %p64, %p65
    %p67 = scmp.ne.s32.totalorder %s53, %s54
    %p68 = scmp.eq.s32.totalorder %s20, 1
    %p69 = por %p67, %p68
    %p71 = scmp.ne.s32.totalorder %s54, %s70
    %p72 = scmp.eq.s32.totalorder %s20, 0
    %p73 = por %p71, %p72
    %s75 = sadd.s32 %s74, 1
    %p78 = scmp.eq.s32.totalorder %s14, 1
    %p79 = scmp.ne.s32.totalorder %s74, %s76
    %p80 = scmp.eq.s32.totalorder %s14, 0
    %p81 = por %p79, %p80
    %p82 = scmp.ne.s32.totalorder %s74, %s76
    %p83 = scmp.eq.s32.totalorder %s19, 1
    %p84 = por %p82, %p83
    %p85 = scmp.ne.s32.totalorder %s76, %s77
    %p86 = scmp.eq.s32.totalorder %s19, 0
    %p87 = por %p85, %p86
    %p88 = scmp.ne.s32.totalorder %s76, %s77
    %p89 = scmp.eq.s32.totalorder %s20, 1
    %p90 = por %p88, %p89
    %p92 = scmp.ne.s32.totalorder %s77, %s91
    %p93 = scmp.eq.s32.totalorder %s20, 0
    %p94 = por %p92, %p93
    %s96 = sadd.s32 %s95, 1
    %p99 = scmp.eq.s32.totalorder %s14, 1
    %p100 = scmp.ne.s32.totalorder %s95, %s97
    %p101 = scmp.eq.s32.totalorder %s14, 0
    %p102 = por %p100, %p101
    %p103 = scmp.ne.s32.totalorder %s95, %s97
    %p104 = scmp.eq.s32.totalorder %s19, 1
    %p105 = por %p103, %p104
    %p106 = scmp.ne.s32.totalorder %s97, %s98
    %p107 = scmp.eq.s32.totalorder %s19, 0
    %p108 = por %p106, %p107
    %p109 = scmp.ne.s32.totalorder %s97, %s98
    %p110 = scmp.eq.s32.totalorder %s20, 1
    %p111 = por %p109, %p110
    %p113 = scmp.ne.s32.totalorder %s98, %s112
    %p114 = scmp.eq.s32.totalorder %s20, 0
    %p115 = por %p113, %p114
    %s117 = sadd.s32 %s116, 1
    %p120 = scmp.eq.s32.totalorder %s14, 1
    %p121 = scmp.ne.s32.totalorder %s116, %s118
    %p122 = scmp.eq.s32.totalorder %s14, 0
    %p123 = por %p121, %p122
    %p124 = scmp.ne.s32.totalorder %s116, %s118
    %p125 = scmp.eq.s32.totalorder %s19, 1
    %p126 = por %p124, %p125
    %p127 = scmp.ne.s32.totalorder %s118, %s119
    %p128 = scmp.eq.s32.totalorder %s19, 0
    %p129 = por %p127, %p128
    %p130 = scmp.ne.s32.totalorder %s118, %s119
    %p131 = scmp.eq.s32.totalorder %s20, 1
    %p132 = por %p130, %p131
    %p134 = scmp.ne.s32.totalorder %s119, %s133
    %p135 = scmp.eq.s32.totalorder %s20, 0
    %p136 = por %p134, %p135
    %s138 = sadd.s32 %s137, 1
    %p141 = scmp.eq.s32.totalorder %s14, 1
    %p142 = scmp.ne.s32.totalorder %s137, %s139
    %p143 = scmp.eq.s32.totalorder %s14, 0
    %p144 = por %p142, %p143
    %p145 = scmp.ne.s32.totalorder %s137, %s139
    %p146 = scmp.eq.s32.totalorder %s19, 1
    %p147 = por %p145, %p146
    %p148 = scmp.ne.s32.totalorder %s139, %s140
    %p149 = scmp.eq.s32.totalorder %s19, 0
    %p150 = por %p148, %p149
    %p151 = scmp.ne.s32.totalorder %s139, %s140
    %p152 = scmp.eq.s32.totalorder %s20, 1
    %p153 = por %p151, %p152
    %p155 = scmp.ne.s32.totalorder %s140, %s154
    %p156 = scmp.eq.s32.totalorder %s20, 0
    %p157 = por %p155, %p156
    %s159 = sadd.s32 %s158, 1
    %p162 = scmp.eq.s32.totalorder %s14, 1
    %p163 = scmp.ne.s32.totalorder %s158, %s160
    %p164 = scmp.eq.s32.totalorder %s14, 0
    %p165 = por %p163, %p164
    %p166 = scmp.ne.s32.totalorder %s158, %s160
    %p167 = scmp.eq.s32.totalorder %s19, 1
    %p168 = por %p166, %p167
    %p169 = scmp.ne.s32.totalorder %s160, %s161
    %p170 = scmp.eq.s32.totalorder %s19, 0
    %p171 = por %p169, %p170
    %p172 = scmp.ne.s32.totalorder %s160, %s161
    %p173 = scmp.eq.s32.totalorder %s20, 1
    %p174 = por %p172, %p173
    %p176 = scmp.ne.s32.totalorder %s161, %s175
    %p177 = scmp.eq.s32.totalorder %s20, 0
    %p178 = por %p176, %p177
    %s180 = sadd.s32 %s179, 1
    %p183 = scmp.eq.s32.totalorder %s14, 1
    %p184 = scmp.ne.s32.totalorder %s179, %s181
    %p185 = scmp.eq.s32.totalorder %s14, 0
    %p186 = por %p184, %p185
    %p187 = scmp.ne.s32.totalorder %s179, %s181
    %p188 = scmp.eq.s32.totalorder %s19, 1
    %p189 = por %p187, %p188
    %p190 = scmp.ne.s32.totalorder %s181, %s182
    %p191 = scmp.eq.s32.totalorder %s19, 0
    %p192 = por %p190, %p191
    %p193 = scmp.ne.s32.totalorder %s181, %s182
    %p194 = scmp.eq.s32.totalorder %s20, 1
    %p195 = por %p193, %p194
    %p197 = scmp.ne.s32.totalorder %s182, %s196
    %p198 = scmp.eq.s32.totalorder %s20, 0
    %p199 = por %p197, %p198
    %s200 = ssub.s32 %s14, %s21
    %p201 = scmp.eq.s32.totalorder %s200, 0
    %s203 = sadd.s32 %s202, 1
    %s204 = scalar_select %p201, %s202, %s203
    %p207 = pneg %p201
    %p208 = scmp.eq.s32.totalorder %s14, 1
    %p209 = por %p207, %p208
    %p210 = scmp.ne.s32.totalorder %s202, %s205
    %p211 = scmp.eq.s32.totalorder %s14, 0
    %p212 = por %p210, %p211
    %p213 = scmp.ne.s32.totalorder %s202, %s205
    %p214 = scmp.eq.s32.totalorder %s19, 1
    %p215 = por %p213, %p214
    %p216 = scmp.ne.s32.totalorder %s205, %s206
    %p217 = scmp.eq.s32.totalorder %s19, 0
    %p218 = por %p216, %p217
    %p219 = scmp.ne.s32.totalorder %s205, %s206
    %p220 = scmp.eq.s32.totalorder %s20, 1
    %p221 = por %p219, %p220
    %p223 = scmp.ne.s32.totalorder %s206, %s222
    %p224 = scmp.eq.s32.totalorder %s20, 0
    %p225 = por %p223, %p224
    %p226 = scmp.le.s32.totalorder 1, %s14
    %p227 = scmp.lt.s32.totalorder %s14, 3
    %p228 = pnand %p226, %p227
    %p229 = pneg %p228
    // Predicated region
    $region9: #{ag_rope_encoder_layer_forward.3} parent=5 // pred_check
      _
    $region10: #{ag_rope_encoder_layer_forward.3} parent=5 // pred_check_branch
      %231 = sbr.rel (%p228) target = $region12
    $region11: #{ag_rope_encoder_layer_forward.3} parent=5 // pred_region
      %s232 = ssub.s32 %s14, 1
      // Predicated region
      $region13: #{ag_rope_encoder_layer_forward.3} parent=11 // pred_check
        %p233 = pneg %p87
      $region14: #{ag_rope_encoder_layer_forward.3} parent=11 // pred_check_branch
        %235 = sbr.rel (%p233) target = $region16
      $region15: #{ag_rope_encoder_layer_forward.3} parent=11 // pred_region
        _
      $region16: #{ag_rope_encoder_layer_forward.3} parent=11 // pred_fallthru
        _
      // Predicated region
      $region17: #{ag_rope_encoder_layer_forward.3} parent=11 // pred_check
        %p236 = pneg %p108
      $region18: #{ag_rope_encoder_layer_forward.3} parent=11 // pred_check_branch
        %238 = sbr.rel (%p236) target = $region20
      $region19: #{ag_rope_encoder_layer_forward.3} parent=11 // pred_region
        _
      $region20: #{ag_rope_encoder_layer_forward.3} parent=11 // pred_fallthru
        _
      // Predicated region
      $region21: #{ag_rope_encoder_layer_forward.3} parent=11 // pred_check
        %p239 = pneg %p129
      $region22: #{ag_rope_encoder_layer_forward.3} parent=11 // pred_check_branch
        %241 = sbr.rel (%p239) target = $region24
      $region23: #{ag_rope_encoder_layer_forward.3} parent=11 // pred_region
        _
      $region24: #{ag_rope_encoder_layer_forward.3} parent=11 // pred_fallthru
        _
      // Predicated region
      $region25: #{ag_rope_encoder_layer_forward.3} parent=11 // pred_check
        %p242 = pneg %p150
      $region26: #{ag_rope_encoder_layer_forward.3} parent=11 // pred_check_branch
        %244 = sbr.rel (%p242) target = $region28
      $region27: #{ag_rope_encoder_layer_forward.3} parent=11 // pred_region
        _
      $region28: #{ag_rope_encoder_layer_forward.3} parent=11 // pred_fallthru
        _
      // Predicated region
      $region29: #{ag_rope_encoder_layer_forward.3} parent=11 // pred_check
        %p245 = pneg %p171
      $region30: #{ag_rope_encoder_layer_forward.3} parent=11 // pred_check_branch
        %247 = sbr.rel (%p245) target = $region32
      $region31: #{ag_rope_encoder_layer_forward.3} parent=11 // pred_region
        _
      $region32: #{ag_rope_encoder_layer_forward.3} parent=11 // pred_fallthru
        _
      // Predicated region
      $region33: #{ag_rope_encoder_layer_forward.3} parent=11 // pred_check
        %p248 = pneg %p192
      $region34: #{ag_rope_encoder_layer_forward.3} parent=11 // pred_check_branch
        %250 = sbr.rel (%p248) target = $region36
      $region35: #{ag_rope_encoder_layer_forward.3} parent=11 // pred_region
        _
      $region36: #{ag_rope_encoder_layer_forward.3} parent=11 // pred_fallthru
        _
    $region12: #{ag_rope_encoder_layer_forward.3} parent=5 // pred_fallthru
      _
    %p251 = scmp.lt.s32.totalorder %s14, 2
    // Predicated region
    $region37: #{ag_rope_encoder_layer_forward.3} parent=5 // pred_check
      %p252 = pneg %p251
    $region38: #{ag_rope_encoder_layer_forward.3} parent=5 // pred_check_branch
      %254 = sbr.rel (%p252) target = $region40
    $region39: #{ag_rope_encoder_layer_forward.3} parent=5 // pred_region
      // Predicated region
      $region41: #{ag_rope_encoder_layer_forward.3} parent=39 // pred_check
        %p255 = pneg %p34
      $region42: #{ag_rope_encoder_layer_forward.3} parent=39 // pred_check_branch
        %257 = sbr.rel (%p255) target = $region44
      $region43: #{ag_rope_encoder_layer_forward.3} parent=39 // pred_region
        %p258 = scmp.lt.s32.totalorder %s14, 1
        %s259 = scalar_select %p258, %s14, 1
        %s260 = smul.addr %s259, 16
        %s261 = smul.addr %s260, 4
        %s262 = scalar_lea.vmem %s0, %s261
      $region44: #{ag_rope_encoder_layer_forward.3} parent=39 // pred_fallthru
        _
      // Predicated region
      $region45: #{ag_rope_encoder_layer_forward.3} parent=39 // pred_check
        %p263 = pneg %p60
      $region46: #{ag_rope_encoder_layer_forward.3} parent=39 // pred_check_branch
        %265 = sbr.rel (%p263) target = $region48
      $region47: #{ag_rope_encoder_layer_forward.3} parent=39 // pred_region
        %p266 = scmp.lt.s32.totalorder %s14, 1
        %s267 = scalar_select %p266, %s14, 1
        %s268 = smul.addr %s267, 16
        %s269 = smul.addr %s268, 4
        %s270 = scalar_lea.vmem %s1, %s269
      $region48: #{ag_rope_encoder_layer_forward.3} parent=39 // pred_fallthru
        _
    $region40: #{ag_rope_encoder_layer_forward.3} parent=5 // pred_fallthru
      _
    %p271 = scmp.le.s32.totalorder 1, %s14
    %p272 = scmp.lt.s32.totalorder %s14, 3
    %p273 = pnand %p271, %p272
    %p274 = pneg %p273
    // Predicated region
    $region49: #{ag_rope_encoder_layer_forward.3} parent=5 // pred_check
      _
    $region50: #{ag_rope_encoder_layer_forward.3} parent=5 // pred_check_branch
      %276 = sbr.rel (%p273) target = $region52
    $region51: #{ag_rope_encoder_layer_forward.3} parent=5 // pred_region
      %s277 = ssub.s32 %s14, 1
      %p278 = scmp.lt.s32.totalorder %s19, 1
      %s279 = scalar_select %p278, %s19, 1
      %s280 = smul.addr %s279, 16
      %s281 = smul.addr %s280, 4
      %s282 = scalar_lea.vmem %s0, %s281
      %p283 = pneg %p40
      %p284 = pneg %p37
      %p285 = scmp.lt.s32.totalorder %s19, 1
      %s286 = scalar_select %p285, %s19, 1
      %s287 = smul.addr %s286, 16
      %s288 = smul.addr %s287, 4
      %s289 = scalar_lea.vmem %s1, %s288
      %p290 = pneg %p66
      %p291 = pneg %p63
      %p292 = pneg %p87
      %p293 = pneg %p84
      %p294 = pneg %p108
      %p295 = pneg %p105
      %p296 = pneg %p129
      %p297 = pneg %p126
      %p298 = pneg %p150
      %p299 = pneg %p147
      %p300 = pneg %p171
      %p301 = pneg %p168
      %p302 = pneg %p192
      %p303 = pneg %p189
      %p304 = pneg %p218
      %p305 = pneg %p215
      %p306 = scmp.lt.s32.totalorder %s19, 1
      %s307 = scalar_select %p306, %s19, 1
      %s308 = smul.addr %s307, 2
      %s309 = smul.addr %s308, 8
      %s310 = scalar_lea.vmem %s8, %s309
      %p311 = scmp.lt.s32.totalorder %s19, 1
      %s312 = scalar_select %p311, %s19, 1
      %s313 = smul.addr %s312, 16
      %s314 = smul.addr %s313, 4
      %s315 = scalar_lea.vmem %s0, %s314
      %p316 = scmp.lt.s32.totalorder %s19, 1
      %s317 = scalar_select %p316, %s19, 1
      %s318 = smul.addr %s317, 16
      %s319 = smul.addr %s318, 4
      %s320 = scalar_lea.vmem %s1, %s319
      %p321 = scmp.lt.s32.totalorder %s19, 1
      %s322 = scalar_select %p321, %s19, 1
      %s323 = smul.addr %s322, 2
      %s324 = smul.addr %s323, 8
      %s325 = scalar_lea.vmem %s8, %s324
      %v326 = vld [vmem:[%s3] sm:$0x1]
      %v327 = vld [vmem:[%s4] sm:$0x1]
      %v328 = vld [vmem:[%s315] sm:$0xf]
      %v329 = vld [vmem:[%s315 + $0x4] sm:$0xf]
      %v330 = vld [vmem:[%s315 + $0x8] sm:$0xf]
      %v331 = vld [vmem:[%s315 + $0xc] sm:$0xf]
      %v332 = vld [vmem:[%s315 + $0x10] sm:$0xf]
      %v333 = vld [vmem:[%s315 + $0x14] sm:$0xf]
      %v334 = vld [vmem:[%s315 + $0x18] sm:$0xf]
      %v335 = vld [vmem:[%s315 + $0x1c] sm:$0xf]
      %v336 = vld [vmem:[%s315 + $0x20] sm:$0xf]
      %v337 = vld [vmem:[%s315 + $0x24] sm:$0xf]
      %v338 = vld [vmem:[%s315 + $0x28] sm:$0xf]
      %v339 = vld [vmem:[%s315 + $0x2c] sm:$0xf]
      %v340 = vld [vmem:[%s315 + $0x30] sm:$0xf]
      %v341 = vld [vmem:[%s315 + $0x34] sm:$0xf]
      %v342 = vld [vmem:[%s315 + $0x38] sm:$0xf]
      %v343 = vld [vmem:[%s315 + $0x3c] sm:$0xf]
      %v344 = vld [vmem:[%s2] sm:$0x1]
      %v345 = vld [vmem:[%s2 + $0x1] sm:$0x1]
      %v346 = vld [vmem:[%s2 + $0x2] sm:$0x1]
      %v347 = vld [vmem:[%s2 + $0x3] sm:$0x1]
      %v349 = vlaneseq
      %v350 = vshrl.u32 %v349, 7
      %v351 = vsub.s32 0, %v350
      %v352 = vrot.slane %v344, %v351
      %v354 = vmul.f32 %v328, %v352
      %v355 = vmul.f32 %v332, %v352
      %v356 = vmul.f32 %v336, %v352
      %v357 = vmul.f32 %v340, %v352
      %v359 = vlaneseq
      %v360 = vshrl.u32 %v359, 7
      %v361 = vsub.s32 0, %v360
      %v362 = vrot.slane %v345, %v361
      %v364 = vmul.f32 %v329, %v362
      %v365 = vmul.f32 %v333, %v362
      %v366 = vmul.f32 %v337, %v362
      %v367 = vmul.f32 %v341, %v362
      %v368 = vadd.f32 %v354, %v364
      %v369 = vadd.f32 %v355, %v365
      %v370 = vadd.f32 %v356, %v366
      %v371 = vadd.f32 %v357, %v367
      %v373 = vlaneseq
      %v374 = vshrl.u32 %v373, 7
      %v375 = vsub.s32 0, %v374
      %v376 = vrot.slane %v346, %v375
      %v378 = vmul.f32 %v330, %v376
      %v379 = vmul.f32 %v334, %v376
      %v380 = vmul.f32 %v338, %v376
      %v381 = vmul.f32 %v342, %v376
      %v382 = vadd.f32 %v368, %v378
      %v383 = vadd.f32 %v369, %v379
      %v384 = vadd.f32 %v370, %v380
      %v385 = vadd.f32 %v371, %v381
      %v387 = vlaneseq
      %v388 = vshrl.u32 %v387, 7
      %v389 = vsub.s32 0, %v388
      %v390 = vrot.slane %v347, %v389
      %v392 = vmul.f32 %v331, %v390
      %v393 = vmul.f32 %v335, %v390
      %v394 = vmul.f32 %v339, %v390
      %v395 = vmul.f32 %v343, %v390
      %v396 = vadd.f32 %v382, %v392
      %v397 = vadd.f32 %v383, %v393
      %v398 = vadd.f32 %v384, %v394
      %v399 = vadd.f32 %v385, %v395
      %404 = vrot.lane.b32.xlu0 %v396, 96
      %v405 = vpop.permute.xlu0 %404
      %406 = vrot.lane.b32.xlu0 %v397, 96
      %v407 = vpop.permute.xlu0 %406
      %408 = vrot.lane.b32.xlu0 %v398, 96
      %v409 = vpop.permute.xlu0 %408
      %410 = vrot.lane.b32.xlu0 %v399, 96
      %v411 = vpop.permute.xlu0 %410
      %v416 = vadd.f32 %v396, %v405
      %v417 = vadd.f32 %v397, %v407
      %v418 = vadd.f32 %v398, %v409
      %v419 = vadd.f32 %v399, %v411
      %420 = vrot.lane.b32.xlu0 %v396, 64
      %v421 = vpop.permute.xlu0 %420
      %422 = vrot.lane.b32.xlu0 %v397, 64
      %v423 = vpop.permute.xlu0 %422
      %424 = vrot.lane.b32.xlu0 %v398, 64
      %v425 = vpop.permute.xlu0 %424
      %426 = vrot.lane.b32.xlu0 %v399, 64
      %v427 = vpop.permute.xlu0 %426
      %v432 = vadd.f32 %v416, %v421
      %v433 = vadd.f32 %v417, %v423
      %v434 = vadd.f32 %v418, %v425
      %v435 = vadd.f32 %v419, %v427
      %436 = vrot.lane.b32.xlu0 %v396, 32
      %v437 = vpop.permute.xlu0 %436
      %438 = vrot.lane.b32.xlu0 %v397, 32
      %v439 = vpop.permute.xlu0 %438
      %440 = vrot.lane.b32.xlu0 %v398, 32
      %v441 = vpop.permute.xlu0 %440
      %442 = vrot.lane.b32.xlu0 %v399, 32
      %v443 = vpop.permute.xlu0 %442
      %v448 = vadd.f32 %v432, %v437
      %v449 = vadd.f32 %v433, %v439
      %v450 = vadd.f32 %v434, %v441
      %v451 = vadd.f32 %v435, %v443
      %v456 = vcombine.low %v448, %v449
      %v457 = vcombine.low %v450, %v451
      %vm460 = vcmask 261120
      %v461 = vsel %vm460, %v456, 0.0
      %462 = vadd.xlane.f32.xlu0 %v461
      %v463 = vpop.xlane.xlu0 %462
      %v464 = vsel %vm460, %v457, 0.0
      %465 = vadd.xlane.f32.xlu0 %v464
      %v466 = vpop.xlane.xlu0 %465
      %v467 = vrcp.pop 32.0
      %v468 = vmul.f32 %v463, %v467
      %v469 = vmul.f32 %v466, %v467
      %v473 = vunpack.c.l.s4 839922192
      %v474 = vunpack.c.0.s8 %v473
      %v475 = vlaneseq
      %v476 = vshrl.u32 %v475, 7
      %v477 = vsub.s32 %v474, %v476
      %v478 = vrot.slane %v468, %v477
      %v480 = vunpack.c.l.s4 1985246804
      %v481 = vunpack.c.0.s8 %v480
      %v482 = vlaneseq
      %v483 = vshrl.u32 %v482, 7
      %v484 = vsub.s32 %v481, %v483
      %v485 = vrot.slane %v468, %v484
      %v487 = vunpack.c.l.s4 839922192
      %v488 = vunpack.c.0.s8 %v487
      %v489 = vlaneseq
      %v490 = vshrl.u32 %v489, 7
      %v491 = vsub.s32 %v488, %v490
      %v492 = vrot.slane %v469, %v491
      %v494 = vunpack.c.l.s4 1985246804
      %v495 = vunpack.c.0.s8 %v494
      %v496 = vlaneseq
      %v497 = vshrl.u32 %v496, 7
      %v498 = vsub.s32 %v495, %v497
      %v499 = vrot.slane %v469, %v498
      %v504 = vsub.f32 %v448, %v478
      %v505 = vsub.f32 %v449, %v485
      %v506 = vsub.f32 %v450, %v492
      %v507 = vsub.f32 %v451, %v499
      %v508 = vmul.f32 %v504, %v504
      %v509 = vmul.f32 %v505, %v505
      %v510 = vmul.f32 %v506, %v506
      %v511 = vmul.f32 %v507, %v507
      %v516 = vcombine.low %v508, %v509
      %v517 = vcombine.low %v510, %v511
      %v520 = vsel %vm460, %v516, 0.0
      %521 = vadd.xlane.f32.xlu0 %v520
      %v522 = vpop.xlane.xlu0 %521
      %v523 = vsel %vm460, %v517, 0.0
      %524 = vadd.xlane.f32.xlu0 %v523
      %v525 = vpop.xlane.xlu0 %524
      %v526 = vmul.f32 %v522, %v467
      %v527 = vmul.f32 %v525, %v467
      %v528 = vadd.f32 %v526, 1e-05
      %v529 = vadd.f32 %v527, 1e-05
      %v530 = vrsqrt.pop %v528
      %v531 = vrsqrt.pop %v529
      %v535 = vunpack.c.l.s4 839922192
      %v536 = vunpack.c.0.s8 %v535
      %v537 = vlaneseq
      %v538 = vshrl.u32 %v537, 7
      %v539 = vsub.s32 %v536, %v538
      %v540 = vrot.slane %v530, %v539
      %v542 = vunpack.c.l.s4 1985246804
      %v543 = vunpack.c.0.s8 %v542
      %v544 = vlaneseq
      %v545 = vshrl.u32 %v544, 7
      %v546 = vsub.s32 %v543, %v545
      %v547 = vrot.slane %v530, %v546
      %v549 = vunpack.c.l.s4 839922192
      %v550 = vunpack.c.0.s8 %v549
      %v551 = vlaneseq
      %v552 = vshrl.u32 %v551, 7
      %v553 = vsub.s32 %v550, %v552
      %v554 = vrot.slane %v531, %v553
      %v556 = vunpack.c.l.s4 1985246804
      %v557 = vunpack.c.0.s8 %v556
      %v558 = vlaneseq
      %v559 = vshrl.u32 %v558, 7
      %v560 = vsub.s32 %v557, %v559
      %v561 = vrot.slane %v531, %v560
      %v566 = vmul.f32 %v504, %v540
      %v567 = vmul.f32 %v505, %v547
      %v568 = vmul.f32 %v506, %v554
      %v569 = vmul.f32 %v507, %v561
      %v571 = vlaneseq
      %v572 = vshrl.u32 %v571, 7
      %v573 = vsub.s32 0, %v572
      %v574 = vrot.slane %v326, %v573
      %v576 = vcombine.high %v574, %v574
      %v578 = vmul.f32 %v566, %v574
      %v579 = vmul.f32 %v567, %v576
      %v580 = vmul.f32 %v568, %v574
      %v581 = vmul.f32 %v569, %v576
      %v583 = vlaneseq
      %v584 = vshrl.u32 %v583, 7
      %v585 = vsub.s32 0, %v584
      %v586 = vrot.slane %v327, %v585
      %v588 = vcombine.high %v586, %v586
      %v590 = vadd.f32 %v578, %v586
      %v591 = vadd.f32 %v579, %v588
      %v592 = vadd.f32 %v580, %v586
      %v593 = vadd.f32 %v581, %v588
      %v594 = vld [vmem:[%s320] sm:$0xf]
      %v595 = vld [vmem:[%s320 + $0x4] sm:$0xf]
      %v596 = vld [vmem:[%s320 + $0x8] sm:$0xf]
      %v597 = vld [vmem:[%s320 + $0xc] sm:$0xf]
      %v598 = vld [vmem:[%s320 + $0x10] sm:$0xf]
      %v599 = vld [vmem:[%s320 + $0x14] sm:$0xf]
      %v600 = vld [vmem:[%s320 + $0x18] sm:$0xf]
      %v601 = vld [vmem:[%s320 + $0x1c] sm:$0xf]
      %v602 = vld [vmem:[%s320 + $0x20] sm:$0xf]
      %v603 = vld [vmem:[%s320 + $0x24] sm:$0xf]
      %v604 = vld [vmem:[%s320 + $0x28] sm:$0xf]
      %v605 = vld [vmem:[%s320 + $0x2c] sm:$0xf]
      %v606 = vld [vmem:[%s320 + $0x30] sm:$0xf]
      %v607 = vld [vmem:[%s320 + $0x34] sm:$0xf]
      %v608 = vld [vmem:[%s320 + $0x38] sm:$0xf]
      %v609 = vld [vmem:[%s320 + $0x3c] sm:$0xf]
      %v610 = vmax.f32 %v594, %v595
      %v611 = vmax.f32 %v598, %v599
      %v612 = vmax.f32 %v602, %v603
      %v613 = vmax.f32 %v606, %v607
      %v614 = vmax.f32 %v610, %v596
      %v615 = vmax.f32 %v611, %v600
      %v616 = vmax.f32 %v612, %v604
      %v617 = vmax.f32 %v613, %v608
      %v618 = vmax.f32 %v614, %v597
      %v619 = vmax.f32 %v615, %v601
      %v620 = vmax.f32 %v616, %v605
      %v621 = vmax.f32 %v617, %v609
      %626 = vrot.lane.b32.xlu0 %v618, 96
      %v627 = vpop.permute.xlu0 %626
      %628 = vrot.lane.b32.xlu0 %v619, 96
      %v629 = vpop.permute.xlu0 %628
      %630 = vrot.lane.b32.xlu0 %v620, 96
      %v631 = vpop.permute.xlu0 %630
      %632 = vrot.lane.b32.xlu0 %v621, 96
      %v633 = vpop.permute.xlu0 %632
      %v638 = vmax.f32 %v618, %v627
      %v639 = vmax.f32 %v619, %v629
      %v640 = vmax.f32 %v620, %v631
      %v641 = vmax.f32 %v621, %v633
      %642 = vrot.lane.b32.xlu0 %v618, 64
      %v643 = vpop.permute.xlu0 %642
      %644 = vrot.lane.b32.xlu0 %v619, 64
      %v645 = vpop.permute.xlu0 %644
      %646 = vrot.lane.b32.xlu0 %v620, 64
      %v647 = vpop.permute.xlu0 %646
      %648 = vrot.lane.b32.xlu0 %v621, 64
      %v649 = vpop.permute.xlu0 %648
      %v654 = vmax.f32 %v638, %v643
      %v655 = vmax.f32 %v639, %v645
      %v656 = vmax.f32 %v640, %v647
      %v657 = vmax.f32 %v641, %v649
      %658 = vrot.lane.b32.xlu0 %v618, 32
      %v659 = vpop.permute.xlu0 %658
      %660 = vrot.lane.b32.xlu0 %v619, 32
      %v661 = vpop.permute.xlu0 %660
      %662 = vrot.lane.b32.xlu0 %v620, 32
      %v663 = vpop.permute.xlu0 %662
      %664 = vrot.lane.b32.xlu0 %v621, 32
      %v665 = vpop.permute.xlu0 %664
      %v670 = vmax.f32 %v654, %v659
      %v671 = vmax.f32 %v655, %v661
      %v672 = vmax.f32 %v656, %v663
      %v673 = vmax.f32 %v657, %v665
      %v678 = vcombine.low %v670, %v671
      %v679 = vcombine.low %v672, %v673
      %v682 = vsel %vm460, %v678, 0.0
      %683 = vadd.xlane.f32.xlu0 %v682
      %v684 = vpop.xlane.xlu0 %683
      %v685 = vsel %vm460, %v679, 0.0
      %686 = vadd.xlane.f32.xlu0 %v685
      %v687 = vpop.xlane.xlu0 %686
      %v688 = vmul.f32 %v684, %v467
      %v689 = vmul.f32 %v687, %v467
      %v693 = vunpack.c.l.s4 839922192
      %v694 = vunpack.c.0.s8 %v693
      %v695 = vlaneseq
      %v696 = vshrl.u32 %v695, 7
      %v697 = vsub.s32 %v694, %v696
      %v698 = vrot.slane %v688, %v697
      %v700 = vunpack.c.l.s4 1985246804
      %v701 = vunpack.c.0.s8 %v700
      %v702 = vlaneseq
      %v703 = vshrl.u32 %v702, 7
      %v704 = vsub.s32 %v701, %v703
      %v705 = vrot.slane %v688, %v704
      %v707 = vunpack.c.l.s4 839922192
      %v708 = vunpack.c.0.s8 %v707
      %v709 = vlaneseq
      %v710 = vshrl.u32 %v709, 7
      %v711 = vsub.s32 %v708, %v710
      %v712 = vrot.slane %v689, %v711
      %v714 = vunpack.c.l.s4 1985246804
      %v715 = vunpack.c.0.s8 %v714
      %v716 = vlaneseq
      %v717 = vshrl.u32 %v716, 7
      %v718 = vsub.s32 %v715, %v717
      %v719 = vrot.slane %v689, %v718
      %v724 = vsub.f32 %v670, %v698
      %v725 = vsub.f32 %v671, %v705
      %v726 = vsub.f32 %v672, %v712
      %v727 = vsub.f32 %v673, %v719
      %v728 = vmul.f32 %v724, %v724
      %v729 = vmul.f32 %v725, %v725
      %v730 = vmul.f32 %v726, %v726
      %v731 = vmul.f32 %v727, %v727
      %v736 = vcombine.low %v728, %v729
      %v737 = vcombine.low %v730, %v731
      %v740 = vsel %vm460, %v736, 0.0
      %741 = vadd.xlane.f32.xlu0 %v740
      %v742 = vpop.xlane.xlu0 %741
      %v743 = vsel %vm460, %v737, 0.0
      %744 = vadd.xlane.f32.xlu0 %v743
      %v745 = vpop.xlane.xlu0 %744
      %v746 = vmul.f32 %v742, %v467
      %v747 = vmul.f32 %v745, %v467
      %v748 = vadd.f32 %v746, 1e-05
      %v749 = vadd.f32 %v747, 1e-05
      %v750 = vrsqrt.pop %v748
      %v751 = vrsqrt.pop %v749
      %v755 = vunpack.c.l.s4 839922192
      %v756 = vunpack.c.0.s8 %v755
      %v757 = vlaneseq
      %v758 = vshrl.u32 %v757, 7
      %v759 = vsub.s32 %v756, %v758
      %v760 = vrot.slane %v750, %v759
      %v762 = vunpack.c.l.s4 1985246804
      %v763 = vunpack.c.0.s8 %v762
      %v764 = vlaneseq
      %v765 = vshrl.u32 %v764, 7
      %v766 = vsub.s32 %v763, %v765
      %v767 = vrot.slane %v750, %v766
      %v769 = vunpack.c.l.s4 839922192
      %v770 = vunpack.c.0.s8 %v769
      %v771 = vlaneseq
      %v772 = vshrl.u32 %v771, 7
      %v773 = vsub.s32 %v770, %v772
      %v774 = vrot.slane %v751, %v773
      %v776 = vunpack.c.l.s4 1985246804
      %v777 = vunpack.c.0.s8 %v776
      %v778 = vlaneseq
      %v779 = vshrl.u32 %v778, 7
      %v780 = vsub.s32 %v777, %v779
      %v781 = vrot.slane %v751, %v780
      %v786 = vmul.f32 %v724, %v760
      %v787 = vmul.f32 %v725, %v767
      %v788 = vmul.f32 %v726, %v774
      %v789 = vmul.f32 %v727, %v781
      %v790 = vmul.f32 %v786, %v574
      %v791 = vmul.f32 %v787, %v576
      %v792 = vmul.f32 %v788, %v574
      %v793 = vmul.f32 %v789, %v576
      %v794 = vadd.f32 %v790, %v586
      %v795 = vadd.f32 %v791, %v588
      %v796 = vadd.f32 %v792, %v586
      %v797 = vadd.f32 %v793, %v588
      %v798 = vld [vmem:[%s5] sm:$0xff]
      %v799 = vld [vmem:[%s5 + $0x8] sm:$0xff]
      %v800 = vld [vmem:[%s5 + $0x10] sm:$0xff]
      %v801 = vld [vmem:[%s5 + $0x18] sm:$0xff]
      %v806 = vcombine.low %v590, %v591
      %v807 = vcombine.low %v592, %v593
      %v808 = vsel %vm460, %v806, 0
      %v810 = vsel %vm460, %v807, 0
      %812 = vmatprep.subr.mxu0 0.0
      %813 = vmatpush1.msra.mxu0 %v798
      %814 = vmatprep.subr.mxu0 0.0
      %815 = vmatpush1.msra.mxu0 %v799
      %816 = vmatprep.subr.mxu0 0.0
      %817 = vmatpush1.msra.mxu0 %v800
      %818 = vmatprep.subr.mxu0 0.0
      %819 = vmatpush1.msra.mxu0 %v801
      %820 = vmatprep.subr.mxu0 0.0
      %821 = vmatpush1.msra.mxu0 0.0
      %822 = vmatprep.subr.mxu0 0.0
      %823 = vmatpush1.msra.mxu0 0.0
      %824 = vmatprep.subr.mxu0 0.0
      %825 = vmatpush1.msra.mxu0 0.0
      %826 = vmatprep.subr.mxu0 0.0
      %827 = vmatpush1.msra.mxu0 0.0
      %828 = vmatprep.subr.mxu0 0.0
      %829 = vmatpush1.msra.mxu0 0.0
      %830 = vmatprep.subr.mxu0 0.0
      %831 = vmatpush1.msra.mxu0 0.0
      %832 = vmatprep.subr.mxu0 0.0
      %833 = vmatpush1.msra.mxu0 0.0
      %834 = vmatprep.subr.mxu0 0.0
      %835 = vmatpush1.msra.mxu0 0.0
      %836 = vmatprep.subr.mxu0 0.0
      %837 = vmatpush1.msra.mxu0 0.0
      %838 = vmatprep.subr.mxu0 0.0
      %839 = vmatpush1.msra.mxu0 0.0
      %840 = vmatprep.subr.mxu0 0.0
      %841 = vmatpush1.msra.mxu0 0.0
      %842 = vmatprep.subr.mxu0 0.0
      %843 = vmatpush1.msra.mxu0 0.0
      %844 = vmatprep.subr.mxu0 0.0
      %845 = vmatpush1.msra.mxu0 0.0
      %846 = vmatprep.subr.mxu0 0.0
      %847 = vmatpush1.msra.mxu0 0.0
      %848 = vmatprep.subr.mxu0 0.0
      %849 = vmatpush1.msra.mxu0 0.0
      %850 = vmatprep.subr.mxu0 0.0
      %851 = vmatpush1.msra.mxu0 0.0
      %852 = vmatprep.subr.mxu0 0.0
      %853 = vmatpush1.msra.mxu0 0.0
      %854 = vmatprep.subr.mxu0 0.0
      %855 = vmatpush1.msra.mxu0 0.0
      %856 = vmatprep.subr.mxu0 0.0
      %857 = vmatpush1.msra.mxu0 0.0
      %858 = vmatprep.subr.mxu0 0.0
      %859 = vmatpush1.msra.mxu0 0.0
      %860 = vmatprep.subr.mxu0 0.0
      %861 = vmatpush1.msra.mxu0 0.0
      %862 = vmatprep.subr.mxu0 0.0
      %863 = vmatpush1.msra.mxu0 0.0
      %864 = vmatprep.subr.mxu0 0.0
      %865 = vmatpush1.msra.mxu0 0.0
      %866 = vmatprep.subr.mxu0 0.0
      %867 = vmatpush1.msra.mxu0 0.0
      %868 = vmatprep.subr.mxu0 0.0
      %869 = vmatpush1.msra.mxu0 0.0
      %870 = vmatprep.subr.mxu0 0.0
      %871 = vmatpush1.msra.mxu0 0.0
      %872 = vmatprep.subr.mxu0 0.0
      %873 = vmatpush1.msra.mxu0 0.0
      %874 = vmatprep.subr.mxu0 0.0
      %875 = vmatpush1.msra.mxu0 0.0
      %876 = vmatprep.mubr.f32.mxu0 0.0
      %877 = vmatmul.mubr.f32.gmra.mrb[0].mxu0 %v808
      %v878 = vpop.f32.mrb[0].mxu0
      %v879 = vadd.f32 0.0, %v878
      %v880 = vpop.f32.mrb[0].mxu0
      %881 = vmatprep.mubr.f32.mxu0 0.0
      %882 = vmatmul.mubr.f32.gmra.mrb[0].mxu0 %v810
      %v883 = vpop.f32.mrb[0].mxu0
      %v884 = vadd.f32 0.0, %v883
      %v885 = vpop.f32.mrb[0].mxu0
      %886 = vdwg.mxu0
      %v887 = vld [vmem:[%s6] sm:$0xff]
      %v888 = vld [vmem:[%s6 + $0x8] sm:$0xff]
      %v889 = vld [vmem:[%s6 + $0x10] sm:$0xff]
      %v890 = vld [vmem:[%s6 + $0x18] sm:$0xff]
      %v895 = vcombine.low %v794, %v795
      %v896 = vcombine.low %v796, %v797
      %v897 = vsel %vm460, %v895, 0
      %v899 = vsel %vm460, %v896, 0
      %901 = vmatprep.subr.mxu0 0.0
      %902 = vmatpush1.msra.mxu0 %v887
      %903 = vmatprep.subr.mxu0 0.0
      %904 = vmatpush1.msra.mxu0 %v888
      %905 = vmatprep.subr.mxu0 0.0
      %906 = vmatpush1.msra.mxu0 %v889
      %907 = vmatprep.subr.mxu0 0.0
      %908 = vmatpush1.msra.mxu0 %v890
      %909 = vmatprep.subr.mxu0 0.0
      %910 = vmatpush1.msra.mxu0 0.0
      %911 = vmatprep.subr.mxu0 0.0
      %912 = vmatpush1.msra.mxu0 0.0
      %913 = vmatprep.subr.mxu0 0.0
      %914 = vmatpush1.msra.mxu0 0.0
      %915 = vmatprep.subr.mxu0 0.0
      %916 = vmatpush1.msra.mxu0 0.0
      %917 = vmatprep.subr.mxu0 0.0
      %918 = vmatpush1.msra.mxu0 0.0
      %919 = vmatprep.subr.mxu0 0.0
      %920 = vmatpush1.msra.mxu0 0.0
      %921 = vmatprep.subr.mxu0 0.0
      %922 = vmatpush1.msra.mxu0 0.0
      %923 = vmatprep.subr.mxu0 0.0
      %924 = vmatpush1.msra.mxu0 0.0
      %925 = vmatprep.subr.mxu0 0.0
      %926 = vmatpush1.msra.mxu0 0.0
      %927 = vmatprep.subr.mxu0 0.0
      %928 = vmatpush1.msra.mxu0 0.0
      %929 = vmatprep.subr.mxu0 0.0
      %930 = vmatpush1.msra.mxu0 0.0
      %931 = vmatprep.subr.mxu0 0.0
      %932 = vmatpush1.msra.mxu0 0.0
      %933 = vmatprep.subr.mxu0 0.0
      %934 = vmatpush1.msra.mxu0 0.0
      %935 = vmatprep.subr.mxu0 0.0
      %936 = vmatpush1.msra.mxu0 0.0
      %937 = vmatprep.subr.mxu0 0.0
      %938 = vmatpush1.msra.mxu0 0.0
      %939 = vmatprep.subr.mxu0 0.0
      %940 = vmatpush1.msra.mxu0 0.0
      %941 = vmatprep.subr.mxu0 0.0
      %942 = vmatpush1.msra.mxu0 0.0
      %943 = vmatprep.subr.mxu0 0.0
      %944 = vmatpush1.msra.mxu0 0.0
      %945 = vmatprep.subr.mxu0 0.0
      %946 = vmatpush1.msra.mxu0 0.0
      %947 = vmatprep.subr.mxu0 0.0
      %948 = vmatpush1.msra.mxu0 0.0
      %949 = vmatprep.subr.mxu0 0.0
      %950 = vmatpush1.msra.mxu0 0.0
      %951 = vmatprep.subr.mxu0 0.0
      %952 = vmatpush1.msra.mxu0 0.0
      %953 = vmatprep.subr.mxu0 0.0
      %954 = vmatpush1.msra.mxu0 0.0
      %955 = vmatprep.subr.mxu0 0.0
      %956 = vmatpush1.msra.mxu0 0.0
      %957 = vmatprep.subr.mxu0 0.0
      %958 = vmatpush1.msra.mxu0 0.0
      %959 = vmatprep.subr.mxu0 0.0
      %960 = vmatpush1.msra.mxu0 0.0
      %961 = vmatprep.subr.mxu0 0.0
      %962 = vmatpush1.msra.mxu0 0.0
      %963 = vmatprep.subr.mxu0 0.0
      %964 = vmatpush1.msra.mxu0 0.0
      %965 = vmatprep.mubr.f32.mxu0 0.0
      %966 = vmatmul.mubr.f32.gmra.mrb[0].mxu0 %v897
      %v967 = vpop.f32.mrb[0].mxu0
      %v968 = vadd.f32 0.0, %v967
      %v969 = vpop.f32.mrb[0].mxu0
      %970 = vmatprep.mubr.f32.mxu0 0.0
      %971 = vmatmul.mubr.f32.gmra.mrb[0].mxu0 %v899
      %v972 = vpop.f32.mrb[0].mxu0
      %v973 = vadd.f32 0.0, %v972
      %v974 = vpop.f32.mrb[0].mxu0
      %975 = vdwg.mxu0
      %vm976 = vcmask 64512
      %v978 = vsel %vm976, %v879, 0
      %v981 = vsel %vm976, %v884, 0
      %v984 = vsel %vm976, %v968, 0
      %v987 = vsel %vm976, %v973, 0
      %989 = vmatprep.subr.mxu0 0.0
      %990 = vmatpush1.xpose.msra.mxu0 %v984
      %991 = vmatprep.subr.mxu0 0.0
      %992 = vmatpush1.xpose.msra.mxu0 %v987
      %993 = vmatprep.subr.mxu0 0.0
      %994 = vmatpush1.xpose.msra.mxu0 0.0
      %995 = vmatprep.subr.mxu0 0.0
      %996 = vmatpush1.xpose.msra.mxu0 0.0
      %997 = vmatprep.subr.mxu0 0.0
      %998 = vmatpush1.xpose.msra.mxu0 0.0
      %999 = vmatprep.subr.mxu0 0.0
      %1000 = vmatpush1.xpose.msra.mxu0 0.0
      %1001 = vmatprep.subr.mxu0 0.0
      %1002 = vmatpush1.xpose.msra.mxu0 0.0
      %1003 = vmatprep.subr.mxu0 0.0
      %1004 = vmatpush1.xpose.msra.mxu0 0.0
      %1005 = vmatprep.subr.mxu0 0.0
      %1006 = vmatpush1.xpose.msra.mxu0 0.0
      %1007 = vmatprep.subr.mxu0 0.0
      %1008 = vmatpush1.xpose.msra.mxu0 0.0
      %1009 = vmatprep.subr.mxu0 0.0
      %1010 = vmatpush1.xpose.msra.mxu0 0.0
      %1011 = vmatprep.subr.mxu0 0.0
      %1012 = vmatpush1.xpose.msra.mxu0 0.0
      %1013 = vmatprep.subr.mxu0 0.0
      %1014 = vmatpush1.xpose.msra.mxu0 0.0
      %1015 = vmatprep.subr.mxu0 0.0
      %1016 = vmatpush1.xpose.msra.mxu0 0.0
      %1017 = vmatprep.subr.mxu0 0.0
      %1018 = vmatpush1.xpose.msra.mxu0 0.0
      %1019 = vmatprep.subr.mxu0 0.0
      %1020 = vmatpush1.xpose.msra.mxu0 0.0
      %1021 = vmatprep.subr.mxu0 0.0
      %1022 = vmatpush1.xpose.msra.mxu0 0.0
      %1023 = vmatprep.subr.mxu0 0.0
      %1024 = vmatpush1.xpose.msra.mxu0 0.0
      %1025 = vmatprep.subr.mxu0 0.0
      %1026 = vmatpush1.xpose.msra.mxu0 0.0
      %1027 = vmatprep.subr.mxu0 0.0
      %1028 = vmatpush1.xpose.msra.mxu0 0.0
      %1029 = vmatprep.subr.mxu0 0.0
      %1030 = vmatpush1.xpose.msra.mxu0 0.0
      %1031 = vmatprep.subr.mxu0 0.0
      %1032 = vmatpush1.xpose.msra.mxu0 0.0
      %1033 = vmatprep.subr.mxu0 0.0
      %1034 = vmatpush1.xpose.msra.mxu0 0.0
      %1035 = vmatprep.subr.mxu0 0.0
      %1036 = vmatpush1.xpose.msra.mxu0 0.0
      %1037 = vmatprep.subr.mxu0 0.0
      %1038 = vmatpush1.xpose.msra.mxu0 0.0
      %1039 = vmatprep.subr.mxu0 0.0
      %1040 = vmatpush1.xpose.msra.mxu0 0.0
      %1041 = vmatprep.subr.mxu0 0.0
      %1042 = vmatpush1.xpose.msra.mxu0 0.0
      %1043 = vmatprep.subr.mxu0 0.0
      %1044 = vmatpush1.xpose.msra.mxu0 0.0
      %1045 = vmatprep.subr.mxu0 0.0
      %1046 = vmatpush1.xpose.msra.mxu0 0.0
      %1047 = vmatprep.subr.mxu0 0.0
      %1048 = vmatpush1.xpose.msra.mxu0 0.0
      %1049 = vmatprep.subr.mxu0 0.0
      %1050 = vmatpush1.xpose.msra.mxu0 0.0
      %1051 = vmatprep.subr.mxu0 0.0
      %1052 = vmatpush1.xpose.msra.mxu0 0.0
      %1053 = vmatprep.mubr.f32.mxu0 0.0
      %1054 = vmatmul.mubr.f32.gmra.mrb[0].mxu0 %v978
      %v1055 = vpop.f32.mrb[0].mxu0
      %v1056 = vadd.f32 0.0, %v1055
      %v1057 = vpop.f32.mrb[0].mxu0
      %1058 = vmatprep.mubr.f32.mxu0 0.0
      %1059 = vmatmul.mubr.f32.gmra.mrb[0].mxu0 %v981
      %v1060 = vpop.f32.mrb[0].mxu0
      %v1061 = vadd.f32 0.0, %v1060
      %v1062 = vpop.f32.mrb[0].mxu0
      %1063 = vdwg.mxu0
      %v1064 = vmul.f32 %v1056, 0.35355338
      %v1065 = vmul.f32 %v1061, 0.35355338
      %vm1066 = vcmask 130048
      %v1067 = vsel %vm1066, %v1064, -inf
      %1068 = vmax.xlane.f32.xlu0 %v1067
      %v1069 = vpop.xlane.xlu0 %1068
      %v1070 = vsel %vm1066, %v1065, -inf
      %1071 = vmax.xlane.f32.xlu0 %v1070
      %v1072 = vpop.xlane.xlu0 %1071
      %v1073 = vsub.f32 %v1064, %v1069
      %v1074 = vsub.f32 %v1065, %v1072
      %v1075 = vmul.f32 %v1073, 1.442695
      %v1076 = vpow.pop %v1075
      %v1077 = vmul.f32 %v1074, 1.442695
      %v1078 = vpow.pop %v1077
      %v1079 = vsel %vm1066, %v1076, 0.0
      %1080 = vadd.xlane.f32.xlu0 %v1079
      %v1081 = vpop.xlane.xlu0 %1080
      %v1082 = vsel %vm1066, %v1078, 0.0
      %1083 = vadd.xlane.f32.xlu0 %v1082
      %v1084 = vpop.xlane.xlu0 %1083
      %v1085 = vrcp.pop %v1081
      %v1086 = vrcp.pop %v1084
      %v1087 = vmul.f32 %v1076, %v1085
      %v1088 = vmul.f32 %v1078, %v1086
      %1089 = vrot.lane.b32.xlu0 %v968, 96
      %v1090 = vpop.permute.xlu0 %1089
      %1091 = vrot.lane.b32.xlu0 %v973, 96
      %v1092 = vpop.permute.xlu0 %1091
      %v1096 = vsel %vm1066, %v1087, 0
      %v1099 = vsel %vm1066, %v1088, 0
      %1101 = vmatprep.subr.mxu0 0.0
      %1102 = vmatpush1.msra.mxu0 %v1090
      %1103 = vmatprep.subr.mxu0 0.0
      %1104 = vmatpush1.msra.mxu0 %v1092
      %1105 = vmatprep.subr.mxu0 0.0
      %1106 = vmatpush1.msra.mxu0 0.0
      %1107 = vmatprep.subr.mxu0 0.0
      %1108 = vmatpush1.msra.mxu0 0.0
      %1109 = vmatprep.subr.mxu0 0.0
      %1110 = vmatpush1.msra.mxu0 0.0
      %1111 = vmatprep.subr.mxu0 0.0
      %1112 = vmatpush1.msra.mxu0 0.0
      %1113 = vmatprep.subr.mxu0 0.0
      %1114 = vmatpush1.msra.mxu0 0.0
      %1115 = vmatprep.subr.mxu0 0.0
      %1116 = vmatpush1.msra.mxu0 0.0
      %1117 = vmatprep.subr.mxu0 0.0
      %1118 = vmatpush1.msra.mxu0 0.0
      %1119 = vmatprep.subr.mxu0 0.0
      %1120 = vmatpush1.msra.mxu0 0.0
      %1121 = vmatprep.subr.mxu0 0.0
      %1122 = vmatpush1.msra.mxu0 0.0
      %1123 = vmatprep.subr.mxu0 0.0
      %1124 = vmatpush1.msra.mxu0 0.0
      %1125 = vmatprep.subr.mxu0 0.0
      %1126 = vmatpush1.msra.mxu0 0.0
      %1127 = vmatprep.subr.mxu0 0.0
      %1128 = vmatpush1.msra.mxu0 0.0
      %1129 = vmatprep.subr.mxu0 0.0
      %1130 = vmatpush1.msra.mxu0 0.0
      %1131 = vmatprep.subr.mxu0 0.0
      %1132 = vmatpush1.msra.mxu0 0.0
      %1133 = vmatprep.subr.mxu0 0.0
      %1134 = vmatpush1.msra.mxu0 0.0
      %1135 = vmatprep.subr.mxu0 0.0
      %1136 = vmatpush1.msra.mxu0 0.0
      %1137 = vmatprep.subr.mxu0 0.0
      %1138 = vmatpush1.msra.mxu0 0.0
      %1139 = vmatprep.subr.mxu0 0.0
      %1140 = vmatpush1.msra.mxu0 0.0
      %1141 = vmatprep.subr.mxu0 0.0
      %1142 = vmatpush1.msra.mxu0 0.0
      %1143 = vmatprep.subr.mxu0 0.0
      %1144 = vmatpush1.msra.mxu0 0.0
      %1145 = vmatprep.subr.mxu0 0.0
      %1146 = vmatpush1.msra.mxu0 0.0
      %1147 = vmatprep.subr.mxu0 0.0
      %1148 = vmatpush1.msra.mxu0 0.0
      %1149 = vmatprep.subr.mxu0 0.0
      %1150 = vmatpush1.msra.mxu0 0.0
      %1151 = vmatprep.subr.mxu0 0.0
      %1152 = vmatpush1.msra.mxu0 0.0
      %1153 = vmatprep.subr.mxu0 0.0
      %1154 = vmatpush1.msra.mxu0 0.0
      %1155 = vmatprep.subr.mxu0 0.0
      %1156 = vmatpush1.msra.mxu0 0.0
      %1157 = vmatprep.subr.mxu0 0.0
      %1158 = vmatpush1.msra.mxu0 0.0
      %1159 = vmatprep.subr.mxu0 0.0
      %1160 = vmatpush1.msra.mxu0 0.0
      %1161 = vmatprep.subr.mxu0 0.0
      %1162 = vmatpush1.msra.mxu0 0.0
      %1163 = vmatprep.subr.mxu0 0.0
      %1164 = vmatpush1.msra.mxu0 0.0
      %1165 = vmatprep.mubr.f32.mxu0 0.0
      %1166 = vmatmul.mubr.f32.gmra.mrb[0].mxu0 %v1096
      %v1167 = vpop.f32.mrb[0].mxu0
      %v1168 = vadd.f32 0.0, %v1167
      %v1169 = vpop.f32.mrb[0].mxu0
      %1170 = vmatprep.mubr.f32.mxu0 0.0
      %1171 = vmatmul.mubr.f32.gmra.mrb[0].mxu0 %v1099
      %v1172 = vpop.f32.mrb[0].mxu0
      %v1173 = vadd.f32 0.0, %v1172
      %v1174 = vpop.f32.mrb[0].mxu0
      %1175 = vdwg.mxu0
      %1176 = vrot.lane.b32.xlu0 %v879, 120
      %v1177 = vpop.permute.xlu0 %1176
      %1178 = vrot.lane.b32.xlu0 %v884, 120
      %v1179 = vpop.permute.xlu0 %1178
      %1180 = vrot.lane.b32.xlu0 %v968, 120
      %v1181 = vpop.permute.xlu0 %1180
      %1182 = vrot.lane.b32.xlu0 %v973, 120
      %v1183 = vpop.permute.xlu0 %1182
      %v1184 = vsel %vm976, %v1177, 0
      %v1186 = vsel %vm976, %v1179, 0
      %v1188 = vsel %vm976, %v1181, 0
      %v1190 = vsel %vm976, %v1183, 0
      %1192 = vmatprep.subr.mxu0 0.0
      %1193 = vmatpush1.xpose.msra.mxu0 %v1188
      %1194 = vmatprep.subr.mxu0 0.0
      %1195 = vmatpush1.xpose.msra.mxu0 %v1190
      %1196 = vmatprep.subr.mxu0 0.0
      %1197 = vmatpush1.xpose.msra.mxu0 0.0
      %1198 = vmatprep.subr.mxu0 0.0
      %1199 = vmatpush1.xpose.msra.mxu0 0.0
      %1200 = vmatprep.subr.mxu0 0.0
      %1201 = vmatpush1.xpose.msra.mxu0 0.0
      %1202 = vmatprep.subr.mxu0 0.0
      %1203 = vmatpush1.xpose.msra.mxu0 0.0
      %1204 = vmatprep.subr.mxu0 0.0
      %1205 = vmatpush1.xpose.msra.mxu0 0.0
      %1206 = vmatprep.subr.mxu0 0.0
      %1207 = vmatpush1.xpose.msra.mxu0 0.0
      %1208 = vmatprep.subr.mxu0 0.0
      %1209 = vmatpush1.xpose.msra.mxu0 0.0
      %1210 = vmatprep.subr.mxu0 0.0
      %1211 = vmatpush1.xpose.msra.mxu0 0.0
      %1212 = vmatprep.subr.mxu0 0.0
      %1213 = vmatpush1.xpose.msra.mxu0 0.0
      %1214 = vmatprep.subr.mxu0 0.0
      %1215 = vmatpush1.xpose.msra.mxu0 0.0
      %1216 = vmatprep.subr.mxu0 0.0
      %1217 = vmatpush1.xpose.msra.mxu0 0.0
      %1218 = vmatprep.subr.mxu0 0.0
      %1219 = vmatpush1.xpose.msra.mxu0 0.0
      %1220 = vmatprep.subr.mxu0 0.0
      %1221 = vmatpush1.xpose.msra.mxu0 0.0
      %1222 = vmatprep.subr.mxu0 0.0
      %1223 = vmatpush1.xpose.msra.mxu0 0.0
      %1224 = vmatprep.subr.mxu0 0.0
      %1225 = vmatpush1.xpose.msra.mxu0 0.0
      %1226 = vmatprep.subr.mxu0 0.0
      %1227 = vmatpush1.xpose.msra.mxu0 0.0
      %1228 = vmatprep.subr.mxu0 0.0
      %1229 = vmatpush1.xpose.msra.mxu0 0.0
      %1230 = vmatprep.subr.mxu0 0.0
      %1231 = vmatpush1.xpose.msra.mxu0 0.0
      %1232 = vmatprep.subr.mxu0 0.0
      %1233 = vmatpush1.xpose.msra.mxu0 0.0
      %1234 = vmatprep.subr.mxu0 0.0
      %1235 = vmatpush1.xpose.msra.mxu0 0.0
      %1236 = vmatprep.subr.mxu0 0.0
      %1237 = vmatpush1.xpose.msra.mxu0 0.0
      %1238 = vmatprep.subr.mxu0 0.0
      %1239 = vmatpush1.xpose.msra.mxu0 0.0
      %1240 = vmatprep.subr.mxu0 0.0
      %1241 = vmatpush1.xpose.msra.mxu0 0.0
      %1242 = vmatprep.subr.mxu0 0.0
      %1243 = vmatpush1.xpose.msra.mxu0 0.0
      %1244 = vmatprep.subr.mxu0 0.0
      %1245 = vmatpush1.xpose.msra.mxu0 0.0
      %1246 = vmatprep.subr.mxu0 0.0
      %1247 = vmatpush1.xpose.msra.mxu0 0.0
      %1248 = vmatprep.subr.mxu0 0.0
      %1249 = vmatpush1.xpose.msra.mxu0 0.0
      %1250 = vmatprep.subr.mxu0 0.0
      %1251 = vmatpush1.xpose.msra.mxu0 0.0
      %1252 = vmatprep.subr.mxu0 0.0
      %1253 = vmatpush1.xpose.msra.mxu0 0.0
      %1254 = vmatprep.subr.mxu0 0.0
      %1255 = vmatpush1.xpose.msra.mxu0 0.0
      %1256 = vmatprep.mubr.f32.mxu0 0.0
      %1257 = vmatmul.mubr.f32.gmra.mrb[0].mxu0 %v1184
      %v1258 = vpop.f32.mrb[0].mxu0
      %v1259 = vadd.f32 0.0, %v1258
      %v1260 = vpop.f32.mrb[0].mxu0
      %1261 = vmatprep.mubr.f32.mxu0 0.0
      %1262 = vmatmul.mubr.f32.gmra.mrb[0].mxu0 %v1186
      %v1263 = vpop.f32.mrb[0].mxu0
      %v1264 = vadd.f32 0.0, %v1263
      %v1265 = vpop.f32.mrb[0].mxu0
      %1266 = vdwg.mxu0
      %v1267 = vmul.f32 %v1259, 0.35355338
      %v1268 = vmul.f32 %v1264, 0.35355338
      %v1269 = vsel %vm1066, %v1267, -inf
      %1270 = vmax.xlane.f32.xlu0 %v1269
      %v1271 = vpop.xlane.xlu0 %1270
      %v1272 = vsel %vm1066, %v1268, -inf
      %1273 = vmax.xlane.f32.xlu0 %v1272
      %v1274 = vpop.xlane.xlu0 %1273
      %v1275 = vsub.f32 %v1267, %v1271
      %v1276 = vsub.f32 %v1268, %v1274
      %v1277 = vmul.f32 %v1275, 1.442695
      %v1278 = vpow.pop %v1277
      %v1279 = vmul.f32 %v1276, 1.442695
      %v1280 = vpow.pop %v1279
      %v1281 = vsel %vm1066, %v1278, 0.0
      %1282 = vadd.xlane.f32.xlu0 %v1281
      %v1283 = vpop.xlane.xlu0 %1282
      %v1284 = vsel %vm1066, %v1280, 0.0
      %1285 = vadd.xlane.f32.xlu0 %v1284
      %v1286 = vpop.xlane.xlu0 %1285
      %v1287 = vrcp.pop %v1283
      %v1288 = vrcp.pop %v1286
      %v1289 = vmul.f32 %v1278, %v1287
      %v1290 = vmul.f32 %v1280, %v1288
      %1291 = vrot.lane.b32.xlu0 %v968, 88
      %v1292 = vpop.permute.xlu0 %1291
      %1293 = vrot.lane.b32.xlu0 %v973, 88
      %v1294 = vpop.permute.xlu0 %1293
      %v1298 = vsel %vm1066, %v1289, 0
      %v1301 = vsel %vm1066, %v1290, 0
      %1303 = vmatprep.subr.mxu0 0.0
      %1304 = vmatpush1.msra.mxu0 %v1292
      %1305 = vmatprep.subr.mxu0 0.0
      %1306 = vmatpush1.msra.mxu0 %v1294
      %1307 = vmatprep.subr.mxu0 0.0
      %1308 = vmatpush1.msra.mxu0 0.0
      %1309 = vmatprep.subr.mxu0 0.0
      %1310 = vmatpush1.msra.mxu0 0.0
      %1311 = vmatprep.subr.mxu0 0.0
      %1312 = vmatpush1.msra.mxu0 0.0
      %1313 = vmatprep.subr.mxu0 0.0
      %1314 = vmatpush1.msra.mxu0 0.0
      %1315 = vmatprep.subr.mxu0 0.0
      %1316 = vmatpush1.msra.mxu0 0.0
      %1317 = vmatprep.subr.mxu0 0.0
      %1318 = vmatpush1.msra.mxu0 0.0
      %1319 = vmatprep.subr.mxu0 0.0
      %1320 = vmatpush1.msra.mxu0 0.0
      %1321 = vmatprep.subr.mxu0 0.0
      %1322 = vmatpush1.msra.mxu0 0.0
      %1323 = vmatprep.subr.mxu0 0.0
      %1324 = vmatpush1.msra.mxu0 0.0
      %1325 = vmatprep.subr.mxu0 0.0
      %1326 = vmatpush1.msra.mxu0 0.0
      %1327 = vmatprep.subr.mxu0 0.0
      %1328 = vmatpush1.msra.mxu0 0.0
      %1329 = vmatprep.subr.mxu0 0.0
      %1330 = vmatpush1.msra.mxu0 0.0
      %1331 = vmatprep.subr.mxu0 0.0
      %1332 = vmatpush1.msra.mxu0 0.0
      %1333 = vmatprep.subr.mxu0 0.0
      %1334 = vmatpush1.msra.mxu0 0.0
      %1335 = vmatprep.subr.mxu0 0.0
      %1336 = vmatpush1.msra.mxu0 0.0
      %1337 = vmatprep.subr.mxu0 0.0
      %1338 = vmatpush1.msra.mxu0 0.0
      %1339 = vmatprep.subr.mxu0 0.0
      %1340 = vmatpush1.msra.mxu0 0.0
      %1341 = vmatprep.subr.mxu0 0.0
      %1342 = vmatpush1.msra.mxu0 0.0
      %1343 = vmatprep.subr.mxu0 0.0
      %1344 = vmatpush1.msra.mxu0 0.0
      %1345 = vmatprep.subr.mxu0 0.0
      %1346 = vmatpush1.msra.mxu0 0.0
      %1347 = vmatprep.subr.mxu0 0.0
      %1348 = vmatpush1.msra.mxu0 0.0
      %1349 = vmatprep.subr.mxu0 0.0
      %1350 = vmatpush1.msra.mxu0 0.0
      %1351 = vmatprep.subr.mxu0 0.0
      %1352 = vmatpush1.msra.mxu0 0.0
      %1353 = vmatprep.subr.mxu0 0.0
      %1354 = vmatpush1.msra.mxu0 0.0
      %1355 = vmatprep.subr.mxu0 0.0
      %1356 = vmatpush1.msra.mxu0 0.0
      %1357 = vmatprep.subr.mxu0 0.0
      %1358 = vmatpush1.msra.mxu0 0.0
      %1359 = vmatprep.subr.mxu0 0.0
      %1360 = vmatpush1.msra.mxu0 0.0
      %1361 = vmatprep.subr.mxu0 0.0
      %1362 = vmatpush1.msra.mxu0 0.0
      %1363 = vmatprep.subr.mxu0 0.0
      %1364 = vmatpush1.msra.mxu0 0.0
      %1365 = vmatprep.subr.mxu0 0.0
      %1366 = vmatpush1.msra.mxu0 0.0
      %1367 = vmatprep.mubr.f32.mxu0 0.0
      %1368 = vmatmul.mubr.f32.gmra.mrb[0].mxu0 %v1298
      %v1369 = vpop.f32.mrb[0].mxu0
      %v1370 = vadd.f32 0.0, %v1369
      %v1371 = vpop.f32.mrb[0].mxu0
      %1372 = vmatprep.mubr.f32.mxu0 0.0
      %1373 = vmatmul.mubr.f32.gmra.mrb[0].mxu0 %v1301
      %v1374 = vpop.f32.mrb[0].mxu0
      %v1375 = vadd.f32 0.0, %v1374
      %v1376 = vpop.f32.mrb[0].mxu0
      %1377 = vdwg.mxu0
      %1378 = vrot.lane.b32.xlu0 %v879, 112
      %v1379 = vpop.permute.xlu0 %1378
      %1380 = vrot.lane.b32.xlu0 %v884, 112
      %v1381 = vpop.permute.xlu0 %1380
      %1382 = vrot.lane.b32.xlu0 %v968, 112
      %v1383 = vpop.permute.xlu0 %1382
      %1384 = vrot.lane.b32.xlu0 %v973, 112
      %v1385 = vpop.permute.xlu0 %1384
      %v1386 = vsel %vm976, %v1379, 0
      %v1388 = vsel %vm976, %v1381, 0
      %v1390 = vsel %vm976, %v1383, 0
      %v1392 = vsel %vm976, %v1385, 0
      %1394 = vmatprep.subr.mxu0 0.0
      %1395 = vmatpush1.xpose.msra.mxu0 %v1390
      %1396 = vmatprep.subr.mxu0 0.0
      %1397 = vmatpush1.xpose.msra.mxu0 %v1392
      %1398 = vmatprep.subr.mxu0 0.0
      %1399 = vmatpush1.xpose.msra.mxu0 0.0
      %1400 = vmatprep.subr.mxu0 0.0
      %1401 = vmatpush1.xpose.msra.mxu0 0.0
      %1402 = vmatprep.subr.mxu0 0.0
      %1403 = vmatpush1.xpose.msra.mxu0 0.0
      %1404 = vmatprep.subr.mxu0 0.0
      %1405 = vmatpush1.xpose.msra.mxu0 0.0
      %1406 = vmatprep.subr.mxu0 0.0
      %1407 = vmatpush1.xpose.msra.mxu0 0.0
      %1408 = vmatprep.subr.mxu0 0.0
      %1409 = vmatpush1.xpose.msra.mxu0 0.0
      %1410 = vmatprep.subr.mxu0 0.0
      %1411 = vmatpush1.xpose.msra.mxu0 0.0
      %1412 = vmatprep.subr.mxu0 0.0
      %1413 = vmatpush1.xpose.msra.mxu0 0.0
      %1414 = vmatprep.subr.mxu0 0.0
      %1415 = vmatpush1.xpose.msra.mxu0 0.0
      %1416 = vmatprep.subr.mxu0 0.0
      %1417 = vmatpush1.xpose.msra.mxu0 0.0
      %1418 = vmatprep.subr.mxu0 0.0
      %1419 = vmatpush1.xpose.msra.mxu0 0.0
      %1420 = vmatprep.subr.mxu0 0.0
      %1421 = vmatpush1.xpose.msra.mxu0 0.0
      %1422 = vmatprep.subr.mxu0 0.0
      %1423 = vmatpush1.xpose.msra.mxu0 0.0
      %1424 = vmatprep.subr.mxu0 0.0
      %1425 = vmatpush1.xpose.msra.mxu0 0.0
      %1426 = vmatprep.subr.mxu0 0.0
      %1427 = vmatpush1.xpose.msra.mxu0 0.0
      %1428 = vmatprep.subr.mxu0 0.0
      %1429 = vmatpush1.xpose.msra.mxu0 0.0
      %1430 = vmatprep.subr.mxu0 0.0
      %1431 = vmatpush1.xpose.msra.mxu0 0.0
      %1432 = vmatprep.subr.mxu0 0.0
      %1433 = vmatpush1.xpose.msra.mxu0 0.0
      %1434 = vmatprep.subr.mxu0 0.0
      %1435 = vmatpush1.xpose.msra.mxu0 0.0
      %1436 = vmatprep.subr.mxu0 0.0
      %1437 = vmatpush1.xpose.msra.mxu0 0.0
      %1438 = vmatprep.subr.mxu0 0.0
      %1439 = vmatpush1.xpose.msra.mxu0 0.0
      %1440 = vmatprep.subr.mxu0 0.0
      %1441 = vmatpush1.xpose.msra.mxu0 0.0
      %1442 = vmatprep.subr.mxu0 0.0
      %1443 = vmatpush1.xpose.msra.mxu0 0.0
      %1444 = vmatprep.subr.mxu0 0.0
      %1445 = vmatpush1.xpose.msra.mxu0 0.0
      %1446 = vmatprep.subr.mxu0 0.0
      %1447 = vmatpush1.xpose.msra.mxu0 0.0
      %1448 = vmatprep.subr.mxu0 0.0
      %1449 = vmatpush1.xpose.msra.mxu0 0.0
      %1450 = vmatprep.subr.mxu0 0.0
      %1451 = vmatpush1.xpose.msra.mxu0 0.0
      %1452 = vmatprep.subr.mxu0 0.0
      %1453 = vmatpush1.xpose.msra.mxu0 0.0
      %1454 = vmatprep.subr.mxu0 0.0
      %1455 = vmatpush1.xpose.msra.mxu0 0.0
      %1456 = vmatprep.subr.mxu0 0.0
      %1457 = vmatpush1.xpose.msra.mxu0 0.0
      %1458 = vmatprep.mubr.f32.mxu0 0.0
      %1459 = vmatmul.mubr.f32.gmra.mrb[0].mxu0 %v1386
      %v1460 = vpop.f32.mrb[0].mxu0
      %v1461 = vadd.f32 0.0, %v1460
      %v1462 = vpop.f32.mrb[0].mxu0
      %1463 = vmatprep.mubr.f32.mxu0 0.0
      %1464 = vmatmul.mubr.f32.gmra.mrb[0].mxu0 %v1388
      %v1465 = vpop.f32.mrb[0].mxu0
      %v1466 = vadd.f32 0.0, %v1465
      %v1467 = vpop.f32.mrb[0].mxu0
      %1468 = vdwg.mxu0
      %v1469 = vmul.f32 %v1461, 0.35355338
      %v1470 = vmul.f32 %v1466, 0.35355338
      %v1471 = vsel %vm1066, %v1469, -inf
      %1472 = vmax.xlane.f32.xlu0 %v1471
      %v1473 = vpop.xlane.xlu0 %1472
      %v1474 = vsel %vm1066, %v1470, -inf
      %1475 = vmax.xlane.f32.xlu0 %v1474
      %v1476 = vpop.xlane.xlu0 %1475
      %v1477 = vsub.f32 %v1469, %v1473
      %v1478 = vsub.f32 %v1470, %v1476
      %v1479 = vmul.f32 %v1477, 1.442695
      %v1480 = vpow.pop %v1479
      %v1481 = vmul.f32 %v1478, 1.442695
      %v1482 = vpow.pop %v1481
      %v1483 = vsel %vm1066, %v1480, 0.0
      %1484 = vadd.xlane.f32.xlu0 %v1483
      %v1485 = vpop.xlane.xlu0 %1484
      %v1486 = vsel %vm1066, %v1482, 0.0
      %1487 = vadd.xlane.f32.xlu0 %v1486
      %v1488 = vpop.xlane.xlu0 %1487
      %v1489 = vrcp.pop %v1485
      %v1490 = vrcp.pop %v1488
      %v1491 = vmul.f32 %v1480, %v1489
      %v1492 = vmul.f32 %v1482, %v1490
      %1493 = vrot.lane.b32.xlu0 %v968, 80
      %v1494 = vpop.permute.xlu0 %1493
      %1495 = vrot.lane.b32.xlu0 %v973, 80
      %v1496 = vpop.permute.xlu0 %1495
      %v1500 = vsel %vm1066, %v1491, 0
      %v1503 = vsel %vm1066, %v1492, 0
      %1505 = vmatprep.subr.mxu0 0.0
      %1506 = vmatpush1.msra.mxu0 %v1494
      %1507 = vmatprep.subr.mxu0 0.0
      %1508 = vmatpush1.msra.mxu0 %v1496
      %1509 = vmatprep.subr.mxu0 0.0
      %1510 = vmatpush1.msra.mxu0 0.0
      %1511 = vmatprep.subr.mxu0 0.0
      %1512 = vmatpush1.msra.mxu0 0.0
      %1513 = vmatprep.subr.mxu0 0.0
      %1514 = vmatpush1.msra.mxu0 0.0
      %1515 = vmatprep.subr.mxu0 0.0
      %1516 = vmatpush1.msra.mxu0 0.0
      %1517 = vmatprep.subr.mxu0 0.0
      %1518 = vmatpush1.msra.mxu0 0.0
      %1519 = vmatprep.subr.mxu0 0.0
      %1520 = vmatpush1.msra.mxu0 0.0
      %1521 = vmatprep.subr.mxu0 0.0
      %1522 = vmatpush1.msra.mxu0 0.0
      %1523 = vmatprep.subr.mxu0 0.0
      %1524 = vmatpush1.msra.mxu0 0.0
      %1525 = vmatprep.subr.mxu0 0.0
      %1526 = vmatpush1.msra.mxu0 0.0
      %1527 = vmatprep.subr.mxu0 0.0
      %1528 = vmatpush1.msra.mxu0 0.0
      %1529 = vmatprep.subr.mxu0 0.0
      %1530 = vmatpush1.msra.mxu0 0.0
      %1531 = vmatprep.subr.mxu0 0.0
      %1532 = vmatpush1.msra.mxu0 0.0
      %1533 = vmatprep.subr.mxu0 0.0
      %1534 = vmatpush1.msra.mxu0 0.0
      %1535 = vmatprep.subr.mxu0 0.0
      %1536 = vmatpush1.msra.mxu0 0.0
      %1537 = vmatprep.subr.mxu0 0.0
      %1538 = vmatpush1.msra.mxu0 0.0
      %1539 = vmatprep.subr.mxu0 0.0
      %1540 = vmatpush1.msra.mxu0 0.0
      %1541 = vmatprep.subr.mxu0 0.0
      %1542 = vmatpush1.msra.mxu0 0.0
      %1543 = vmatprep.subr.mxu0 0.0
      %1544 = vmatpush1.msra.mxu0 0.0
      %1545 = vmatprep.subr.mxu0 0.0
      %1546 = vmatpush1.msra.mxu0 0.0
      %1547 = vmatprep.subr.mxu0 0.0
      %1548 = vmatpush1.msra.mxu0 0.0
      %1549 = vmatprep.subr.mxu0 0.0
      %1550 = vmatpush1.msra.mxu0 0.0
      %1551 = vmatprep.subr.mxu0 0.0
      %1552 = vmatpush1.msra.mxu0 0.0
      %1553 = vmatprep.subr.mxu0 0.0
      %1554 = vmatpush1.msra.mxu0 0.0
      %1555 = vmatprep.subr.mxu0 0.0
      %1556 = vmatpush1.msra.mxu0 0.0
      %1557 = vmatprep.subr.mxu0 0.0
      %1558 = vmatpush1.msra.mxu0 0.0
      %1559 = vmatprep.subr.mxu0 0.0
      %1560 = vmatpush1.msra.mxu0 0.0
      %1561 = vmatprep.subr.mxu0 0.0
      %1562 = vmatpush1.msra.mxu0 0.0
      %1563 = vmatprep.subr.mxu0 0.0
      %1564 = vmatpush1.msra.mxu0 0.0
      %1565 = vmatprep.subr.mxu0 0.0
      %1566 = vmatpush1.msra.mxu0 0.0
      %1567 = vmatprep.subr.mxu0 0.0
      %1568 = vmatpush1.msra.mxu0 0.0
      %1569 = vmatprep.mubr.f32.mxu0 0.0
      %1570 = vmatmul.mubr.f32.gmra.mrb[0].mxu0 %v1500
      %v1571 = vpop.f32.mrb[0].mxu0
      %v1572 = vadd.f32 0.0, %v1571
      %v1573 = vpop.f32.mrb[0].mxu0
      %1574 = vmatprep.mubr.f32.mxu0 0.0
      %1575 = vmatmul.mubr.f32.gmra.mrb[0].mxu0 %v1503
      %v1576 = vpop.f32.mrb[0].mxu0
      %v1577 = vadd.f32 0.0, %v1576
      %v1578 = vpop.f32.mrb[0].mxu0
      %1579 = vdwg.mxu0
      %1580 = vrot.lane.b32.xlu0 %v879, 104
      %v1581 = vpop.permute.xlu0 %1580
      %1582 = vrot.lane.b32.xlu0 %v884, 104
      %v1583 = vpop.permute.xlu0 %1582
      %1584 = vrot.lane.b32.xlu0 %v968, 104
      %v1585 = vpop.permute.xlu0 %1584
      %1586 = vrot.lane.b32.xlu0 %v973, 104
      %v1587 = vpop.permute.xlu0 %1586
      %v1588 = vsel %vm976, %v1581, 0
      %v1590 = vsel %vm976, %v1583, 0
      %v1592 = vsel %vm976, %v1585, 0
      %v1594 = vsel %vm976, %v1587, 0
      %1596 = vmatprep.subr.mxu0 0.0
      %1597 = vmatpush1.xpose.msra.mxu0 %v1592
      %1598 = vmatprep.subr.mxu0 0.0
      %1599 = vmatpush1.xpose.msra.mxu0 %v1594
      %1600 = vmatprep.subr.mxu0 0.0
      %1601 = vmatpush1.xpose.msra.mxu0 0.0
      %1602 = vmatprep.subr.mxu0 0.0
      %1603 = vmatpush1.xpose.msra.mxu0 0.0
      %1604 = vmatprep.subr.mxu0 0.0
      %1605 = vmatpush1.xpose.msra.mxu0 0.0
      %1606 = vmatprep.subr.mxu0 0.0
      %1607 = vmatpush1.xpose.msra.mxu0 0.0
      %1608 = vmatprep.subr.mxu0 0.0
      %1609 = vmatpush1.xpose.msra.mxu0 0.0
      %1610 = vmatprep.subr.mxu0 0.0
      %1611 = vmatpush1.xpose.msra.mxu0 0.0
      %1612 = vmatprep.subr.mxu0 0.0
      %1613 = vmatpush1.xpose.msra.mxu0 0.0
      %1614 = vmatprep.subr.mxu0 0.0
      %1615 = vmatpush1.xpose.msra.mxu0 0.0
      %1616 = vmatprep.subr.mxu0 0.0
      %1617 = vmatpush1.xpose.msra.mxu0 0.0
      %1618 = vmatprep.subr.mxu0 0.0
      %1619 = vmatpush1.xpose.msra.mxu0 0.0
      %1620 = vmatprep.subr.mxu0 0.0
      %1621 = vmatpush1.xpose.msra.mxu0 0.0
      %1622 = vmatprep.subr.mxu0 0.0
      %1623 = vmatpush1.xpose.msra.mxu0 0.0
      %1624 = vmatprep.subr.mxu0 0.0
      %1625 = vmatpush1.xpose.msra.mxu0 0.0
      %1626 = vmatprep.subr.mxu0 0.0
      %1627 = vmatpush1.xpose.msra.mxu0 0.0
      %1628 = vmatprep.subr.mxu0 0.0
      %1629 = vmatpush1.xpose.msra.mxu0 0.0
      %1630 = vmatprep.subr.mxu0 0.0
      %1631 = vmatpush1.xpose.msra.mxu0 0.0
      %1632 = vmatprep.subr.mxu0 0.0
      %1633 = vmatpush1.xpose.msra.mxu0 0.0
      %1634 = vmatprep.subr.mxu0 0.0
      %1635 = vmatpush1.xpose.msra.mxu0 0.0
      %1636 = vmatprep.subr.mxu0 0.0
      %1637 = vmatpush1.xpose.msra.mxu0 0.0
      %1638 = vmatprep.subr.mxu0 0.0
      %1639 = vmatpush1.xpose.msra.mxu0 0.0
      %1640 = vmatprep.subr.mxu0 0.0
      %1641 = vmatpush1.xpose.msra.mxu0 0.0
      %1642 = vmatprep.subr.mxu0 0.0
      %1643 = vmatpush1.xpose.msra.mxu0 0.0
      %1644 = vmatprep.subr.mxu0 0.0
      %1645 = vmatpush1.xpose.msra.mxu0 0.0
      %1646 = vmatprep.subr.mxu0 0.0
      %1647 = vmatpush1.xpose.msra.mxu0 0.0
      %1648 = vmatprep.subr.mxu0 0.0
      %1649 = vmatpush1.xpose.msra.mxu0 0.0
      %1650 = vmatprep.subr.mxu0 0.0
      %1651 = vmatpush1.xpose.msra.mxu0 0.0
      %1652 = vmatprep.subr.mxu0 0.0
      %1653 = vmatpush1.xpose.msra.mxu0 0.0
      %1654 = vmatprep.subr.mxu0 0.0
      %1655 = vmatpush1.xpose.msra.mxu0 0.0
      %1656 = vmatprep.subr.mxu0 0.0
      %1657 = vmatpush1.xpose.msra.mxu0 0.0
      %1658 = vmatprep.subr.mxu0 0.0
      %1659 = vmatpush1.xpose.msra.mxu0 0.0
      %1660 = vmatprep.mubr.f32.mxu0 0.0
      %1661 = vmatmul.mubr.f32.gmra.mrb[0].mxu0 %v1588
      %v1662 = vpop.f32.mrb[0].mxu0
      %v1663 = vadd.f32 0.0, %v1662
      %v1664 = vpop.f32.mrb[0].mxu0
      %1665 = vmatprep.mubr.f32.mxu0 0.0
      %1666 = vmatmul.mubr.f32.gmra.mrb[0].mxu0 %v1590
      %v1667 = vpop.f32.mrb[0].mxu0
      %v1668 = vadd.f32 0.0, %v1667
      %v1669 = vpop.f32.mrb[0].mxu0
      %1670 = vdwg.mxu0
      %v1671 = vmul.f32 %v1663, 0.35355338
      %v1672 = vmul.f32 %v1668, 0.35355338
      %v1673 = vsel %vm1066, %v1671, -inf
      %1674 = vmax.xlane.f32.xlu0 %v1673
      %v1675 = vpop.xlane.xlu0 %1674
      %v1676 = vsel %vm1066, %v1672, -inf
      %1677 = vmax.xlane.f32.xlu0 %v1676
      %v1678 = vpop.xlane.xlu0 %1677
      %v1679 = vsub.f32 %v1671, %v1675
      %v1680 = vsub.f32 %v1672, %v1678
      %v1681 = vmul.f32 %v1679, 1.442695
      %v1682 = vpow.pop %v1681
      %v1683 = vmul.f32 %v1680, 1.442695
      %v1684 = vpow.pop %v1683
      %v1685 = vsel %vm1066, %v1682, 0.0
      %1686 = vadd.xlane.f32.xlu0 %v1685
      %v1687 = vpop.xlane.xlu0 %1686
      %v1688 = vsel %vm1066, %v1684, 0.0
      %1689 = vadd.xlane.f32.xlu0 %v1688
      %v1690 = vpop.xlane.xlu0 %1689
      %v1691 = vrcp.pop %v1687
      %v1692 = vrcp.pop %v1690
      %v1693 = vmul.f32 %v1682, %v1691
      %v1694 = vmul.f32 %v1684, %v1692
      %1695 = vrot.lane.b32.xlu0 %v968, 72
      %v1696 = vpop.permute.xlu0 %1695
      %1697 = vrot.lane.b32.xlu0 %v973, 72
      %v1698 = vpop.permute.xlu0 %1697
      %v1702 = vsel %vm1066, %v1693, 0
      %v1705 = vsel %vm1066, %v1694, 0
      %1707 = vmatprep.subr.mxu0 0.0
      %1708 = vmatpush1.msra.mxu0 %v1696
      %1709 = vmatprep.subr.mxu0 0.0
      %1710 = vmatpush1.msra.mxu0 %v1698
      %1711 = vmatprep.subr.mxu0 0.0
      %1712 = vmatpush1.msra.mxu0 0.0
      %1713 = vmatprep.subr.mxu0 0.0
      %1714 = vmatpush1.msra.mxu0 0.0
      %1715 = vmatprep.subr.mxu0 0.0
      %1716 = vmatpush1.msra.mxu0 0.0
      %1717 = vmatprep.subr.mxu0 0.0
      %1718 = vmatpush1.msra.mxu0 0.0
      %1719 = vmatprep.subr.mxu0 0.0
      %1720 = vmatpush1.msra.mxu0 0.0
      %1721 = vmatprep.subr.mxu0 0.0
      %1722 = vmatpush1.msra.mxu0 0.0
      %1723 = vmatprep.subr.mxu0 0.0
      %1724 = vmatpush1.msra.mxu0 0.0
      %1725 = vmatprep.subr.mxu0 0.0
      %1726 = vmatpush1.msra.mxu0 0.0
      %1727 = vmatprep.subr.mxu0 0.0
      %1728 = vmatpush1.msra.mxu0 0.0
      %1729 = vmatprep.subr.mxu0 0.0
      %1730 = vmatpush1.msra.mxu0 0.0
      %1731 = vmatprep.subr.mxu0 0.0
      %1732 = vmatpush1.msra.mxu0 0.0
      %1733 = vmatprep.subr.mxu0 0.0
      %1734 = vmatpush1.msra.mxu0 0.0
      %1735 = vmatprep.subr.mxu0 0.0
      %1736 = vmatpush1.msra.mxu0 0.0
      %1737 = vmatprep.subr.mxu0 0.0
      %1738 = vmatpush1.msra.mxu0 0.0
      %1739 = vmatprep.subr.mxu0 0.0
      %1740 = vmatpush1.msra.mxu0 0.0
      %1741 = vmatprep.subr.mxu0 0.0
      %1742 = vmatpush1.msra.mxu0 0.0
      %1743 = vmatprep.subr.mxu0 0.0
      %1744 = vmatpush1.msra.mxu0 0.0
      %1745 = vmatprep.subr.mxu0 0.0
      %1746 = vmatpush1.msra.mxu0 0.0
      %1747 = vmatprep.subr.mxu0 0.0
      %1748 = vmatpush1.msra.mxu0 0.0
      %1749 = vmatprep.subr.mxu0 0.0
      %1750 = vmatpush1.msra.mxu0 0.0
      %1751 = vmatprep.subr.mxu0 0.0
      %1752 = vmatpush1.msra.mxu0 0.0
      %1753 = vmatprep.subr.mxu0 0.0
      %1754 = vmatpush1.msra.mxu0 0.0
      %1755 = vmatprep.subr.mxu0 0.0
      %1756 = vmatpush1.msra.mxu0 0.0
      %1757 = vmatprep.subr.mxu0 0.0
      %1758 = vmatpush1.msra.mxu0 0.0
      %1759 = vmatprep.subr.mxu0 0.0
      %1760 = vmatpush1.msra.mxu0 0.0
      %1761 = vmatprep.subr.mxu0 0.0
      %1762 = vmatpush1.msra.mxu0 0.0
      %1763 = vmatprep.subr.mxu0 0.0
      %1764 = vmatpush1.msra.mxu0 0.0
      %1765 = vmatprep.subr.mxu0 0.0
      %1766 = vmatpush1.msra.mxu0 0.0
      %1767 = vmatprep.subr.mxu0 0.0
      %1768 = vmatpush1.msra.mxu0 0.0
      %1769 = vmatprep.subr.mxu0 0.0
      %1770 = vmatpush1.msra.mxu0 0.0
      %1771 = vmatprep.mubr.f32.mxu0 0.0
      %1772 = vmatmul.mubr.f32.gmra.mrb[0].mxu0 %v1702
      %v1773 = vpop.f32.mrb[0].mxu0
      %v1774 = vadd.f32 0.0, %v1773
      %v1775 = vpop.f32.mrb[0].mxu0
      %1776 = vmatprep.mubr.f32.mxu0 0.0
      %1777 = vmatmul.mubr.f32.gmra.mrb[0].mxu0 %v1705
      %v1778 = vpop.f32.mrb[0].mxu0
      %v1779 = vadd.f32 0.0, %v1778
      %v1780 = vpop.f32.mrb[0].mxu0
      %1781 = vdwg.mxu0
      %1784 = vrot.lane.b32.xlu0 %v1370, 8
      %v1785 = vpop.permute.xlu0 %1784
      %1786 = vrot.lane.b32.xlu0 %v1375, 8
      %v1787 = vpop.permute.xlu0 %1786
      %1792 = vrot.lane.b32.xlu0 %v1572, 16
      %v1793 = vpop.permute.xlu0 %1792
      %1794 = vrot.lane.b32.xlu0 %v1577, 16
      %v1795 = vpop.permute.xlu0 %1794
      %1800 = vrot.lane.b32.xlu0 %v1774, 24
      %v1801 = vpop.permute.xlu0 %1800
      %1802 = vrot.lane.b32.xlu0 %v1779, 24
      %v1803 = vpop.permute.xlu0 %1802
      %v1806 = vsel %vm976, %v1168, %v1785
      %v1807 = vsel %vm976, %v1173, %v1787
      %v1808 = vsel %vm1066, %v1806, %v1793
      %v1809 = vsel %vm1066, %v1807, %v1795
      %vm1810 = vcmask 195584
      %v1811 = vsel %vm1810, %v1808, %v1801
      %v1812 = vsel %vm1810, %v1809, %v1803
      %v1813 = vld [vmem:[%s7] sm:$0xff]
      %v1814 = vld [vmem:[%s7 + $0x8] sm:$0xff]
      %v1815 = vld [vmem:[%s7 + $0x10] sm:$0xff]
      %v1816 = vld [vmem:[%s7 + $0x18] sm:$0xff]
      %v1818 = vsel %vm460, %v1811, 0
      %v1821 = vsel %vm460, %v1812, 0
      %1823 = vmatprep.subr.mxu0 0.0
      %1824 = vmatpush1.msra.mxu0 %v1813
      %1825 = vmatprep.subr.mxu0 0.0
      %1826 = vmatpush1.msra.mxu0 %v1814
      %1827 = vmatprep.subr.mxu0 0.0
      %1828 = vmatpush1.msra.mxu0 %v1815
      %1829 = vmatprep.subr.mxu0 0.0
      %1830 = vmatpush1.msra.mxu0 %v1816
      %1831 = vmatprep.subr.mxu0 0.0
      %1832 = vmatpush1.msra.mxu0 0.0
      %1833 = vmatprep.subr.mxu0 0.0
      %1834 = vmatpush1.msra.mxu0 0.0
      %1835 = vmatprep.subr.mxu0 0.0
      %1836 = vmatpush1.msra.mxu0 0.0
      %1837 = vmatprep.subr.mxu0 0.0
      %1838 = vmatpush1.msra.mxu0 0.0
      %1839 = vmatprep.subr.mxu0 0.0
      %1840 = vmatpush1.msra.mxu0 0.0
      %1841 = vmatprep.subr.mxu0 0.0
      %1842 = vmatpush1.msra.mxu0 0.0
      %1843 = vmatprep.subr.mxu0 0.0
      %1844 = vmatpush1.msra.mxu0 0.0
      %1845 = vmatprep.subr.mxu0 0.0
      %1846 = vmatpush1.msra.mxu0 0.0
      %1847 = vmatprep.subr.mxu0 0.0
      %1848 = vmatpush1.msra.mxu0 0.0
      %1849 = vmatprep.subr.mxu0 0.0
      %1850 = vmatpush1.msra.mxu0 0.0
      %1851 = vmatprep.subr.mxu0 0.0
      %1852 = vmatpush1.msra.mxu0 0.0
      %1853 = vmatprep.subr.mxu0 0.0
      %1854 = vmatpush1.msra.mxu0 0.0
      %1855 = vmatprep.subr.mxu0 0.0
      %1856 = vmatpush1.msra.mxu0 0.0
      %1857 = vmatprep.subr.mxu0 0.0
      %1858 = vmatpush1.msra.mxu0 0.0
      %1859 = vmatprep.subr.mxu0 0.0
      %1860 = vmatpush1.msra.mxu0 0.0
      %1861 = vmatprep.subr.mxu0 0.0
      %1862 = vmatpush1.msra.mxu0 0.0
      %1863 = vmatprep.subr.mxu0 0.0
      %1864 = vmatpush1.msra.mxu0 0.0
      %1865 = vmatprep.subr.mxu0 0.0
      %1866 = vmatpush1.msra.mxu0 0.0
      %1867 = vmatprep.subr.mxu0 0.0
      %1868 = vmatpush1.msra.mxu0 0.0
      %1869 = vmatprep.subr.mxu0 0.0
      %1870 = vmatpush1.msra.mxu0 0.0
      %1871 = vmatprep.subr.mxu0 0.0
      %1872 = vmatpush1.msra.mxu0 0.0
      %1873 = vmatprep.subr.mxu0 0.0
      %1874 = vmatpush1.msra.mxu0 0.0
      %1875 = vmatprep.subr.mxu0 0.0
      %1876 = vmatpush1.msra.mxu0 0.0
      %1877 = vmatprep.subr.mxu0 0.0
      %1878 = vmatpush1.msra.mxu0 0.0
      %1879 = vmatprep.subr.mxu0 0.0
      %1880 = vmatpush1.msra.mxu0 0.0
      %1881 = vmatprep.subr.mxu0 0.0
      %1882 = vmatpush1.msra.mxu0 0.0
      %1883 = vmatprep.subr.mxu0 0.0
      %1884 = vmatpush1.msra.mxu0 0.0
      %1885 = vmatprep.subr.mxu0 0.0
      %1886 = vmatpush1.msra.mxu0 0.0
      %1887 = vmatprep.mubr.f32.mxu0 0.0
      %1888 = vmatmul.mubr.f32.gmra.mrb[0].mxu0 %v1818
      %v1889 = vpop.f32.mrb[0].mxu0
      %v1890 = vadd.f32 0.0, %v1889
      %v1891 = vpop.f32.mrb[0].mxu0
      %1892 = vmatprep.mubr.f32.mxu0 0.0
      %1893 = vmatmul.mubr.f32.gmra.mrb[0].mxu0 %v1821
      %v1894 = vpop.f32.mrb[0].mxu0
      %v1895 = vadd.f32 0.0, %v1894
      %v1896 = vpop.f32.mrb[0].mxu0
      %1897 = vdwg.mxu0
      %1898 = vst.msk [vmem:[%s325] sm:$0xff] %vm460, %v1890
      %1899 = vst.msk [vmem:[%s325 + $0x8] sm:$0xff] %vm460, %v1895
      %p1900 = scmp.lt.s32.totalorder %s19, 1
      %s1901 = scalar_select %p1900, %s19, 1
      %s1902 = smul.addr %s1901, 2
      %s1903 = smul.addr %s1902, 8
      %s1904 = scalar_lea.vmem %s8, %s1903
      // Predicated region
      $region53: #{ag_rope_encoder_layer_forward.3} parent=51 // pred_check
        %p1905 = pneg %p215
      $region54: #{ag_rope_encoder_layer_forward.3} parent=51 // pred_check_branch
        %1907 = sbr.rel (%p1905) target = $region56
      $region55: #{ag_rope_encoder_layer_forward.3} parent=51 // pred_region
        _
      $region56: #{ag_rope_encoder_layer_forward.3} parent=51 // pred_fallthru
        _
    $region52: #{ag_rope_encoder_layer_forward.3} parent=5 // pred_fallthru
      _
    %p1908 = scmp.le.s32.totalorder 2, %s14
    // Predicated region
    $region57: #{ag_rope_encoder_layer_forward.3} parent=5 // pred_check
      %p1909 = pneg %p1908
    $region58: #{ag_rope_encoder_layer_forward.3} parent=5 // pred_check_branch
      %1911 = sbr.rel (%p1909) target = $region60
    $region59: #{ag_rope_encoder_layer_forward.3} parent=5 // pred_region
      %s1912 = ssub.s32 %s14, 2
      // Predicated region
      $region61: #{ag_rope_encoder_layer_forward.3} parent=59 // pred_check
        %p1913 = pneg %p221
      $region62: #{ag_rope_encoder_layer_forward.3} parent=59 // pred_check_branch
        %1915 = sbr.rel (%p1913) target = $region64
      $region63: #{ag_rope_encoder_layer_forward.3} parent=59 // pred_region
        %p1916 = scmp.lt.s32.totalorder %s20, 1
        %s1917 = scalar_select %p1916, %s20, 1
        %s1918 = smul.addr %s1917, 2
        %s1919 = smul.addr %s1918, 8
        %s1920 = scalar_lea.vmem %s8, %s1919
      $region64: #{ag_rope_encoder_layer_forward.3} parent=59 // pred_fallthru
        _
    $region60: #{ag_rope_encoder_layer_forward.3} parent=5 // pred_fallthru
      _
  $region6: #{ag_rope_encoder_layer_forward.3} parent=0 // loop_footer
    %s18 = sadd.s32 1, %s14
  $region7: #{ag_rope_encoder_layer_forward.3} parent=0 // loop_footer_branch
    %13 = sbr.rel target = $region3
  $region8: #{ag_rope_encoder_layer_forward.3} parent=0 // loop_exit
    _

// kernel: ag_rope_encoder_layer_forward.4
$region0: #{ag_rope_encoder_layer_forward.4}
  #allocation0 [shape = 'u32[]', space=smem, size = 0x4, offset = 0x4, fixed_abs, tag = 'smem constant byte address 0x4 - core index']
  #allocation1 [shape = 'u32[144,128]{1,0:T(1,128)}', space=vmem, size = 0x12000, scoped, tag = 'internal scratch']
  %s0 = inlined_call_operand.vmem [shape: f32[128,128], index: 0, kind: input, shape index: {}]
  %s1 = inlined_call_operand.vmem [shape: f32[128,128], index: 1, kind: input, shape index: {}]
  %s2 = inlined_call_operand.vmem [shape: f32[128,128], index: 2, kind: input, shape index: {}]
  %s3 = inlined_call_operand.vmem [shape: f32[128,128], index: 3, kind: input, shape index: {}]
  %s4 = inlined_call_operand.vmem [shape: f32[128,128], index: 4, kind: output, shape index: {}]
  %s5 = sld [smem:[#allocation0]]
  $region26: #{ag_rope_encoder_layer_forward.4} parent=0
    _
  %s7 = ssub.s32 1, %s5
  %s8 = scalar_select 0, %s7, %s5
  // Predicated region
  $region2: #{ag_rope_encoder_layer_forward.4} parent=0 // pred_check
    _
  $region3: #{ag_rope_encoder_layer_forward.4} parent=0 // pred_check_branch
    %10 = sbr.rel (0) target = $region5
  $region4: #{ag_rope_encoder_layer_forward.4} parent=0 // pred_region
    _
  $region5: #{ag_rope_encoder_layer_forward.4} parent=0 // pred_fallthru
    _
  // Predicated region
  $region6: #{ag_rope_encoder_layer_forward.4} parent=0 // pred_check
    _
  $region7: #{ag_rope_encoder_layer_forward.4} parent=0 // pred_check_branch
    %12 = sbr.rel (0) target = $region9
  $region8: #{ag_rope_encoder_layer_forward.4} parent=0 // pred_region
    _
  $region9: #{ag_rope_encoder_layer_forward.4} parent=0 // pred_fallthru
    _
  // Predicated region
  $region10: #{ag_rope_encoder_layer_forward.4} parent=0 // pred_check
    _
  $region11: #{ag_rope_encoder_layer_forward.4} parent=0 // pred_check_branch
    %14 = sbr.rel (0) target = $region13
  $region12: #{ag_rope_encoder_layer_forward.4} parent=0 // pred_region
    _
  $region13: #{ag_rope_encoder_layer_forward.4} parent=0 // pred_fallthru
    _
  // Predicated region
  $region14: #{ag_rope_encoder_layer_forward.4} parent=0 // pred_check
    _
  $region15: #{ag_rope_encoder_layer_forward.4} parent=0 // pred_check_branch
    %16 = sbr.rel (0) target = $region17
  $region16: #{ag_rope_encoder_layer_forward.4} parent=0 // pred_region
    _
  $region17: #{ag_rope_encoder_layer_forward.4} parent=0 // pred_fallthru
    _
  %v17 = vld [vmem:[%s0] sm:$0xff]
  %v18 = vld [vmem:[%s0 + $0x8] sm:$0xff]
  %v19 = vld [vmem:[%s0 + $0x10] sm:$0xff]
  %v20 = vld [vmem:[%s0 + $0x18] sm:$0xff]
  %v21 = vld [vmem:[%s0 + $0x20] sm:$0xff]
  %v22 = vld [vmem:[%s0 + $0x28] sm:$0xff]
  %v23 = vld [vmem:[%s0 + $0x30] sm:$0xff]
  %v24 = vld [vmem:[%s0 + $0x38] sm:$0xff]
  %v25 = vld [vmem:[%s0 + $0x40] sm:$0xff]
  %v26 = vld [vmem:[%s0 + $0x48] sm:$0xff]
  %v27 = vld [vmem:[%s0 + $0x50] sm:$0xff]
  %v28 = vld [vmem:[%s0 + $0x58] sm:$0xff]
  %v29 = vld [vmem:[%s0 + $0x60] sm:$0xff]
  %v30 = vld [vmem:[%s0 + $0x68] sm:$0xff]
  %v31 = vld [vmem:[%s0 + $0x70] sm:$0xff]
  %v32 = vld [vmem:[%s0 + $0x78] sm:$0xff]
  %v33 = vld [vmem:[%s2] sm:$0xff]
  %v34 = vld [vmem:[%s2 + $0x8] sm:$0xff]
  %v35 = vld [vmem:[%s2 + $0x10] sm:$0xff]
  %v36 = vld [vmem:[%s2 + $0x18] sm:$0xff]
  %v37 = vld [vmem:[%s2 + $0x20] sm:$0xff]
  %v38 = vld [vmem:[%s2 + $0x28] sm:$0xff]
  %v39 = vld [vmem:[%s2 + $0x30] sm:$0xff]
  %v40 = vld [vmem:[%s2 + $0x38] sm:$0xff]
  %v41 = vld [vmem:[%s2 + $0x40] sm:$0xff]
  %v42 = vld [vmem:[%s2 + $0x48] sm:$0xff]
  %v43 = vld [vmem:[%s2 + $0x50] sm:$0xff]
  %v44 = vld [vmem:[%s2 + $0x58] sm:$0xff]
  %v45 = vld [vmem:[%s2 + $0x60] sm:$0xff]
  %v46 = vld [vmem:[%s2 + $0x68] sm:$0xff]
  %v47 = vld [vmem:[%s2 + $0x70] sm:$0xff]
  %v48 = vld [vmem:[%s2 + $0x78] sm:$0xff]
  %v49 = vld [vmem:[%s1] sm:$0xff]
  %v50 = vld [vmem:[%s1 + $0x8] sm:$0xff]
  %v51 = vld [vmem:[%s1 + $0x10] sm:$0xff]
  %v52 = vld [vmem:[%s1 + $0x18] sm:$0xff]
  %v53 = vld [vmem:[%s1 + $0x20] sm:$0xff]
  %v54 = vld [vmem:[%s1 + $0x28] sm:$0xff]
  %v55 = vld [vmem:[%s1 + $0x30] sm:$0xff]
  %v56 = vld [vmem:[%s1 + $0x38] sm:$0xff]
  %v57 = vld [vmem:[%s1 + $0x40] sm:$0xff]
  %v58 = vld [vmem:[%s1 + $0x48] sm:$0xff]
  %v59 = vld [vmem:[%s1 + $0x50] sm:$0xff]
  %v60 = vld [vmem:[%s1 + $0x58] sm:$0xff]
  %v61 = vld [vmem:[%s1 + $0x60] sm:$0xff]
  %v62 = vld [vmem:[%s1 + $0x68] sm:$0xff]
  %v63 = vld [vmem:[%s1 + $0x70] sm:$0xff]
  %v64 = vld [vmem:[%s1 + $0x78] sm:$0xff]
  %v65 = vld [vmem:[%s3] sm:$0xff]
  %v66 = vld [vmem:[%s3 + $0x8] sm:$0xff]
  %v67 = vld [vmem:[%s3 + $0x10] sm:$0xff]
  %v68 = vld [vmem:[%s3 + $0x18] sm:$0xff]
  %v69 = vld [vmem:[%s3 + $0x20] sm:$0xff]
  %v70 = vld [vmem:[%s3 + $0x28] sm:$0xff]
  %v71 = vld [vmem:[%s3 + $0x30] sm:$0xff]
  %v72 = vld [vmem:[%s3 + $0x38] sm:$0xff]
  %v73 = vld [vmem:[%s3 + $0x40] sm:$0xff]
  %v74 = vld [vmem:[%s3 + $0x48] sm:$0xff]
  %v75 = vld [vmem:[%s3 + $0x50] sm:$0xff]
  %v76 = vld [vmem:[%s3 + $0x58] sm:$0xff]
  %v77 = vld [vmem:[%s3 + $0x60] sm:$0xff]
  %v78 = vld [vmem:[%s3 + $0x68] sm:$0xff]
  %v79 = vld [vmem:[%s3 + $0x70] sm:$0xff]
  %v80 = vld [vmem:[%s3 + $0x78] sm:$0xff]
  %81 = vmatprep.subr.mxu0 0.0
  %82 = vmatpush1.msra.mxu0 %v65
  %83 = vmatprep.subr.mxu0 0.0
  %84 = vmatpush1.msra.mxu0 %v66
  %85 = vmatprep.subr.mxu0 0.0
  %86 = vmatpush1.msra.mxu0 %v67
  %87 = vmatprep.subr.mxu0 0.0
  %88 = vmatpush1.msra.mxu0 %v68
  %89 = vmatprep.subr.mxu0 0.0
  %90 = vmatpush1.msra.mxu0 %v69
  %91 = vmatprep.subr.mxu0 0.0
  %92 = vmatpush1.msra.mxu0 %v70
  %93 = vmatprep.subr.mxu0 0.0
  %94 = vmatpush1.msra.mxu0 %v71
  %95 = vmatprep.subr.mxu0 0.0
  %96 = vmatpush1.msra.mxu0 %v72
  %97 = vmatprep.subr.mxu0 0.0
  %98 = vmatpush1.msra.mxu0 %v73
  %99 = vmatprep.subr.mxu0 0.0
  %100 = vmatpush1.msra.mxu0 %v74
  %101 = vmatprep.subr.mxu0 0.0
  %102 = vmatpush1.msra.mxu0 %v75
  %103 = vmatprep.subr.mxu0 0.0
  %104 = vmatpush1.msra.mxu0 %v76
  %105 = vmatprep.subr.mxu0 0.0
  %106 = vmatpush1.msra.mxu0 %v77
  %107 = vmatprep.subr.mxu0 0.0
  %108 = vmatpush1.msra.mxu0 %v78
  %109 = vmatprep.subr.mxu0 0.0
  %110 = vmatpush1.msra.mxu0 %v79
  %111 = vmatprep.subr.mxu0 0.0
  %112 = vmatpush1.msra.mxu0 %v80
  %113 = vmatprep.subr.mxu0 0.0
  %114 = vmatpush1.msra.mxu0 0.0
  %115 = vmatprep.subr.mxu0 0.0
  %116 = vmatpush1.msra.mxu0 0.0
  %117 = vmatprep.subr.mxu0 0.0
  %118 = vmatpush1.msra.mxu0 0.0
  %119 = vmatprep.subr.mxu0 0.0
  %120 = vmatpush1.msra.mxu0 0.0
  %121 = vmatprep.subr.mxu0 0.0
  %122 = vmatpush1.msra.mxu0 0.0
  %123 = vmatprep.subr.mxu0 0.0
  %124 = vmatpush1.msra.mxu0 0.0
  %125 = vmatprep.subr.mxu0 0.0
  %126 = vmatpush1.msra.mxu0 0.0
  %127 = vmatprep.subr.mxu0 0.0
  %128 = vmatpush1.msra.mxu0 0.0
  %129 = vmatprep.subr.mxu0 0.0
  %130 = vmatpush1.msra.mxu0 0.0
  %131 = vmatprep.subr.mxu0 0.0
  %132 = vmatpush1.msra.mxu0 0.0
  %133 = vmatprep.subr.mxu0 0.0
  %134 = vmatpush1.msra.mxu0 0.0
  %135 = vmatprep.subr.mxu0 0.0
  %136 = vmatpush1.msra.mxu0 0.0
  %137 = vmatprep.subr.mxu0 0.0
  %138 = vmatpush1.msra.mxu0 0.0
  %139 = vmatprep.subr.mxu0 0.0
  %140 = vmatpush1.msra.mxu0 0.0
  %141 = vmatprep.subr.mxu0 0.0
  %142 = vmatpush1.msra.mxu0 0.0
  %143 = vmatprep.subr.mxu0 0.0
  %144 = vmatpush1.msra.mxu0 0.0
  %145 = vmatprep.mubr.f32.mxu0 0.0
  %146 = vmatmul.mubr.f32.gmra.mrb[0].mxu0 %v49
  %v147 = vpop.f32.mrb[0].mxu0
  %v148 = vadd.f32 0.0, %v147
  %v149 = vpop.f32.mrb[0].mxu0
  %150 = vmatprep.mubr.f32.mxu0 0.0
  %151 = vmatmul.mubr.f32.gmra.mrb[0].mxu0 %v50
  %v152 = vpop.f32.mrb[0].mxu0
  %v153 = vadd.f32 0.0, %v152
  %v154 = vpop.f32.mrb[0].mxu0
  %155 = vmatprep.mubr.f32.mxu0 0.0
  %156 = vmatmul.mubr.f32.gmra.mrb[0].mxu0 %v51
  %v157 = vpop.f32.mrb[0].mxu0
  %v158 = vadd.f32 0.0, %v157
  %v159 = vpop.f32.mrb[0].mxu0
  %160 = vmatprep.mubr.f32.mxu0 0.0
  %161 = vmatmul.mubr.f32.gmra.mrb[0].mxu0 %v52
  %v162 = vpop.f32.mrb[0].mxu0
  %v163 = vadd.f32 0.0, %v162
  %v164 = vpop.f32.mrb[0].mxu0
  %165 = vmatprep.mubr.f32.mxu0 0.0
  %166 = vmatmul.mubr.f32.gmra.mrb[0].mxu0 %v53
  %v167 = vpop.f32.mrb[0].mxu0
  %v168 = vadd.f32 0.0, %v167
  %v169 = vpop.f32.mrb[0].mxu0
  %170 = vmatprep.mubr.f32.mxu0 0.0
  %171 = vmatmul.mubr.f32.gmra.mrb[0].mxu0 %v54
  %v172 = vpop.f32.mrb[0].mxu0
  %v173 = vadd.f32 0.0, %v172
  %v174 = vpop.f32.mrb[0].mxu0
  %175 = vmatprep.mubr.f32.mxu0 0.0
  %176 = vmatmul.mubr.f32.gmra.mrb[0].mxu0 %v55
  %v177 = vpop.f32.mrb[0].mxu0
  %v178 = vadd.f32 0.0, %v177
  %v179 = vpop.f32.mrb[0].mxu0
  %180 = vmatprep.mubr.f32.mxu0 0.0
  %181 = vmatmul.mubr.f32.gmra.mrb[0].mxu0 %v56
  %v182 = vpop.f32.mrb[0].mxu0
  %v183 = vadd.f32 0.0, %v182
  %v184 = vpop.f32.mrb[0].mxu0
  %185 = vmatprep.mubr.f32.mxu0 0.0
  %186 = vmatmul.mubr.f32.gmra.mrb[0].mxu0 %v57
  %v187 = vpop.f32.mrb[0].mxu0
  %v188 = vadd.f32 0.0, %v187
  %v189 = vpop.f32.mrb[0].mxu0
  %190 = vmatprep.mubr.f32.mxu0 0.0
  %191 = vmatmul.mubr.f32.gmra.mrb[0].mxu0 %v58
  %v192 = vpop.f32.mrb[0].mxu0
  %v193 = vadd.f32 0.0, %v192
  %v194 = vpop.f32.mrb[0].mxu0
  %195 = vmatprep.mubr.f32.mxu0 0.0
  %196 = vmatmul.mubr.f32.gmra.mrb[0].mxu0 %v59
  %v197 = vpop.f32.mrb[0].mxu0
  %v198 = vadd.f32 0.0, %v197
  %v199 = vpop.f32.mrb[0].mxu0
  %200 = vmatprep.mubr.f32.mxu0 0.0
  %201 = vmatmul.mubr.f32.gmra.mrb[0].mxu0 %v60
  %v202 = vpop.f32.mrb[0].mxu0
  %v203 = vadd.f32 0.0, %v202
  %v204 = vpop.f32.mrb[0].mxu0
  %205 = vmatprep.mubr.f32.mxu0 0.0
  %206 = vmatmul.mubr.f32.gmra.mrb[0].mxu0 %v61
  %v207 = vpop.f32.mrb[0].mxu0
  %v208 = vadd.f32 0.0, %v207
  %v209 = vpop.f32.mrb[0].mxu0
  %210 = vmatprep.mubr.f32.mxu0 0.0
  %211 = vmatmul.mubr.f32.gmra.mrb[0].mxu0 %v62
  %v212 = vpop.f32.mrb[0].mxu0
  %v213 = vadd.f32 0.0, %v212
  %v214 = vpop.f32.mrb[0].mxu0
  %215 = vmatprep.mubr.f32.mxu0 0.0
  %216 = vmatmul.mubr.f32.gmra.mrb[0].mxu0 %v63
  %v217 = vpop.f32.mrb[0].mxu0
  %v218 = vadd.f32 0.0, %v217
  %v219 = vpop.f32.mrb[0].mxu0
  %220 = vmatprep.mubr.f32.mxu0 0.0
  %221 = vmatmul.mubr.f32.gmra.mrb[0].mxu0 %v64
  %v222 = vpop.f32.mrb[0].mxu0
  %v223 = vadd.f32 0.0, %v222
  %v224 = vpop.f32.mrb[0].mxu0
  %225 = vdwg.mxu0
  %226 = vmatprep.subr.mxu0 0.0
  %227 = vmatpush1.msra.mxu0 %v33
  %228 = vmatprep.subr.mxu0 0.0
  %229 = vmatpush1.msra.mxu0 %v34
  %230 = vmatprep.subr.mxu0 0.0
  %231 = vmatpush1.msra.mxu0 %v35
  %232 = vmatprep.subr.mxu0 0.0
  %233 = vmatpush1.msra.mxu0 %v36
  %234 = vmatprep.subr.mxu0 0.0
  %235 = vmatpush1.msra.mxu0 %v37
  %236 = vmatprep.subr.mxu0 0.0
  %237 = vmatpush1.msra.mxu0 %v38
  %238 = vmatprep.subr.mxu0 0.0
  %239 = vmatpush1.msra.mxu0 %v39
  %240 = vmatprep.subr.mxu0 0.0
  %241 = vmatpush1.msra.mxu0 %v40
  %242 = vmatprep.subr.mxu0 0.0
  %243 = vmatpush1.msra.mxu0 %v41
  %244 = vmatprep.subr.mxu0 0.0
  %245 = vmatpush1.msra.mxu0 %v42
  %246 = vmatprep.subr.mxu0 0.0
  %247 = vmatpush1.msra.mxu0 %v43
  %248 = vmatprep.subr.mxu0 0.0
  %249 = vmatpush1.msra.mxu0 %v44
  %250 = vmatprep.subr.mxu0 0.0
  %251 = vmatpush1.msra.mxu0 %v45
  %252 = vmatprep.subr.mxu0 0.0
  %253 = vmatpush1.msra.mxu0 %v46
  %254 = vmatprep.subr.mxu0 0.0
  %255 = vmatpush1.msra.mxu0 %v47
  %256 = vmatprep.subr.mxu0 0.0
  %257 = vmatpush1.msra.mxu0 %v48
  %258 = vmatprep.subr.mxu0 0.0
  %259 = vmatpush1.msra.mxu0 0.0
  %260 = vmatprep.subr.mxu0 0.0
  %261 = vmatpush1.msra.mxu0 0.0
  %262 = vmatprep.subr.mxu0 0.0
  %263 = vmatpush1.msra.mxu0 0.0
  %264 = vmatprep.subr.mxu0 0.0
  %265 = vmatpush1.msra.mxu0 0.0
  %266 = vmatprep.subr.mxu0 0.0
  %267 = vmatpush1.msra.mxu0 0.0
  %268 = vmatprep.subr.mxu0 0.0
  %269 = vmatpush1.msra.mxu0 0.0
  %270 = vmatprep.subr.mxu0 0.0
  %271 = vmatpush1.msra.mxu0 0.0
  %272 = vmatprep.subr.mxu0 0.0
  %273 = vmatpush1.msra.mxu0 0.0
  %274 = vmatprep.subr.mxu0 0.0
  %275 = vmatpush1.msra.mxu0 0.0
  %276 = vmatprep.subr.mxu0 0.0
  %277 = vmatpush1.msra.mxu0 0.0
  %278 = vmatprep.subr.mxu0 0.0
  %279 = vmatpush1.msra.mxu0 0.0
  %280 = vmatprep.subr.mxu0 0.0
  %281 = vmatpush1.msra.mxu0 0.0
  %282 = vmatprep.subr.mxu0 0.0
  %283 = vmatpush1.msra.mxu0 0.0
  %284 = vmatprep.subr.mxu0 0.0
  %285 = vmatpush1.msra.mxu0 0.0
  %286 = vmatprep.subr.mxu0 0.0
  %287 = vmatpush1.msra.mxu0 0.0
  %288 = vmatprep.subr.mxu0 0.0
  %289 = vmatpush1.msra.mxu0 0.0
  %290 = vmatprep.mubr.f32.mxu0 0.0
  %291 = vmatmul.mubr.f32.gmra.mrb[0].mxu0 %v17
  %v292 = vpop.f32.mrb[0].mxu0
  %v293 = vadd.f32 %v148, %v292
  %v294 = vpop.f32.mrb[0].mxu0
  %295 = vmatprep.mubr.f32.mxu0 0.0
  %296 = vmatmul.mubr.f32.gmra.mrb[0].mxu0 %v18
  %v297 = vpop.f32.mrb[0].mxu0
  %v298 = vadd.f32 %v153, %v297
  %v299 = vpop.f32.mrb[0].mxu0
  %300 = vmatprep.mubr.f32.mxu0 0.0
  %301 = vmatmul.mubr.f32.gmra.mrb[0].mxu0 %v19
  %v302 = vpop.f32.mrb[0].mxu0
  %v303 = vadd.f32 %v158, %v302
  %v304 = vpop.f32.mrb[0].mxu0
  %305 = vmatprep.mubr.f32.mxu0 0.0
  %306 = vmatmul.mubr.f32.gmra.mrb[0].mxu0 %v20
  %v307 = vpop.f32.mrb[0].mxu0
  %v308 = vadd.f32 %v163, %v307
  %v309 = vpop.f32.mrb[0].mxu0
  %310 = vmatprep.mubr.f32.mxu0 0.0
  %311 = vmatmul.mubr.f32.gmra.mrb[0].mxu0 %v21
  %v312 = vpop.f32.mrb[0].mxu0
  %v313 = vadd.f32 %v168, %v312
  %v314 = vpop.f32.mrb[0].mxu0
  %315 = vmatprep.mubr.f32.mxu0 0.0
  %316 = vmatmul.mubr.f32.gmra.mrb[0].mxu0 %v22
  %v317 = vpop.f32.mrb[0].mxu0
  %v318 = vadd.f32 %v173, %v317
  %v319 = vpop.f32.mrb[0].mxu0
  %320 = vmatprep.mubr.f32.mxu0 0.0
  %321 = vmatmul.mubr.f32.gmra.mrb[0].mxu0 %v23
  %v322 = vpop.f32.mrb[0].mxu0
  %v323 = vadd.f32 %v178, %v322
  %v324 = vpop.f32.mrb[0].mxu0
  %325 = vmatprep.mubr.f32.mxu0 0.0
  %326 = vmatmul.mubr.f32.gmra.mrb[0].mxu0 %v24
  %v327 = vpop.f32.mrb[0].mxu0
  %v328 = vadd.f32 %v183, %v327
  %v329 = vpop.f32.mrb[0].mxu0
  %330 = vmatprep.mubr.f32.mxu0 0.0
  %331 = vmatmul.mubr.f32.gmra.mrb[0].mxu0 %v25
  %v332 = vpop.f32.mrb[0].mxu0
  %v333 = vadd.f32 %v188, %v332
  %v334 = vpop.f32.mrb[0].mxu0
  %335 = vmatprep.mubr.f32.mxu0 0.0
  %336 = vmatmul.mubr.f32.gmra.mrb[0].mxu0 %v26
  %v337 = vpop.f32.mrb[0].mxu0
  %v338 = vadd.f32 %v193, %v337
  %v339 = vpop.f32.mrb[0].mxu0
  %340 = vmatprep.mubr.f32.mxu0 0.0
  %341 = vmatmul.mubr.f32.gmra.mrb[0].mxu0 %v27
  %v342 = vpop.f32.mrb[0].mxu0
  %v343 = vadd.f32 %v198, %v342
  %v344 = vpop.f32.mrb[0].mxu0
  %345 = vmatprep.mubr.f32.mxu0 0.0
  %346 = vmatmul.mubr.f32.gmra.mrb[0].mxu0 %v28
  %v347 = vpop.f32.mrb[0].mxu0
  %v348 = vadd.f32 %v203, %v347
  %v349 = vpop.f32.mrb[0].mxu0
  %350 = vmatprep.mubr.f32.mxu0 0.0
  %351 = vmatmul.mubr.f32.gmra.mrb[0].mxu0 %v29
  %v352 = vpop.f32.mrb[0].mxu0
  %v353 = vadd.f32 %v208, %v352
  %v354 = vpop.f32.mrb[0].mxu0
  %355 = vmatprep.mubr.f32.mxu0 0.0
  %356 = vmatmul.mubr.f32.gmra.mrb[0].mxu0 %v30
  %v357 = vpop.f32.mrb[0].mxu0
  %v358 = vadd.f32 %v213, %v357
  %v359 = vpop.f32.mrb[0].mxu0
  %360 = vmatprep.mubr.f32.mxu0 0.0
  %361 = vmatmul.mubr.f32.gmra.mrb[0].mxu0 %v31
  %v362 = vpop.f32.mrb[0].mxu0
  %v363 = vadd.f32 %v218, %v362
  %v364 = vpop.f32.mrb[0].mxu0
  %365 = vmatprep.mubr.f32.mxu0 0.0
  %366 = vmatmul.mubr.f32.gmra.mrb[0].mxu0 %v32
  %v367 = vpop.f32.mrb[0].mxu0
  %v368 = vadd.f32 %v223, %v367
  %v369 = vpop.f32.mrb[0].mxu0
  %370 = vdwg.mxu0
  %v371 = vmax.f32 %v293, 0.0
  %v372 = vmax.f32 %v298, 0.0
  %v373 = vmax.f32 %v303, 0.0
  %v374 = vmax.f32 %v308, 0.0
  %v375 = vmax.f32 %v313, 0.0
  %v376 = vmax.f32 %v318, 0.0
  %v377 = vmax.f32 %v323, 0.0
  %v378 = vmax.f32 %v328, 0.0
  %v379 = vmax.f32 %v333, 0.0
  %v380 = vmax.f32 %v338, 0.0
  %v381 = vmax.f32 %v343, 0.0
  %v382 = vmax.f32 %v348, 0.0
  %v383 = vmax.f32 %v353, 0.0
  %v384 = vmax.f32 %v358, 0.0
  %v385 = vmax.f32 %v363, 0.0
  %v386 = vmax.f32 %v368, 0.0
  %387 = vst [vmem:[%s4] sm:$0xff] %v371
  %388 = vst [vmem:[%s4 + $0x8] sm:$0xff] %v372
  %389 = vst [vmem:[%s4 + $0x10] sm:$0xff] %v373
  %390 = vst [vmem:[%s4 + $0x18] sm:$0xff] %v374
  %391 = vst [vmem:[%s4 + $0x20] sm:$0xff] %v375
  %392 = vst [vmem:[%s4 + $0x28] sm:$0xff] %v376
  %393 = vst [vmem:[%s4 + $0x30] sm:$0xff] %v377
  %394 = vst [vmem:[%s4 + $0x38] sm:$0xff] %v378
  %395 = vst [vmem:[%s4 + $0x40] sm:$0xff] %v379
  %396 = vst [vmem:[%s4 + $0x48] sm:$0xff] %v380
  %397 = vst [vmem:[%s4 + $0x50] sm:$0xff] %v381
  %398 = vst [vmem:[%s4 + $0x58] sm:$0xff] %v382
  %399 = vst [vmem:[%s4 + $0x60] sm:$0xff] %v383
  %400 = vst [vmem:[%s4 + $0x68] sm:$0xff] %v384
  %401 = vst [vmem:[%s4 + $0x70] sm:$0xff] %v385
  %402 = vst [vmem:[%s4 + $0x78] sm:$0xff] %v386
  // Predicated region
  $region18: #{ag_rope_encoder_layer_forward.4} parent=0 // pred_check
    _
  $region19: #{ag_rope_encoder_layer_forward.4} parent=0 // pred_check_branch
    %404 = sbr.rel (0) target = $region21
  $region20: #{ag_rope_encoder_layer_forward.4} parent=0 // pred_region
    _
  $region21: #{ag_rope_encoder_layer_forward.4} parent=0 // pred_fallthru
    _
  // Predicated region
  $region22: #{ag_rope_encoder_layer_forward.4} parent=0 // pred_check
    _
  $region23: #{ag_rope_encoder_layer_forward.4} parent=0 // pred_check_branch
    %406 = sbr.rel (0) target = $region25
  $region24: #{ag_rope_encoder_layer_forward.4} parent=0 // pred_region
    _
  $region25: #{ag_rope_encoder_layer_forward.4} parent=0 // pred_fallthru
    _

// kernel: ag_rope_encoder_layer_forward.5
$region0: #{ag_rope_encoder_layer_forward.5}
  #allocation0 [shape = 'u32[]', space=smem, size = 0x4, offset = 0x4, fixed_abs, tag = 'smem constant byte address 0x4 - core index']
  #allocation1 [shape = 'u32[144,128]{1,0:T(1,128)}', space=vmem, size = 0x12000, scoped, tag = 'internal scratch']
  %s0 = inlined_call_operand.vmem [shape: f32[2,18,18,32], index: 0, kind: input, shape index: {}]
  %s1 = inlined_call_operand.vmem [shape: f32[9,32,32], index: 1, kind: input, shape index: {}]
  %s2 = inlined_call_operand.vmem [shape: f32[1,32], index: 2, kind: input, shape index: {}]
  %s3 = inlined_call_operand.vmem [shape: f32[1,32], index: 3, kind: input, shape index: {}]
  %s4 = inlined_call_operand.vmem [shape: f32[2,256,32], index: 4, kind: input, shape index: {}]
  %s5 = inlined_call_operand.hbm [shape: f32[2,256,32], index: 5, kind: output, shape index: {}]
  %s6 = sld [smem:[#allocation0]]
  $region53: #{ag_rope_encoder_layer_forward.5} parent=0
    _
  %s8 = ssub.s32 1, %s6
  %s9 = scalar_select 0, %s8, %s6
  $region1: #{ag_rope_encoder_layer_forward.5} parent=0
    #allocation2 [shape = 'u8[262144]{0}', space=vmem, size = 0x40000, scoped, tag = 'output window, operand 0']
    #allocation3 [shape = 's32[2]{0}', space=sflag, size = 0x8, scoped, tag = 'scoped memory for ag_rope_encoder_layer_forward.5']
    %10 = vsyncpa [#allocation3], 0
    %s11 = scalar_lea.sflag [#allocation3], 1
    %12 = vsyncpa %s11, 0
    loop: start=0, step=1, limit=4
    $region2: #{ag_rope_encoder_layer_forward.5} parent=1 // loop_pre_header
      _
    $region3: #{ag_rope_encoder_layer_forward.5} parent=1 // loop_header
      %s14 = sphi 0, %s18
      %p15 = scmp.ge.s32.totalorder %s14, 4
      %s24 = sphi 0, %s26
      %s27 = sphi 0, %s24
      %s28 = sphi 0, %s27
      %s44 = sphi 0, %s28
      %s48 = sphi 0, %s48
      %s50 = sphi 0, %s48
      %s51 = sphi 0, %s50
      %s65 = sphi 0, %s51
      %s69 = sphi 0, %s69
      %s71 = sphi 0, %s69
      %s72 = sphi 0, %s71
      %s86 = sphi 0, %s72
      %s90 = sphi 0, %s90
      %s92 = sphi 0, %s90
      %s93 = sphi 0, %s92
      %s107 = sphi 0, %s93
      %s113 = sphi 0, %s115
      %s116 = sphi 0, %s113
      %s117 = sphi 0, %s116
      %s133 = sphi 0, %s117
      %s139 = sphi 0, %s141
      %s142 = sphi 0, %s139
      %s143 = sphi 0, %s142
      %s159 = sphi 0, %s143
    $region4: #{ag_rope_encoder_layer_forward.5} parent=1 // loop_header_branch
      %17 = sbr.rel (%p15) target = $region8
    $region5: #{ag_rope_encoder_layer_forward.5} parent=1 // loop_body
      %s19 = ssub.s32 %s14, 1
      %s20 = ssub.s32 %s14, 2
      %s21 = sadd.s32 %s14, 1
      %s22 = ssub.s32 %s14, %s21
      %p23 = scmp.eq.s32.totalorder %s22, 0
      %s25 = sadd.s32 %s24, 1
      %s26 = scalar_select %p23, %s24, %s25
      %p29 = pneg %p23
      %p30 = scmp.eq.s32.totalorder %s14, 1
      %p31 = por %p29, %p30
      %p32 = scmp.ne.s32.totalorder %s24, %s27
      %p33 = scmp.eq.s32.totalorder %s14, 0
      %p34 = por %p32, %p33
      %p35 = scmp.ne.s32.totalorder %s24, %s27
      %p36 = scmp.eq.s32.totalorder %s19, 1
      %p37 = por %p35, %p36
      %p38 = scmp.ne.s32.totalorder %s27, %s28
      %p39 = scmp.eq.s32.totalorder %s19, 0
      %p40 = por %p38, %p39
      %p41 = scmp.ne.s32.totalorder %s27, %s28
      %p42 = scmp.eq.s32.totalorder %s20, 1
      %p43 = por %p41, %p42
      %p45 = scmp.ne.s32.totalorder %s28, %s44
      %p46 = scmp.eq.s32.totalorder %s20, 0
      %p47 = por %p45, %p46
      %s49 = sadd.s32 %s48, 1
      %p52 = scmp.eq.s32.totalorder %s14, 1
      %p53 = scmp.ne.s32.totalorder %s48, %s50
      %p54 = scmp.eq.s32.totalorder %s14, 0
      %p55 = por %p53, %p54
      %p56 = scmp.ne.s32.totalorder %s48, %s50
      %p57 = scmp.eq.s32.totalorder %s19, 1
      %p58 = por %p56, %p57
      %p59 = scmp.ne.s32.totalorder %s50, %s51
      %p60 = scmp.eq.s32.totalorder %s19, 0
      %p61 = por %p59, %p60
      %p62 = scmp.ne.s32.totalorder %s50, %s51
      %p63 = scmp.eq.s32.totalorder %s20, 1
      %p64 = por %p62, %p63
      %p66 = scmp.ne.s32.totalorder %s51, %s65
      %p67 = scmp.eq.s32.totalorder %s20, 0
      %p68 = por %p66, %p67
      %s70 = sadd.s32 %s69, 1
      %p73 = scmp.eq.s32.totalorder %s14, 1
      %p74 = scmp.ne.s32.totalorder %s69, %s71
      %p75 = scmp.eq.s32.totalorder %s14, 0
      %p76 = por %p74, %p75
      %p77 = scmp.ne.s32.totalorder %s69, %s71
      %p78 = scmp.eq.s32.totalorder %s19, 1
      %p79 = por %p77, %p78
      %p80 = scmp.ne.s32.totalorder %s71, %s72
      %p81 = scmp.eq.s32.totalorder %s19, 0
      %p82 = por %p80, %p81
      %p83 = scmp.ne.s32.totalorder %s71, %s72
      %p84 = scmp.eq.s32.totalorder %s20, 1
      %p85 = por %p83, %p84
      %p87 = scmp.ne.s32.totalorder %s72, %s86
      %p88 = scmp.eq.s32.totalorder %s20, 0
      %p89 = por %p87, %p88
      %s91 = sadd.s32 %s90, 1
      %p94 = scmp.eq.s32.totalorder %s14, 1
      %p95 = scmp.ne.s32.totalorder %s90, %s92
      %p96 = scmp.eq.s32.totalorder %s14, 0
      %p97 = por %p95, %p96
      %p98 = scmp.ne.s32.totalorder %s90, %s92
      %p99 = scmp.eq.s32.totalorder %s19, 1
      %p100 = por %p98, %p99
      %p101 = scmp.ne.s32.totalorder %s92, %s93
      %p102 = scmp.eq.s32.totalorder %s19, 0
      %p103 = por %p101, %p102
      %p104 = scmp.ne.s32.totalorder %s92, %s93
      %p105 = scmp.eq.s32.totalorder %s20, 1
      %p106 = por %p104, %p105
      %p108 = scmp.ne.s32.totalorder %s93, %s107
      %p109 = scmp.eq.s32.totalorder %s20, 0
      %p110 = por %p108, %p109
      %s111 = ssub.s32 %s14, %s21
      %p112 = scmp.eq.s32.totalorder %s111, 0
      %s114 = sadd.s32 %s113, 1
      %s115 = scalar_select %p112, %s113, %s114
      %p118 = pneg %p112
      %p119 = scmp.eq.s32.totalorder %s14, 1
      %p120 = por %p118, %p119
      %p121 = scmp.ne.s32.totalorder %s113, %s116
      %p122 = scmp.eq.s32.totalorder %s14, 0
      %p123 = por %p121, %p122
      %p124 = scmp.ne.s32.totalorder %s113, %s116
      %p125 = scmp.eq.s32.totalorder %s19, 1
      %p126 = por %p124, %p125
      %p127 = scmp.ne.s32.totalorder %s116, %s117
      %p128 = scmp.eq.s32.totalorder %s19, 0
      %p129 = por %p127, %p128
      %p130 = scmp.ne.s32.totalorder %s116, %s117
      %p131 = scmp.eq.s32.totalorder %s20, 1
      %p132 = por %p130, %p131
      %p134 = scmp.ne.s32.totalorder %s117, %s133
      %p135 = scmp.eq.s32.totalorder %s20, 0
      %p136 = por %p134, %p135
      %s137 = ssub.s32 %s14, %s21
      %p138 = scmp.eq.s32.totalorder %s137, 0
      %s140 = sadd.s32 %s139, 1
      %s141 = scalar_select %p138, %s139, %s140
      %p144 = pneg %p138
      %p145 = scmp.eq.s32.totalorder %s14, 1
      %p146 = por %p144, %p145
      %p147 = scmp.ne.s32.totalorder %s139, %s142
      %p148 = scmp.eq.s32.totalorder %s14, 0
      %p149 = por %p147, %p148
      %p150 = scmp.ne.s32.totalorder %s139, %s142
      %p151 = scmp.eq.s32.totalorder %s19, 1
      %p152 = por %p150, %p151
      %p153 = scmp.ne.s32.totalorder %s142, %s143
      %p154 = scmp.eq.s32.totalorder %s19, 0
      %p155 = por %p153, %p154
      %p156 = scmp.ne.s32.totalorder %s142, %s143
      %p157 = scmp.eq.s32.totalorder %s20, 1
      %p158 = por %p156, %p157
      %p160 = scmp.ne.s32.totalorder %s143, %s159
      %p161 = scmp.eq.s32.totalorder %s20, 0
      %p162 = por %p160, %p161
      %p163 = scmp.le.s32.totalorder 1, %s14
      %p164 = scmp.lt.s32.totalorder %s14, 3
      %p165 = pnand %p163, %p164
      %p166 = pneg %p165
      // Predicated region
      $region9: #{ag_rope_encoder_layer_forward.5} parent=5 // pred_check
        _
      $region10: #{ag_rope_encoder_layer_forward.5} parent=5 // pred_check_branch
        %168 = sbr.rel (%p165) target = $region12
      $region11: #{ag_rope_encoder_layer_forward.5} parent=5 // pred_region
        %s169 = ssub.s32 %s14, 1
        // Predicated region
        $region13: #{ag_rope_encoder_layer_forward.5} parent=11 // pred_check
          %p170 = pneg %p61
        $region14: #{ag_rope_encoder_layer_forward.5} parent=11 // pred_check_branch
          %172 = sbr.rel (%p170) target = $region16
        $region15: #{ag_rope_encoder_layer_forward.5} parent=11 // pred_region
          _
        $region16: #{ag_rope_encoder_layer_forward.5} parent=11 // pred_fallthru
          _
        // Predicated region
        $region17: #{ag_rope_encoder_layer_forward.5} parent=11 // pred_check
          %p173 = pneg %p82
        $region18: #{ag_rope_encoder_layer_forward.5} parent=11 // pred_check_branch
          %175 = sbr.rel (%p173) target = $region20
        $region19: #{ag_rope_encoder_layer_forward.5} parent=11 // pred_region
          _
        $region20: #{ag_rope_encoder_layer_forward.5} parent=11 // pred_fallthru
          _
        // Predicated region
        $region21: #{ag_rope_encoder_layer_forward.5} parent=11 // pred_check
          %p176 = pneg %p103
        $region22: #{ag_rope_encoder_layer_forward.5} parent=11 // pred_check_branch
          %178 = sbr.rel (%p176) target = $region24
        $region23: #{ag_rope_encoder_layer_forward.5} parent=11 // pred_region
          _
        $region24: #{ag_rope_encoder_layer_forward.5} parent=11 // pred_fallthru
          _
      $region12: #{ag_rope_encoder_layer_forward.5} parent=5 // pred_fallthru
        _
      %p179 = scmp.lt.s32.totalorder %s14, 2
      // Predicated region
      $region25: #{ag_rope_encoder_layer_forward.5} parent=5 // pred_check
        %p180 = pneg %p179
      $region26: #{ag_rope_encoder_layer_forward.5} parent=5 // pred_check_branch
        %182 = sbr.rel (%p180) target = $region28
      $region27: #{ag_rope_encoder_layer_forward.5} parent=5 // pred_region
        // Predicated region
        $region29: #{ag_rope_encoder_layer_forward.5} parent=27 // pred_check
          %p183 = pneg %p34
        $region30: #{ag_rope_encoder_layer_forward.5} parent=27 // pred_check_branch
          %185 = sbr.rel (%p183) target = $region32
        $region31: #{ag_rope_encoder_layer_forward.5} parent=27 // pred_region
          %p186 = scmp.lt.s32.totalorder %s14, 1
          %s187 = scalar_select %p186, %s14, 1
          %s188 = smul.addr %s187, 54
          %s189 = smul.addr %s188, 8
          %s190 = scalar_lea.vmem %s0, %s189
        $region32: #{ag_rope_encoder_layer_forward.5} parent=27 // pred_fallthru
          _
        // Predicated region
        $region33: #{ag_rope_encoder_layer_forward.5} parent=27 // pred_check
          %p191 = pneg %p123
        $region34: #{ag_rope_encoder_layer_forward.5} parent=27 // pred_check_branch
          %193 = sbr.rel (%p191) target = $region36
        $region35: #{ag_rope_encoder_layer_forward.5} parent=27 // pred_region
          %p194 = scmp.lt.s32.totalorder %s14, 1
          %s195 = scalar_select %p194, %s14, 1
          %s196 = smul.addr %s195, 32
          %s197 = smul.addr %s196, 8
          %s198 = scalar_lea.vmem %s4, %s197
        $region36: #{ag_rope_encoder_layer_forward.5} parent=27 // pred_fallthru
          _
      $region28: #{ag_rope_encoder_layer_forward.5} parent=5 // pred_fallthru
        _
      %p199 = scmp.le.s32.totalorder 1, %s14
      %p200 = scmp.lt.s32.totalorder %s14, 3
      %p201 = pnand %p199, %p200
      %p202 = pneg %p201
      // Predicated region
      $region37: #{ag_rope_encoder_layer_forward.5} parent=5 // pred_check
        _
      $region38: #{ag_rope_encoder_layer_forward.5} parent=5 // pred_check_branch
        %204 = sbr.rel (%p201) target = $region40
      $region39: #{ag_rope_encoder_layer_forward.5} parent=5 // pred_region
        %s205 = ssub.s32 %s14, 1
        %p206 = scmp.lt.s32.totalorder %s19, 1
        %s207 = scalar_select %p206, %s19, 1
        %s208 = smul.addr %s207, 54
        %s209 = smul.addr %s208, 8
        %s210 = scalar_lea.vmem %s0, %s209
        %p211 = pneg %p40
        %p212 = pneg %p37
        %p213 = pneg %p61
        %p214 = pneg %p58
        %p215 = pneg %p82
        %p216 = pneg %p79
        %p217 = pneg %p103
        %p218 = pneg %p100
        %p219 = scmp.lt.s32.totalorder %s19, 1
        %s220 = scalar_select %p219, %s19, 1
        %s221 = smul.addr %s220, 32
        %s222 = smul.addr %s221, 8
        %s223 = scalar_lea.vmem %s4, %s222
        %p224 = pneg %p129
        %p225 = pneg %p126
        %p226 = pneg %p155
        %p227 = pneg %p152
        %s228 = sand.u32 %s142, 1
        %s229 = scalar_lea.sflag [#allocation3], %s228
        %s230 = sand.u32 %s142, 1
        %s231 = smul.addr %s230, 256
        %s232 = scalar_lea.vmem [#allocation2], %s231
        %p233 = scmp.lt.s32.totalorder %s19, 1
        %s234 = scalar_select %p233, %s19, 1
        %s235 = smul.addr %s234, 54
        %s236 = smul.addr %s235, 8
        %s237 = scalar_lea.vmem %s0, %s236
        %p238 = scmp.lt.s32.totalorder %s19, 1
        %s239 = scalar_select %p238, %s19, 1
        %s240 = smul.addr %s239, 32
        %s241 = smul.addr %s240, 8
        %s242 = scalar_lea.vmem %s4, %s241
        %v243 = vld [vmem:[%s237] sm:$0xff]
        %v244 = vld [vmem:[%s237 + $0x8] sm:$0xff]
        %v245 = vld [vmem:[%s237 + $0x10] sm:$0x3]
        %v246 = vld [vmem:[%s237 + $0x18] sm:$0xff]
        %v247 = vld [vmem:[%s237 + $0x20] sm:$0xff]
        %v248 = vld [vmem:[%s237 + $0x28] sm:$0x3]
        %v249 = vld [vmem:[%s237 + $0x30] sm:$0xff]
        %v250 = vld [vmem:[%s237 + $0x38] sm:$0xff]
        %v251 = vld [vmem:[%s237 + $0x40] sm:$0x3]
        %v252 = vld [vmem:[%s237 + $0x48] sm:$0xff]
        %v253 = vld [vmem:[%s237 + $0x50] sm:$0xff]
        %v254 = vld [vmem:[%s237 + $0x58] sm:$0x3]
        %v255 = vld [vmem:[%s237 + $0x60] sm:$0xff]
        %v256 = vld [vmem:[%s237 + $0x68] sm:$0xff]
        %v257 = vld [vmem:[%s237 + $0x70] sm:$0x3]
        %v258 = vld [vmem:[%s237 + $0x78] sm:$0xff]
        %v259 = vld [vmem:[%s237 + $0x80] sm:$0xff]
        %v260 = vld [vmem:[%s237 + $0x88] sm:$0x3]
        %v261 = vld [vmem:[%s237 + $0x90] sm:$0xff]
        %v262 = vld [vmem:[%s237 + $0x98] sm:$0xff]
        %v263 = vld [vmem:[%s237 + $0xa0] sm:$0x3]
        %v264 = vld [vmem:[%s237 + $0xa8] sm:$0xff]
        %v265 = vld [vmem:[%s237 + $0xb0] sm:$0xff]
        %v266 = vld [vmem:[%s237 + $0xb8] sm:$0x3]
        %v267 = vld [vmem:[%s237 + $0xc0] sm:$0xff]
        %v268 = vld [vmem:[%s237 + $0xc8] sm:$0xff]
        %v269 = vld [vmem:[%s237 + $0xd0] sm:$0x3]
        %v270 = vld [vmem:[%s237 + $0xd8] sm:$0xff]
        %v271 = vld [vmem:[%s237 + $0xe0] sm:$0xff]
        %v272 = vld [vmem:[%s237 + $0xe8] sm:$0x3]
        %v273 = vld [vmem:[%s237 + $0xf0] sm:$0xff]
        %v274 = vld [vmem:[%s237 + $0xf8] sm:$0xff]
        %v275 = vld [vmem:[%s237 + $0x100] sm:$0x3]
        %v276 = vld [vmem:[%s237 + $0x108] sm:$0xff]
        %v277 = vld [vmem:[%s237 + $0x110] sm:$0xff]
        %v278 = vld [vmem:[%s237 + $0x118] sm:$0x3]
        %v279 = vld [vmem:[%s237 + $0x120] sm:$0xff]
        %v280 = vld [vmem:[%s237 + $0x128] sm:$0xff]
        %v281 = vld [vmem:[%s237 + $0x130] sm:$0x3]
        %v282 = vld [vmem:[%s237 + $0x138] sm:$0xff]
        %v283 = vld [vmem:[%s237 + $0x140] sm:$0xff]
        %v284 = vld [vmem:[%s237 + $0x148] sm:$0x3]
        %v285 = vld [vmem:[%s237 + $0x150] sm:$0xff]
        %v286 = vld [vmem:[%s237 + $0x158] sm:$0xff]
        %v287 = vld [vmem:[%s237 + $0x160] sm:$0x3]
        %v288 = vld [vmem:[%s237 + $0x168] sm:$0xff]
        %v289 = vld [vmem:[%s237 + $0x170] sm:$0xff]
        %v290 = vld [vmem:[%s237 + $0x178] sm:$0x3]
        %v291 = vld [vmem:[%s237 + $0x180] sm:$0xff]
        %v292 = vld [vmem:[%s237 + $0x188] sm:$0xff]
        %v293 = vld [vmem:[%s237 + $0x190] sm:$0x3]
        %v294 = vld [vmem:[%s237 + $0x198] sm:$0xff]
        %v295 = vld [vmem:[%s237 + $0x1a0] sm:$0xff]
        %v296 = vld [vmem:[%s237 + $0x1a8] sm:$0x3]
        %v297 = vld [vmem:[%s1] sm:$0xff]
        %v298 = vld [vmem:[%s1 + $0x8] sm:$0xff]
        %v299 = vld [vmem:[%s1 + $0x10] sm:$0xff]
        %v300 = vld [vmem:[%s1 + $0x18] sm:$0xff]
        %v301 = vld [vmem:[%s1 + $0x20] sm:$0xff]
        %v302 = vld [vmem:[%s1 + $0x28] sm:$0xff]
        %v303 = vld [vmem:[%s1 + $0x30] sm:$0xff]
        %v304 = vld [vmem:[%s1 + $0x38] sm:$0xff]
        %v305 = vld [vmem:[%s1 + $0x40] sm:$0xff]
        %v306 = vld [vmem:[%s1 + $0x48] sm:$0xff]
        %v307 = vld [vmem:[%s1 + $0x50] sm:$0xff]
        %v308 = vld [vmem:[%s1 + $0x58] sm:$0xff]
        %v309 = vld [vmem:[%s1 + $0x60] sm:$0xff]
        %v310 = vld [vmem:[%s1 + $0x68] sm:$0xff]
        %v311 = vld [vmem:[%s1 + $0x70] sm:$0xff]
        %v312 = vld [vmem:[%s1 + $0x78] sm:$0xff]
        %v313 = vld [vmem:[%s1 + $0x80] sm:$0xff]
        %v314 = vld [vmem:[%s1 + $0x88] sm:$0xff]
        %v315 = vld [vmem:[%s1 + $0x90] sm:$0xff]
        %v316 = vld [vmem:[%s1 + $0x98] sm:$0xff]
        %v317 = vld [vmem:[%s1 + $0xa0] sm:$0xff]
        %v318 = vld [vmem:[%s1 + $0xa8] sm:$0xff]
        %v319 = vld [vmem:[%s1 + $0xb0] sm:$0xff]
        %v320 = vld [vmem:[%s1 + $0xb8] sm:$0xff]
        %v321 = vld [vmem:[%s1 + $0xc0] sm:$0xff]
        %v322 = vld [vmem:[%s1 + $0xc8] sm:$0xff]
        %v323 = vld [vmem:[%s1 + $0xd0] sm:$0xff]
        %v324 = vld [vmem:[%s1 + $0xd8] sm:$0xff]
        %v325 = vld [vmem:[%s1 + $0xe0] sm:$0xff]
        %v326 = vld [vmem:[%s1 + $0xe8] sm:$0xff]
        %v327 = vld [vmem:[%s1 + $0xf0] sm:$0xff]
        %v328 = vld [vmem:[%s1 + $0xf8] sm:$0xff]
        %v329 = vld [vmem:[%s1 + $0x100] sm:$0xff]
        %v330 = vld [vmem:[%s1 + $0x108] sm:$0xff]
        %v331 = vld [vmem:[%s1 + $0x110] sm:$0xff]
        %v332 = vld [vmem:[%s1 + $0x118] sm:$0xff]
        %vm381 = vcmask 1046528
        %v382 = vrot.slane %v243, 1
        %v383 = vrot.slane %v244, 1
        %v384 = vsel %vm381, %v382, %v383
        %v385 = vrot.slane %v245, 1
        %v386 = vsel %vm381, %v383, %v385
        %v387 = vrot.slane %v246, 1
        %v388 = vrot.slane %v247, 1
        %v389 = vsel %vm381, %v387, %v388
        %v390 = vrot.slane %v248, 1
        %v391 = vsel %vm381, %v388, %v390
        %v392 = vrot.slane %v249, 1
        %v393 = vrot.slane %v250, 1
        %v394 = vsel %vm381, %v392, %v393
        %v395 = vrot.slane %v251, 1
        %v396 = vsel %vm381, %v393, %v395
        %v397 = vrot.slane %v252, 1
        %v398 = vrot.slane %v253, 1
        %v399 = vsel %vm381, %v397, %v398
        %v400 = vrot.slane %v254, 1
        %v401 = vsel %vm381, %v398, %v400
        %v402 = vrot.slane %v255, 1
        %v403 = vrot.slane %v256, 1
        %v404 = vsel %vm381, %v402, %v403
        %v405 = vrot.slane %v257, 1
        %v406 = vsel %vm381, %v403, %v405
        %v407 = vrot.slane %v258, 1
        %v408 = vrot.slane %v259, 1
        %v409 = vsel %vm381, %v407, %v408
        %v410 = vrot.slane %v260, 1
        %v411 = vsel %vm381, %v408, %v410
        %v412 = vrot.slane %v261, 1
        %v413 = vrot.slane %v262, 1
        %v414 = vsel %vm381, %v412, %v413
        %v415 = vrot.slane %v263, 1
        %v416 = vsel %vm381, %v413, %v415
        %v417 = vrot.slane %v264, 1
        %v418 = vrot.slane %v265, 1
        %v419 = vsel %vm381, %v417, %v418
        %v420 = vrot.slane %v266, 1
        %v421 = vsel %vm381, %v418, %v420
        %v422 = vrot.slane %v267, 1
        %v423 = vrot.slane %v268, 1
        %v424 = vsel %vm381, %v422, %v423
        %v425 = vrot.slane %v269, 1
        %v426 = vsel %vm381, %v423, %v425
        %v427 = vrot.slane %v270, 1
        %v428 = vrot.slane %v271, 1
        %v429 = vsel %vm381, %v427, %v428
        %v430 = vrot.slane %v272, 1
        %v431 = vsel %vm381, %v428, %v430
        %v432 = vrot.slane %v273, 1
        %v433 = vrot.slane %v274, 1
        %v434 = vsel %vm381, %v432, %v433
        %v435 = vrot.slane %v275, 1
        %v436 = vsel %vm381, %v433, %v435
        %v437 = vrot.slane %v276, 1
        %v438 = vrot.slane %v277, 1
        %v439 = vsel %vm381, %v437, %v438
        %v440 = vrot.slane %v278, 1
        %v441 = vsel %vm381, %v438, %v440
        %v442 = vrot.slane %v279, 1
        %v443 = vrot.slane %v280, 1
        %v444 = vsel %vm381, %v442, %v443
        %v445 = vrot.slane %v281, 1
        %v446 = vsel %vm381, %v443, %v445
        %v447 = vrot.slane %v282, 1
        %v448 = vrot.slane %v283, 1
        %v449 = vsel %vm381, %v447, %v448
        %v450 = vrot.slane %v284, 1
        %v451 = vsel %vm381, %v448, %v450
        %v452 = vrot.slane %v285, 1
        %v453 = vrot.slane %v286, 1
        %v454 = vsel %vm381, %v452, %v453
        %v455 = vrot.slane %v287, 1
        %v456 = vsel %vm381, %v453, %v455
        %v457 = vrot.slane %v288, 1
        %v458 = vrot.slane %v289, 1
        %v459 = vsel %vm381, %v457, %v458
        %v460 = vrot.slane %v290, 1
        %v461 = vsel %vm381, %v458, %v460
        %vm462 = vcmask 261120
        %v463 = vsel %vm462, %v384, 0
        %v465 = vsel %vm462, %v386, 0
        %v467 = vsel %vm462, %v389, 0
        %v469 = vsel %vm462, %v391, 0
        %v471 = vsel %vm462, %v394, 0
        %v473 = vsel %vm462, %v396, 0
        %v475 = vsel %vm462, %v399, 0
        %v477 = vsel %vm462, %v401, 0
        %v479 = vsel %vm462, %v404, 0
        %v481 = vsel %vm462, %v406, 0
        %v483 = vsel %vm462, %v409, 0
        %v485 = vsel %vm462, %v411, 0
        %v487 = vsel %vm462, %v414, 0
        %v489 = vsel %vm462, %v416, 0
        %v491 = vsel %vm462, %v419, 0
        %v493 = vsel %vm462, %v421, 0
        %v495 = vsel %vm462, %v424, 0
        %v497 = vsel %vm462, %v426, 0
        %v499 = vsel %vm462, %v429, 0
        %v501 = vsel %vm462, %v431, 0
        %v503 = vsel %vm462, %v434, 0
        %v505 = vsel %vm462, %v436, 0
        %v507 = vsel %vm462, %v439, 0
        %v509 = vsel %vm462, %v441, 0
        %v511 = vsel %vm462, %v444, 0
        %v513 = vsel %vm462, %v446, 0
        %v515 = vsel %vm462, %v449, 0
        %v517 = vsel %vm462, %v451, 0
        %v519 = vsel %vm462, %v454, 0
        %v521 = vsel %vm462, %v456, 0
        %v523 = vsel %vm462, %v459, 0
        %v525 = vsel %vm462, %v461, 0
        %527 = vmatprep.subr.mxu0 0.0
        %528 = vmatpush1.msra.mxu0 %v301
        %529 = vmatprep.subr.mxu0 0.0
        %530 = vmatpush1.msra.mxu0 %v302
        %531 = vmatprep.subr.mxu0 0.0
        %532 = vmatpush1.msra.mxu0 %v303
        %533 = vmatprep.subr.mxu0 0.0
        %534 = vmatpush1.msra.mxu0 %v304
        %535 = vmatprep.subr.mxu0 0.0
        %536 = vmatpush1.msra.mxu0 0.0
        %537 = vmatprep.subr.mxu0 0.0
        %538 = vmatpush1.msra.mxu0 0.0
        %539 = vmatprep.subr.mxu0 0.0
        %540 = vmatpush1.msra.mxu0 0.0
        %541 = vmatprep.subr.mxu0 0.0
        %542 = vmatpush1.msra.mxu0 0.0
        %543 = vmatprep.subr.mxu0 0.0
        %544 = vmatpush1.msra.mxu0 0.0
        %545 = vmatprep.subr.mxu0 0.0
        %546 = vmatpush1.msra.mxu0 0.0
        %547 = vmatprep.subr.mxu0 0.0
        %548 = vmatpush1.msra.mxu0 0.0
        %549 = vmatprep.subr.mxu0 0.0
        %550 = vmatpush1.msra.mxu0 0.0
        %551 = vmatprep.subr.mxu0 0.0
        %552 = vmatpush1.msra.mxu0 0.0
        %553 = vmatprep.subr.mxu0 0.0
        %554 = vmatpush1.msra.mxu0 0.0
        %555 = vmatprep.subr.mxu0 0.0
        %556 = vmatpush1.msra.mxu0 0.0
        %557 = vmatprep.subr.mxu0 0.0
        %558 = vmatpush1.msra.mxu0 0.0
        %559 = vmatprep.subr.mxu0 0.0
        %560 = vmatpush1.msra.mxu0 0.0
        %561 = vmatprep.subr.mxu0 0.0
        %562 = vmatpush1.msra.mxu0 0.0
        %563 = vmatprep.subr.mxu0 0.0
        %564 = vmatpush1.msra.mxu0 0.0
        %565 = vmatprep.subr.mxu0 0.0
        %566 = vmatpush1.msra.mxu0 0.0
        %567 = vmatprep.subr.mxu0 0.0
        %568 = vmatpush1.msra.mxu0 0.0
        %569 = vmatprep.subr.mxu0 0.0
        %570 = vmatpush1.msra.mxu0 0.0
        %571 = vmatprep.subr.mxu0 0.0
        %572 = vmatpush1.msra.mxu0 0.0
        %573 = vmatprep.subr.mxu0 0.0
        %574 = vmatpush1.msra.mxu0 0.0
        %575 = vmatprep.subr.mxu0 0.0
        %576 = vmatpush1.msra.mxu0 0.0
        %577 = vmatprep.subr.mxu0 0.0
        %578 = vmatpush1.msra.mxu0 0.0
        %579 = vmatprep.subr.mxu0 0.0
        %580 = vmatpush1.msra.mxu0 0.0
        %581 = vmatprep.subr.mxu0 0.0
        %582 = vmatpush1.msra.mxu0 0.0
        %583 = vmatprep.subr.mxu0 0.0
        %584 = vmatpush1.msra.mxu0 0.0
        %585 = vmatprep.subr.mxu0 0.0
        %586 = vmatpush1.msra.mxu0 0.0
        %587 = vmatprep.subr.mxu0 0.0
        %588 = vmatpush1.msra.mxu0 0.0
        %589 = vmatprep.subr.mxu0 0.0
        %590 = vmatpush1.msra.mxu0 0.0
        %591 = vmatprep.mubr.f32.mxu0 0.0
        %592 = vmatmul.mubr.f32.gmra.mrb[0].mxu0 %v463
        %v593 = vpop.f32.mrb[0].mxu0
        %v594 = vadd.f32 0.0, %v593
        %v595 = vpop.f32.mrb[0].mxu0
        %596 = vmatprep.mubr.f32.mxu0 0.0
        %597 = vmatmul.mubr.f32.gmra.mrb[0].mxu0 %v465
        %v598 = vpop.f32.mrb[0].mxu0
        %v599 = vadd.f32 0.0, %v598
        %v600 = vpop.f32.mrb[0].mxu0
        %601 = vmatprep.mubr.f32.mxu0 0.0
        %602 = vmatmul.mubr.f32.gmra.mrb[0].mxu0 %v467
        %v603 = vpop.f32.mrb[0].mxu0
        %v604 = vadd.f32 0.0, %v603
        %v605 = vpop.f32.mrb[0].mxu0
        %606 = vmatprep.mubr.f32.mxu0 0.0
        %607 = vmatmul.mubr.f32.gmra.mrb[0].mxu0 %v469
        %v608 = vpop.f32.mrb[0].mxu0
        %v609 = vadd.f32 0.0, %v608
        %v610 = vpop.f32.mrb[0].mxu0
        %611 = vmatprep.mubr.f32.mxu0 0.0
        %612 = vmatmul.mubr.f32.gmra.mrb[0].mxu0 %v471
        %v613 = vpop.f32.mrb[0].mxu0
        %v614 = vadd.f32 0.0, %v613
        %v615 = vpop.f32.mrb[0].mxu0
        %616 = vmatprep.mubr.f32.mxu0 0.0
        %617 = vmatmul.mubr.f32.gmra.mrb[0].mxu0 %v473
        %v618 = vpop.f32.mrb[0].mxu0
        %v619 = vadd.f32 0.0, %v618
        %v620 = vpop.f32.mrb[0].mxu0
        %621 = vmatprep.mubr.f32.mxu0 0.0
        %622 = vmatmul.mubr.f32.gmra.mrb[0].mxu0 %v475
        %v623 = vpop.f32.mrb[0].mxu0
        %v624 = vadd.f32 0.0, %v623
        %v625 = vpop.f32.mrb[0].mxu0
        %626 = vmatprep.mubr.f32.mxu0 0.0
        %627 = vmatmul.mubr.f32.gmra.mrb[0].mxu0 %v477
        %v628 = vpop.f32.mrb[0].mxu0
        %v629 = vadd.f32 0.0, %v628
        %v630 = vpop.f32.mrb[0].mxu0
        %631 = vmatprep.mubr.f32.mxu0 0.0
        %632 = vmatmul.mubr.f32.gmra.mrb[0].mxu0 %v479
        %v633 = vpop.f32.mrb[0].mxu0
        %v634 = vadd.f32 0.0, %v633
        %v635 = vpop.f32.mrb[0].mxu0
        %636 = vmatprep.mubr.f32.mxu0 0.0
        %637 = vmatmul.mubr.f32.gmra.mrb[0].mxu0 %v481
        %v638 = vpop.f32.mrb[0].mxu0
        %v639 = vadd.f32 0.0, %v638
        %v640 = vpop.f32.mrb[0].mxu0
        %641 = vmatprep.mubr.f32.mxu0 0.0
        %642 = vmatmul.mubr.f32.gmra.mrb[0].mxu0 %v483
        %v643 = vpop.f32.mrb[0].mxu0
        %v644 = vadd.f32 0.0, %v643
        %v645 = vpop.f32.mrb[0].mxu0
        %646 = vmatprep.mubr.f32.mxu0 0.0
        %647 = vmatmul.mubr.f32.gmra.mrb[0].mxu0 %v485
        %v648 = vpop.f32.mrb[0].mxu0
        %v649 = vadd.f32 0.0, %v648
        %v650 = vpop.f32.mrb[0].mxu0
        %651 = vmatprep.mubr.f32.mxu0 0.0
        %652 = vmatmul.mubr.f32.gmra.mrb[0].mxu0 %v487
        %v653 = vpop.f32.mrb[0].mxu0
        %v654 = vadd.f32 0.0, %v653
        %v655 = vpop.f32.mrb[0].mxu0
        %656 = vmatprep.mubr.f32.mxu0 0.0
        %657 = vmatmul.mubr.f32.gmra.mrb[0].mxu0 %v489
        %v658 = vpop.f32.mrb[0].mxu0
        %v659 = vadd.f32 0.0, %v658
        %v660 = vpop.f32.mrb[0].mxu0
        %661 = vmatprep.mubr.f32.mxu0 0.0
        %662 = vmatmul.mubr.f32.gmra.mrb[0].mxu0 %v491
        %v663 = vpop.f32.mrb[0].mxu0
        %v664 = vadd.f32 0.0, %v663
        %v665 = vpop.f32.mrb[0].mxu0
        %666 = vmatprep.mubr.f32.mxu0 0.0
        %667 = vmatmul.mubr.f32.gmra.mrb[0].mxu0 %v493
        %v668 = vpop.f32.mrb[0].mxu0
        %v669 = vadd.f32 0.0, %v668
        %v670 = vpop.f32.mrb[0].mxu0
        %671 = vmatprep.mubr.f32.mxu0 0.0
        %672 = vmatmul.mubr.f32.gmra.mrb[0].mxu0 %v495
        %v673 = vpop.f32.mrb[0].mxu0
        %v674 = vadd.f32 0.0, %v673
        %v675 = vpop.f32.mrb[0].mxu0
        %676 = vmatprep.mubr.f32.mxu0 0.0
        %677 = vmatmul.mubr.f32.gmra.mrb[0].mxu0 %v497
        %v678 = vpop.f32.mrb[0].mxu0
        %v679 = vadd.f32 0.0, %v678
        %v680 = vpop.f32.mrb[0].mxu0
        %681 = vmatprep.mubr.f32.mxu0 0.0
        %682 = vmatmul.mubr.f32.gmra.mrb[0].mxu0 %v499
        %v683 = vpop.f32.mrb[0].mxu0
        %v684 = vadd.f32 0.0, %v683
        %v685 = vpop.f32.mrb[0].mxu0
        %686 = vmatprep.mubr.f32.mxu0 0.0
        %687 = vmatmul.mubr.f32.gmra.mrb[0].mxu0 %v501
        %v688 = vpop.f32.mrb[0].mxu0
        %v689 = vadd.f32 0.0, %v688
        %v690 = vpop.f32.mrb[0].mxu0
        %691 = vmatprep.mubr.f32.mxu0 0.0
        %692 = vmatmul.mubr.f32.gmra.mrb[0].mxu0 %v503
        %v693 = vpop.f32.mrb[0].mxu0
        %v694 = vadd.f32 0.0, %v693
        %v695 = vpop.f32.mrb[0].mxu0
        %696 = vmatprep.mubr.f32.mxu0 0.0
        %697 = vmatmul.mubr.f32.gmra.mrb[0].mxu0 %v505
        %v698 = vpop.f32.mrb[0].mxu0
        %v699 = vadd.f32 0.0, %v698
        %v700 = vpop.f32.mrb[0].mxu0
        %701 = vmatprep.mubr.f32.mxu0 0.0
        %702 = vmatmul.mubr.f32.gmra.mrb[0].mxu0 %v507
        %v703 = vpop.f32.mrb[0].mxu0
        %v704 = vadd.f32 0.0, %v703
        %v705 = vpop.f32.mrb[0].mxu0
        %706 = vmatprep.mubr.f32.mxu0 0.0
        %707 = vmatmul.mubr.f32.gmra.mrb[0].mxu0 %v509
        %v708 = vpop.f32.mrb[0].mxu0
        %v709 = vadd.f32 0.0, %v708
        %v710 = vpop.f32.mrb[0].mxu0
        %711 = vmatprep.mubr.f32.mxu0 0.0
        %712 = vmatmul.mubr.f32.gmra.mrb[0].mxu0 %v511
        %v713 = vpop.f32.mrb[0].mxu0
        %v714 = vadd.f32 0.0, %v713
        %v715 = vpop.f32.mrb[0].mxu0
        %716 = vmatprep.mubr.f32.mxu0 0.0
        %717 = vmatmul.mubr.f32.gmra.mrb[0].mxu0 %v513
        %v718 = vpop.f32.mrb[0].mxu0
        %v719 = vadd.f32 0.0, %v718
        %v720 = vpop.f32.mrb[0].mxu0
        %721 = vmatprep.mubr.f32.mxu0 0.0
        %722 = vmatmul.mubr.f32.gmra.mrb[0].mxu0 %v515
        %v723 = vpop.f32.mrb[0].mxu0
        %v724 = vadd.f32 0.0, %v723
        %v725 = vpop.f32.mrb[0].mxu0
        %726 = vmatprep.mubr.f32.mxu0 0.0
        %727 = vmatmul.mubr.f32.gmra.mrb[0].mxu0 %v517
        %v728 = vpop.f32.mrb[0].mxu0
        %v729 = vadd.f32 0.0, %v728
        %v730 = vpop.f32.mrb[0].mxu0
        %731 = vmatprep.mubr.f32.mxu0 0.0
        %732 = vmatmul.mubr.f32.gmra.mrb[0].mxu0 %v519
        %v733 = vpop.f32.mrb[0].mxu0
        %v734 = vadd.f32 0.0, %v733
        %v735 = vpop.f32.mrb[0].mxu0
        %736 = vmatprep.mubr.f32.mxu0 0.0
        %737 = vmatmul.mubr.f32.gmra.mrb[0].mxu0 %v521
        %v738 = vpop.f32.mrb[0].mxu0
        %v739 = vadd.f32 0.0, %v738
        %v740 = vpop.f32.mrb[0].mxu0
        %741 = vmatprep.mubr.f32.mxu0 0.0
        %742 = vmatmul.mubr.f32.gmra.mrb[0].mxu0 %v523
        %v743 = vpop.f32.mrb[0].mxu0
        %v744 = vadd.f32 0.0, %v743
        %v745 = vpop.f32.mrb[0].mxu0
        %746 = vmatprep.mubr.f32.mxu0 0.0
        %747 = vmatmul.mubr.f32.gmra.mrb[0].mxu0 %v525
        %v748 = vpop.f32.mrb[0].mxu0
        %v749 = vadd.f32 0.0, %v748
        %v750 = vpop.f32.mrb[0].mxu0
        %751 = vdwg.mxu0
        %v752 = vsel %vm462, %v243, 0
        %v754 = vsel %vm462, %v244, 0
        %v756 = vsel %vm462, %v246, 0
        %v758 = vsel %vm462, %v247, 0
        %v760 = vsel %vm462, %v249, 0
        %v762 = vsel %vm462, %v250, 0
        %v764 = vsel %vm462, %v252, 0
        %v766 = vsel %vm462, %v253, 0
        %v768 = vsel %vm462, %v255, 0
        %v770 = vsel %vm462, %v256, 0
        %v772 = vsel %vm462, %v258, 0
        %v774 = vsel %vm462, %v259, 0
        %v776 = vsel %vm462, %v261, 0
        %v778 = vsel %vm462, %v262, 0
        %v780 = vsel %vm462, %v264, 0
        %v782 = vsel %vm462, %v265, 0
        %v784 = vsel %vm462, %v267, 0
        %v786 = vsel %vm462, %v268, 0
        %v788 = vsel %vm462, %v270, 0
        %v790 = vsel %vm462, %v271, 0
        %v792 = vsel %vm462, %v273, 0
        %v794 = vsel %vm462, %v274, 0
        %v796 = vsel %vm462, %v276, 0
        %v798 = vsel %vm462, %v277, 0
        %v800 = vsel %vm462, %v279, 0
        %v802 = vsel %vm462, %v280, 0
        %v804 = vsel %vm462, %v282, 0
        %v806 = vsel %vm462, %v283, 0
        %v808 = vsel %vm462, %v285, 0
        %v810 = vsel %vm462, %v286, 0
        %v812 = vsel %vm462, %v288, 0
        %v814 = vsel %vm462, %v289, 0
        %816 = vmatprep.subr.mxu0 0.0
        %817 = vmatpush1.msra.mxu0 %v297
        %818 = vmatprep.subr.mxu0 0.0
        %819 = vmatpush1.msra.mxu0 %v298
        %820 = vmatprep.subr.mxu0 0.0
        %821 = vmatpush1.msra.mxu0 %v299
        %822 = vmatprep.subr.mxu0 0.0
        %823 = vmatpush1.msra.mxu0 %v300
        %824 = vmatprep.subr.mxu0 0.0
        %825 = vmatpush1.msra.mxu0 0.0
        %826 = vmatprep.subr.mxu0 0.0
        %827 = vmatpush1.msra.mxu0 0.0
        %828 = vmatprep.subr.mxu0 0.0
        %829 = vmatpush1.msra.mxu0 0.0
        %830 = vmatprep.subr.mxu0 0.0
        %831 = vmatpush1.msra.mxu0 0.0
        %832 = vmatprep.subr.mxu0 0.0
        %833 = vmatpush1.msra.mxu0 0.0
        %834 = vmatprep.subr.mxu0 0.0
        %835 = vmatpush1.msra.mxu0 0.0
        %836 = vmatprep.subr.mxu0 0.0
        %837 = vmatpush1.msra.mxu0 0.0
        %838 = vmatprep.subr.mxu0 0.0
        %839 = vmatpush1.msra.mxu0 0.0
        %840 = vmatprep.subr.mxu0 0.0
        %841 = vmatpush1.msra.mxu0 0.0
        %842 = vmatprep.subr.mxu0 0.0
        %843 = vmatpush1.msra.mxu0 0.0
        %844 = vmatprep.subr.mxu0 0.0
        %845 = vmatpush1.msra.mxu0 0.0
        %846 = vmatprep.subr.mxu0 0.0
        %847 = vmatpush1.msra.mxu0 0.0
        %848 = vmatprep.subr.mxu0 0.0
        %849 = vmatpush1.msra.mxu0 0.0
        %850 = vmatprep.subr.mxu0 0.0
        %851 = vmatpush1.msra.mxu0 0.0
        %852 = vmatprep.subr.mxu0 0.0
        %853 = vmatpush1.msra.mxu0 0.0
        %854 = vmatprep.subr.mxu0 0.0
        %855 = vmatpush1.msra.mxu0 0.0
        %856 = vmatprep.subr.mxu0 0.0
        %857 = vmatpush1.msra.mxu0 0.0
        %858 = vmatprep.subr.mxu0 0.0
        %859 = vmatpush1.msra.mxu0 0.0
        %860 = vmatprep.subr.mxu0 0.0
        %861 = vmatpush1.msra.mxu0 0.0
        %862 = vmatprep.subr.mxu0 0.0
        %863 = vmatpush1.msra.mxu0 0.0
        %864 = vmatprep.subr.mxu0 0.0
        %865 = vmatpush1.msra.mxu0 0.0
        %866 = vmatprep.subr.mxu0 0.0
        %867 = vmatpush1.msra.mxu0 0.0
        %868 = vmatprep.subr.mxu0 0.0
        %869 = vmatpush1.msra.mxu0 0.0
        %870 = vmatprep.subr.mxu0 0.0
        %871 = vmatpush1.msra.mxu0 0.0
        %872 = vmatprep.subr.mxu0 0.0
        %873 = vmatpush1.msra.mxu0 0.0
        %874 = vmatprep.subr.mxu0 0.0
        %875 = vmatpush1.msra.mxu0 0.0
        %876 = vmatprep.subr.mxu0 0.0
        %877 = vmatpush1.msra.mxu0 0.0
        %878 = vmatprep.subr.mxu0 0.0
        %879 = vmatpush1.msra.mxu0 0.0
        %880 = vmatprep.mubr.f32.mxu0 0.0
        %881 = vmatmul.mubr.f32.gmra.mrb[0].mxu0 %v752
        %v882 = vpop.f32.mrb[0].mxu0
        %v883 = vadd.f32 %v594, %v882
        %v884 = vpop.f32.mrb[0].mxu0
        %885 = vmatprep.mubr.f32.mxu0 0.0
        %886 = vmatmul.mubr.f32.gmra.mrb[0].mxu0 %v754
        %v887 = vpop.f32.mrb[0].mxu0
        %v888 = vadd.f32 %v599, %v887
        %v889 = vpop.f32.mrb[0].mxu0
        %890 = vmatprep.mubr.f32.mxu0 0.0
        %891 = vmatmul.mubr.f32.gmra.mrb[0].mxu0 %v756
        %v892 = vpop.f32.mrb[0].mxu0
        %v893 = vadd.f32 %v604, %v892
        %v894 = vpop.f32.mrb[0].mxu0
        %895 = vmatprep.mubr.f32.mxu0 0.0
        %896 = vmatmul.mubr.f32.gmra.mrb[0].mxu0 %v758
        %v897 = vpop.f32.mrb[0].mxu0
        %v898 = vadd.f32 %v609, %v897
        %v899 = vpop.f32.mrb[0].mxu0
        %900 = vmatprep.mubr.f32.mxu0 0.0
        %901 = vmatmul.mubr.f32.gmra.mrb[0].mxu0 %v760
        %v902 = vpop.f32.mrb[0].mxu0
        %v903 = vadd.f32 %v614, %v902
        %v904 = vpop.f32.mrb[0].mxu0
        %905 = vmatprep.mubr.f32.mxu0 0.0
        %906 = vmatmul.mubr.f32.gmra.mrb[0].mxu0 %v762
        %v907 = vpop.f32.mrb[0].mxu0
        %v908 = vadd.f32 %v619, %v907
        %v909 = vpop.f32.mrb[0].mxu0
        %910 = vmatprep.mubr.f32.mxu0 0.0
        %911 = vmatmul.mubr.f32.gmra.mrb[0].mxu0 %v764
        %v912 = vpop.f32.mrb[0].mxu0
        %v913 = vadd.f32 %v624, %v912
        %v914 = vpop.f32.mrb[0].mxu0
        %915 = vmatprep.mubr.f32.mxu0 0.0
        %916 = vmatmul.mubr.f32.gmra.mrb[0].mxu0 %v766
        %v917 = vpop.f32.mrb[0].mxu0
        %v918 = vadd.f32 %v629, %v917
        %v919 = vpop.f32.mrb[0].mxu0
        %920 = vmatprep.mubr.f32.mxu0 0.0
        %921 = vmatmul.mubr.f32.gmra.mrb[0].mxu0 %v768
        %v922 = vpop.f32.mrb[0].mxu0
        %v923 = vadd.f32 %v634, %v922
        %v924 = vpop.f32.mrb[0].mxu0
        %925 = vmatprep.mubr.f32.mxu0 0.0
        %926 = vmatmul.mubr.f32.gmra.mrb[0].mxu0 %v770
        %v927 = vpop.f32.mrb[0].mxu0
        %v928 = vadd.f32 %v639, %v927
        %v929 = vpop.f32.mrb[0].mxu0
        %930 = vmatprep.mubr.f32.mxu0 0.0
        %931 = vmatmul.mubr.f32.gmra.mrb[0].mxu0 %v772
        %v932 = vpop.f32.mrb[0].mxu0
        %v933 = vadd.f32 %v644, %v932
        %v934 = vpop.f32.mrb[0].mxu0
        %935 = vmatprep.mubr.f32.mxu0 0.0
        %936 = vmatmul.mubr.f32.gmra.mrb[0].mxu0 %v774
        %v937 = vpop.f32.mrb[0].mxu0
        %v938 = vadd.f32 %v649, %v937
        %v939 = vpop.f32.mrb[0].mxu0
        %940 = vmatprep.mubr.f32.mxu0 0.0
        %941 = vmatmul.mubr.f32.gmra.mrb[0].mxu0 %v776
        %v942 = vpop.f32.mrb[0].mxu0
        %v943 = vadd.f32 %v654, %v942
        %v944 = vpop.f32.mrb[0].mxu0
        %945 = vmatprep.mubr.f32.mxu0 0.0
        %946 = vmatmul.mubr.f32.gmra.mrb[0].mxu0 %v778
        %v947 = vpop.f32.mrb[0].mxu0
        %v948 = vadd.f32 %v659, %v947
        %v949 = vpop.f32.mrb[0].mxu0
        %950 = vmatprep.mubr.f32.mxu0 0.0
        %951 = vmatmul.mubr.f32.gmra.mrb[0].mxu0 %v780
        %v952 = vpop.f32.mrb[0].mxu0
        %v953 = vadd.f32 %v664, %v952
        %v954 = vpop.f32.mrb[0].mxu0
        %955 = vmatprep.mubr.f32.mxu0 0.0
        %956 = vmatmul.mubr.f32.gmra.mrb[0].mxu0 %v782
        %v957 = vpop.f32.mrb[0].mxu0
        %v958 = vadd.f32 %v669, %v957
        %v959 = vpop.f32.mrb[0].mxu0
        %960 = vmatprep.mubr.f32.mxu0 0.0
        %961 = vmatmul.mubr.f32.gmra.mrb[0].mxu0 %v784
        %v962 = vpop.f32.mrb[0].mxu0
        %v963 = vadd.f32 %v674, %v962
        %v964 = vpop.f32.mrb[0].mxu0
        %965 = vmatprep.mubr.f32.mxu0 0.0
        %966 = vmatmul.mubr.f32.gmra.mrb[0].mxu0 %v786
        %v967 = vpop.f32.mrb[0].mxu0
        %v968 = vadd.f32 %v679, %v967
        %v969 = vpop.f32.mrb[0].mxu0
        %970 = vmatprep.mubr.f32.mxu0 0.0
        %971 = vmatmul.mubr.f32.gmra.mrb[0].mxu0 %v788
        %v972 = vpop.f32.mrb[0].mxu0
        %v973 = vadd.f32 %v684, %v972
        %v974 = vpop.f32.mrb[0].mxu0
        %975 = vmatprep.mubr.f32.mxu0 0.0
        %976 = vmatmul.mubr.f32.gmra.mrb[0].mxu0 %v790
        %v977 = vpop.f32.mrb[0].mxu0
        %v978 = vadd.f32 %v689, %v977
        %v979 = vpop.f32.mrb[0].mxu0
        %980 = vmatprep.mubr.f32.mxu0 0.0
        %981 = vmatmul.mubr.f32.gmra.mrb[0].mxu0 %v792
        %v982 = vpop.f32.mrb[0].mxu0
        %v983 = vadd.f32 %v694, %v982
        %v984 = vpop.f32.mrb[0].mxu0
        %985 = vmatprep.mubr.f32.mxu0 0.0
        %986 = vmatmul.mubr.f32.gmra.mrb[0].mxu0 %v794
        %v987 = vpop.f32.mrb[0].mxu0
        %v988 = vadd.f32 %v699, %v987
        %v989 = vpop.f32.mrb[0].mxu0
        %990 = vmatprep.mubr.f32.mxu0 0.0
        %991 = vmatmul.mubr.f32.gmra.mrb[0].mxu0 %v796
        %v992 = vpop.f32.mrb[0].mxu0
        %v993 = vadd.f32 %v704, %v992
        %v994 = vpop.f32.mrb[0].mxu0
        %995 = vmatprep.mubr.f32.mxu0 0.0
        %996 = vmatmul.mubr.f32.gmra.mrb[0].mxu0 %v798
        %v997 = vpop.f32.mrb[0].mxu0
        %v998 = vadd.f32 %v709, %v997
        %v999 = vpop.f32.mrb[0].mxu0
        %1000 = vmatprep.mubr.f32.mxu0 0.0
        %1001 = vmatmul.mubr.f32.gmra.mrb[0].mxu0 %v800
        %v1002 = vpop.f32.mrb[0].mxu0
        %v1003 = vadd.f32 %v714, %v1002
        %v1004 = vpop.f32.mrb[0].mxu0
        %1005 = vmatprep.mubr.f32.mxu0 0.0
        %1006 = vmatmul.mubr.f32.gmra.mrb[0].mxu0 %v802
        %v1007 = vpop.f32.mrb[0].mxu0
        %v1008 = vadd.f32 %v719, %v1007
        %v1009 = vpop.f32.mrb[0].mxu0
        %1010 = vmatprep.mubr.f32.mxu0 0.0
        %1011 = vmatmul.mubr.f32.gmra.mrb[0].mxu0 %v804
        %v1012 = vpop.f32.mrb[0].mxu0
        %v1013 = vadd.f32 %v724, %v1012
        %v1014 = vpop.f32.mrb[0].mxu0
        %1015 = vmatprep.mubr.f32.mxu0 0.0
        %1016 = vmatmul.mubr.f32.gmra.mrb[0].mxu0 %v806
        %v1017 = vpop.f32.mrb[0].mxu0
        %v1018 = vadd.f32 %v729, %v1017
        %v1019 = vpop.f32.mrb[0].mxu0
        %1020 = vmatprep.mubr.f32.mxu0 0.0
        %1021 = vmatmul.mubr.f32.gmra.mrb[0].mxu0 %v808
        %v1022 = vpop.f32.mrb[0].mxu0
        %v1023 = vadd.f32 %v734, %v1022
        %v1024 = vpop.f32.mrb[0].mxu0
        %1025 = vmatprep.mubr.f32.mxu0 0.0
        %1026 = vmatmul.mubr.f32.gmra.mrb[0].mxu0 %v810
        %v1027 = vpop.f32.mrb[0].mxu0
        %v1028 = vadd.f32 %v739, %v1027
        %v1029 = vpop.f32.mrb[0].mxu0
        %1030 = vmatprep.mubr.f32.mxu0 0.0
        %1031 = vmatmul.mubr.f32.gmra.mrb[0].mxu0 %v812
        %v1032 = vpop.f32.mrb[0].mxu0
        %v1033 = vadd.f32 %v744, %v1032
        %v1034 = vpop.f32.mrb[0].mxu0
        %1035 = vmatprep.mubr.f32.mxu0 0.0
        %1036 = vmatmul.mubr.f32.gmra.mrb[0].mxu0 %v814
        %v1037 = vpop.f32.mrb[0].mxu0
        %v1038 = vadd.f32 %v749, %v1037
        %v1039 = vpop.f32.mrb[0].mxu0
        %1040 = vdwg.mxu0
        %vm1041 = vcmask 1045504
        %v1042 = vrot.slane %v243, 2
        %v1043 = vrot.slane %v244, 2
        %v1044 = vsel %vm1041, %v1042, %v1043
        %v1045 = vrot.slane %v245, 2
        %v1046 = vsel %vm1041, %v1043, %v1045
        %v1047 = vrot.slane %v246, 2
        %v1048 = vrot.slane %v247, 2
        %v1049 = vsel %vm1041, %v1047, %v1048
        %v1050 = vrot.slane %v248, 2
        %v1051 = vsel %vm1041, %v1048, %v1050
        %v1052 = vrot.slane %v249, 2
        %v1053 = vrot.slane %v250, 2
        %v1054 = vsel %vm1041, %v1052, %v1053
        %v1055 = vrot.slane %v251, 2
        %v1056 = vsel %vm1041, %v1053, %v1055
        %v1057 = vrot.slane %v252, 2
        %v1058 = vrot.slane %v253, 2
        %v1059 = vsel %vm1041, %v1057, %v1058
        %v1060 = vrot.slane %v254, 2
        %v1061 = vsel %vm1041, %v1058, %v1060
        %v1062 = vrot.slane %v255, 2
        %v1063 = vrot.slane %v256, 2
        %v1064 = vsel %vm1041, %v1062, %v1063
        %v1065 = vrot.slane %v257, 2
        %v1066 = vsel %vm1041, %v1063, %v1065
        %v1067 = vrot.slane %v258, 2
        %v1068 = vrot.slane %v259, 2
        %v1069 = vsel %vm1041, %v1067, %v1068
        %v1070 = vrot.slane %v260, 2
        %v1071 = vsel %vm1041, %v1068, %v1070
        %v1072 = vrot.slane %v261, 2
        %v1073 = vrot.slane %v262, 2
        %v1074 = vsel %vm1041, %v1072, %v1073
        %v1075 = vrot.slane %v263, 2
        %v1076 = vsel %vm1041, %v1073, %v1075
        %v1077 = vrot.slane %v264, 2
        %v1078 = vrot.slane %v265, 2
        %v1079 = vsel %vm1041, %v1077, %v1078
        %v1080 = vrot.slane %v266, 2
        %v1081 = vsel %vm1041, %v1078, %v1080
        %v1082 = vrot.slane %v267, 2
        %v1083 = vrot.slane %v268, 2
        %v1084 = vsel %vm1041, %v1082, %v1083
        %v1085 = vrot.slane %v269, 2
        %v1086 = vsel %vm1041, %v1083, %v1085
        %v1087 = vrot.slane %v270, 2
        %v1088 = vrot.slane %v271, 2
        %v1089 = vsel %vm1041, %v1087, %v1088
        %v1090 = vrot.slane %v272, 2
        %v1091 = vsel %vm1041, %v1088, %v1090
        %v1092 = vrot.slane %v273, 2
        %v1093 = vrot.slane %v274, 2
        %v1094 = vsel %vm1041, %v1092, %v1093
        %v1095 = vrot.slane %v275, 2
        %v1096 = vsel %vm1041, %v1093, %v1095
        %v1097 = vrot.slane %v276, 2
        %v1098 = vrot.slane %v277, 2
        %v1099 = vsel %vm1041, %v1097, %v1098
        %v1100 = vrot.slane %v278, 2
        %v1101 = vsel %vm1041, %v1098, %v1100
        %v1102 = vrot.slane %v279, 2
        %v1103 = vrot.slane %v280, 2
        %v1104 = vsel %vm1041, %v1102, %v1103
        %v1105 = vrot.slane %v281, 2
        %v1106 = vsel %vm1041, %v1103, %v1105
        %v1107 = vrot.slane %v282, 2
        %v1108 = vrot.slane %v283, 2
        %v1109 = vsel %vm1041, %v1107, %v1108
        %v1110 = vrot.slane %v284, 2
        %v1111 = vsel %vm1041, %v1108, %v1110
        %v1112 = vrot.slane %v285, 2
        %v1113 = vrot.slane %v286, 2
        %v1114 = vsel %vm1041, %v1112, %v1113
        %v1115 = vrot.slane %v287, 2
        %v1116 = vsel %vm1041, %v1113, %v1115
        %v1117 = vrot.slane %v288, 2
        %v1118 = vrot.slane %v289, 2
        %v1119 = vsel %vm1041, %v1117, %v1118
        %v1120 = vrot.slane %v290, 2
        %v1121 = vsel %vm1041, %v1118, %v1120
        %v1122 = vsel %vm462, %v1044, 0
        %v1124 = vsel %vm462, %v1046, 0
        %v1126 = vsel %vm462, %v1049, 0
        %v1128 = vsel %vm462, %v1051, 0
        %v1130 = vsel %vm462, %v1054, 0
        %v1132 = vsel %vm462, %v1056, 0
        %v1134 = vsel %vm462, %v1059, 0
        %v1136 = vsel %vm462, %v1061, 0
        %v1138 = vsel %vm462, %v1064, 0
        %v1140 = vsel %vm462, %v1066, 0
        %v1142 = vsel %vm462, %v1069, 0
        %v1144 = vsel %vm462, %v1071, 0
        %v1146 = vsel %vm462, %v1074, 0
        %v1148 = vsel %vm462, %v1076, 0
        %v1150 = vsel %vm462, %v1079, 0
        %v1152 = vsel %vm462, %v1081, 0
        %v1154 = vsel %vm462, %v1084, 0
        %v1156 = vsel %vm462, %v1086, 0
        %v1158 = vsel %vm462, %v1089, 0
        %v1160 = vsel %vm462, %v1091, 0
        %v1162 = vsel %vm462, %v1094, 0
        %v1164 = vsel %vm462, %v1096, 0
        %v1166 = vsel %vm462, %v1099, 0
        %v1168 = vsel %vm462, %v1101, 0
        %v1170 = vsel %vm462, %v1104, 0
        %v1172 = vsel %vm462, %v1106, 0
        %v1174 = vsel %vm462, %v1109, 0
        %v1176 = vsel %vm462, %v1111, 0
        %v1178 = vsel %vm462, %v1114, 0
        %v1180 = vsel %vm462, %v1116, 0
        %v1182 = vsel %vm462, %v1119, 0
        %v1184 = vsel %vm462, %v1121, 0
        %1186 = vmatprep.subr.mxu0 0.0
        %1187 = vmatpush1.msra.mxu0 %v305
        %1188 = vmatprep.subr.mxu0 0.0
        %1189 = vmatpush1.msra.mxu0 %v306
        %1190 = vmatprep.subr.mxu0 0.0
        %1191 = vmatpush1.msra.mxu0 %v307
        %1192 = vmatprep.subr.mxu0 0.0
        %1193 = vmatpush1.msra.mxu0 %v308
        %1194 = vmatprep.subr.mxu0 0.0
        %1195 = vmatpush1.msra.mxu0 0.0
        %1196 = vmatprep.subr.mxu0 0.0
        %1197 = vmatpush1.msra.mxu0 0.0
        %1198 = vmatprep.subr.mxu0 0.0
        %1199 = vmatpush1.msra.mxu0 0.0
        %1200 = vmatprep.subr.mxu0 0.0
        %1201 = vmatpush1.msra.mxu0 0.0
        %1202 = vmatprep.subr.mxu0 0.0
        %1203 = vmatpush1.msra.mxu0 0.0
        %1204 = vmatprep.subr.mxu0 0.0
        %1205 = vmatpush1.msra.mxu0 0.0
        %1206 = vmatprep.subr.mxu0 0.0
        %1207 = vmatpush1.msra.mxu0 0.0
        %1208 = vmatprep.subr.mxu0 0.0
        %1209 = vmatpush1.msra.mxu0 0.0
        %1210 = vmatprep.subr.mxu0 0.0
        %1211 = vmatpush1.msra.mxu0 0.0
        %1212 = vmatprep.subr.mxu0 0.0
        %1213 = vmatpush1.msra.mxu0 0.0
        %1214 = vmatprep.subr.mxu0 0.0
        %1215 = vmatpush1.msra.mxu0 0.0
        %1216 = vmatprep.subr.mxu0 0.0
        %1217 = vmatpush1.msra.mxu0 0.0
        %1218 = vmatprep.subr.mxu0 0.0
        %1219 = vmatpush1.msra.mxu0 0.0
        %1220 = vmatprep.subr.mxu0 0.0
        %1221 = vmatpush1.msra.mxu0 0.0
        %1222 = vmatprep.subr.mxu0 0.0
        %1223 = vmatpush1.msra.mxu0 0.0
        %1224 = vmatprep.subr.mxu0 0.0
        %1225 = vmatpush1.msra.mxu0 0.0
        %1226 = vmatprep.subr.mxu0 0.0
        %1227 = vmatpush1.msra.mxu0 0.0
        %1228 = vmatprep.subr.mxu0 0.0
        %1229 = vmatpush1.msra.mxu0 0.0
        %1230 = vmatprep.subr.mxu0 0.0
        %1231 = vmatpush1.msra.mxu0 0.0
        %1232 = vmatprep.subr.mxu0 0.0
        %1233 = vmatpush1.msra.mxu0 0.0
        %1234 = vmatprep.subr.mxu0 0.0
        %1235 = vmatpush1.msra.mxu0 0.0
        %1236 = vmatprep.subr.mxu0 0.0
        %1237 = vmatpush1.msra.mxu0 0.0
        %1238 = vmatprep.subr.mxu0 0.0
        %1239 = vmatpush1.msra.mxu0 0.0
        %1240 = vmatprep.subr.mxu0 0.0
        %1241 = vmatpush1.msra.mxu0 0.0
        %1242 = vmatprep.subr.mxu0 0.0
        %1243 = vmatpush1.msra.mxu0 0.0
        %1244 = vmatprep.subr.mxu0 0.0
        %1245 = vmatpush1.msra.mxu0 0.0
        %1246 = vmatprep.subr.mxu0 0.0
        %1247 = vmatpush1.msra.mxu0 0.0
        %1248 = vmatprep.subr.mxu0 0.0
        %1249 = vmatpush1.msra.mxu0 0.0
        %1250 = vmatprep.mubr.f32.mxu0 0.0
        %1251 = vmatmul.mubr.f32.gmra.mrb[0].mxu0 %v1122
        %v1252 = vpop.f32.mrb[0].mxu0
        %v1253 = vadd.f32 0.0, %v1252
        %v1254 = vpop.f32.mrb[0].mxu0
        %1255 = vmatprep.mubr.f32.mxu0 0.0
        %1256 = vmatmul.mubr.f32.gmra.mrb[0].mxu0 %v1124
        %v1257 = vpop.f32.mrb[0].mxu0
        %v1258 = vadd.f32 0.0, %v1257
        %v1259 = vpop.f32.mrb[0].mxu0
        %1260 = vmatprep.mubr.f32.mxu0 0.0
        %1261 = vmatmul.mubr.f32.gmra.mrb[0].mxu0 %v1126
        %v1262 = vpop.f32.mrb[0].mxu0
        %v1263 = vadd.f32 0.0, %v1262
        %v1264 = vpop.f32.mrb[0].mxu0
        %1265 = vmatprep.mubr.f32.mxu0 0.0
        %1266 = vmatmul.mubr.f32.gmra.mrb[0].mxu0 %v1128
        %v1267 = vpop.f32.mrb[0].mxu0
        %v1268 = vadd.f32 0.0, %v1267
        %v1269 = vpop.f32.mrb[0].mxu0
        %1270 = vmatprep.mubr.f32.mxu0 0.0
        %1271 = vmatmul.mubr.f32.gmra.mrb[0].mxu0 %v1130
        %v1272 = vpop.f32.mrb[0].mxu0
        %v1273 = vadd.f32 0.0, %v1272
        %v1274 = vpop.f32.mrb[0].mxu0
        %1275 = vmatprep.mubr.f32.mxu0 0.0
        %1276 = vmatmul.mubr.f32.gmra.mrb[0].mxu0 %v1132
        %v1277 = vpop.f32.mrb[0].mxu0
        %v1278 = vadd.f32 0.0, %v1277
        %v1279 = vpop.f32.mrb[0].mxu0
        %1280 = vmatprep.mubr.f32.mxu0 0.0
        %1281 = vmatmul.mubr.f32.gmra.mrb[0].mxu0 %v1134
        %v1282 = vpop.f32.mrb[0].mxu0
        %v1283 = vadd.f32 0.0, %v1282
        %v1284 = vpop.f32.mrb[0].mxu0
        %1285 = vmatprep.mubr.f32.mxu0 0.0
        %1286 = vmatmul.mubr.f32.gmra.mrb[0].mxu0 %v1136
        %v1287 = vpop.f32.mrb[0].mxu0
        %v1288 = vadd.f32 0.0, %v1287
        %v1289 = vpop.f32.mrb[0].mxu0
        %1290 = vmatprep.mubr.f32.mxu0 0.0
        %1291 = vmatmul.mubr.f32.gmra.mrb[0].mxu0 %v1138
        %v1292 = vpop.f32.mrb[0].mxu0
        %v1293 = vadd.f32 0.0, %v1292
        %v1294 = vpop.f32.mrb[0].mxu0
        %1295 = vmatprep.mubr.f32.mxu0 0.0
        %1296 = vmatmul.mubr.f32.gmra.mrb[0].mxu0 %v1140
        %v1297 = vpop.f32.mrb[0].mxu0
        %v1298 = vadd.f32 0.0, %v1297
        %v1299 = vpop.f32.mrb[0].mxu0
        %1300 = vmatprep.mubr.f32.mxu0 0.0
        %1301 = vmatmul.mubr.f32.gmra.mrb[0].mxu0 %v1142
        %v1302 = vpop.f32.mrb[0].mxu0
        %v1303 = vadd.f32 0.0, %v1302
        %v1304 = vpop.f32.mrb[0].mxu0
        %1305 = vmatprep.mubr.f32.mxu0 0.0
        %1306 = vmatmul.mubr.f32.gmra.mrb[0].mxu0 %v1144
        %v1307 = vpop.f32.mrb[0].mxu0
        %v1308 = vadd.f32 0.0, %v1307
        %v1309 = vpop.f32.mrb[0].mxu0
        %1310 = vmatprep.mubr.f32.mxu0 0.0
        %1311 = vmatmul.mubr.f32.gmra.mrb[0].mxu0 %v1146
        %v1312 = vpop.f32.mrb[0].mxu0
        %v1313 = vadd.f32 0.0, %v1312
        %v1314 = vpop.f32.mrb[0].mxu0
        %1315 = vmatprep.mubr.f32.mxu0 0.0
        %1316 = vmatmul.mubr.f32.gmra.mrb[0].mxu0 %v1148
        %v1317 = vpop.f32.mrb[0].mxu0
        %v1318 = vadd.f32 0.0, %v1317
        %v1319 = vpop.f32.mrb[0].mxu0
        %1320 = vmatprep.mubr.f32.mxu0 0.0
        %1321 = vmatmul.mubr.f32.gmra.mrb[0].mxu0 %v1150
        %v1322 = vpop.f32.mrb[0].mxu0
        %v1323 = vadd.f32 0.0, %v1322
        %v1324 = vpop.f32.mrb[0].mxu0
        %1325 = vmatprep.mubr.f32.mxu0 0.0
        %1326 = vmatmul.mubr.f32.gmra.mrb[0].mxu0 %v1152
        %v1327 = vpop.f32.mrb[0].mxu0
        %v1328 = vadd.f32 0.0, %v1327
        %v1329 = vpop.f32.mrb[0].mxu0
        %1330 = vmatprep.mubr.f32.mxu0 0.0
        %1331 = vmatmul.mubr.f32.gmra.mrb[0].mxu0 %v1154
        %v1332 = vpop.f32.mrb[0].mxu0
        %v1333 = vadd.f32 0.0, %v1332
        %v1334 = vpop.f32.mrb[0].mxu0
        %1335 = vmatprep.mubr.f32.mxu0 0.0
        %1336 = vmatmul.mubr.f32.gmra.mrb[0].mxu0 %v1156
        %v1337 = vpop.f32.mrb[0].mxu0
        %v1338 = vadd.f32 0.0, %v1337
        %v1339 = vpop.f32.mrb[0].mxu0
        %1340 = vmatprep.mubr.f32.mxu0 0.0
        %1341 = vmatmul.mubr.f32.gmra.mrb[0].mxu0 %v1158
        %v1342 = vpop.f32.mrb[0].mxu0
        %v1343 = vadd.f32 0.0, %v1342
        %v1344 = vpop.f32.mrb[0].mxu0
        %1345 = vmatprep.mubr.f32.mxu0 0.0
        %1346 = vmatmul.mubr.f32.gmra.mrb[0].mxu0 %v1160
        %v1347 = vpop.f32.mrb[0].mxu0
        %v1348 = vadd.f32 0.0, %v1347
        %v1349 = vpop.f32.mrb[0].mxu0
        %1350 = vmatprep.mubr.f32.mxu0 0.0
        %1351 = vmatmul.mubr.f32.gmra.mrb[0].mxu0 %v1162
        %v1352 = vpop.f32.mrb[0].mxu0
        %v1353 = vadd.f32 0.0, %v1352
        %v1354 = vpop.f32.mrb[0].mxu0
        %1355 = vmatprep.mubr.f32.mxu0 0.0
        %1356 = vmatmul.mubr.f32.gmra.mrb[0].mxu0 %v1164
        %v1357 = vpop.f32.mrb[0].mxu0
        %v1358 = vadd.f32 0.0, %v1357
        %v1359 = vpop.f32.mrb[0].mxu0
        %1360 = vmatprep.mubr.f32.mxu0 0.0
        %1361 = vmatmul.mubr.f32.gmra.mrb[0].mxu0 %v1166
        %v1362 = vpop.f32.mrb[0].mxu0
        %v1363 = vadd.f32 0.0, %v1362
        %v1364 = vpop.f32.mrb[0].mxu0
        %1365 = vmatprep.mubr.f32.mxu0 0.0
        %1366 = vmatmul.mubr.f32.gmra.mrb[0].mxu0 %v1168
        %v1367 = vpop.f32.mrb[0].mxu0
        %v1368 = vadd.f32 0.0, %v1367
        %v1369 = vpop.f32.mrb[0].mxu0
        %1370 = vmatprep.mubr.f32.mxu0 0.0
        %1371 = vmatmul.mubr.f32.gmra.mrb[0].mxu0 %v1170
        %v1372 = vpop.f32.mrb[0].mxu0
        %v1373 = vadd.f32 0.0, %v1372
        %v1374 = vpop.f32.mrb[0].mxu0
        %1375 = vmatprep.mubr.f32.mxu0 0.0
        %1376 = vmatmul.mubr.f32.gmra.mrb[0].mxu0 %v1172
        %v1377 = vpop.f32.mrb[0].mxu0
        %v1378 = vadd.f32 0.0, %v1377
        %v1379 = vpop.f32.mrb[0].mxu0
        %1380 = vmatprep.mubr.f32.mxu0 0.0
        %1381 = vmatmul.mubr.f32.gmra.mrb[0].mxu0 %v1174
        %v1382 = vpop.f32.mrb[0].mxu0
        %v1383 = vadd.f32 0.0, %v1382
        %v1384 = vpop.f32.mrb[0].mxu0
        %1385 = vmatprep.mubr.f32.mxu0 0.0
        %1386 = vmatmul.mubr.f32.gmra.mrb[0].mxu0 %v1176
        %v1387 = vpop.f32.mrb[0].mxu0
        %v1388 = vadd.f32 0.0, %v1387
        %v1389 = vpop.f32.mrb[0].mxu0
        %1390 = vmatprep.mubr.f32.mxu0 0.0
        %1391 = vmatmul.mubr.f32.gmra.mrb[0].mxu0 %v1178
        %v1392 = vpop.f32.mrb[0].mxu0
        %v1393 = vadd.f32 0.0, %v1392
        %v1394 = vpop.f32.mrb[0].mxu0
        %1395 = vmatprep.mubr.f32.mxu0 0.0
        %1396 = vmatmul.mubr.f32.gmra.mrb[0].mxu0 %v1180
        %v1397 = vpop.f32.mrb[0].mxu0
        %v1398 = vadd.f32 0.0, %v1397
        %v1399 = vpop.f32.mrb[0].mxu0
        %1400 = vmatprep.mubr.f32.mxu0 0.0
        %1401 = vmatmul.mubr.f32.gmra.mrb[0].mxu0 %v1182
        %v1402 = vpop.f32.mrb[0].mxu0
        %v1403 = vadd.f32 0.0, %v1402
        %v1404 = vpop.f32.mrb[0].mxu0
        %1405 = vmatprep.mubr.f32.mxu0 0.0
        %1406 = vmatmul.mubr.f32.gmra.mrb[0].mxu0 %v1184
        %v1407 = vpop.f32.mrb[0].mxu0
        %v1408 = vadd.f32 0.0, %v1407
        %v1409 = vpop.f32.mrb[0].mxu0
        %1410 = vdwg.mxu0
        %v1411 = vadd.f32 %v883, %v1253
        %v1412 = vadd.f32 %v888, %v1258
        %v1413 = vadd.f32 %v893, %v1263
        %v1414 = vadd.f32 %v898, %v1268
        %v1415 = vadd.f32 %v903, %v1273
        %v1416 = vadd.f32 %v908, %v1278
        %v1417 = vadd.f32 %v913, %v1283
        %v1418 = vadd.f32 %v918, %v1288
        %v1419 = vadd.f32 %v923, %v1293
        %v1420 = vadd.f32 %v928, %v1298
        %v1421 = vadd.f32 %v933, %v1303
        %v1422 = vadd.f32 %v938, %v1308
        %v1423 = vadd.f32 %v943, %v1313
        %v1424 = vadd.f32 %v948, %v1318
        %v1425 = vadd.f32 %v953, %v1323
        %v1426 = vadd.f32 %v958, %v1328
        %v1427 = vadd.f32 %v963, %v1333
        %v1428 = vadd.f32 %v968, %v1338
        %v1429 = vadd.f32 %v973, %v1343
        %v1430 = vadd.f32 %v978, %v1348
        %v1431 = vadd.f32 %v983, %v1353
        %v1432 = vadd.f32 %v988, %v1358
        %v1433 = vadd.f32 %v993, %v1363
        %v1434 = vadd.f32 %v998, %v1368
        %v1435 = vadd.f32 %v1003, %v1373
        %v1436 = vadd.f32 %v1008, %v1378
        %v1437 = vadd.f32 %v1013, %v1383
        %v1438 = vadd.f32 %v1018, %v1388
        %v1439 = vadd.f32 %v1023, %v1393
        %v1440 = vadd.f32 %v1028, %v1398
        %v1441 = vadd.f32 %v1033, %v1403
        %v1442 = vadd.f32 %v1038, %v1408
        %v1444 = vsel %vm462, %v291, 0
        %v1447 = vsel %vm462, %v292, 0
        %1449 = vmatprep.subr.mxu0 0.0
        %1450 = vmatpush1.msra.mxu0 %v309
        %1451 = vmatprep.subr.mxu0 0.0
        %1452 = vmatpush1.msra.mxu0 %v310
        %1453 = vmatprep.subr.mxu0 0.0
        %1454 = vmatpush1.msra.mxu0 %v311
        %1455 = vmatprep.subr.mxu0 0.0
        %1456 = vmatpush1.msra.mxu0 %v312
        %1457 = vmatprep.subr.mxu0 0.0
        %1458 = vmatpush1.msra.mxu0 0.0
        %1459 = vmatprep.subr.mxu0 0.0
        %1460 = vmatpush1.msra.mxu0 0.0
        %1461 = vmatprep.subr.mxu0 0.0
        %1462 = vmatpush1.msra.mxu0 0.0
        %1463 = vmatprep.subr.mxu0 0.0
        %1464 = vmatpush1.msra.mxu0 0.0
        %1465 = vmatprep.subr.mxu0 0.0
        %1466 = vmatpush1.msra.mxu0 0.0
        %1467 = vmatprep.subr.mxu0 0.0
        %1468 = vmatpush1.msra.mxu0 0.0
        %1469 = vmatprep.subr.mxu0 0.0
        %1470 = vmatpush1.msra.mxu0 0.0
        %1471 = vmatprep.subr.mxu0 0.0
        %1472 = vmatpush1.msra.mxu0 0.0
        %1473 = vmatprep.subr.mxu0 0.0
        %1474 = vmatpush1.msra.mxu0 0.0
        %1475 = vmatprep.subr.mxu0 0.0
        %1476 = vmatpush1.msra.mxu0 0.0
        %1477 = vmatprep.subr.mxu0 0.0
        %1478 = vmatpush1.msra.mxu0 0.0
        %1479 = vmatprep.subr.mxu0 0.0
        %1480 = vmatpush1.msra.mxu0 0.0
        %1481 = vmatprep.subr.mxu0 0.0
        %1482 = vmatpush1.msra.mxu0 0.0
        %1483 = vmatprep.subr.mxu0 0.0
        %1484 = vmatpush1.msra.mxu0 0.0
        %1485 = vmatprep.subr.mxu0 0.0
        %1486 = vmatpush1.msra.mxu0 0.0
        %1487 = vmatprep.subr.mxu0 0.0
        %1488 = vmatpush1.msra.mxu0 0.0
        %1489 = vmatprep.subr.mxu0 0.0
        %1490 = vmatpush1.msra.mxu0 0.0
        %1491 = vmatprep.subr.mxu0 0.0
        %1492 = vmatpush1.msra.mxu0 0.0
        %1493 = vmatprep.subr.mxu0 0.0
        %1494 = vmatpush1.msra.mxu0 0.0
        %1495 = vmatprep.subr.mxu0 0.0
        %1496 = vmatpush1.msra.mxu0 0.0
        %1497 = vmatprep.subr.mxu0 0.0
        %1498 = vmatpush1.msra.mxu0 0.0
        %1499 = vmatprep.subr.mxu0 0.0
        %1500 = vmatpush1.msra.mxu0 0.0
        %1501 = vmatprep.subr.mxu0 0.0
        %1502 = vmatpush1.msra.mxu0 0.0
        %1503 = vmatprep.subr.mxu0 0.0
        %1504 = vmatpush1.msra.mxu0 0.0
        %1505 = vmatprep.subr.mxu0 0.0
        %1506 = vmatpush1.msra.mxu0 0.0
        %1507 = vmatprep.subr.mxu0 0.0
        %1508 = vmatpush1.msra.mxu0 0.0
        %1509 = vmatprep.subr.mxu0 0.0
        %1510 = vmatpush1.msra.mxu0 0.0
        %1511 = vmatprep.subr.mxu0 0.0
        %1512 = vmatpush1.msra.mxu0 0.0
        %1513 = vmatprep.mubr.f32.mxu0 0.0
        %1514 = vmatmul.mubr.f32.gmra.mrb[0].mxu0 %v756
        %v1515 = vpop.f32.mrb[0].mxu0
        %v1516 = vadd.f32 0.0, %v1515
        %v1517 = vpop.f32.mrb[0].mxu0
        %1518 = vmatprep.mubr.f32.mxu0 0.0
        %1519 = vmatmul.mubr.f32.gmra.mrb[0].mxu0 %v758
        %v1520 = vpop.f32.mrb[0].mxu0
        %v1521 = vadd.f32 0.0, %v1520
        %v1522 = vpop.f32.mrb[0].mxu0
        %1523 = vmatprep.mubr.f32.mxu0 0.0
        %1524 = vmatmul.mubr.f32.gmra.mrb[0].mxu0 %v760
        %v1525 = vpop.f32.mrb[0].mxu0
        %v1526 = vadd.f32 0.0, %v1525
        %v1527 = vpop.f32.mrb[0].mxu0
        %1528 = vmatprep.mubr.f32.mxu0 0.0
        %1529 = vmatmul.mubr.f32.gmra.mrb[0].mxu0 %v762
        %v1530 = vpop.f32.mrb[0].mxu0
        %v1531 = vadd.f32 0.0, %v1530
        %v1532 = vpop.f32.mrb[0].mxu0
        %1533 = vmatprep.mubr.f32.mxu0 0.0
        %1534 = vmatmul.mubr.f32.gmra.mrb[0].mxu0 %v764
        %v1535 = vpop.f32.mrb[0].mxu0
        %v1536 = vadd.f32 0.0, %v1535
        %v1537 = vpop.f32.mrb[0].mxu0
        %1538 = vmatprep.mubr.f32.mxu0 0.0
        %1539 = vmatmul.mubr.f32.gmra.mrb[0].mxu0 %v766
        %v1540 = vpop.f32.mrb[0].mxu0
        %v1541 = vadd.f32 0.0, %v1540
        %v1542 = vpop.f32.mrb[0].mxu0
        %1543 = vmatprep.mubr.f32.mxu0 0.0
        %1544 = vmatmul.mubr.f32.gmra.mrb[0].mxu0 %v768
        %v1545 = vpop.f32.mrb[0].mxu0
        %v1546 = vadd.f32 0.0, %v1545
        %v1547 = vpop.f32.mrb[0].mxu0
        %1548 = vmatprep.mubr.f32.mxu0 0.0
        %1549 = vmatmul.mubr.f32.gmra.mrb[0].mxu0 %v770
        %v1550 = vpop.f32.mrb[0].mxu0
        %v1551 = vadd.f32 0.0, %v1550
        %v1552 = vpop.f32.mrb[0].mxu0
        %1553 = vmatprep.mubr.f32.mxu0 0.0
        %1554 = vmatmul.mubr.f32.gmra.mrb[0].mxu0 %v772
        %v1555 = vpop.f32.mrb[0].mxu0
        %v1556 = vadd.f32 0.0, %v1555
        %v1557 = vpop.f32.mrb[0].mxu0
        %1558 = vmatprep.mubr.f32.mxu0 0.0
        %1559 = vmatmul.mubr.f32.gmra.mrb[0].mxu0 %v774
        %v1560 = vpop.f32.mrb[0].mxu0
        %v1561 = vadd.f32 0.0, %v1560
        %v1562 = vpop.f32.mrb[0].mxu0
        %1563 = vmatprep.mubr.f32.mxu0 0.0
        %1564 = vmatmul.mubr.f32.gmra.mrb[0].mxu0 %v776
        %v1565 = vpop.f32.mrb[0].mxu0
        %v1566 = vadd.f32 0.0, %v1565
        %v1567 = vpop.f32.mrb[0].mxu0
        %1568 = vmatprep.mubr.f32.mxu0 0.0
        %1569 = vmatmul.mubr.f32.gmra.mrb[0].mxu0 %v778
        %v1570 = vpop.f32.mrb[0].mxu0
        %v1571 = vadd.f32 0.0, %v1570
        %v1572 = vpop.f32.mrb[0].mxu0
        %1573 = vmatprep.mubr.f32.mxu0 0.0
        %1574 = vmatmul.mubr.f32.gmra.mrb[0].mxu0 %v780
        %v1575 = vpop.f32.mrb[0].mxu0
        %v1576 = vadd.f32 0.0, %v1575
        %v1577 = vpop.f32.mrb[0].mxu0
        %1578 = vmatprep.mubr.f32.mxu0 0.0
        %1579 = vmatmul.mubr.f32.gmra.mrb[0].mxu0 %v782
        %v1580 = vpop.f32.mrb[0].mxu0
        %v1581 = vadd.f32 0.0, %v1580
        %v1582 = vpop.f32.mrb[0].mxu0
        %1583 = vmatprep.mubr.f32.mxu0 0.0
        %1584 = vmatmul.mubr.f32.gmra.mrb[0].mxu0 %v784
        %v1585 = vpop.f32.mrb[0].mxu0
        %v1586 = vadd.f32 0.0, %v1585
        %v1587 = vpop.f32.mrb[0].mxu0
        %1588 = vmatprep.mubr.f32.mxu0 0.0
        %1589 = vmatmul.mubr.f32.gmra.mrb[0].mxu0 %v786
        %v1590 = vpop.f32.mrb[0].mxu0
        %v1591 = vadd.f32 0.0, %v1590
        %v1592 = vpop.f32.mrb[0].mxu0
        %1593 = vmatprep.mubr.f32.mxu0 0.0
        %1594 = vmatmul.mubr.f32.gmra.mrb[0].mxu0 %v788
        %v1595 = vpop.f32.mrb[0].mxu0
        %v1596 = vadd.f32 0.0, %v1595
        %v1597 = vpop.f32.mrb[0].mxu0
        %1598 = vmatprep.mubr.f32.mxu0 0.0
        %1599 = vmatmul.mubr.f32.gmra.mrb[0].mxu0 %v790
        %v1600 = vpop.f32.mrb[0].mxu0
        %v1601 = vadd.f32 0.0, %v1600
        %v1602 = vpop.f32.mrb[0].mxu0
        %1603 = vmatprep.mubr.f32.mxu0 0.0
        %1604 = vmatmul.mubr.f32.gmra.mrb[0].mxu0 %v792
        %v1605 = vpop.f32.mrb[0].mxu0
        %v1606 = vadd.f32 0.0, %v1605
        %v1607 = vpop.f32.mrb[0].mxu0
        %1608 = vmatprep.mubr.f32.mxu0 0.0
        %1609 = vmatmul.mubr.f32.gmra.mrb[0].mxu0 %v794
        %v1610 = vpop.f32.mrb[0].mxu0
        %v1611 = vadd.f32 0.0, %v1610
        %v1612 = vpop.f32.mrb[0].mxu0
        %1613 = vmatprep.mubr.f32.mxu0 0.0
        %1614 = vmatmul.mubr.f32.gmra.mrb[0].mxu0 %v796
        %v1615 = vpop.f32.mrb[0].mxu0
        %v1616 = vadd.f32 0.0, %v1615
        %v1617 = vpop.f32.mrb[0].mxu0
        %1618 = vmatprep.mubr.f32.mxu0 0.0
        %1619 = vmatmul.mubr.f32.gmra.mrb[0].mxu0 %v798
        %v1620 = vpop.f32.mrb[0].mxu0
        %v1621 = vadd.f32 0.0, %v1620
        %v1622 = vpop.f32.mrb[0].mxu0
        %1623 = vmatprep.mubr.f32.mxu0 0.0
        %1624 = vmatmul.mubr.f32.gmra.mrb[0].mxu0 %v800
        %v1625 = vpop.f32.mrb[0].mxu0
        %v1626 = vadd.f32 0.0, %v1625
        %v1627 = vpop.f32.mrb[0].mxu0
        %1628 = vmatprep.mubr.f32.mxu0 0.0
        %1629 = vmatmul.mubr.f32.gmra.mrb[0].mxu0 %v802
        %v1630 = vpop.f32.mrb[0].mxu0
        %v1631 = vadd.f32 0.0, %v1630
        %v1632 = vpop.f32.mrb[0].mxu0
        %1633 = vmatprep.mubr.f32.mxu0 0.0
        %1634 = vmatmul.mubr.f32.gmra.mrb[0].mxu0 %v804
        %v1635 = vpop.f32.mrb[0].mxu0
        %v1636 = vadd.f32 0.0, %v1635
        %v1637 = vpop.f32.mrb[0].mxu0
        %1638 = vmatprep.mubr.f32.mxu0 0.0
        %1639 = vmatmul.mubr.f32.gmra.mrb[0].mxu0 %v806
        %v1640 = vpop.f32.mrb[0].mxu0
        %v1641 = vadd.f32 0.0, %v1640
        %v1642 = vpop.f32.mrb[0].mxu0
        %1643 = vmatprep.mubr.f32.mxu0 0.0
        %1644 = vmatmul.mubr.f32.gmra.mrb[0].mxu0 %v808
        %v1645 = vpop.f32.mrb[0].mxu0
        %v1646 = vadd.f32 0.0, %v1645
        %v1647 = vpop.f32.mrb[0].mxu0
        %1648 = vmatprep.mubr.f32.mxu0 0.0
        %1649 = vmatmul.mubr.f32.gmra.mrb[0].mxu0 %v810
        %v1650 = vpop.f32.mrb[0].mxu0
        %v1651 = vadd.f32 0.0, %v1650
        %v1652 = vpop.f32.mrb[0].mxu0
        %1653 = vmatprep.mubr.f32.mxu0 0.0
        %1654 = vmatmul.mubr.f32.gmra.mrb[0].mxu0 %v812
        %v1655 = vpop.f32.mrb[0].mxu0
        %v1656 = vadd.f32 0.0, %v1655
        %v1657 = vpop.f32.mrb[0].mxu0
        %1658 = vmatprep.mubr.f32.mxu0 0.0
        %1659 = vmatmul.mubr.f32.gmra.mrb[0].mxu0 %v814
        %v1660 = vpop.f32.mrb[0].mxu0
        %v1661 = vadd.f32 0.0, %v1660
        %v1662 = vpop.f32.mrb[0].mxu0
        %1663 = vmatprep.mubr.f32.mxu0 0.0
        %1664 = vmatmul.mubr.f32.gmra.mrb[0].mxu0 %v1444
        %v1665 = vpop.f32.mrb[0].mxu0
        %v1666 = vadd.f32 0.0, %v1665
        %v1667 = vpop.f32.mrb[0].mxu0
        %1668 = vmatprep.mubr.f32.mxu0 0.0
        %1669 = vmatmul.mubr.f32.gmra.mrb[0].mxu0 %v1447
        %v1670 = vpop.f32.mrb[0].mxu0
        %v1671 = vadd.f32 0.0, %v1670
        %v1672 = vpop.f32.mrb[0].mxu0
        %1673 = vdwg.mxu0
        %v1674 = vadd.f32 %v1411, %v1516
        %v1675 = vadd.f32 %v1412, %v1521
        %v1676 = vadd.f32 %v1413, %v1526
        %v1677 = vadd.f32 %v1414, %v1531
        %v1678 = vadd.f32 %v1415, %v1536
        %v1679 = vadd.f32 %v1416, %v1541
        %v1680 = vadd.f32 %v1417, %v1546
        %v1681 = vadd.f32 %v1418, %v1551
        %v1682 = vadd.f32 %v1419, %v1556
        %v1683 = vadd.f32 %v1420, %v1561
        %v1684 = vadd.f32 %v1421, %v1566
        %v1685 = vadd.f32 %v1422, %v1571
        %v1686 = vadd.f32 %v1423, %v1576
        %v1687 = vadd.f32 %v1424, %v1581
        %v1688 = vadd.f32 %v1425, %v1586
        %v1689 = vadd.f32 %v1426, %v1591
        %v1690 = vadd.f32 %v1427, %v1596
        %v1691 = vadd.f32 %v1428, %v1601
        %v1692 = vadd.f32 %v1429, %v1606
        %v1693 = vadd.f32 %v1430, %v1611
        %v1694 = vadd.f32 %v1431, %v1616
        %v1695 = vadd.f32 %v1432, %v1621
        %v1696 = vadd.f32 %v1433, %v1626
        %v1697 = vadd.f32 %v1434, %v1631
        %v1698 = vadd.f32 %v1435, %v1636
        %v1699 = vadd.f32 %v1436, %v1641
        %v1700 = vadd.f32 %v1437, %v1646
        %v1701 = vadd.f32 %v1438, %v1651
        %v1702 = vadd.f32 %v1439, %v1656
        %v1703 = vadd.f32 %v1440, %v1661
        %v1704 = vadd.f32 %v1441, %v1666
        %v1705 = vadd.f32 %v1442, %v1671
        %v1707 = vrot.slane %v291, 1
        %v1708 = vrot.slane %v292, 1
        %v1709 = vsel %vm381, %v1707, %v1708
        %v1710 = vrot.slane %v293, 1
        %v1711 = vsel %vm381, %v1708, %v1710
        %v1712 = vsel %vm462, %v1709, 0
        %v1714 = vsel %vm462, %v1711, 0
        %1716 = vmatprep.subr.mxu0 0.0
        %1717 = vmatpush1.msra.mxu0 %v313
        %1718 = vmatprep.subr.mxu0 0.0
        %1719 = vmatpush1.msra.mxu0 %v314
        %1720 = vmatprep.subr.mxu0 0.0
        %1721 = vmatpush1.msra.mxu0 %v315
        %1722 = vmatprep.subr.mxu0 0.0
        %1723 = vmatpush1.msra.mxu0 %v316
        %1724 = vmatprep.subr.mxu0 0.0
        %1725 = vmatpush1.msra.mxu0 0.0
        %1726 = vmatprep.subr.mxu0 0.0
        %1727 = vmatpush1.msra.mxu0 0.0
        %1728 = vmatprep.subr.mxu0 0.0
        %1729 = vmatpush1.msra.mxu0 0.0
        %1730 = vmatprep.subr.mxu0 0.0
        %1731 = vmatpush1.msra.mxu0 0.0
        %1732 = vmatprep.subr.mxu0 0.0
        %1733 = vmatpush1.msra.mxu0 0.0
        %1734 = vmatprep.subr.mxu0 0.0
        %1735 = vmatpush1.msra.mxu0 0.0
        %1736 = vmatprep.subr.mxu0 0.0
        %1737 = vmatpush1.msra.mxu0 0.0
        %1738 = vmatprep.subr.mxu0 0.0
        %1739 = vmatpush1.msra.mxu0 0.0
        %1740 = vmatprep.subr.mxu0 0.0
        %1741 = vmatpush1.msra.mxu0 0.0
        %1742 = vmatprep.subr.mxu0 0.0
        %1743 = vmatpush1.msra.mxu0 0.0
        %1744 = vmatprep.subr.mxu0 0.0
        %1745 = vmatpush1.msra.mxu0 0.0
        %1746 = vmatprep.subr.mxu0 0.0
        %1747 = vmatpush1.msra.mxu0 0.0
        %1748 = vmatprep.subr.mxu0 0.0
        %1749 = vmatpush1.msra.mxu0 0.0
        %1750 = vmatprep.subr.mxu0 0.0
        %1751 = vmatpush1.msra.mxu0 0.0
        %1752 = vmatprep.subr.mxu0 0.0
        %1753 = vmatpush1.msra.mxu0 0.0
        %1754 = vmatprep.subr.mxu0 0.0
        %1755 = vmatpush1.msra.mxu0 0.0
        %1756 = vmatprep.subr.mxu0 0.0
        %1757 = vmatpush1.msra.mxu0 0.0
        %1758 = vmatprep.subr.mxu0 0.0
        %1759 = vmatpush1.msra.mxu0 0.0
        %1760 = vmatprep.subr.mxu0 0.0
        %1761 = vmatpush1.msra.mxu0 0.0
        %1762 = vmatprep.subr.mxu0 0.0
        %1763 = vmatpush1.msra.mxu0 0.0
        %1764 = vmatprep.subr.mxu0 0.0
        %1765 = vmatpush1.msra.mxu0 0.0
        %1766 = vmatprep.subr.mxu0 0.0
        %1767 = vmatpush1.msra.mxu0 0.0
        %1768 = vmatprep.subr.mxu0 0.0
        %1769 = vmatpush1.msra.mxu0 0.0
        %1770 = vmatprep.subr.mxu0 0.0
        %1771 = vmatpush1.msra.mxu0 0.0
        %1772 = vmatprep.subr.mxu0 0.0
        %1773 = vmatpush1.msra.mxu0 0.0
        %1774 = vmatprep.subr.mxu0 0.0
        %1775 = vmatpush1.msra.mxu0 0.0
        %1776 = vmatprep.subr.mxu0 0.0
        %1777 = vmatpush1.msra.mxu0 0.0
        %1778 = vmatprep.subr.mxu0 0.0
        %1779 = vmatpush1.msra.mxu0 0.0
        %1780 = vmatprep.mubr.f32.mxu0 0.0
        %1781 = vmatmul.mubr.f32.gmra.mrb[0].mxu0 %v467
        %v1782 = vpop.f32.mrb[0].mxu0
        %v1783 = vadd.f32 0.0, %v1782
        %v1784 = vpop.f32.mrb[0].mxu0
        %1785 = vmatprep.mubr.f32.mxu0 0.0
        %1786 = vmatmul.mubr.f32.gmra.mrb[0].mxu0 %v469
        %v1787 = vpop.f32.mrb[0].mxu0
        %v1788 = vadd.f32 0.0, %v1787
        %v1789 = vpop.f32.mrb[0].mxu0
        %1790 = vmatprep.mubr.f32.mxu0 0.0
        %1791 = vmatmul.mubr.f32.gmra.mrb[0].mxu0 %v471
        %v1792 = vpop.f32.mrb[0].mxu0
        %v1793 = vadd.f32 0.0, %v1792
        %v1794 = vpop.f32.mrb[0].mxu0
        %1795 = vmatprep.mubr.f32.mxu0 0.0
        %1796 = vmatmul.mubr.f32.gmra.mrb[0].mxu0 %v473
        %v1797 = vpop.f32.mrb[0].mxu0
        %v1798 = vadd.f32 0.0, %v1797
        %v1799 = vpop.f32.mrb[0].mxu0
        %1800 = vmatprep.mubr.f32.mxu0 0.0
        %1801 = vmatmul.mubr.f32.gmra.mrb[0].mxu0 %v475
        %v1802 = vpop.f32.mrb[0].mxu0
        %v1803 = vadd.f32 0.0, %v1802
        %v1804 = vpop.f32.mrb[0].mxu0
        %1805 = vmatprep.mubr.f32.mxu0 0.0
        %1806 = vmatmul.mubr.f32.gmra.mrb[0].mxu0 %v477
        %v1807 = vpop.f32.mrb[0].mxu0
        %v1808 = vadd.f32 0.0, %v1807
        %v1809 = vpop.f32.mrb[0].mxu0
        %1810 = vmatprep.mubr.f32.mxu0 0.0
        %1811 = vmatmul.mubr.f32.gmra.mrb[0].mxu0 %v479
        %v1812 = vpop.f32.mrb[0].mxu0
        %v1813 = vadd.f32 0.0, %v1812
        %v1814 = vpop.f32.mrb[0].mxu0
        %1815 = vmatprep.mubr.f32.mxu0 0.0
        %1816 = vmatmul.mubr.f32.gmra.mrb[0].mxu0 %v481
        %v1817 = vpop.f32.mrb[0].mxu0
        %v1818 = vadd.f32 0.0, %v1817
        %v1819 = vpop.f32.mrb[0].mxu0
        %1820 = vmatprep.mubr.f32.mxu0 0.0
        %1821 = vmatmul.mubr.f32.gmra.mrb[0].mxu0 %v483
        %v1822 = vpop.f32.mrb[0].mxu0
        %v1823 = vadd.f32 0.0, %v1822
        %v1824 = vpop.f32.mrb[0].mxu0
        %1825 = vmatprep.mubr.f32.mxu0 0.0
        %1826 = vmatmul.mubr.f32.gmra.mrb[0].mxu0 %v485
        %v1827 = vpop.f32.mrb[0].mxu0
        %v1828 = vadd.f32 0.0, %v1827
        %v1829 = vpop.f32.mrb[0].mxu0
        %1830 = vmatprep.mubr.f32.mxu0 0.0
        %1831 = vmatmul.mubr.f32.gmra.mrb[0].mxu0 %v487
        %v1832 = vpop.f32.mrb[0].mxu0
        %v1833 = vadd.f32 0.0, %v1832
        %v1834 = vpop.f32.mrb[0].mxu0
        %1835 = vmatprep.mubr.f32.mxu0 0.0
        %1836 = vmatmul.mubr.f32.gmra.mrb[0].mxu0 %v489
        %v1837 = vpop.f32.mrb[0].mxu0
        %v1838 = vadd.f32 0.0, %v1837
        %v1839 = vpop.f32.mrb[0].mxu0
        %1840 = vmatprep.mubr.f32.mxu0 0.0
        %1841 = vmatmul.mubr.f32.gmra.mrb[0].mxu0 %v491
        %v1842 = vpop.f32.mrb[0].mxu0
        %v1843 = vadd.f32 0.0, %v1842
        %v1844 = vpop.f32.mrb[0].mxu0
        %1845 = vmatprep.mubr.f32.mxu0 0.0
        %1846 = vmatmul.mubr.f32.gmra.mrb[0].mxu0 %v493
        %v1847 = vpop.f32.mrb[0].mxu0
        %v1848 = vadd.f32 0.0, %v1847
        %v1849 = vpop.f32.mrb[0].mxu0
        %1850 = vmatprep.mubr.f32.mxu0 0.0
        %1851 = vmatmul.mubr.f32.gmra.mrb[0].mxu0 %v495
        %v1852 = vpop.f32.mrb[0].mxu0
        %v1853 = vadd.f32 0.0, %v1852
        %v1854 = vpop.f32.mrb[0].mxu0
        %1855 = vmatprep.mubr.f32.mxu0 0.0
        %1856 = vmatmul.mubr.f32.gmra.mrb[0].mxu0 %v497
        %v1857 = vpop.f32.mrb[0].mxu0
        %v1858 = vadd.f32 0.0, %v1857
        %v1859 = vpop.f32.mrb[0].mxu0
        %1860 = vmatprep.mubr.f32.mxu0 0.0
        %1861 = vmatmul.mubr.f32.gmra.mrb[0].mxu0 %v499
        %v1862 = vpop.f32.mrb[0].mxu0
        %v1863 = vadd.f32 0.0, %v1862
        %v1864 = vpop.f32.mrb[0].mxu0
        %1865 = vmatprep.mubr.f32.mxu0 0.0
        %1866 = vmatmul.mubr.f32.gmra.mrb[0].mxu0 %v501
        %v1867 = vpop.f32.mrb[0].mxu0
        %v1868 = vadd.f32 0.0, %v1867
        %v1869 = vpop.f32.mrb[0].mxu0
        %1870 = vmatprep.mubr.f32.mxu0 0.0
        %1871 = vmatmul.mubr.f32.gmra.mrb[0].mxu0 %v503
        %v1872 = vpop.f32.mrb[0].mxu0
        %v1873 = vadd.f32 0.0, %v1872
        %v1874 = vpop.f32.mrb[0].mxu0
        %1875 = vmatprep.mubr.f32.mxu0 0.0
        %1876 = vmatmul.mubr.f32.gmra.mrb[0].mxu0 %v505
        %v1877 = vpop.f32.mrb[0].mxu0
        %v1878 = vadd.f32 0.0, %v1877
        %v1879 = vpop.f32.mrb[0].mxu0
        %1880 = vmatprep.mubr.f32.mxu0 0.0
        %1881 = vmatmul.mubr.f32.gmra.mrb[0].mxu0 %v507
        %v1882 = vpop.f32.mrb[0].mxu0
        %v1883 = vadd.f32 0.0, %v1882
        %v1884 = vpop.f32.mrb[0].mxu0
        %1885 = vmatprep.mubr.f32.mxu0 0.0
        %1886 = vmatmul.mubr.f32.gmra.mrb[0].mxu0 %v509
        %v1887 = vpop.f32.mrb[0].mxu0
        %v1888 = vadd.f32 0.0, %v1887
        %v1889 = vpop.f32.mrb[0].mxu0
        %1890 = vmatprep.mubr.f32.mxu0 0.0
        %1891 = vmatmul.mubr.f32.gmra.mrb[0].mxu0 %v511
        %v1892 = vpop.f32.mrb[0].mxu0
        %v1893 = vadd.f32 0.0, %v1892
        %v1894 = vpop.f32.mrb[0].mxu0
        %1895 = vmatprep.mubr.f32.mxu0 0.0
        %1896 = vmatmul.mubr.f32.gmra.mrb[0].mxu0 %v513
        %v1897 = vpop.f32.mrb[0].mxu0
        %v1898 = vadd.f32 0.0, %v1897
        %v1899 = vpop.f32.mrb[0].mxu0
        %1900 = vmatprep.mubr.f32.mxu0 0.0
        %1901 = vmatmul.mubr.f32.gmra.mrb[0].mxu0 %v515
        %v1902 = vpop.f32.mrb[0].mxu0
        %v1903 = vadd.f32 0.0, %v1902
        %v1904 = vpop.f32.mrb[0].mxu0
        %1905 = vmatprep.mubr.f32.mxu0 0.0
        %1906 = vmatmul.mubr.f32.gmra.mrb[0].mxu0 %v517
        %v1907 = vpop.f32.mrb[0].mxu0
        %v1908 = vadd.f32 0.0, %v1907
        %v1909 = vpop.f32.mrb[0].mxu0
        %1910 = vmatprep.mubr.f32.mxu0 0.0
        %1911 = vmatmul.mubr.f32.gmra.mrb[0].mxu0 %v519
        %v1912 = vpop.f32.mrb[0].mxu0
        %v1913 = vadd.f32 0.0, %v1912
        %v1914 = vpop.f32.mrb[0].mxu0
        %1915 = vmatprep.mubr.f32.mxu0 0.0
        %1916 = vmatmul.mubr.f32.gmra.mrb[0].mxu0 %v521
        %v1917 = vpop.f32.mrb[0].mxu0
        %v1918 = vadd.f32 0.0, %v1917
        %v1919 = vpop.f32.mrb[0].mxu0
        %1920 = vmatprep.mubr.f32.mxu0 0.0
        %1921 = vmatmul.mubr.f32.gmra.mrb[0].mxu0 %v523
        %v1922 = vpop.f32.mrb[0].mxu0
        %v1923 = vadd.f32 0.0, %v1922
        %v1924 = vpop.f32.mrb[0].mxu0
        %1925 = vmatprep.mubr.f32.mxu0 0.0
        %1926 = vmatmul.mubr.f32.gmra.mrb[0].mxu0 %v525
        %v1927 = vpop.f32.mrb[0].mxu0
        %v1928 = vadd.f32 0.0, %v1927
        %v1929 = vpop.f32.mrb[0].mxu0
        %1930 = vmatprep.mubr.f32.mxu0 0.0
        %1931 = vmatmul.mubr.f32.gmra.mrb[0].mxu0 %v1712
        %v1932 = vpop.f32.mrb[0].mxu0
        %v1933 = vadd.f32 0.0, %v1932
        %v1934 = vpop.f32.mrb[0].mxu0
        %1935 = vmatprep.mubr.f32.mxu0 0.0
        %1936 = vmatmul.mubr.f32.gmra.mrb[0].mxu0 %v1714
        %v1937 = vpop.f32.mrb[0].mxu0
        %v1938 = vadd.f32 0.0, %v1937
        %v1939 = vpop.f32.mrb[0].mxu0
        %1940 = vdwg.mxu0
        %v1941 = vadd.f32 %v1674, %v1783
        %v1942 = vadd.f32 %v1675, %v1788
        %v1943 = vadd.f32 %v1676, %v1793
        %v1944 = vadd.f32 %v1677, %v1798
        %v1945 = vadd.f32 %v1678, %v1803
        %v1946 = vadd.f32 %v1679, %v1808
        %v1947 = vadd.f32 %v1680, %v1813
        %v1948 = vadd.f32 %v1681, %v1818
        %v1949 = vadd.f32 %v1682, %v1823
        %v1950 = vadd.f32 %v1683, %v1828
        %v1951 = vadd.f32 %v1684, %v1833
        %v1952 = vadd.f32 %v1685, %v1838
        %v1953 = vadd.f32 %v1686, %v1843
        %v1954 = vadd.f32 %v1687, %v1848
        %v1955 = vadd.f32 %v1688, %v1853
        %v1956 = vadd.f32 %v1689, %v1858
        %v1957 = vadd.f32 %v1690, %v1863
        %v1958 = vadd.f32 %v1691, %v1868
        %v1959 = vadd.f32 %v1692, %v1873
        %v1960 = vadd.f32 %v1693, %v1878
        %v1961 = vadd.f32 %v1694, %v1883
        %v1962 = vadd.f32 %v1695, %v1888
        %v1963 = vadd.f32 %v1696, %v1893
        %v1964 = vadd.f32 %v1697, %v1898
        %v1965 = vadd.f32 %v1698, %v1903
        %v1966 = vadd.f32 %v1699, %v1908
        %v1967 = vadd.f32 %v1700, %v1913
        %v1968 = vadd.f32 %v1701, %v1918
        %v1969 = vadd.f32 %v1702, %v1923
        %v1970 = vadd.f32 %v1703, %v1928
        %v1971 = vadd.f32 %v1704, %v1933
        %v1972 = vadd.f32 %v1705, %v1938
        %v1973 = vrot.slane %v291, 2
        %v1974 = vrot.slane %v292, 2
        %v1975 = vsel %vm1041, %v1973, %v1974
        %v1976 = vrot.slane %v293, 2
        %v1977 = vsel %vm1041, %v1974, %v1976
        %v1978 = vsel %vm462, %v1975, 0
        %v1980 = vsel %vm462, %v1977, 0
        %1982 = vmatprep.subr.mxu0 0.0
        %1983 = vmatpush1.msra.mxu0 %v317
        %1984 = vmatprep.subr.mxu0 0.0
        %1985 = vmatpush1.msra.mxu0 %v318
        %1986 = vmatprep.subr.mxu0 0.0
        %1987 = vmatpush1.msra.mxu0 %v319
        %1988 = vmatprep.subr.mxu0 0.0
        %1989 = vmatpush1.msra.mxu0 %v320
        %1990 = vmatprep.subr.mxu0 0.0
        %1991 = vmatpush1.msra.mxu0 0.0
        %1992 = vmatprep.subr.mxu0 0.0
        %1993 = vmatpush1.msra.mxu0 0.0
        %1994 = vmatprep.subr.mxu0 0.0
        %1995 = vmatpush1.msra.mxu0 0.0
        %1996 = vmatprep.subr.mxu0 0.0
        %1997 = vmatpush1.msra.mxu0 0.0
        %1998 = vmatprep.subr.mxu0 0.0
        %1999 = vmatpush1.msra.mxu0 0.0
        %2000 = vmatprep.subr.mxu0 0.0
        %2001 = vmatpush1.msra.mxu0 0.0
        %2002 = vmatprep.subr.mxu0 0.0
        %2003 = vmatpush1.msra.mxu0 0.0
        %2004 = vmatprep.subr.mxu0 0.0
        %2005 = vmatpush1.msra.mxu0 0.0
        %2006 = vmatprep.subr.mxu0 0.0
        %2007 = vmatpush1.msra.mxu0 0.0
        %2008 = vmatprep.subr.mxu0 0.0
        %2009 = vmatpush1.msra.mxu0 0.0
        %2010 = vmatprep.subr.mxu0 0.0
        %2011 = vmatpush1.msra.mxu0 0.0
        %2012 = vmatprep.subr.mxu0 0.0
        %2013 = vmatpush1.msra.mxu0 0.0
        %2014 = vmatprep.subr.mxu0 0.0
        %2015 = vmatpush1.msra.mxu0 0.0
        %2016 = vmatprep.subr.mxu0 0.0
        %2017 = vmatpush1.msra.mxu0 0.0
        %2018 = vmatprep.subr.mxu0 0.0
        %2019 = vmatpush1.msra.mxu0 0.0
        %2020 = vmatprep.subr.mxu0 0.0
        %2021 = vmatpush1.msra.mxu0 0.0
        %2022 = vmatprep.subr.mxu0 0.0
        %2023 = vmatpush1.msra.mxu0 0.0
        %2024 = vmatprep.subr.mxu0 0.0
        %2025 = vmatpush1.msra.mxu0 0.0
        %2026 = vmatprep.subr.mxu0 0.0
        %2027 = vmatpush1.msra.mxu0 0.0
        %2028 = vmatprep.subr.mxu0 0.0
        %2029 = vmatpush1.msra.mxu0 0.0
        %2030 = vmatprep.subr.mxu0 0.0
        %2031 = vmatpush1.msra.mxu0 0.0
        %2032 = vmatprep.subr.mxu0 0.0
        %2033 = vmatpush1.msra.mxu0 0.0
        %2034 = vmatprep.subr.mxu0 0.0
        %2035 = vmatpush1.msra.mxu0 0.0
        %2036 = vmatprep.subr.mxu0 0.0
        %2037 = vmatpush1.msra.mxu0 0.0
        %2038 = vmatprep.subr.mxu0 0.0
        %2039 = vmatpush1.msra.mxu0 0.0
        %2040 = vmatprep.subr.mxu0 0.0
        %2041 = vmatpush1.msra.mxu0 0.0
        %2042 = vmatprep.subr.mxu0 0.0
        %2043 = vmatpush1.msra.mxu0 0.0
        %2044 = vmatprep.subr.mxu0 0.0
        %2045 = vmatpush1.msra.mxu0 0.0
        %2046 = vmatprep.mubr.f32.mxu0 0.0
        %2047 = vmatmul.mubr.f32.gmra.mrb[0].mxu0 %v1126
        %v2048 = vpop.f32.mrb[0].mxu0
        %v2049 = vadd.f32 0.0, %v2048
        %v2050 = vpop.f32.mrb[0].mxu0
        %2051 = vmatprep.mubr.f32.mxu0 0.0
        %2052 = vmatmul.mubr.f32.gmra.mrb[0].mxu0 %v1128
        %v2053 = vpop.f32.mrb[0].mxu0
        %v2054 = vadd.f32 0.0, %v2053
        %v2055 = vpop.f32.mrb[0].mxu0
        %2056 = vmatprep.mubr.f32.mxu0 0.0
        %2057 = vmatmul.mubr.f32.gmra.mrb[0].mxu0 %v1130
        %v2058 = vpop.f32.mrb[0].mxu0
        %v2059 = vadd.f32 0.0, %v2058
        %v2060 = vpop.f32.mrb[0].mxu0
        %2061 = vmatprep.mubr.f32.mxu0 0.0
        %2062 = vmatmul.mubr.f32.gmra.mrb[0].mxu0 %v1132
        %v2063 = vpop.f32.mrb[0].mxu0
        %v2064 = vadd.f32 0.0, %v2063
        %v2065 = vpop.f32.mrb[0].mxu0
        %2066 = vmatprep.mubr.f32.mxu0 0.0
        %2067 = vmatmul.mubr.f32.gmra.mrb[0].mxu0 %v1134
        %v2068 = vpop.f32.mrb[0].mxu0
        %v2069 = vadd.f32 0.0, %v2068
        %v2070 = vpop.f32.mrb[0].mxu0
        %2071 = vmatprep.mubr.f32.mxu0 0.0
        %2072 = vmatmul.mubr.f32.gmra.mrb[0].mxu0 %v1136
        %v2073 = vpop.f32.mrb[0].mxu0
        %v2074 = vadd.f32 0.0, %v2073
        %v2075 = vpop.f32.mrb[0].mxu0
        %2076 = vmatprep.mubr.f32.mxu0 0.0
        %2077 = vmatmul.mubr.f32.gmra.mrb[0].mxu0 %v1138
        %v2078 = vpop.f32.mrb[0].mxu0
        %v2079 = vadd.f32 0.0, %v2078
        %v2080 = vpop.f32.mrb[0].mxu0
        %2081 = vmatprep.mubr.f32.mxu0 0.0
        %2082 = vmatmul.mubr.f32.gmra.mrb[0].mxu0 %v1140
        %v2083 = vpop.f32.mrb[0].mxu0
        %v2084 = vadd.f32 0.0, %v2083
        %v2085 = vpop.f32.mrb[0].mxu0
        %2086 = vmatprep.mubr.f32.mxu0 0.0
        %2087 = vmatmul.mubr.f32.gmra.mrb[0].mxu0 %v1142
        %v2088 = vpop.f32.mrb[0].mxu0
        %v2089 = vadd.f32 0.0, %v2088
        %v2090 = vpop.f32.mrb[0].mxu0
        %2091 = vmatprep.mubr.f32.mxu0 0.0
        %2092 = vmatmul.mubr.f32.gmra.mrb[0].mxu0 %v1144
        %v2093 = vpop.f32.mrb[0].mxu0
        %v2094 = vadd.f32 0.0, %v2093
        %v2095 = vpop.f32.mrb[0].mxu0
        %2096 = vmatprep.mubr.f32.mxu0 0.0
        %2097 = vmatmul.mubr.f32.gmra.mrb[0].mxu0 %v1146
        %v2098 = vpop.f32.mrb[0].mxu0
        %v2099 = vadd.f32 0.0, %v2098
        %v2100 = vpop.f32.mrb[0].mxu0
        %2101 = vmatprep.mubr.f32.mxu0 0.0
        %2102 = vmatmul.mubr.f32.gmra.mrb[0].mxu0 %v1148
        %v2103 = vpop.f32.mrb[0].mxu0
        %v2104 = vadd.f32 0.0, %v2103
        %v2105 = vpop.f32.mrb[0].mxu0
        %2106 = vmatprep.mubr.f32.mxu0 0.0
        %2107 = vmatmul.mubr.f32.gmra.mrb[0].mxu0 %v1150
        %v2108 = vpop.f32.mrb[0].mxu0
        %v2109 = vadd.f32 0.0, %v2108
        %v2110 = vpop.f32.mrb[0].mxu0
        %2111 = vmatprep.mubr.f32.mxu0 0.0
        %2112 = vmatmul.mubr.f32.gmra.mrb[0].mxu0 %v1152
        %v2113 = vpop.f32.mrb[0].mxu0
        %v2114 = vadd.f32 0.0, %v2113
        %v2115 = vpop.f32.mrb[0].mxu0
        %2116 = vmatprep.mubr.f32.mxu0 0.0
        %2117 = vmatmul.mubr.f32.gmra.mrb[0].mxu0 %v1154
        %v2118 = vpop.f32.mrb[0].mxu0
        %v2119 = vadd.f32 0.0, %v2118
        %v2120 = vpop.f32.mrb[0].mxu0
        %2121 = vmatprep.mubr.f32.mxu0 0.0
        %2122 = vmatmul.mubr.f32.gmra.mrb[0].mxu0 %v1156
        %v2123 = vpop.f32.mrb[0].mxu0
        %v2124 = vadd.f32 0.0, %v2123
        %v2125 = vpop.f32.mrb[0].mxu0
        %2126 = vmatprep.mubr.f32.mxu0 0.0
        %2127 = vmatmul.mubr.f32.gmra.mrb[0].mxu0 %v1158
        %v2128 = vpop.f32.mrb[0].mxu0
        %v2129 = vadd.f32 0.0, %v2128
        %v2130 = vpop.f32.mrb[0].mxu0
        %2131 = vmatprep.mubr.f32.mxu0 0.0
        %2132 = vmatmul.mubr.f32.gmra.mrb[0].mxu0 %v1160
        %v2133 = vpop.f32.mrb[0].mxu0
        %v2134 = vadd.f32 0.0, %v2133
        %v2135 = vpop.f32.mrb[0].mxu0
        %2136 = vmatprep.mubr.f32.mxu0 0.0
        %2137 = vmatmul.mubr.f32.gmra.mrb[0].mxu0 %v1162
        %v2138 = vpop.f32.mrb[0].mxu0
        %v2139 = vadd.f32 0.0, %v2138
        %v2140 = vpop.f32.mrb[0].mxu0
        %2141 = vmatprep.mubr.f32.mxu0 0.0
        %2142 = vmatmul.mubr.f32.gmra.mrb[0].mxu0 %v1164
        %v2143 = vpop.f32.mrb[0].mxu0
        %v2144 = vadd.f32 0.0, %v2143
        %v2145 = vpop.f32.mrb[0].mxu0
        %2146 = vmatprep.mubr.f32.mxu0 0.0
        %2147 = vmatmul.mubr.f32.gmra.mrb[0].mxu0 %v1166
        %v2148 = vpop.f32.mrb[0].mxu0
        %v2149 = vadd.f32 0.0, %v2148
        %v2150 = vpop.f32.mrb[0].mxu0
        %2151 = vmatprep.mubr.f32.mxu0 0.0
        %2152 = vmatmul.mubr.f32.gmra.mrb[0].mxu0 %v1168
        %v2153 = vpop.f32.mrb[0].mxu0
        %v2154 = vadd.f32 0.0, %v2153
        %v2155 = vpop.f32.mrb[0].mxu0
        %2156 = vmatprep.mubr.f32.mxu0 0.0
        %2157 = vmatmul.mubr.f32.gmra.mrb[0].mxu0 %v1170
        %v2158 = vpop.f32.mrb[0].mxu0
        %v2159 = vadd.f32 0.0, %v2158
        %v2160 = vpop.f32.mrb[0].mxu0
        %2161 = vmatprep.mubr.f32.mxu0 0.0
        %2162 = vmatmul.mubr.f32.gmra.mrb[0].mxu0 %v1172
        %v2163 = vpop.f32.mrb[0].mxu0
        %v2164 = vadd.f32 0.0, %v2163
        %v2165 = vpop.f32.mrb[0].mxu0
        %2166 = vmatprep.mubr.f32.mxu0 0.0
        %2167 = vmatmul.mubr.f32.gmra.mrb[0].mxu0 %v1174
        %v2168 = vpop.f32.mrb[0].mxu0
        %v2169 = vadd.f32 0.0, %v2168
        %v2170 = vpop.f32.mrb[0].mxu0
        %2171 = vmatprep.mubr.f32.mxu0 0.0
        %2172 = vmatmul.mubr.f32.gmra.mrb[0].mxu0 %v1176
        %v2173 = vpop.f32.mrb[0].mxu0
        %v2174 = vadd.f32 0.0, %v2173
        %v2175 = vpop.f32.mrb[0].mxu0
        %2176 = vmatprep.mubr.f32.mxu0 0.0
        %2177 = vmatmul.mubr.f32.gmra.mrb[0].mxu0 %v1178
        %v2178 = vpop.f32.mrb[0].mxu0
        %v2179 = vadd.f32 0.0, %v2178
        %v2180 = vpop.f32.mrb[0].mxu0
        %2181 = vmatprep.mubr.f32.mxu0 0.0
        %2182 = vmatmul.mubr.f32.gmra.mrb[0].mxu0 %v1180
        %v2183 = vpop.f32.mrb[0].mxu0
        %v2184 = vadd.f32 0.0, %v2183
        %v2185 = vpop.f32.mrb[0].mxu0
        %2186 = vmatprep.mubr.f32.mxu0 0.0
        %2187 = vmatmul.mubr.f32.gmra.mrb[0].mxu0 %v1182
        %v2188 = vpop.f32.mrb[0].mxu0
        %v2189 = vadd.f32 0.0, %v2188
        %v2190 = vpop.f32.mrb[0].mxu0
        %2191 = vmatprep.mubr.f32.mxu0 0.0
        %2192 = vmatmul.mubr.f32.gmra.mrb[0].mxu0 %v1184
        %v2193 = vpop.f32.mrb[0].mxu0
        %v2194 = vadd.f32 0.0, %v2193
        %v2195 = vpop.f32.mrb[0].mxu0
        %2196 = vmatprep.mubr.f32.mxu0 0.0
        %2197 = vmatmul.mubr.f32.gmra.mrb[0].mxu0 %v1978
        %v2198 = vpop.f32.mrb[0].mxu0
        %v2199 = vadd.f32 0.0, %v2198
        %v2200 = vpop.f32.mrb[0].mxu0
        %2201 = vmatprep.mubr.f32.mxu0 0.0
        %2202 = vmatmul.mubr.f32.gmra.mrb[0].mxu0 %v1980
        %v2203 = vpop.f32.mrb[0].mxu0
        %v2204 = vadd.f32 0.0, %v2203
        %v2205 = vpop.f32.mrb[0].mxu0
        %2206 = vdwg.mxu0
        %v2207 = vadd.f32 %v1941, %v2049
        %v2208 = vadd.f32 %v1942, %v2054
        %v2209 = vadd.f32 %v1943, %v2059
        %v2210 = vadd.f32 %v1944, %v2064
        %v2211 = vadd.f32 %v1945, %v2069
        %v2212 = vadd.f32 %v1946, %v2074
        %v2213 = vadd.f32 %v1947, %v2079
        %v2214 = vadd.f32 %v1948, %v2084
        %v2215 = vadd.f32 %v1949, %v2089
        %v2216 = vadd.f32 %v1950, %v2094
        %v2217 = vadd.f32 %v1951, %v2099
        %v2218 = vadd.f32 %v1952, %v2104
        %v2219 = vadd.f32 %v1953, %v2109
        %v2220 = vadd.f32 %v1954, %v2114
        %v2221 = vadd.f32 %v1955, %v2119
        %v2222 = vadd.f32 %v1956, %v2124
        %v2223 = vadd.f32 %v1957, %v2129
        %v2224 = vadd.f32 %v1958, %v2134
        %v2225 = vadd.f32 %v1959, %v2139
        %v2226 = vadd.f32 %v1960, %v2144
        %v2227 = vadd.f32 %v1961, %v2149
        %v2228 = vadd.f32 %v1962, %v2154
        %v2229 = vadd.f32 %v1963, %v2159
        %v2230 = vadd.f32 %v1964, %v2164
        %v2231 = vadd.f32 %v1965, %v2169
        %v2232 = vadd.f32 %v1966, %v2174
        %v2233 = vadd.f32 %v1967, %v2179
        %v2234 = vadd.f32 %v1968, %v2184
        %v2235 = vadd.f32 %v1969, %v2189
        %v2236 = vadd.f32 %v1970, %v2194
        %v2237 = vadd.f32 %v1971, %v2199
        %v2238 = vadd.f32 %v1972, %v2204
        %v2240 = vsel %vm462, %v294, 0
        %v2243 = vsel %vm462, %v295, 0
        %2245 = vmatprep.subr.mxu0 0.0
        %2246 = vmatpush1.msra.mxu0 %v321
        %2247 = vmatprep.subr.mxu0 0.0
        %2248 = vmatpush1.msra.mxu0 %v322
        %2249 = vmatprep.subr.mxu0 0.0
        %2250 = vmatpush1.msra.mxu0 %v323
        %2251 = vmatprep.subr.mxu0 0.0
        %2252 = vmatpush1.msra.mxu0 %v324
        %2253 = vmatprep.subr.mxu0 0.0
        %2254 = vmatpush1.msra.mxu0 0.0
        %2255 = vmatprep.subr.mxu0 0.0
        %2256 = vmatpush1.msra.mxu0 0.0
        %2257 = vmatprep.subr.mxu0 0.0
        %2258 = vmatpush1.msra.mxu0 0.0
        %2259 = vmatprep.subr.mxu0 0.0
        %2260 = vmatpush1.msra.mxu0 0.0
        %2261 = vmatprep.subr.mxu0 0.0
        %2262 = vmatpush1.msra.mxu0 0.0
        %2263 = vmatprep.subr.mxu0 0.0
        %2264 = vmatpush1.msra.mxu0 0.0
        %2265 = vmatprep.subr.mxu0 0.0
        %2266 = vmatpush1.msra.mxu0 0.0
        %2267 = vmatprep.subr.mxu0 0.0
        %2268 = vmatpush1.msra.mxu0 0.0
        %2269 = vmatprep.subr.mxu0 0.0
        %2270 = vmatpush1.msra.mxu0 0.0
        %2271 = vmatprep.subr.mxu0 0.0
        %2272 = vmatpush1.msra.mxu0 0.0
        %2273 = vmatprep.subr.mxu0 0.0
        %2274 = vmatpush1.msra.mxu0 0.0
        %2275 = vmatprep.subr.mxu0 0.0
        %2276 = vmatpush1.msra.mxu0 0.0
        %2277 = vmatprep.subr.mxu0 0.0
        %2278 = vmatpush1.msra.mxu0 0.0
        %2279 = vmatprep.subr.mxu0 0.0
        %2280 = vmatpush1.msra.mxu0 0.0
        %2281 = vmatprep.subr.mxu0 0.0
        %2282 = vmatpush1.msra.mxu0 0.0
        %2283 = vmatprep.subr.mxu0 0.0
        %2284 = vmatpush1.msra.mxu0 0.0
        %2285 = vmatprep.subr.mxu0 0.0
        %2286 = vmatpush1.msra.mxu0 0.0
        %2287 = vmatprep.subr.mxu0 0.0
        %2288 = vmatpush1.msra.mxu0 0.0
        %2289 = vmatprep.subr.mxu0 0.0
        %2290 = vmatpush1.msra.mxu0 0.0
        %2291 = vmatprep.subr.mxu0 0.0
        %2292 = vmatpush1.msra.mxu0 0.0
        %2293 = vmatprep.subr.mxu0 0.0
        %2294 = vmatpush1.msra.mxu0 0.0
        %2295 = vmatprep.subr.mxu0 0.0
        %2296 = vmatpush1.msra.mxu0 0.0
        %2297 = vmatprep.subr.mxu0 0.0
        %2298 = vmatpush1.msra.mxu0 0.0
        %2299 = vmatprep.subr.mxu0 0.0
        %2300 = vmatpush1.msra.mxu0 0.0
        %2301 = vmatprep.subr.mxu0 0.0
        %2302 = vmatpush1.msra.mxu0 0.0
        %2303 = vmatprep.subr.mxu0 0.0
        %2304 = vmatpush1.msra.mxu0 0.0
        %2305 = vmatprep.subr.mxu0 0.0
        %2306 = vmatpush1.msra.mxu0 0.0
        %2307 = vmatprep.subr.mxu0 0.0
        %2308 = vmatpush1.msra.mxu0 0.0
        %2309 = vmatprep.mubr.f32.mxu0 0.0
        %2310 = vmatmul.mubr.f32.gmra.mrb[0].mxu0 %v760
        %v2311 = vpop.f32.mrb[0].mxu0
        %v2312 = vadd.f32 0.0, %v2311
        %v2313 = vpop.f32.mrb[0].mxu0
        %2314 = vmatprep.mubr.f32.mxu0 0.0
        %2315 = vmatmul.mubr.f32.gmra.mrb[0].mxu0 %v762
        %v2316 = vpop.f32.mrb[0].mxu0
        %v2317 = vadd.f32 0.0, %v2316
        %v2318 = vpop.f32.mrb[0].mxu0
        %2319 = vmatprep.mubr.f32.mxu0 0.0
        %2320 = vmatmul.mubr.f32.gmra.mrb[0].mxu0 %v764
        %v2321 = vpop.f32.mrb[0].mxu0
        %v2322 = vadd.f32 0.0, %v2321
        %v2323 = vpop.f32.mrb[0].mxu0
        %2324 = vmatprep.mubr.f32.mxu0 0.0
        %2325 = vmatmul.mubr.f32.gmra.mrb[0].mxu0 %v766
        %v2326 = vpop.f32.mrb[0].mxu0
        %v2327 = vadd.f32 0.0, %v2326
        %v2328 = vpop.f32.mrb[0].mxu0
        %2329 = vmatprep.mubr.f32.mxu0 0.0
        %2330 = vmatmul.mubr.f32.gmra.mrb[0].mxu0 %v768
        %v2331 = vpop.f32.mrb[0].mxu0
        %v2332 = vadd.f32 0.0, %v2331
        %v2333 = vpop.f32.mrb[0].mxu0
        %2334 = vmatprep.mubr.f32.mxu0 0.0
        %2335 = vmatmul.mubr.f32.gmra.mrb[0].mxu0 %v770
        %v2336 = vpop.f32.mrb[0].mxu0
        %v2337 = vadd.f32 0.0, %v2336
        %v2338 = vpop.f32.mrb[0].mxu0
        %2339 = vmatprep.mubr.f32.mxu0 0.0
        %2340 = vmatmul.mubr.f32.gmra.mrb[0].mxu0 %v772
        %v2341 = vpop.f32.mrb[0].mxu0
        %v2342 = vadd.f32 0.0, %v2341
        %v2343 = vpop.f32.mrb[0].mxu0
        %2344 = vmatprep.mubr.f32.mxu0 0.0
        %2345 = vmatmul.mubr.f32.gmra.mrb[0].mxu0 %v774
        %v2346 = vpop.f32.mrb[0].mxu0
        %v2347 = vadd.f32 0.0, %v2346
        %v2348 = vpop.f32.mrb[0].mxu0
        %2349 = vmatprep.mubr.f32.mxu0 0.0
        %2350 = vmatmul.mubr.f32.gmra.mrb[0].mxu0 %v776
        %v2351 = vpop.f32.mrb[0].mxu0
        %v2352 = vadd.f32 0.0, %v2351
        %v2353 = vpop.f32.mrb[0].mxu0
        %2354 = vmatprep.mubr.f32.mxu0 0.0
        %2355 = vmatmul.mubr.f32.gmra.mrb[0].mxu0 %v778
        %v2356 = vpop.f32.mrb[0].mxu0
        %v2357 = vadd.f32 0.0, %v2356
        %v2358 = vpop.f32.mrb[0].mxu0
        %2359 = vmatprep.mubr.f32.mxu0 0.0
        %2360 = vmatmul.mubr.f32.gmra.mrb[0].mxu0 %v780
        %v2361 = vpop.f32.mrb[0].mxu0
        %v2362 = vadd.f32 0.0, %v2361
        %v2363 = vpop.f32.mrb[0].mxu0
        %2364 = vmatprep.mubr.f32.mxu0 0.0
        %2365 = vmatmul.mubr.f32.gmra.mrb[0].mxu0 %v782
        %v2366 = vpop.f32.mrb[0].mxu0
        %v2367 = vadd.f32 0.0, %v2366
        %v2368 = vpop.f32.mrb[0].mxu0
        %2369 = vmatprep.mubr.f32.mxu0 0.0
        %2370 = vmatmul.mubr.f32.gmra.mrb[0].mxu0 %v784
        %v2371 = vpop.f32.mrb[0].mxu0
        %v2372 = vadd.f32 0.0, %v2371
        %v2373 = vpop.f32.mrb[0].mxu0
        %2374 = vmatprep.mubr.f32.mxu0 0.0
        %2375 = vmatmul.mubr.f32.gmra.mrb[0].mxu0 %v786
        %v2376 = vpop.f32.mrb[0].mxu0
        %v2377 = vadd.f32 0.0, %v2376
        %v2378 = vpop.f32.mrb[0].mxu0
        %2379 = vmatprep.mubr.f32.mxu0 0.0
        %2380 = vmatmul.mubr.f32.gmra.mrb[0].mxu0 %v788
        %v2381 = vpop.f32.mrb[0].mxu0
        %v2382 = vadd.f32 0.0, %v2381
        %v2383 = vpop.f32.mrb[0].mxu0
        %2384 = vmatprep.mubr.f32.mxu0 0.0
        %2385 = vmatmul.mubr.f32.gmra.mrb[0].mxu0 %v790
        %v2386 = vpop.f32.mrb[0].mxu0
        %v2387 = vadd.f32 0.0, %v2386
        %v2388 = vpop.f32.mrb[0].mxu0
        %2389 = vmatprep.mubr.f32.mxu0 0.0
        %2390 = vmatmul.mubr.f32.gmra.mrb[0].mxu0 %v792
        %v2391 = vpop.f32.mrb[0].mxu0
        %v2392 = vadd.f32 0.0, %v2391
        %v2393 = vpop.f32.mrb[0].mxu0
        %2394 = vmatprep.mubr.f32.mxu0 0.0
        %2395 = vmatmul.mubr.f32.gmra.mrb[0].mxu0 %v794
        %v2396 = vpop.f32.mrb[0].mxu0
        %v2397 = vadd.f32 0.0, %v2396
        %v2398 = vpop.f32.mrb[0].mxu0
        %2399 = vmatprep.mubr.f32.mxu0 0.0
        %2400 = vmatmul.mubr.f32.gmra.mrb[0].mxu0 %v796
        %v2401 = vpop.f32.mrb[0].mxu0
        %v2402 = vadd.f32 0.0, %v2401
        %v2403 = vpop.f32.mrb[0].mxu0
        %2404 = vmatprep.mubr.f32.mxu0 0.0
        %2405 = vmatmul.mubr.f32.gmra.mrb[0].mxu0 %v798
        %v2406 = vpop.f32.mrb[0].mxu0
        %v2407 = vadd.f32 0.0, %v2406
        %v2408 = vpop.f32.mrb[0].mxu0
        %2409 = vmatprep.mubr.f32.mxu0 0.0
        %2410 = vmatmul.mubr.f32.gmra.mrb[0].mxu0 %v800
        %v2411 = vpop.f32.mrb[0].mxu0
        %v2412 = vadd.f32 0.0, %v2411
        %v2413 = vpop.f32.mrb[0].mxu0
        %2414 = vmatprep.mubr.f32.mxu0 0.0
        %2415 = vmatmul.mubr.f32.gmra.mrb[0].mxu0 %v802
        %v2416 = vpop.f32.mrb[0].mxu0
        %v2417 = vadd.f32 0.0, %v2416
        %v2418 = vpop.f32.mrb[0].mxu0
        %2419 = vmatprep.mubr.f32.mxu0 0.0
        %2420 = vmatmul.mubr.f32.gmra.mrb[0].mxu0 %v804
        %v2421 = vpop.f32.mrb[0].mxu0
        %v2422 = vadd.f32 0.0, %v2421
        %v2423 = vpop.f32.mrb[0].mxu0
        %2424 = vmatprep.mubr.f32.mxu0 0.0
        %2425 = vmatmul.mubr.f32.gmra.mrb[0].mxu0 %v806
        %v2426 = vpop.f32.mrb[0].mxu0
        %v2427 = vadd.f32 0.0, %v2426
        %v2428 = vpop.f32.mrb[0].mxu0
        %2429 = vmatprep.mubr.f32.mxu0 0.0
        %2430 = vmatmul.mubr.f32.gmra.mrb[0].mxu0 %v808
        %v2431 = vpop.f32.mrb[0].mxu0
        %v2432 = vadd.f32 0.0, %v2431
        %v2433 = vpop.f32.mrb[0].mxu0
        %2434 = vmatprep.mubr.f32.mxu0 0.0
        %2435 = vmatmul.mubr.f32.gmra.mrb[0].mxu0 %v810
        %v2436 = vpop.f32.mrb[0].mxu0
        %v2437 = vadd.f32 0.0, %v2436
        %v2438 = vpop.f32.mrb[0].mxu0
        %2439 = vmatprep.mubr.f32.mxu0 0.0
        %2440 = vmatmul.mubr.f32.gmra.mrb[0].mxu0 %v812
        %v2441 = vpop.f32.mrb[0].mxu0
        %v2442 = vadd.f32 0.0, %v2441
        %v2443 = vpop.f32.mrb[0].mxu0
        %2444 = vmatprep.mubr.f32.mxu0 0.0
        %2445 = vmatmul.mubr.f32.gmra.mrb[0].mxu0 %v814
        %v2446 = vpop.f32.mrb[0].mxu0
        %v2447 = vadd.f32 0.0, %v2446
        %v2448 = vpop.f32.mrb[0].mxu0
        %2449 = vmatprep.mubr.f32.mxu0 0.0
        %2450 = vmatmul.mubr.f32.gmra.mrb[0].mxu0 %v1444
        %v2451 = vpop.f32.mrb[0].mxu0
        %v2452 = vadd.f32 0.0, %v2451
        %v2453 = vpop.f32.mrb[0].mxu0
        %2454 = vmatprep.mubr.f32.mxu0 0.0
        %2455 = vmatmul.mubr.f32.gmra.mrb[0].mxu0 %v1447
        %v2456 = vpop.f32.mrb[0].mxu0
        %v2457 = vadd.f32 0.0, %v2456
        %v2458 = vpop.f32.mrb[0].mxu0
        %2459 = vmatprep.mubr.f32.mxu0 0.0
        %2460 = vmatmul.mubr.f32.gmra.mrb[0].mxu0 %v2240
        %v2461 = vpop.f32.mrb[0].mxu0
        %v2462 = vadd.f32 0.0, %v2461
        %v2463 = vpop.f32.mrb[0].mxu0
        %2464 = vmatprep.mubr.f32.mxu0 0.0
        %2465 = vmatmul.mubr.f32.gmra.mrb[0].mxu0 %v2243
        %v2466 = vpop.f32.mrb[0].mxu0
        %v2467 = vadd.f32 0.0, %v2466
        %v2468 = vpop.f32.mrb[0].mxu0
        %2469 = vdwg.mxu0
        %v2470 = vadd.f32 %v2207, %v2312
        %v2471 = vadd.f32 %v2208, %v2317
        %v2472 = vadd.f32 %v2209, %v2322
        %v2473 = vadd.f32 %v2210, %v2327
        %v2474 = vadd.f32 %v2211, %v2332
        %v2475 = vadd.f32 %v2212, %v2337
        %v2476 = vadd.f32 %v2213, %v2342
        %v2477 = vadd.f32 %v2214, %v2347
        %v2478 = vadd.f32 %v2215, %v2352
        %v2479 = vadd.f32 %v2216, %v2357
        %v2480 = vadd.f32 %v2217, %v2362
        %v2481 = vadd.f32 %v2218, %v2367
        %v2482 = vadd.f32 %v2219, %v2372
        %v2483 = vadd.f32 %v2220, %v2377
        %v2484 = vadd.f32 %v2221, %v2382
        %v2485 = vadd.f32 %v2222, %v2387
        %v2486 = vadd.f32 %v2223, %v2392
        %v2487 = vadd.f32 %v2224, %v2397
        %v2488 = vadd.f32 %v2225, %v2402
        %v2489 = vadd.f32 %v2226, %v2407
        %v2490 = vadd.f32 %v2227, %v2412
        %v2491 = vadd.f32 %v2228, %v2417
        %v2492 = vadd.f32 %v2229, %v2422
        %v2493 = vadd.f32 %v2230, %v2427
        %v2494 = vadd.f32 %v2231, %v2432
        %v2495 = vadd.f32 %v2232, %v2437
        %v2496 = vadd.f32 %v2233, %v2442
        %v2497 = vadd.f32 %v2234, %v2447
        %v2498 = vadd.f32 %v2235, %v2452
        %v2499 = vadd.f32 %v2236, %v2457
        %v2500 = vadd.f32 %v2237, %v2462
        %v2501 = vadd.f32 %v2238, %v2467
        %v2503 = vrot.slane %v294, 1
        %v2504 = vrot.slane %v295, 1
        %v2505 = vsel %vm381, %v2503, %v2504
        %v2506 = vrot.slane %v296, 1
        %v2507 = vsel %vm381, %v2504, %v2506
        %v2508 = vsel %vm462, %v2505, 0
        %v2510 = vsel %vm462, %v2507, 0
        %2512 = vmatprep.subr.mxu0 0.0
        %2513 = vmatpush1.msra.mxu0 %v325
        %2514 = vmatprep.subr.mxu0 0.0
        %2515 = vmatpush1.msra.mxu0 %v326
        %2516 = vmatprep.subr.mxu0 0.0
        %2517 = vmatpush1.msra.mxu0 %v327
        %2518 = vmatprep.subr.mxu0 0.0
        %2519 = vmatpush1.msra.mxu0 %v328
        %2520 = vmatprep.subr.mxu0 0.0
        %2521 = vmatpush1.msra.mxu0 0.0
        %2522 = vmatprep.subr.mxu0 0.0
        %2523 = vmatpush1.msra.mxu0 0.0
        %2524 = vmatprep.subr.mxu0 0.0
        %2525 = vmatpush1.msra.mxu0 0.0
        %2526 = vmatprep.subr.mxu0 0.0
        %2527 = vmatpush1.msra.mxu0 0.0
        %2528 = vmatprep.subr.mxu0 0.0
        %2529 = vmatpush1.msra.mxu0 0.0
        %2530 = vmatprep.subr.mxu0 0.0
        %2531 = vmatpush1.msra.mxu0 0.0
        %2532 = vmatprep.subr.mxu0 0.0
        %2533 = vmatpush1.msra.mxu0 0.0
        %2534 = vmatprep.subr.mxu0 0.0
        %2535 = vmatpush1.msra.mxu0 0.0
        %2536 = vmatprep.subr.mxu0 0.0
        %2537 = vmatpush1.msra.mxu0 0.0
        %2538 = vmatprep.subr.mxu0 0.0
        %2539 = vmatpush1.msra.mxu0 0.0
        %2540 = vmatprep.subr.mxu0 0.0
        %2541 = vmatpush1.msra.mxu0 0.0
        %2542 = vmatprep.subr.mxu0 0.0
        %2543 = vmatpush1.msra.mxu0 0.0
        %2544 = vmatprep.subr.mxu0 0.0
        %2545 = vmatpush1.msra.mxu0 0.0
        %2546 = vmatprep.subr.mxu0 0.0
        %2547 = vmatpush1.msra.mxu0 0.0
        %2548 = vmatprep.subr.mxu0 0.0
        %2549 = vmatpush1.msra.mxu0 0.0
        %2550 = vmatprep.subr.mxu0 0.0
        %2551 = vmatpush1.msra.mxu0 0.0
        %2552 = vmatprep.subr.mxu0 0.0
        %2553 = vmatpush1.msra.mxu0 0.0
        %2554 = vmatprep.subr.mxu0 0.0
        %2555 = vmatpush1.msra.mxu0 0.0
        %2556 = vmatprep.subr.mxu0 0.0
        %2557 = vmatpush1.msra.mxu0 0.0
        %2558 = vmatprep.subr.mxu0 0.0
        %2559 = vmatpush1.msra.mxu0 0.0
        %2560 = vmatprep.subr.mxu0 0.0
        %2561 = vmatpush1.msra.mxu0 0.0
        %2562 = vmatprep.subr.mxu0 0.0
        %2563 = vmatpush1.msra.mxu0 0.0
        %2564 = vmatprep.subr.mxu0 0.0
        %2565 = vmatpush1.msra.mxu0 0.0
        %2566 = vmatprep.subr.mxu0 0.0
        %2567 = vmatpush1.msra.mxu0 0.0
        %2568 = vmatprep.subr.mxu0 0.0
        %2569 = vmatpush1.msra.mxu0 0.0
        %2570 = vmatprep.subr.mxu0 0.0
        %2571 = vmatpush1.msra.mxu0 0.0
        %2572 = vmatprep.subr.mxu0 0.0
        %2573 = vmatpush1.msra.mxu0 0.0
        %2574 = vmatprep.subr.mxu0 0.0
        %2575 = vmatpush1.msra.mxu0 0.0
        %2576 = vmatprep.mubr.f32.mxu0 0.0
        %2577 = vmatmul.mubr.f32.gmra.mrb[0].mxu0 %v471
        %v2578 = vpop.f32.mrb[0].mxu0
        %v2579 = vadd.f32 0.0, %v2578
        %v2580 = vpop.f32.mrb[0].mxu0
        %2581 = vmatprep.mubr.f32.mxu0 0.0
        %2582 = vmatmul.mubr.f32.gmra.mrb[0].mxu0 %v473
        %v2583 = vpop.f32.mrb[0].mxu0
        %v2584 = vadd.f32 0.0, %v2583
        %v2585 = vpop.f32.mrb[0].mxu0
        %2586 = vmatprep.mubr.f32.mxu0 0.0
        %2587 = vmatmul.mubr.f32.gmra.mrb[0].mxu0 %v475
        %v2588 = vpop.f32.mrb[0].mxu0
        %v2589 = vadd.f32 0.0, %v2588
        %v2590 = vpop.f32.mrb[0].mxu0
        %2591 = vmatprep.mubr.f32.mxu0 0.0
        %2592 = vmatmul.mubr.f32.gmra.mrb[0].mxu0 %v477
        %v2593 = vpop.f32.mrb[0].mxu0
        %v2594 = vadd.f32 0.0, %v2593
        %v2595 = vpop.f32.mrb[0].mxu0
        %2596 = vmatprep.mubr.f32.mxu0 0.0
        %2597 = vmatmul.mubr.f32.gmra.mrb[0].mxu0 %v479
        %v2598 = vpop.f32.mrb[0].mxu0
        %v2599 = vadd.f32 0.0, %v2598
        %v2600 = vpop.f32.mrb[0].mxu0
        %2601 = vmatprep.mubr.f32.mxu0 0.0
        %2602 = vmatmul.mubr.f32.gmra.mrb[0].mxu0 %v481
        %v2603 = vpop.f32.mrb[0].mxu0
        %v2604 = vadd.f32 0.0, %v2603
        %v2605 = vpop.f32.mrb[0].mxu0
        %2606 = vmatprep.mubr.f32.mxu0 0.0
        %2607 = vmatmul.mubr.f32.gmra.mrb[0].mxu0 %v483
        %v2608 = vpop.f32.mrb[0].mxu0
        %v2609 = vadd.f32 0.0, %v2608
        %v2610 = vpop.f32.mrb[0].mxu0
        %2611 = vmatprep.mubr.f32.mxu0 0.0
        %2612 = vmatmul.mubr.f32.gmra.mrb[0].mxu0 %v485
        %v2613 = vpop.f32.mrb[0].mxu0
        %v2614 = vadd.f32 0.0, %v2613
        %v2615 = vpop.f32.mrb[0].mxu0
        %2616 = vmatprep.mubr.f32.mxu0 0.0
        %2617 = vmatmul.mubr.f32.gmra.mrb[0].mxu0 %v487
        %v2618 = vpop.f32.mrb[0].mxu0
        %v2619 = vadd.f32 0.0, %v2618
        %v2620 = vpop.f32.mrb[0].mxu0
        %2621 = vmatprep.mubr.f32.mxu0 0.0
        %2622 = vmatmul.mubr.f32.gmra.mrb[0].mxu0 %v489
        %v2623 = vpop.f32.mrb[0].mxu0
        %v2624 = vadd.f32 0.0, %v2623
        %v2625 = vpop.f32.mrb[0].mxu0
        %2626 = vmatprep.mubr.f32.mxu0 0.0
        %2627 = vmatmul.mubr.f32.gmra.mrb[0].mxu0 %v491
        %v2628 = vpop.f32.mrb[0].mxu0
        %v2629 = vadd.f32 0.0, %v2628
        %v2630 = vpop.f32.mrb[0].mxu0
        %2631 = vmatprep.mubr.f32.mxu0 0.0
        %2632 = vmatmul.mubr.f32.gmra.mrb[0].mxu0 %v493
        %v2633 = vpop.f32.mrb[0].mxu0
        %v2634 = vadd.f32 0.0, %v2633
        %v2635 = vpop.f32.mrb[0].mxu0
        %2636 = vmatprep.mubr.f32.mxu0 0.0
        %2637 = vmatmul.mubr.f32.gmra.mrb[0].mxu0 %v495
        %v2638 = vpop.f32.mrb[0].mxu0
        %v2639 = vadd.f32 0.0, %v2638
        %v2640 = vpop.f32.mrb[0].mxu0
        %2641 = vmatprep.mubr.f32.mxu0 0.0
        %2642 = vmatmul.mubr.f32.gmra.mrb[0].mxu0 %v497
        %v2643 = vpop.f32.mrb[0].mxu0
        %v2644 = vadd.f32 0.0, %v2643
        %v2645 = vpop.f32.mrb[0].mxu0
        %2646 = vmatprep.mubr.f32.mxu0 0.0
        %2647 = vmatmul.mubr.f32.gmra.mrb[0].mxu0 %v499
        %v2648 = vpop.f32.mrb[0].mxu0
        %v2649 = vadd.f32 0.0, %v2648
        %v2650 = vpop.f32.mrb[0].mxu0
        %2651 = vmatprep.mubr.f32.mxu0 0.0
        %2652 = vmatmul.mubr.f32.gmra.mrb[0].mxu0 %v501
        %v2653 = vpop.f32.mrb[0].mxu0
        %v2654 = vadd.f32 0.0, %v2653
        %v2655 = vpop.f32.mrb[0].mxu0
        %2656 = vmatprep.mubr.f32.mxu0 0.0
        %2657 = vmatmul.mubr.f32.gmra.mrb[0].mxu0 %v503
        %v2658 = vpop.f32.mrb[0].mxu0
        %v2659 = vadd.f32 0.0, %v2658
        %v2660 = vpop.f32.mrb[0].mxu0
        %2661 = vmatprep.mubr.f32.mxu0 0.0
        %2662 = vmatmul.mubr.f32.gmra.mrb[0].mxu0 %v505
        %v2663 = vpop.f32.mrb[0].mxu0
        %v2664 = vadd.f32 0.0, %v2663
        %v2665 = vpop.f32.mrb[0].mxu0
        %2666 = vmatprep.mubr.f32.mxu0 0.0
        %2667 = vmatmul.mubr.f32.gmra.mrb[0].mxu0 %v507
        %v2668 = vpop.f32.mrb[0].mxu0
        %v2669 = vadd.f32 0.0, %v2668
        %v2670 = vpop.f32.mrb[0].mxu0
        %2671 = vmatprep.mubr.f32.mxu0 0.0
        %2672 = vmatmul.mubr.f32.gmra.mrb[0].mxu0 %v509
        %v2673 = vpop.f32.mrb[0].mxu0
        %v2674 = vadd.f32 0.0, %v2673
        %v2675 = vpop.f32.mrb[0].mxu0
        %2676 = vmatprep.mubr.f32.mxu0 0.0
        %2677 = vmatmul.mubr.f32.gmra.mrb[0].mxu0 %v511
        %v2678 = vpop.f32.mrb[0].mxu0
        %v2679 = vadd.f32 0.0, %v2678
        %v2680 = vpop.f32.mrb[0].mxu0
        %2681 = vmatprep.mubr.f32.mxu0 0.0
        %2682 = vmatmul.mubr.f32.gmra.mrb[0].mxu0 %v513
        %v2683 = vpop.f32.mrb[0].mxu0
        %v2684 = vadd.f32 0.0, %v2683
        %v2685 = vpop.f32.mrb[0].mxu0
        %2686 = vmatprep.mubr.f32.mxu0 0.0
        %2687 = vmatmul.mubr.f32.gmra.mrb[0].mxu0 %v515
        %v2688 = vpop.f32.mrb[0].mxu0
        %v2689 = vadd.f32 0.0, %v2688
        %v2690 = vpop.f32.mrb[0].mxu0
        %2691 = vmatprep.mubr.f32.mxu0 0.0
        %2692 = vmatmul.mubr.f32.gmra.mrb[0].mxu0 %v517
        %v2693 = vpop.f32.mrb[0].mxu0
        %v2694 = vadd.f32 0.0, %v2693
        %v2695 = vpop.f32.mrb[0].mxu0
        %2696 = vmatprep.mubr.f32.mxu0 0.0
        %2697 = vmatmul.mubr.f32.gmra.mrb[0].mxu0 %v519
        %v2698 = vpop.f32.mrb[0].mxu0
        %v2699 = vadd.f32 0.0, %v2698
        %v2700 = vpop.f32.mrb[0].mxu0
        %2701 = vmatprep.mubr.f32.mxu0 0.0
        %2702 = vmatmul.mubr.f32.gmra.mrb[0].mxu0 %v521
        %v2703 = vpop.f32.mrb[0].mxu0
        %v2704 = vadd.f32 0.0, %v2703
        %v2705 = vpop.f32.mrb[0].mxu0
        %2706 = vmatprep.mubr.f32.mxu0 0.0
        %2707 = vmatmul.mubr.f32.gmra.mrb[0].mxu0 %v523
        %v2708 = vpop.f32.mrb[0].mxu0
        %v2709 = vadd.f32 0.0, %v2708
        %v2710 = vpop.f32.mrb[0].mxu0
        %2711 = vmatprep.mubr.f32.mxu0 0.0
        %2712 = vmatmul.mubr.f32.gmra.mrb[0].mxu0 %v525
        %v2713 = vpop.f32.mrb[0].mxu0
        %v2714 = vadd.f32 0.0, %v2713
        %v2715 = vpop.f32.mrb[0].mxu0
        %2716 = vmatprep.mubr.f32.mxu0 0.0
        %2717 = vmatmul.mubr.f32.gmra.mrb[0].mxu0 %v1712
        %v2718 = vpop.f32.mrb[0].mxu0
        %v2719 = vadd.f32 0.0, %v2718
        %v2720 = vpop.f32.mrb[0].mxu0
        %2721 = vmatprep.mubr.f32.mxu0 0.0
        %2722 = vmatmul.mubr.f32.gmra.mrb[0].mxu0 %v1714
        %v2723 = vpop.f32.mrb[0].mxu0
        %v2724 = vadd.f32 0.0, %v2723
        %v2725 = vpop.f32.mrb[0].mxu0
        %2726 = vmatprep.mubr.f32.mxu0 0.0
        %2727 = vmatmul.mubr.f32.gmra.mrb[0].mxu0 %v2508
        %v2728 = vpop.f32.mrb[0].mxu0
        %v2729 = vadd.f32 0.0, %v2728
        %v2730 = vpop.f32.mrb[0].mxu0
        %2731 = vmatprep.mubr.f32.mxu0 0.0
        %2732 = vmatmul.mubr.f32.gmra.mrb[0].mxu0 %v2510
        %v2733 = vpop.f32.mrb[0].mxu0
        %v2734 = vadd.f32 0.0, %v2733
        %v2735 = vpop.f32.mrb[0].mxu0
        %2736 = vdwg.mxu0
        %v2737 = vadd.f32 %v2470, %v2579
        %v2738 = vadd.f32 %v2471, %v2584
        %v2739 = vadd.f32 %v2472, %v2589
        %v2740 = vadd.f32 %v2473, %v2594
        %v2741 = vadd.f32 %v2474, %v2599
        %v2742 = vadd.f32 %v2475, %v2604
        %v2743 = vadd.f32 %v2476, %v2609
        %v2744 = vadd.f32 %v2477, %v2614
        %v2745 = vadd.f32 %v2478, %v2619
        %v2746 = vadd.f32 %v2479, %v2624
        %v2747 = vadd.f32 %v2480, %v2629
        %v2748 = vadd.f32 %v2481, %v2634
        %v2749 = vadd.f32 %v2482, %v2639
        %v2750 = vadd.f32 %v2483, %v2644
        %v2751 = vadd.f32 %v2484, %v2649
        %v2752 = vadd.f32 %v2485, %v2654
        %v2753 = vadd.f32 %v2486, %v2659
        %v2754 = vadd.f32 %v2487, %v2664
        %v2755 = vadd.f32 %v2488, %v2669
        %v2756 = vadd.f32 %v2489, %v2674
        %v2757 = vadd.f32 %v2490, %v2679
        %v2758 = vadd.f32 %v2491, %v2684
        %v2759 = vadd.f32 %v2492, %v2689
        %v2760 = vadd.f32 %v2493, %v2694
        %v2761 = vadd.f32 %v2494, %v2699
        %v2762 = vadd.f32 %v2495, %v2704
        %v2763 = vadd.f32 %v2496, %v2709
        %v2764 = vadd.f32 %v2497, %v2714
        %v2765 = vadd.f32 %v2498, %v2719
        %v2766 = vadd.f32 %v2499, %v2724
        %v2767 = vadd.f32 %v2500, %v2729
        %v2768 = vadd.f32 %v2501, %v2734
        %v2769 = vrot.slane %v294, 2
        %v2770 = vrot.slane %v295, 2
        %v2771 = vsel %vm1041, %v2769, %v2770
        %v2772 = vrot.slane %v296, 2
        %v2773 = vsel %vm1041, %v2770, %v2772
        %v2774 = vsel %vm462, %v2771, 0
        %v2776 = vsel %vm462, %v2773, 0
        %2778 = vmatprep.subr.mxu0 0.0
        %2779 = vmatpush1.msra.mxu0 %v329
        %2780 = vmatprep.subr.mxu0 0.0
        %2781 = vmatpush1.msra.mxu0 %v330
        %2782 = vmatprep.subr.mxu0 0.0
        %2783 = vmatpush1.msra.mxu0 %v331
        %2784 = vmatprep.subr.mxu0 0.0
        %2785 = vmatpush1.msra.mxu0 %v332
        %2786 = vmatprep.subr.mxu0 0.0
        %2787 = vmatpush1.msra.mxu0 0.0
        %2788 = vmatprep.subr.mxu0 0.0
        %2789 = vmatpush1.msra.mxu0 0.0
        %2790 = vmatprep.subr.mxu0 0.0
        %2791 = vmatpush1.msra.mxu0 0.0
        %2792 = vmatprep.subr.mxu0 0.0
        %2793 = vmatpush1.msra.mxu0 0.0
        %2794 = vmatprep.subr.mxu0 0.0
        %2795 = vmatpush1.msra.mxu0 0.0
        %2796 = vmatprep.subr.mxu0 0.0
        %2797 = vmatpush1.msra.mxu0 0.0
        %2798 = vmatprep.subr.mxu0 0.0
        %2799 = vmatpush1.msra.mxu0 0.0
        %2800 = vmatprep.subr.mxu0 0.0
        %2801 = vmatpush1.msra.mxu0 0.0
        %2802 = vmatprep.subr.mxu0 0.0
        %2803 = vmatpush1.msra.mxu0 0.0
        %2804 = vmatprep.subr.mxu0 0.0
        %2805 = vmatpush1.msra.mxu0 0.0
        %2806 = vmatprep.subr.mxu0 0.0
        %2807 = vmatpush1.msra.mxu0 0.0
        %2808 = vmatprep.subr.mxu0 0.0
        %2809 = vmatpush1.msra.mxu0 0.0
        %2810 = vmatprep.subr.mxu0 0.0
        %2811 = vmatpush1.msra.mxu0 0.0
        %2812 = vmatprep.subr.mxu0 0.0
        %2813 = vmatpush1.msra.mxu0 0.0
        %2814 = vmatprep.subr.mxu0 0.0
        %2815 = vmatpush1.msra.mxu0 0.0
        %2816 = vmatprep.subr.mxu0 0.0
        %2817 = vmatpush1.msra.mxu0 0.0
        %2818 = vmatprep.subr.mxu0 0.0
        %2819 = vmatpush1.msra.mxu0 0.0
        %2820 = vmatprep.subr.mxu0 0.0
        %2821 = vmatpush1.msra.mxu0 0.0
        %2822 = vmatprep.subr.mxu0 0.0
        %2823 = vmatpush1.msra.mxu0 0.0
        %2824 = vmatprep.subr.mxu0 0.0
        %2825 = vmatpush1.msra.mxu0 0.0
        %2826 = vmatprep.subr.mxu0 0.0
        %2827 = vmatpush1.msra.mxu0 0.0
        %2828 = vmatprep.subr.mxu0 0.0
        %2829 = vmatpush1.msra.mxu0 0.0
        %2830 = vmatprep.subr.mxu0 0.0
        %2831 = vmatpush1.msra.mxu0 0.0
        %2832 = vmatprep.subr.mxu0 0.0
        %2833 = vmatpush1.msra.mxu0 0.0
        %2834 = vmatprep.subr.mxu0 0.0
        %2835 = vmatpush1.msra.mxu0 0.0
        %2836 = vmatprep.subr.mxu0 0.0
        %2837 = vmatpush1.msra.mxu0 0.0
        %2838 = vmatprep.subr.mxu0 0.0
        %2839 = vmatpush1.msra.mxu0 0.0
        %2840 = vmatprep.subr.mxu0 0.0
        %2841 = vmatpush1.msra.mxu0 0.0
        %2842 = vmatprep.mubr.f32.mxu0 0.0
        %2843 = vmatmul.mubr.f32.gmra.mrb[0].mxu0 %v1130
        %v2844 = vpop.f32.mrb[0].mxu0
        %v2845 = vadd.f32 0.0, %v2844
        %v2846 = vpop.f32.mrb[0].mxu0
        %2847 = vmatprep.mubr.f32.mxu0 0.0
        %2848 = vmatmul.mubr.f32.gmra.mrb[0].mxu0 %v1132
        %v2849 = vpop.f32.mrb[0].mxu0
        %v2850 = vadd.f32 0.0, %v2849
        %v2851 = vpop.f32.mrb[0].mxu0
        %2852 = vmatprep.mubr.f32.mxu0 0.0
        %2853 = vmatmul.mubr.f32.gmra.mrb[0].mxu0 %v1134
        %v2854 = vpop.f32.mrb[0].mxu0
        %v2855 = vadd.f32 0.0, %v2854
        %v2856 = vpop.f32.mrb[0].mxu0
        %2857 = vmatprep.mubr.f32.mxu0 0.0
        %2858 = vmatmul.mubr.f32.gmra.mrb[0].mxu0 %v1136
        %v2859 = vpop.f32.mrb[0].mxu0
        %v2860 = vadd.f32 0.0, %v2859
        %v2861 = vpop.f32.mrb[0].mxu0
        %2862 = vmatprep.mubr.f32.mxu0 0.0
        %2863 = vmatmul.mubr.f32.gmra.mrb[0].mxu0 %v1138
        %v2864 = vpop.f32.mrb[0].mxu0
        %v2865 = vadd.f32 0.0, %v2864
        %v2866 = vpop.f32.mrb[0].mxu0
        %2867 = vmatprep.mubr.f32.mxu0 0.0
        %2868 = vmatmul.mubr.f32.gmra.mrb[0].mxu0 %v1140
        %v2869 = vpop.f32.mrb[0].mxu0
        %v2870 = vadd.f32 0.0, %v2869
        %v2871 = vpop.f32.mrb[0].mxu0
        %2872 = vmatprep.mubr.f32.mxu0 0.0
        %2873 = vmatmul.mubr.f32.gmra.mrb[0].mxu0 %v1142
        %v2874 = vpop.f32.mrb[0].mxu0
        %v2875 = vadd.f32 0.0, %v2874
        %v2876 = vpop.f32.mrb[0].mxu0
        %2877 = vmatprep.mubr.f32.mxu0 0.0
        %2878 = vmatmul.mubr.f32.gmra.mrb[0].mxu0 %v1144
        %v2879 = vpop.f32.mrb[0].mxu0
        %v2880 = vadd.f32 0.0, %v2879
        %v2881 = vpop.f32.mrb[0].mxu0
        %2882 = vmatprep.mubr.f32.mxu0 0.0
        %2883 = vmatmul.mubr.f32.gmra.mrb[0].mxu0 %v1146
        %v2884 = vpop.f32.mrb[0].mxu0
        %v2885 = vadd.f32 0.0, %v2884
        %v2886 = vpop.f32.mrb[0].mxu0
        %2887 = vmatprep.mubr.f32.mxu0 0.0
        %2888 = vmatmul.mubr.f32.gmra.mrb[0].mxu0 %v1148
        %v2889 = vpop.f32.mrb[0].mxu0
        %v2890 = vadd.f32 0.0, %v2889
        %v2891 = vpop.f32.mrb[0].mxu0
        %2892 = vmatprep.mubr.f32.mxu0 0.0
        %2893 = vmatmul.mubr.f32.gmra.mrb[0].mxu0 %v1150
        %v2894 = vpop.f32.mrb[0].mxu0
        %v2895 = vadd.f32 0.0, %v2894
        %v2896 = vpop.f32.mrb[0].mxu0
        %2897 = vmatprep.mubr.f32.mxu0 0.0
        %2898 = vmatmul.mubr.f32.gmra.mrb[0].mxu0 %v1152
        %v2899 = vpop.f32.mrb[0].mxu0
        %v2900 = vadd.f32 0.0, %v2899
        %v2901 = vpop.f32.mrb[0].mxu0
        %2902 = vmatprep.mubr.f32.mxu0 0.0
        %2903 = vmatmul.mubr.f32.gmra.mrb[0].mxu0 %v1154
        %v2904 = vpop.f32.mrb[0].mxu0
        %v2905 = vadd.f32 0.0, %v2904
        %v2906 = vpop.f32.mrb[0].mxu0
        %2907 = vmatprep.mubr.f32.mxu0 0.0
        %2908 = vmatmul.mubr.f32.gmra.mrb[0].mxu0 %v1156
        %v2909 = vpop.f32.mrb[0].mxu0
        %v2910 = vadd.f32 0.0, %v2909
        %v2911 = vpop.f32.mrb[0].mxu0
        %2912 = vmatprep.mubr.f32.mxu0 0.0
        %2913 = vmatmul.mubr.f32.gmra.mrb[0].mxu0 %v1158
        %v2914 = vpop.f32.mrb[0].mxu0
        %v2915 = vadd.f32 0.0, %v2914
        %v2916 = vpop.f32.mrb[0].mxu0
        %2917 = vmatprep.mubr.f32.mxu0 0.0
        %2918 = vmatmul.mubr.f32.gmra.mrb[0].mxu0 %v1160
        %v2919 = vpop.f32.mrb[0].mxu0
        %v2920 = vadd.f32 0.0, %v2919
        %v2921 = vpop.f32.mrb[0].mxu0
        %2922 = vmatprep.mubr.f32.mxu0 0.0
        %2923 = vmatmul.mubr.f32.gmra.mrb[0].mxu0 %v1162
        %v2924 = vpop.f32.mrb[0].mxu0
        %v2925 = vadd.f32 0.0, %v2924
        %v2926 = vpop.f32.mrb[0].mxu0
        %2927 = vmatprep.mubr.f32.mxu0 0.0
        %2928 = vmatmul.mubr.f32.gmra.mrb[0].mxu0 %v1164
        %v2929 = vpop.f32.mrb[0].mxu0
        %v2930 = vadd.f32 0.0, %v2929
        %v2931 = vpop.f32.mrb[0].mxu0
        %2932 = vmatprep.mubr.f32.mxu0 0.0
        %2933 = vmatmul.mubr.f32.gmra.mrb[0].mxu0 %v1166
        %v2934 = vpop.f32.mrb[0].mxu0
        %v2935 = vadd.f32 0.0, %v2934
        %v2936 = vpop.f32.mrb[0].mxu0
        %2937 = vmatprep.mubr.f32.mxu0 0.0
        %2938 = vmatmul.mubr.f32.gmra.mrb[0].mxu0 %v1168
        %v2939 = vpop.f32.mrb[0].mxu0
        %v2940 = vadd.f32 0.0, %v2939
        %v2941 = vpop.f32.mrb[0].mxu0
        %2942 = vmatprep.mubr.f32.mxu0 0.0
        %2943 = vmatmul.mubr.f32.gmra.mrb[0].mxu0 %v1170
        %v2944 = vpop.f32.mrb[0].mxu0
        %v2945 = vadd.f32 0.0, %v2944
        %v2946 = vpop.f32.mrb[0].mxu0
        %2947 = vmatprep.mubr.f32.mxu0 0.0
        %2948 = vmatmul.mubr.f32.gmra.mrb[0].mxu0 %v1172
        %v2949 = vpop.f32.mrb[0].mxu0
        %v2950 = vadd.f32 0.0, %v2949
        %v2951 = vpop.f32.mrb[0].mxu0
        %2952 = vmatprep.mubr.f32.mxu0 0.0
        %2953 = vmatmul.mubr.f32.gmra.mrb[0].mxu0 %v1174
        %v2954 = vpop.f32.mrb[0].mxu0
        %v2955 = vadd.f32 0.0, %v2954
        %v2956 = vpop.f32.mrb[0].mxu0
        %2957 = vmatprep.mubr.f32.mxu0 0.0
        %2958 = vmatmul.mubr.f32.gmra.mrb[0].mxu0 %v1176
        %v2959 = vpop.f32.mrb[0].mxu0
        %v2960 = vadd.f32 0.0, %v2959
        %v2961 = vpop.f32.mrb[0].mxu0
        %2962 = vmatprep.mubr.f32.mxu0 0.0
        %2963 = vmatmul.mubr.f32.gmra.mrb[0].mxu0 %v1178
        %v2964 = vpop.f32.mrb[0].mxu0
        %v2965 = vadd.f32 0.0, %v2964
        %v2966 = vpop.f32.mrb[0].mxu0
        %2967 = vmatprep.mubr.f32.mxu0 0.0
        %2968 = vmatmul.mubr.f32.gmra.mrb[0].mxu0 %v1180
        %v2969 = vpop.f32.mrb[0].mxu0
        %v2970 = vadd.f32 0.0, %v2969
        %v2971 = vpop.f32.mrb[0].mxu0
        %2972 = vmatprep.mubr.f32.mxu0 0.0
        %2973 = vmatmul.mubr.f32.gmra.mrb[0].mxu0 %v1182
        %v2974 = vpop.f32.mrb[0].mxu0
        %v2975 = vadd.f32 0.0, %v2974
        %v2976 = vpop.f32.mrb[0].mxu0
        %2977 = vmatprep.mubr.f32.mxu0 0.0
        %2978 = vmatmul.mubr.f32.gmra.mrb[0].mxu0 %v1184
        %v2979 = vpop.f32.mrb[0].mxu0
        %v2980 = vadd.f32 0.0, %v2979
        %v2981 = vpop.f32.mrb[0].mxu0
        %2982 = vmatprep.mubr.f32.mxu0 0.0
        %2983 = vmatmul.mubr.f32.gmra.mrb[0].mxu0 %v1978
        %v2984 = vpop.f32.mrb[0].mxu0
        %v2985 = vadd.f32 0.0, %v2984
        %v2986 = vpop.f32.mrb[0].mxu0
        %2987 = vmatprep.mubr.f32.mxu0 0.0
        %2988 = vmatmul.mubr.f32.gmra.mrb[0].mxu0 %v1980
        %v2989 = vpop.f32.mrb[0].mxu0
        %v2990 = vadd.f32 0.0, %v2989
        %v2991 = vpop.f32.mrb[0].mxu0
        %2992 = vmatprep.mubr.f32.mxu0 0.0
        %2993 = vmatmul.mubr.f32.gmra.mrb[0].mxu0 %v2774
        %v2994 = vpop.f32.mrb[0].mxu0
        %v2995 = vadd.f32 0.0, %v2994
        %v2996 = vpop.f32.mrb[0].mxu0
        %2997 = vmatprep.mubr.f32.mxu0 0.0
        %2998 = vmatmul.mubr.f32.gmra.mrb[0].mxu0 %v2776
        %v2999 = vpop.f32.mrb[0].mxu0
        %v3000 = vadd.f32 0.0, %v2999
        %v3001 = vpop.f32.mrb[0].mxu0
        %3002 = vdwg.mxu0
        %v3003 = vadd.f32 %v2737, %v2845
        %v3004 = vadd.f32 %v2738, %v2850
        %v3005 = vadd.f32 %v2739, %v2855
        %v3006 = vadd.f32 %v2740, %v2860
        %v3007 = vadd.f32 %v2741, %v2865
        %v3008 = vadd.f32 %v2742, %v2870
        %v3009 = vadd.f32 %v2743, %v2875
        %v3010 = vadd.f32 %v2744, %v2880
        %v3011 = vadd.f32 %v2745, %v2885
        %v3012 = vadd.f32 %v2746, %v2890
        %v3013 = vadd.f32 %v2747, %v2895
        %v3014 = vadd.f32 %v2748, %v2900
        %v3015 = vadd.f32 %v2749, %v2905
        %v3016 = vadd.f32 %v2750, %v2910
        %v3017 = vadd.f32 %v2751, %v2915
        %v3018 = vadd.f32 %v2752, %v2920
        %v3019 = vadd.f32 %v2753, %v2925
        %v3020 = vadd.f32 %v2754, %v2930
        %v3021 = vadd.f32 %v2755, %v2935
        %v3022 = vadd.f32 %v2756, %v2940
        %v3023 = vadd.f32 %v2757, %v2945
        %v3024 = vadd.f32 %v2758, %v2950
        %v3025 = vadd.f32 %v2759, %v2955
        %v3026 = vadd.f32 %v2760, %v2960
        %v3027 = vadd.f32 %v2761, %v2965
        %v3028 = vadd.f32 %v2762, %v2970
        %v3029 = vadd.f32 %v2763, %v2975
        %v3030 = vadd.f32 %v2764, %v2980
        %v3031 = vadd.f32 %v2765, %v2985
        %v3032 = vadd.f32 %v2766, %v2990
        %v3033 = vadd.f32 %v2767, %v2995
        %v3034 = vadd.f32 %v2768, %v3000
        %v3035 = vld [vmem:[%s2] sm:$0x1]
        %v3036 = vld [vmem:[%s3] sm:$0x1]
        %v3037 = vsel %vm462, %v3003, 0.0
        %3038 = vadd.xlane.f32.xlu0 %v3037
        %v3039 = vpop.xlane.xlu0 %3038
        %v3040 = vsel %vm462, %v3004, 0.0
        %3041 = vadd.xlane.f32.xlu0 %v3040
        %v3042 = vpop.xlane.xlu0 %3041
        %v3043 = vsel %vm462, %v3005, 0.0
        %3044 = vadd.xlane.f32.xlu0 %v3043
        %v3045 = vpop.xlane.xlu0 %3044
        %v3046 = vsel %vm462, %v3006, 0.0
        %3047 = vadd.xlane.f32.xlu0 %v3046
        %v3048 = vpop.xlane.xlu0 %3047
        %v3049 = vsel %vm462, %v3007, 0.0
        %3050 = vadd.xlane.f32.xlu0 %v3049
        %v3051 = vpop.xlane.xlu0 %3050
        %v3052 = vsel %vm462, %v3008, 0.0
        %3053 = vadd.xlane.f32.xlu0 %v3052
        %v3054 = vpop.xlane.xlu0 %3053
        %v3055 = vsel %vm462, %v3009, 0.0
        %3056 = vadd.xlane.f32.xlu0 %v3055
        %v3057 = vpop.xlane.xlu0 %3056
        %v3058 = vsel %vm462, %v3010, 0.0
        %3059 = vadd.xlane.f32.xlu0 %v3058
        %v3060 = vpop.xlane.xlu0 %3059
        %v3061 = vsel %vm462, %v3011, 0.0
        %3062 = vadd.xlane.f32.xlu0 %v3061
        %v3063 = vpop.xlane.xlu0 %3062
        %v3064 = vsel %vm462, %v3012, 0.0
        %3065 = vadd.xlane.f32.xlu0 %v3064
        %v3066 = vpop.xlane.xlu0 %3065
        %v3067 = vsel %vm462, %v3013, 0.0
        %3068 = vadd.xlane.f32.xlu0 %v3067
        %v3069 = vpop.xlane.xlu0 %3068
        %v3070 = vsel %vm462, %v3014, 0.0
        %3071 = vadd.xlane.f32.xlu0 %v3070
        %v3072 = vpop.xlane.xlu0 %3071
        %v3073 = vsel %vm462, %v3015, 0.0
        %3074 = vadd.xlane.f32.xlu0 %v3073
        %v3075 = vpop.xlane.xlu0 %3074
        %v3076 = vsel %vm462, %v3016, 0.0
        %3077 = vadd.xlane.f32.xlu0 %v3076
        %v3078 = vpop.xlane.xlu0 %3077
        %v3079 = vsel %vm462, %v3017, 0.0
        %3080 = vadd.xlane.f32.xlu0 %v3079
        %v3081 = vpop.xlane.xlu0 %3080
        %v3082 = vsel %vm462, %v3018, 0.0
        %3083 = vadd.xlane.f32.xlu0 %v3082
        %v3084 = vpop.xlane.xlu0 %3083
        %v3085 = vsel %vm462, %v3019, 0.0
        %3086 = vadd.xlane.f32.xlu0 %v3085
        %v3087 = vpop.xlane.xlu0 %3086
        %v3088 = vsel %vm462, %v3020, 0.0
        %3089 = vadd.xlane.f32.xlu0 %v3088
        %v3090 = vpop.xlane.xlu0 %3089
        %v3091 = vsel %vm462, %v3021, 0.0
        %3092 = vadd.xlane.f32.xlu0 %v3091
        %v3093 = vpop.xlane.xlu0 %3092
        %v3094 = vsel %vm462, %v3022, 0.0
        %3095 = vadd.xlane.f32.xlu0 %v3094
        %v3096 = vpop.xlane.xlu0 %3095
        %v3097 = vsel %vm462, %v3023, 0.0
        %3098 = vadd.xlane.f32.xlu0 %v3097
        %v3099 = vpop.xlane.xlu0 %3098
        %v3100 = vsel %vm462, %v3024, 0.0
        %3101 = vadd.xlane.f32.xlu0 %v3100
        %v3102 = vpop.xlane.xlu0 %3101
        %v3103 = vsel %vm462, %v3025, 0.0
        %3104 = vadd.xlane.f32.xlu0 %v3103
        %v3105 = vpop.xlane.xlu0 %3104
        %v3106 = vsel %vm462, %v3026, 0.0
        %3107 = vadd.xlane.f32.xlu0 %v3106
        %v3108 = vpop.xlane.xlu0 %3107
        %v3109 = vsel %vm462, %v3027, 0.0
        %3110 = vadd.xlane.f32.xlu0 %v3109
        %v3111 = vpop.xlane.xlu0 %3110
        %v3112 = vsel %vm462, %v3028, 0.0
        %3113 = vadd.xlane.f32.xlu0 %v3112
        %v3114 = vpop.xlane.xlu0 %3113
        %v3115 = vsel %vm462, %v3029, 0.0
        %3116 = vadd.xlane.f32.xlu0 %v3115
        %v3117 = vpop.xlane.xlu0 %3116
        %v3118 = vsel %vm462, %v3030, 0.0
        %3119 = vadd.xlane.f32.xlu0 %v3118
        %v3120 = vpop.xlane.xlu0 %3119
        %v3121 = vsel %vm462, %v3031, 0.0
        %3122 = vadd.xlane.f32.xlu0 %v3121
        %v3123 = vpop.xlane.xlu0 %3122
        %v3124 = vsel %vm462, %v3032, 0.0
        %3125 = vadd.xlane.f32.xlu0 %v3124
        %v3126 = vpop.xlane.xlu0 %3125
        %v3127 = vsel %vm462, %v3033, 0.0
        %3128 = vadd.xlane.f32.xlu0 %v3127
        %v3129 = vpop.xlane.xlu0 %3128
        %v3130 = vsel %vm462, %v3034, 0.0
        %3131 = vadd.xlane.f32.xlu0 %v3130
        %v3132 = vpop.xlane.xlu0 %3131
        %v3133 = vrcp.pop 32.0
        %v3134 = vmul.f32 %v3039, %v3133
        %v3135 = vmul.f32 %v3042, %v3133
        %v3136 = vmul.f32 %v3045, %v3133
        %v3137 = vmul.f32 %v3048, %v3133
        %v3138 = vmul.f32 %v3051, %v3133
        %v3139 = vmul.f32 %v3054, %v3133
        %v3140 = vmul.f32 %v3057, %v3133
        %v3141 = vmul.f32 %v3060, %v3133
        %v3142 = vmul.f32 %v3063, %v3133
        %v3143 = vmul.f32 %v3066, %v3133
        %v3144 = vmul.f32 %v3069, %v3133
        %v3145 = vmul.f32 %v3072, %v3133
        %v3146 = vmul.f32 %v3075, %v3133
        %v3147 = vmul.f32 %v3078, %v3133
        %v3148 = vmul.f32 %v3081, %v3133
        %v3149 = vmul.f32 %v3084, %v3133
        %v3150 = vmul.f32 %v3087, %v3133
        %v3151 = vmul.f32 %v3090, %v3133
        %v3152 = vmul.f32 %v3093, %v3133
        %v3153 = vmul.f32 %v3096, %v3133
        %v3154 = vmul.f32 %v3099, %v3133
        %v3155 = vmul.f32 %v3102, %v3133
        %v3156 = vmul.f32 %v3105, %v3133
        %v3157 = vmul.f32 %v3108, %v3133
        %v3158 = vmul.f32 %v3111, %v3133
        %v3159 = vmul.f32 %v3114, %v3133
        %v3160 = vmul.f32 %v3117, %v3133
        %v3161 = vmul.f32 %v3120, %v3133
        %v3162 = vmul.f32 %v3123, %v3133
        %v3163 = vmul.f32 %v3126, %v3133
        %v3164 = vmul.f32 %v3129, %v3133
        %v3165 = vmul.f32 %v3132, %v3133
        %v3166 = vsub.f32 %v3003, %v3134
        %v3167 = vsub.f32 %v3004, %v3135
        %v3168 = vsub.f32 %v3005, %v3136
        %v3169 = vsub.f32 %v3006, %v3137
        %v3170 = vsub.f32 %v3007, %v3138
        %v3171 = vsub.f32 %v3008, %v3139
        %v3172 = vsub.f32 %v3009, %v3140
        %v3173 = vsub.f32 %v3010, %v3141
        %v3174 = vsub.f32 %v3011, %v3142
        %v3175 = vsub.f32 %v3012, %v3143
        %v3176 = vsub.f32 %v3013, %v3144
        %v3177 = vsub.f32 %v3014, %v3145
        %v3178 = vsub.f32 %v3015, %v3146
        %v3179 = vsub.f32 %v3016, %v3147
        %v3180 = vsub.f32 %v3017, %v3148
        %v3181 = vsub.f32 %v3018, %v3149
        %v3182 = vsub.f32 %v3019, %v3150
        %v3183 = vsub.f32 %v3020, %v3151
        %v3184 = vsub.f32 %v3021, %v3152
        %v3185 = vsub.f32 %v3022, %v3153
        %v3186 = vsub.f32 %v3023, %v3154
        %v3187 = vsub.f32 %v3024, %v3155
        %v3188 = vsub.f32 %v3025, %v3156
        %v3189 = vsub.f32 %v3026, %v3157
        %v3190 = vsub.f32 %v3027, %v3158
        %v3191 = vsub.f32 %v3028, %v3159
        %v3192 = vsub.f32 %v3029, %v3160
        %v3193 = vsub.f32 %v3030, %v3161
        %v3194 = vsub.f32 %v3031, %v3162
        %v3195 = vsub.f32 %v3032, %v3163
        %v3196 = vsub.f32 %v3033, %v3164
        %v3197 = vsub.f32 %v3034, %v3165
        %v3198 = vmul.f32 %v3166, %v3166
        %v3199 = vmul.f32 %v3167, %v3167
        %v3200 = vmul.f32 %v3168, %v3168
        %v3201 = vmul.f32 %v3169, %v3169
        %v3202 = vmul.f32 %v3170, %v3170
        %v3203 = vmul.f32 %v3171, %v3171
        %v3204 = vmul.f32 %v3172, %v3172
        %v3205 = vmul.f32 %v3173, %v3173
        %v3206 = vmul.f32 %v3174, %v3174
        %v3207 = vmul.f32 %v3175, %v3175
        %v3208 = vmul.f32 %v3176, %v3176
        %v3209 = vmul.f32 %v3177, %v3177
        %v3210 = vmul.f32 %v3178, %v3178
        %v3211 = vmul.f32 %v3179, %v3179
        %v3212 = vmul.f32 %v3180, %v3180
        %v3213 = vmul.f32 %v3181, %v3181
        %v3214 = vmul.f32 %v3182, %v3182
        %v3215 = vmul.f32 %v3183, %v3183
        %v3216 = vmul.f32 %v3184, %v3184
        %v3217 = vmul.f32 %v3185, %v3185
        %v3218 = vmul.f32 %v3186, %v3186
        %v3219 = vmul.f32 %v3187, %v3187
        %v3220 = vmul.f32 %v3188, %v3188
        %v3221 = vmul.f32 %v3189, %v3189
        %v3222 = vmul.f32 %v3190, %v3190
        %v3223 = vmul.f32 %v3191, %v3191
        %v3224 = vmul.f32 %v3192, %v3192
        %v3225 = vmul.f32 %v3193, %v3193
        %v3226 = vmul.f32 %v3194, %v3194
        %v3227 = vmul.f32 %v3195, %v3195
        %v3228 = vmul.f32 %v3196, %v3196
        %v3229 = vmul.f32 %v3197, %v3197
        %v3230 = vsel %vm462, %v3198, 0.0
        %3231 = vadd.xlane.f32.xlu0 %v3230
        %v3232 = vpop.xlane.xlu0 %3231
        %v3233 = vsel %vm462, %v3199, 0.0
        %3234 = vadd.xlane.f32.xlu0 %v3233
        %v3235 = vpop.xlane.xlu0 %3234
        %v3236 = vsel %vm462, %v3200, 0.0
        %3237 = vadd.xlane.f32.xlu0 %v3236
        %v3238 = vpop.xlane.xlu0 %3237
        %v3239 = vsel %vm462, %v3201, 0.0
        %3240 = vadd.xlane.f32.xlu0 %v3239
        %v3241 = vpop.xlane.xlu0 %3240
        %v3242 = vsel %vm462, %v3202, 0.0
        %3243 = vadd.xlane.f32.xlu0 %v3242
        %v3244 = vpop.xlane.xlu0 %3243
        %v3245 = vsel %vm462, %v3203, 0.0
        %3246 = vadd.xlane.f32.xlu0 %v3245
        %v3247 = vpop.xlane.xlu0 %3246
        %v3248 = vsel %vm462, %v3204, 0.0
        %3249 = vadd.xlane.f32.xlu0 %v3248
        %v3250 = vpop.xlane.xlu0 %3249
        %v3251 = vsel %vm462, %v3205, 0.0
        %3252 = vadd.xlane.f32.xlu0 %v3251
        %v3253 = vpop.xlane.xlu0 %3252
        %v3254 = vsel %vm462, %v3206, 0.0
        %3255 = vadd.xlane.f32.xlu0 %v3254
        %v3256 = vpop.xlane.xlu0 %3255
        %v3257 = vsel %vm462, %v3207, 0.0
        %3258 = vadd.xlane.f32.xlu0 %v3257
        %v3259 = vpop.xlane.xlu0 %3258
        %v3260 = vsel %vm462, %v3208, 0.0
        %3261 = vadd.xlane.f32.xlu0 %v3260
        %v3262 = vpop.xlane.xlu0 %3261
        %v3263 = vsel %vm462, %v3209, 0.0
        %3264 = vadd.xlane.f32.xlu0 %v3263
        %v3265 = vpop.xlane.xlu0 %3264
        %v3266 = vsel %vm462, %v3210, 0.0
        %3267 = vadd.xlane.f32.xlu0 %v3266
        %v3268 = vpop.xlane.xlu0 %3267
        %v3269 = vsel %vm462, %v3211, 0.0
        %3270 = vadd.xlane.f32.xlu0 %v3269
        %v3271 = vpop.xlane.xlu0 %3270
        %v3272 = vsel %vm462, %v3212, 0.0
        %3273 = vadd.xlane.f32.xlu0 %v3272
        %v3274 = vpop.xlane.xlu0 %3273
        %v3275 = vsel %vm462, %v3213, 0.0
        %3276 = vadd.xlane.f32.xlu0 %v3275
        %v3277 = vpop.xlane.xlu0 %3276
        %v3278 = vsel %vm462, %v3214, 0.0
        %3279 = vadd.xlane.f32.xlu0 %v3278
        %v3280 = vpop.xlane.xlu0 %3279
        %v3281 = vsel %vm462, %v3215, 0.0
        %3282 = vadd.xlane.f32.xlu0 %v3281
        %v3283 = vpop.xlane.xlu0 %3282
        %v3284 = vsel %vm462, %v3216, 0.0
        %3285 = vadd.xlane.f32.xlu0 %v3284
        %v3286 = vpop.xlane.xlu0 %3285
        %v3287 = vsel %vm462, %v3217, 0.0
        %3288 = vadd.xlane.f32.xlu0 %v3287
        %v3289 = vpop.xlane.xlu0 %3288
        %v3290 = vsel %vm462, %v3218, 0.0
        %3291 = vadd.xlane.f32.xlu0 %v3290
        %v3292 = vpop.xlane.xlu0 %3291
        %v3293 = vsel %vm462, %v3219, 0.0
        %3294 = vadd.xlane.f32.xlu0 %v3293
        %v3295 = vpop.xlane.xlu0 %3294
        %v3296 = vsel %vm462, %v3220, 0.0
        %3297 = vadd.xlane.f32.xlu0 %v3296
        %v3298 = vpop.xlane.xlu0 %3297
        %v3299 = vsel %vm462, %v3221, 0.0
        %3300 = vadd.xlane.f32.xlu0 %v3299
        %v3301 = vpop.xlane.xlu0 %3300
        %v3302 = vsel %vm462, %v3222, 0.0
        %3303 = vadd.xlane.f32.xlu0 %v3302
        %v3304 = vpop.xlane.xlu0 %3303
        %v3305 = vsel %vm462, %v3223, 0.0
        %3306 = vadd.xlane.f32.xlu0 %v3305
        %v3307 = vpop.xlane.xlu0 %3306
        %v3308 = vsel %vm462, %v3224, 0.0
        %3309 = vadd.xlane.f32.xlu0 %v3308
        %v3310 = vpop.xlane.xlu0 %3309
        %v3311 = vsel %vm462, %v3225, 0.0
        %3312 = vadd.xlane.f32.xlu0 %v3311
        %v3313 = vpop.xlane.xlu0 %3312
        %v3314 = vsel %vm462, %v3226, 0.0
        %3315 = vadd.xlane.f32.xlu0 %v3314
        %v3316 = vpop.xlane.xlu0 %3315
        %v3317 = vsel %vm462, %v3227, 0.0
        %3318 = vadd.xlane.f32.xlu0 %v3317
        %v3319 = vpop.xlane.xlu0 %3318
        %v3320 = vsel %vm462, %v3228, 0.0
        %3321 = vadd.xlane.f32.xlu0 %v3320
        %v3322 = vpop.xlane.xlu0 %3321
        %v3323 = vsel %vm462, %v3229, 0.0
        %3324 = vadd.xlane.f32.xlu0 %v3323
        %v3325 = vpop.xlane.xlu0 %3324
        %v3326 = vmul.f32 %v3232, %v3133
        %v3327 = vmul.f32 %v3235, %v3133
        %v3328 = vmul.f32 %v3238, %v3133
        %v3329 = vmul.f32 %v3241, %v3133
        %v3330 = vmul.f32 %v3244, %v3133
        %v3331 = vmul.f32 %v3247, %v3133
        %v3332 = vmul.f32 %v3250, %v3133
        %v3333 = vmul.f32 %v3253, %v3133
        %v3334 = vmul.f32 %v3256, %v3133
        %v3335 = vmul.f32 %v3259, %v3133
        %v3336 = vmul.f32 %v3262, %v3133
        %v3337 = vmul.f32 %v3265, %v3133
        %v3338 = vmul.f32 %v3268, %v3133
        %v3339 = vmul.f32 %v3271, %v3133
        %v3340 = vmul.f32 %v3274, %v3133
        %v3341 = vmul.f32 %v3277, %v3133
        %v3342 = vmul.f32 %v3280, %v3133
        %v3343 = vmul.f32 %v3283, %v3133
        %v3344 = vmul.f32 %v3286, %v3133
        %v3345 = vmul.f32 %v3289, %v3133
        %v3346 = vmul.f32 %v3292, %v3133
        %v3347 = vmul.f32 %v3295, %v3133
        %v3348 = vmul.f32 %v3298, %v3133
        %v3349 = vmul.f32 %v3301, %v3133
        %v3350 = vmul.f32 %v3304, %v3133
        %v3351 = vmul.f32 %v3307, %v3133
        %v3352 = vmul.f32 %v3310, %v3133
        %v3353 = vmul.f32 %v3313, %v3133
        %v3354 = vmul.f32 %v3316, %v3133
        %v3355 = vmul.f32 %v3319, %v3133
        %v3356 = vmul.f32 %v3322, %v3133
        %v3357 = vmul.f32 %v3325, %v3133
        %v3358 = vadd.f32 %v3326, 1e-05
        %v3359 = vadd.f32 %v3327, 1e-05
        %v3360 = vadd.f32 %v3328, 1e-05
        %v3361 = vadd.f32 %v3329, 1e-05
        %v3362 = vadd.f32 %v3330, 1e-05
        %v3363 = vadd.f32 %v3331, 1e-05
        %v3364 = vadd.f32 %v3332, 1e-05
        %v3365 = vadd.f32 %v3333, 1e-05
        %v3366 = vadd.f32 %v3334, 1e-05
        %v3367 = vadd.f32 %v3335, 1e-05
        %v3368 = vadd.f32 %v3336, 1e-05
        %v3369 = vadd.f32 %v3337, 1e-05
        %v3370 = vadd.f32 %v3338, 1e-05
        %v3371 = vadd.f32 %v3339, 1e-05
        %v3372 = vadd.f32 %v3340, 1e-05
        %v3373 = vadd.f32 %v3341, 1e-05
        %v3374 = vadd.f32 %v3342, 1e-05
        %v3375 = vadd.f32 %v3343, 1e-05
        %v3376 = vadd.f32 %v3344, 1e-05
        %v3377 = vadd.f32 %v3345, 1e-05
        %v3378 = vadd.f32 %v3346, 1e-05
        %v3379 = vadd.f32 %v3347, 1e-05
        %v3380 = vadd.f32 %v3348, 1e-05
        %v3381 = vadd.f32 %v3349, 1e-05
        %v3382 = vadd.f32 %v3350, 1e-05
        %v3383 = vadd.f32 %v3351, 1e-05
        %v3384 = vadd.f32 %v3352, 1e-05
        %v3385 = vadd.f32 %v3353, 1e-05
        %v3386 = vadd.f32 %v3354, 1e-05
        %v3387 = vadd.f32 %v3355, 1e-05
        %v3388 = vadd.f32 %v3356, 1e-05
        %v3389 = vadd.f32 %v3357, 1e-05
        %v3390 = vrsqrt.pop %v3358
        %v3391 = vrsqrt.pop %v3359
        %v3392 = vrsqrt.pop %v3360
        %v3393 = vrsqrt.pop %v3361
        %v3394 = vrsqrt.pop %v3362
        %v3395 = vrsqrt.pop %v3363
        %v3396 = vrsqrt.pop %v3364
        %v3397 = vrsqrt.pop %v3365
        %v3398 = vrsqrt.pop %v3366
        %v3399 = vrsqrt.pop %v3367
        %v3400 = vrsqrt.pop %v3368
        %v3401 = vrsqrt.pop %v3369
        %v3402 = vrsqrt.pop %v3370
        %v3403 = vrsqrt.pop %v3371
        %v3404 = vrsqrt.pop %v3372
        %v3405 = vrsqrt.pop %v3373
        %v3406 = vrsqrt.pop %v3374
        %v3407 = vrsqrt.pop %v3375
        %v3408 = vrsqrt.pop %v3376
        %v3409 = vrsqrt.pop %v3377
        %v3410 = vrsqrt.pop %v3378
        %v3411 = vrsqrt.pop %v3379
        %v3412 = vrsqrt.pop %v3380
        %v3413 = vrsqrt.pop %v3381
        %v3414 = vrsqrt.pop %v3382
        %v3415 = vrsqrt.pop %v3383
        %v3416 = vrsqrt.pop %v3384
        %v3417 = vrsqrt.pop %v3385
        %v3418 = vrsqrt.pop %v3386
        %v3419 = vrsqrt.pop %v3387
        %v3420 = vrsqrt.pop %v3388
        %v3421 = vrsqrt.pop %v3389
        %v3422 = vmul.f32 %v3166, %v3390
        %v3423 = vmul.f32 %v3167, %v3391
        %v3424 = vmul.f32 %v3168, %v3392
        %v3425 = vmul.f32 %v3169, %v3393
        %v3426 = vmul.f32 %v3170, %v3394
        %v3427 = vmul.f32 %v3171, %v3395
        %v3428 = vmul.f32 %v3172, %v3396
        %v3429 = vmul.f32 %v3173, %v3397
        %v3430 = vmul.f32 %v3174, %v3398
        %v3431 = vmul.f32 %v3175, %v3399
        %v3432 = vmul.f32 %v3176, %v3400
        %v3433 = vmul.f32 %v3177, %v3401
        %v3434 = vmul.f32 %v3178, %v3402
        %v3435 = vmul.f32 %v3179, %v3403
        %v3436 = vmul.f32 %v3180, %v3404
        %v3437 = vmul.f32 %v3181, %v3405
        %v3438 = vmul.f32 %v3182, %v3406
        %v3439 = vmul.f32 %v3183, %v3407
        %v3440 = vmul.f32 %v3184, %v3408
        %v3441 = vmul.f32 %v3185, %v3409
        %v3442 = vmul.f32 %v3186, %v3410
        %v3443 = vmul.f32 %v3187, %v3411
        %v3444 = vmul.f32 %v3188, %v3412
        %v3445 = vmul.f32 %v3189, %v3413
        %v3446 = vmul.f32 %v3190, %v3414
        %v3447 = vmul.f32 %v3191, %v3415
        %v3448 = vmul.f32 %v3192, %v3416
        %v3449 = vmul.f32 %v3193, %v3417
        %v3450 = vmul.f32 %v3194, %v3418
        %v3451 = vmul.f32 %v3195, %v3419
        %v3452 = vmul.f32 %v3196, %v3420
        %v3453 = vmul.f32 %v3197, %v3421
        %v3455 = vlaneseq
        %v3456 = vshrl.u32 %v3455, 7
        %v3457 = vsub.s32 0, %v3456
        %v3458 = vrot.slane %v3035, %v3457
        %v3460 = vmul.f32 %v3422, %v3458
        %v3461 = vmul.f32 %v3423, %v3458
        %v3462 = vmul.f32 %v3424, %v3458
        %v3463 = vmul.f32 %v3425, %v3458
        %v3464 = vmul.f32 %v3426, %v3458
        %v3465 = vmul.f32 %v3427, %v3458
        %v3466 = vmul.f32 %v3428, %v3458
        %v3467 = vmul.f32 %v3429, %v3458
        %v3468 = vmul.f32 %v3430, %v3458
        %v3469 = vmul.f32 %v3431, %v3458
        %v3470 = vmul.f32 %v3432, %v3458
        %v3471 = vmul.f32 %v3433, %v3458
        %v3472 = vmul.f32 %v3434, %v3458
        %v3473 = vmul.f32 %v3435, %v3458
        %v3474 = vmul.f32 %v3436, %v3458
        %v3475 = vmul.f32 %v3437, %v3458
        %v3476 = vmul.f32 %v3438, %v3458
        %v3477 = vmul.f32 %v3439, %v3458
        %v3478 = vmul.f32 %v3440, %v3458
        %v3479 = vmul.f32 %v3441, %v3458
        %v3480 = vmul.f32 %v3442, %v3458
        %v3481 = vmul.f32 %v3443, %v3458
        %v3482 = vmul.f32 %v3444, %v3458
        %v3483 = vmul.f32 %v3445, %v3458
        %v3484 = vmul.f32 %v3446, %v3458
        %v3485 = vmul.f32 %v3447, %v3458
        %v3486 = vmul.f32 %v3448, %v3458
        %v3487 = vmul.f32 %v3449, %v3458
        %v3488 = vmul.f32 %v3450, %v3458
        %v3489 = vmul.f32 %v3451, %v3458
        %v3490 = vmul.f32 %v3452, %v3458
        %v3491 = vmul.f32 %v3453, %v3458
        %v3493 = vlaneseq
        %v3494 = vshrl.u32 %v3493, 7
        %v3495 = vsub.s32 0, %v3494
        %v3496 = vrot.slane %v3036, %v3495
        %v3498 = vadd.f32 %v3460, %v3496
        %v3499 = vadd.f32 %v3461, %v3496
        %v3500 = vadd.f32 %v3462, %v3496
        %v3501 = vadd.f32 %v3463, %v3496
        %v3502 = vadd.f32 %v3464, %v3496
        %v3503 = vadd.f32 %v3465, %v3496
        %v3504 = vadd.f32 %v3466, %v3496
        %v3505 = vadd.f32 %v3467, %v3496
        %v3506 = vadd.f32 %v3468, %v3496
        %v3507 = vadd.f32 %v3469, %v3496
        %v3508 = vadd.f32 %v3470, %v3496
        %v3509 = vadd.f32 %v3471, %v3496
        %v3510 = vadd.f32 %v3472, %v3496
        %v3511 = vadd.f32 %v3473, %v3496
        %v3512 = vadd.f32 %v3474, %v3496
        %v3513 = vadd.f32 %v3475, %v3496
        %v3514 = vadd.f32 %v3476, %v3496
        %v3515 = vadd.f32 %v3477, %v3496
        %v3516 = vadd.f32 %v3478, %v3496
        %v3517 = vadd.f32 %v3479, %v3496
        %v3518 = vadd.f32 %v3480, %v3496
        %v3519 = vadd.f32 %v3481, %v3496
        %v3520 = vadd.f32 %v3482, %v3496
        %v3521 = vadd.f32 %v3483, %v3496
        %v3522 = vadd.f32 %v3484, %v3496
        %v3523 = vadd.f32 %v3485, %v3496
        %v3524 = vadd.f32 %v3486, %v3496
        %v3525 = vadd.f32 %v3487, %v3496
        %v3526 = vadd.f32 %v3488, %v3496
        %v3527 = vadd.f32 %v3489, %v3496
        %v3528 = vadd.f32 %v3490, %v3496
        %v3529 = vadd.f32 %v3491, %v3496
        %v3530 = vld [vmem:[%s242] sm:$0xff]
        %v3531 = vld [vmem:[%s242 + $0x8] sm:$0xff]
        %v3532 = vld [vmem:[%s242 + $0x10] sm:$0xff]
        %v3533 = vld [vmem:[%s242 + $0x18] sm:$0xff]
        %v3534 = vld [vmem:[%s242 + $0x20] sm:$0xff]
        %v3535 = vld [vmem:[%s242 + $0x28] sm:$0xff]
        %v3536 = vld [vmem:[%s242 + $0x30] sm:$0xff]
        %v3537 = vld [vmem:[%s242 + $0x38] sm:$0xff]
        %v3538 = vld [vmem:[%s242 + $0x40] sm:$0xff]
        %v3539 = vld [vmem:[%s242 + $0x48] sm:$0xff]
        %v3540 = vld [vmem:[%s242 + $0x50] sm:$0xff]
        %v3541 = vld [vmem:[%s242 + $0x58] sm:$0xff]
        %v3542 = vld [vmem:[%s242 + $0x60] sm:$0xff]
        %v3543 = vld [vmem:[%s242 + $0x68] sm:$0xff]
        %v3544 = vld [vmem:[%s242 + $0x70] sm:$0xff]
        %v3545 = vld [vmem:[%s242 + $0x78] sm:$0xff]
        %v3546 = vld [vmem:[%s242 + $0x80] sm:$0xff]
        %v3547 = vld [vmem:[%s242 + $0x88] sm:$0xff]
        %v3548 = vld [vmem:[%s242 + $0x90] sm:$0xff]
        %v3549 = vld [vmem:[%s242 + $0x98] sm:$0xff]
        %v3550 = vld [vmem:[%s242 + $0xa0] sm:$0xff]
        %v3551 = vld [vmem:[%s242 + $0xa8] sm:$0xff]
        %v3552 = vld [vmem:[%s242 + $0xb0] sm:$0xff]
        %v3553 = vld [vmem:[%s242 + $0xb8] sm:$0xff]
        %v3554 = vld [vmem:[%s242 + $0xc0] sm:$0xff]
        %v3555 = vld [vmem:[%s242 + $0xc8] sm:$0xff]
        %v3556 = vld [vmem:[%s242 + $0xd0] sm:$0xff]
        %v3557 = vld [vmem:[%s242 + $0xd8] sm:$0xff]
        %v3558 = vld [vmem:[%s242 + $0xe0] sm:$0xff]
        %v3559 = vld [vmem:[%s242 + $0xe8] sm:$0xff]
        %v3560 = vld [vmem:[%s242 + $0xf0] sm:$0xff]
        %v3561 = vld [vmem:[%s242 + $0xf8] sm:$0xff]
        %v3562 = vadd.f32 %v3530, %v3498
        %v3563 = vadd.f32 %v3531, %v3499
        %v3564 = vadd.f32 %v3532, %v3500
        %v3565 = vadd.f32 %v3533, %v3501
        %v3566 = vadd.f32 %v3534, %v3502
        %v3567 = vadd.f32 %v3535, %v3503
        %v3568 = vadd.f32 %v3536, %v3504
        %v3569 = vadd.f32 %v3537, %v3505
        %v3570 = vadd.f32 %v3538, %v3506
        %v3571 = vadd.f32 %v3539, %v3507
        %v3572 = vadd.f32 %v3540, %v3508
        %v3573 = vadd.f32 %v3541, %v3509
        %v3574 = vadd.f32 %v3542, %v3510
        %v3575 = vadd.f32 %v3543, %v3511
        %v3576 = vadd.f32 %v3544, %v3512
        %v3577 = vadd.f32 %v3545, %v3513
        %v3578 = vadd.f32 %v3546, %v3514
        %v3579 = vadd.f32 %v3547, %v3515
        %v3580 = vadd.f32 %v3548, %v3516
        %v3581 = vadd.f32 %v3549, %v3517
        %v3582 = vadd.f32 %v3550, %v3518
        %v3583 = vadd.f32 %v3551, %v3519
        %v3584 = vadd.f32 %v3552, %v3520
        %v3585 = vadd.f32 %v3553, %v3521
        %v3586 = vadd.f32 %v3554, %v3522
        %v3587 = vadd.f32 %v3555, %v3523
        %v3588 = vadd.f32 %v3556, %v3524
        %v3589 = vadd.f32 %v3557, %v3525
        %v3590 = vadd.f32 %v3558, %v3526
        %v3591 = vadd.f32 %v3559, %v3527
        %v3592 = vadd.f32 %v3560, %v3528
        %v3593 = vadd.f32 %v3561, %v3529
        %3594 = vst.msk [vmem:[%s232] sm:$0xff] %vm462, %v3562
        %3595 = vst.msk [vmem:[%s232 + $0x8] sm:$0xff] %vm462, %v3563
        %3596 = vst.msk [vmem:[%s232 + $0x10] sm:$0xff] %vm462, %v3564
        %3597 = vst.msk [vmem:[%s232 + $0x18] sm:$0xff] %vm462, %v3565
        %3598 = vst.msk [vmem:[%s232 + $0x20] sm:$0xff] %vm462, %v3566
        %3599 = vst.msk [vmem:[%s232 + $0x28] sm:$0xff] %vm462, %v3567
        %3600 = vst.msk [vmem:[%s232 + $0x30] sm:$0xff] %vm462, %v3568
        %3601 = vst.msk [vmem:[%s232 + $0x38] sm:$0xff] %vm462, %v3569
        %3602 = vst.msk [vmem:[%s232 + $0x40] sm:$0xff] %vm462, %v3570
        %3603 = vst.msk [vmem:[%s232 + $0x48] sm:$0xff] %vm462, %v3571
        %3604 = vst.msk [vmem:[%s232 + $0x50] sm:$0xff] %vm462, %v3572
        %3605 = vst.msk [vmem:[%s232 + $0x58] sm:$0xff] %vm462, %v3573
        %3606 = vst.msk [vmem:[%s232 + $0x60] sm:$0xff] %vm462, %v3574
        %3607 = vst.msk [vmem:[%s232 + $0x68] sm:$0xff] %vm462, %v3575
        %3608 = vst.msk [vmem:[%s232 + $0x70] sm:$0xff] %vm462, %v3576
        %3609 = vst.msk [vmem:[%s232 + $0x78] sm:$0xff] %vm462, %v3577
        %3610 = vst.msk [vmem:[%s232 + $0x80] sm:$0xff] %vm462, %v3578
        %3611 = vst.msk [vmem:[%s232 + $0x88] sm:$0xff] %vm462, %v3579
        %3612 = vst.msk [vmem:[%s232 + $0x90] sm:$0xff] %vm462, %v3580
        %3613 = vst.msk [vmem:[%s232 + $0x98] sm:$0xff] %vm462, %v3581
        %3614 = vst.msk [vmem:[%s232 + $0xa0] sm:$0xff] %vm462, %v3582
        %3615 = vst.msk [vmem:[%s232 + $0xa8] sm:$0xff] %vm462, %v3583
        %3616 = vst.msk [vmem:[%s232 + $0xb0] sm:$0xff] %vm462, %v3584
        %3617 = vst.msk [vmem:[%s232 + $0xb8] sm:$0xff] %vm462, %v3585
        %3618 = vst.msk [vmem:[%s232 + $0xc0] sm:$0xff] %vm462, %v3586
        %3619 = vst.msk [vmem:[%s232 + $0xc8] sm:$0xff] %vm462, %v3587
        %3620 = vst.msk [vmem:[%s232 + $0xd0] sm:$0xff] %vm462, %v3588
        %3621 = vst.msk [vmem:[%s232 + $0xd8] sm:$0xff] %vm462, %v3589
        %3622 = vst.msk [vmem:[%s232 + $0xe0] sm:$0xff] %vm462, %v3590
        %3623 = vst.msk [vmem:[%s232 + $0xe8] sm:$0xff] %vm462, %v3591
        %3624 = vst.msk [vmem:[%s232 + $0xf0] sm:$0xff] %vm462, %v3592
        %3625 = vst.msk [vmem:[%s232 + $0xf8] sm:$0xff] %vm462, %v3593
        %s3626 = sand.u32 %s142, 1
        %s3627 = scalar_lea.sflag [#allocation3], %s3626
        %s3628 = sand.u32 %s142, 1
        %s3629 = smul.addr %s3628, 256
        %s3630 = scalar_lea.vmem [#allocation2], %s3629
        // Predicated region
        $region41: #{ag_rope_encoder_layer_forward.5} parent=39 // pred_check
          %p3631 = pneg %p152
        $region42: #{ag_rope_encoder_layer_forward.5} parent=39 // pred_check_branch
          %3633 = sbr.rel (%p3631) target = $region44
        $region43: #{ag_rope_encoder_layer_forward.5} parent=39 // pred_region
          %s3635 = ssub.s32 4096, 4096
          %3636 = vsyncadd %s3627, %s3635
          %s3637 = smul.addr %s19, 32
          %s3638 = smul.addr %s3637, 128
          %s3639 = scalar_lea.hbm %s5, %s3638
          %s3640 = sshll.u32 %s3630, 4
          %s3641 = int_to_ptr.vmem [resolvable:$true] %s3640
          %3646 = dma.vmem_to_hbm [thread:$0]  %s3641, 4096, %s3639, %s3627, 128, 128, 8
        $region44: #{ag_rope_encoder_layer_forward.5} parent=39 // pred_fallthru
          _
      $region40: #{ag_rope_encoder_layer_forward.5} parent=5 // pred_fallthru
        _
      %p3647 = scmp.le.s32.totalorder 2, %s14
      // Predicated region
      $region45: #{ag_rope_encoder_layer_forward.5} parent=5 // pred_check
        %p3648 = pneg %p3647
      $region46: #{ag_rope_encoder_layer_forward.5} parent=5 // pred_check_branch
        %3650 = sbr.rel (%p3648) target = $region48
      $region47: #{ag_rope_encoder_layer_forward.5} parent=5 // pred_region
        %s3651 = ssub.s32 %s14, 2
        // Predicated region
        $region49: #{ag_rope_encoder_layer_forward.5} parent=47 // pred_check
          %p3652 = pneg %p158
        $region50: #{ag_rope_encoder_layer_forward.5} parent=47 // pred_check_branch
          %3654 = sbr.rel (%p3652) target = $region52
        $region51: #{ag_rope_encoder_layer_forward.5} parent=47 // pred_region
          %s3655 = sand.u32 %s143, 1
          %s3656 = scalar_lea.sflag [#allocation3], %s3655
          %s3657 = sand.u32 %s143, 1
          %s3658 = smul.addr %s3657, 256
          %s3659 = scalar_lea.vmem [#allocation2], %s3658
          %3660 = dma.done %s3656, 4096
        $region52: #{ag_rope_encoder_layer_forward.5} parent=47 // pred_fallthru
          _
      $region48: #{ag_rope_encoder_layer_forward.5} parent=5 // pred_fallthru
        _
    $region6: #{ag_rope_encoder_layer_forward.5} parent=1 // loop_footer
      %s18 = sadd.s32 1, %s14
    $region7: #{ag_rope_encoder_layer_forward.5} parent=1 // loop_footer_branch
      %13 = sbr.rel target = $region3
    $region8: #{ag_rope_encoder_layer_forward.5} parent=1 // loop_exit
      _
    %3661 = vsyncpa [#allocation3], 1
    %s3662 = scalar_lea.sflag [#allocation3], 1
    %3663 = vsyncpa %s3662, 1

</llo_original>
